<compile_context>
chip_gen: v6e
topology: v6e:2x2x1
jax: 0.10.0
libtpu: 0.0.40
codegen_flags: <defaults>
</compile_context>

<pallas_src>
import jax
import jax.numpy as jnp
from jax import lax
from jax.experimental import pallas as pl
from jax.experimental.pallas import tpu as pltpu


def _conv3x3_vpu(pad_ref, w_ref, b_ref, n_out, n_in, h, w):
    """3x3 'SAME' conv + bias + ReLU on the VPU.

    pad_ref : VMEM ref (n_in, h+2, w+2), zero border, data in the interior.
    w_ref   : SMEM ref (n_out*n_in*9,) flattened OIHW weights (BN folded in).
    b_ref   : SMEM ref (n_out,) per-output-channel bias.
    Returns a list of n_out (h, w) float32 planes (post-ReLU).
    """
    accs = [jnp.zeros((h, w), jnp.float32) for _ in range(n_out)]
    for ci in range(n_in):
        plane = pad_ref[ci]                      # (h+2, w+2) f32
        for ky in range(3):
            for kx in range(3):
                tap = plane[ky:ky + h, kx:kx + w]            # shifted view
                base = ci * 9 + ky * 3 + kx
                for co in range(n_out):
                    # scalar (SMEM) * plane FMA -> VPU, W on lanes
                    accs[co] = accs[co] + w_ref[co * n_in * 9 + base] * tap
    return [jnp.maximum(a + b_ref[co], 0.0) for co, a in enumerate(accs)]


def _outconv_dis_kernel(x_ref, w1_ref, b1_ref, w2_ref, b2_ref, w3_ref, b3_ref,
                        out_ref, pad_scr):
    """Fused conv3x3+BN+ReLU -> conv3x3+BN+ReLU -> conv1x1+bias -> clamped sigmoid.

    x_ref  : (1, Cin, H, W) NCHW input tile (one batch element), VMEM
    w*_ref : flattened weights / biases in SMEM (BN scale pre-folded)
    out_ref: (1, Cout, H, W) NCHW output tile, VMEM
    pad_scr: VMEM scratch (Cin, H+2, W+2), shared zero-halo buffer
    """
    _, cin, h, w = x_ref.shape
    cout = out_ref.shape[1]
    hp, wp = h + 2, w + 2

    # --- refresh only the 1-pixel zero border of the shared halo scratch ---
    # (interior is fully overwritten below; doing this every step keeps the
    #  kernel correct under per-core scratch persistence with "parallel").
    pad_scr[:, 0:1, :] = jnp.zeros((cin, 1, wp), jnp.float32)
    pad_scr[:, hp - 1:hp, :] = jnp.zeros((cin, 1, wp), jnp.float32)
    pad_scr[:, :, 0:1] = jnp.zeros((cin, hp, 1), jnp.float32)
    pad_scr[:, :, wp - 1:wp] = jnp.zeros((cin, hp, 1), jnp.float32)

    # --- conv1 (BN scale folded into weights) + bias + ReLU ----------------
    pad_scr[:, 1:h + 1, 1:w + 1] = x_ref[0].astype(jnp.float32)
    y1 = _conv3x3_vpu(pad_scr, w1_ref, b1_ref, cin, cin, h, w)

    # --- conv2: reuse the same halo buffer for the intermediate activation -
    for ci in range(cin):
        pad_scr[ci:ci + 1, 1:h + 1, 1:w + 1] = y1[ci].reshape(1, h, w)
    y2 = _conv3x3_vpu(pad_scr, w2_ref, b2_ref, cin, cin, h, w)

    # --- conv3 (1x1, bias) + clamped sigmoid, written directly as NCHW -----
    for co in range(cout):
        o = jnp.zeros((h, w), jnp.float32)
        for ci in range(cin):
            o = o + w3_ref[co * cin + ci] * y2[ci]
        o = o + b3_ref[co]
        o = jnp.clip(jax.nn.sigmoid(o), 0.0001, 1.0 - 0.0001)
        out_ref[0:1, co:co + 1, :, :] = o.reshape(1, 1, h, w).astype(out_ref.dtype)


def outconv_dis_forward(x_nchw, params, activation=True):
    """x_nchw: (N, Cin, H, W) float32.  Returns (N, Cout, H, W)."""
    assert activation, "this kernel implements the activation=True path"
    N, Cin, H, W = x_nchw.shape
    Cout = int(params["b3"].shape[0])

    # Flatten the (tiny) weights so they live as 1-D scalar tables in SMEM.
    w1f = params["w1"].reshape(-1)   # (Cin*Cin*9,)  OIHW order, BN-folded
    w2f = params["w2"].reshape(-1)   # (Cin*Cin*9,)
    w3f = params["w3"].reshape(-1)   # (Cout*Cin,)
    b1, b2, b3 = params["b1"], params["b2"], params["b3"]

    def smem_spec(size):
        return pl.BlockSpec((size,), lambda n: (0,),
                            memory_space=pltpu.MemorySpace.SMEM)

    flops = int(2 * N * H * W * (2 * 9 * Cin * Cin + Cin * Cout))
    transcendentals = int(N * H * W * Cout)
    bytes_accessed = int(4 * (x_nchw.size + N * Cout * H * W
                              + w1f.size + w2f.size + w3f.size
                              + b1.size + b2.size + b3.size))

    return pl.pallas_call(
        _outconv_dis_kernel,
        out_shape=jax.ShapeDtypeStruct((N, Cout, H, W), x_nchw.dtype),
        grid_spec=pltpu.PrefetchScalarGridSpec(
            num_scalar_prefetch=0,
            grid=(N,),
            in_specs=[
                pl.BlockSpec((1, Cin, H, W), lambda n: (n, 0, 0, 0)),
                smem_spec(int(w1f.size)), smem_spec(Cin),
                smem_spec(int(w2f.size)), smem_spec(Cin),
                smem_spec(int(w3f.size)), smem_spec(Cout),
            ],
            out_specs=pl.BlockSpec((1, Cout, H, W), lambda n: (n, 0, 0, 0)),
            scratch_shapes=[pltpu.VMEM((Cin, H + 2, W + 2), jnp.float32)],
        ),
        compiler_params=pltpu.CompilerParams(
            dimension_semantics=("parallel",),
            vmem_limit_bytes=32 * 1024 * 1024),
        cost_estimate=pl.CostEstimate(
            flops=flops,
            transcendentals=transcendentals,
            bytes_accessed=bytes_accessed),
    )(x_nchw, w1f, b1, w2f, b2, w3f, b3)


def make_params(key, in_ch, out_ch):
    """Deterministic synthetic parameters; BN (inference) folded into weights."""
    ks = jax.random.split(key, 12)
    eps = 1e-5

    def bn_fold(kg, kb, km, kv, c):
        gamma = 1.0 + 0.1 * jax.random.normal(kg, (c,), jnp.float32)
        beta = 0.1 * jax.random.normal(kb, (c,), jnp.float32)
        mean = 0.1 * jax.random.normal(km, (c,), jnp.float32)
        var = jnp.abs(1.0 + 0.1 * jax.random.normal(kv, (c,), jnp.float32))
        scale = gamma / jnp.sqrt(var + eps)
        bias = beta - mean * scale
        return scale, bias

    # OIHW conv weights (PyTorch layout), no conv bias (matches bias=False).
    w1 = 0.2 * jax.random.normal(ks[0], (in_ch, in_ch, 3, 3), jnp.float32)
    s1, b1 = bn_fold(ks[1], ks[2], ks[3], ks[4], in_ch)
    w2 = 0.2 * jax.random.normal(ks[5], (in_ch, in_ch, 3, 3), jnp.float32)
    s2, b2 = bn_fold(ks[6], ks[7], ks[8], ks[9], in_ch)
    w3 = 0.2 * jax.random.normal(ks[10], (out_ch, in_ch), jnp.float32)
    b3 = 0.1 * jax.random.normal(ks[11], (out_ch,), jnp.float32)

    # Fold the BN scale into the conv output channels (inference mode):
    # conv(x) * s + b  ==  conv_with(w * s[:,None,None,None])(x) + b
    w1 = w1 * s1[:, None, None, None]
    w2 = w2 * s2[:, None, None, None]
    return dict(w1=w1, b1=b1, w2=w2, b2=b2, w3=w3, b3=b3)


def _reference_forward(x_nchw, params):
    """Plain-JAX reference (lax.conv, NCHW) for correctness checking."""
    dn = ("NCHW", "OIHW", "NCHW")
    y = lax.conv_general_dilated(x_nchw, params["w1"], (1, 1), "SAME",
                                 dimension_numbers=dn)
    y = jnp.maximum(y + params["b1"][None, :, None, None], 0.0)
    y = lax.conv_general_dilated(y, params["w2"], (1, 1), "SAME",
                                 dimension_numbers=dn)
    y = jnp.maximum(y + params["b2"][None, :, None, None], 0.0)
    y = jnp.einsum("nchw,oc->nohw", y, params["w3"]) \
        + params["b3"][None, :, None, None]
    return jnp.clip(jax.nn.sigmoid(y), 0.0001, 1.0 - 0.0001)


if __name__ == "__main__":
    N, Cin, Cout, H, W = 2, 4, 3, 16, 16
    key = jax.random.PRNGKey(0)
    kx, kp = jax.random.split(key)
    x = jax.random.normal(kx, (N, Cin, H, W), jnp.float32)
    params = make_params(kp, Cin, Cout)

    out = outconv_dis_forward(x, params)
    jax.block_until_ready(out)

    ref = _reference_forward(x, params)
    assert out.shape == (N, Cout, H, W)
    assert jnp.allclose(out, ref, atol=1e-5, rtol=1e-5), "mismatch vs reference"
    print("KERNEL_OK")
</pallas_src>

<mosaic_0001>
module attributes {stable_mosaic.version = 11 : i64} {
  func.func @_outconv_dis_kernel(%arg0: i32, %arg1: memref<1x4x16x16xf32, #tpu.memory_space<vmem>>, %arg2: memref<144xf32, #tpu.memory_space<smem>>, %arg3: memref<4xf32, #tpu.memory_space<smem>>, %arg4: memref<144xf32, #tpu.memory_space<smem>>, %arg5: memref<4xf32, #tpu.memory_space<smem>>, %arg6: memref<12xf32, #tpu.memory_space<smem>>, %arg7: memref<3xf32, #tpu.memory_space<smem>>, %arg8: memref<1x3x16x16xf32, #tpu.memory_space<vmem>>, %arg9: memref<4x18x18xf32, #tpu.memory_space<vmem>>) attributes {dimension_semantics = [#tpu.dimension_semantics<parallel>], iteration_bounds = array<i64: 2>, scalar_prefetch = 0 : i64, scratch_operands = 1 : i64, tpu.core_type = #tpu.core_type<tc>, window_params = [{transform_indices = @transform_0, window_bounds = array<i64: 1, 4, 16, 16>}, {transform_indices = @transform_1, window_bounds = array<i64: 144>}, {transform_indices = @transform_2, window_bounds = array<i64: 4>}, {transform_indices = @transform_3, window_bounds = array<i64: 144>}, {transform_indices = @transform_4, window_bounds = array<i64: 4>}, {transform_indices = @transform_5, window_bounds = array<i64: 12>}, {transform_indices = @transform_6, window_bounds = array<i64: 3>}, {transform_indices = @transform_7, window_bounds = array<i64: 1, 3, 16, 16>}]} {
    %cst = arith.constant 0.000000e+00 : f32
    %0 = vector.broadcast %cst : f32 to vector<4x1x18xf32>
    %c0 = arith.constant 0 : index
    %c0_0 = arith.constant 0 : index
    %c0_1 = arith.constant 0 : index
    %1 = vector.load %arg9[%c0, %c0_0, %c0_1] : memref<4x18x18xf32, #tpu.memory_space<vmem>>, vector<4x1x18xf32>
    tpu.vector_store %arg9[%c0, %c0_0, %c0_1], %0 {strides = array<i32>} : memref<4x18x18xf32, #tpu.memory_space<vmem>>, vector<4x1x18xf32>,
    %cst_2 = arith.constant 0.000000e+00 : f32
    %2 = vector.broadcast %cst_2 : f32 to vector<4x1x18xf32>
    %c0_3 = arith.constant 0 : index
    %c17 = arith.constant 17 : index
    %c0_4 = arith.constant 0 : index
    %3 = vector.load %arg9[%c0_3, %c17, %c0_4] : memref<4x18x18xf32, #tpu.memory_space<vmem>>, vector<4x1x18xf32>
    tpu.vector_store %arg9[%c0_3, %c17, %c0_4], %2 {strides = array<i32>} : memref<4x18x18xf32, #tpu.memory_space<vmem>>, vector<4x1x18xf32>,
    %cst_5 = arith.constant 0.000000e+00 : f32
    %4 = vector.broadcast %cst_5 : f32 to vector<4x18x1xf32>
    %c0_6 = arith.constant 0 : index
    %c0_7 = arith.constant 0 : index
    %c0_8 = arith.constant 0 : index
    %5 = vector.load %arg9[%c0_6, %c0_7, %c0_8] : memref<4x18x18xf32, #tpu.memory_space<vmem>>, vector<4x18x1xf32>
    tpu.vector_store %arg9[%c0_6, %c0_7, %c0_8], %4 {strides = array<i32>} : memref<4x18x18xf32, #tpu.memory_space<vmem>>, vector<4x18x1xf32>,
    %cst_9 = arith.constant 0.000000e+00 : f32
    %6 = vector.broadcast %cst_9 : f32 to vector<4x18x1xf32>
    %c0_10 = arith.constant 0 : index
    %c0_11 = arith.constant 0 : index
    %c17_12 = arith.constant 17 : index
    %7 = vector.load %arg9[%c0_10, %c0_11, %c17_12] : memref<4x18x18xf32, #tpu.memory_space<vmem>>, vector<4x18x1xf32>
    tpu.vector_store %arg9[%c0_10, %c0_11, %c17_12], %6 {strides = array<i32>} : memref<4x18x18xf32, #tpu.memory_space<vmem>>, vector<4x18x1xf32>,
    %c0_13 = arith.constant 0 : index
    %c0_14 = arith.constant 0 : index
    %c0_15 = arith.constant 0 : index
    %c0_16 = arith.constant 0 : index
    %8 = vector.load %arg1[%c0_13, %c0_14, %c0_15, %c0_16] : memref<1x4x16x16xf32, #tpu.memory_space<vmem>>, vector<1x4x16x16xf32>
    %9 = vector.shape_cast %8 : vector<1x4x16x16xf32> to vector<4x16x16xf32>
    %c0_17 = arith.constant 0 : index
    %c1 = arith.constant 1 : index
    %c1_18 = arith.constant 1 : index
    %10 = vector.load %arg9[%c0_17, %c1, %c1_18] : memref<4x18x18xf32, #tpu.memory_space<vmem>>, vector<4x16x16xf32>
    tpu.vector_store %arg9[%c0_17, %c1, %c1_18], %9 {strides = array<i32>} : memref<4x18x18xf32, #tpu.memory_space<vmem>>, vector<4x16x16xf32>,
    %cst_19 = arith.constant 0.000000e+00 : f32
    %11 = vector.broadcast %cst_19 : f32 to vector<16x16xf32>
    %cst_20 = arith.constant 0.000000e+00 : f32
    %12 = vector.broadcast %cst_20 : f32 to vector<16x16xf32>
    %cst_21 = arith.constant 0.000000e+00 : f32
    %13 = vector.broadcast %cst_21 : f32 to vector<16x16xf32>
    %cst_22 = arith.constant 0.000000e+00 : f32
    %14 = vector.broadcast %cst_22 : f32 to vector<16x16xf32>
    %c0_23 = arith.constant 0 : index
    %c0_24 = arith.constant 0 : index
    %c0_25 = arith.constant 0 : index
    %15 = vector.load %arg9[%c0_23, %c0_24, %c0_25] : memref<4x18x18xf32, #tpu.memory_space<vmem>>, vector<1x18x18xf32>
    %16 = vector.shape_cast %15 : vector<1x18x18xf32> to vector<18x18xf32>
    %17 = vector.extract_strided_slice %16 {offsets = [0, 0], sizes = [16, 16], strides = [1, 1]} : vector<18x18xf32> to vector<16x16xf32>
    %c0_26 = arith.constant 0 : index
    %18 = memref.load %arg2[%c0_26] : memref<144xf32, #tpu.memory_space<smem>>
    %19 = vector.broadcast %18 : f32 to vector<16x16xf32>
    %20 = arith.mulf %19, %17 : vector<16x16xf32>
    %21 = arith.addf %11, %20 : vector<16x16xf32>
    %c36 = arith.constant 36 : index
    %22 = memref.load %arg2[%c36] : memref<144xf32, #tpu.memory_space<smem>>
    %23 = vector.broadcast %22 : f32 to vector<16x16xf32>
    %24 = arith.mulf %23, %17 : vector<16x16xf32>
    %25 = arith.addf %12, %24 : vector<16x16xf32>
    %c72 = arith.constant 72 : index
    %26 = memref.load %arg2[%c72] : memref<144xf32, #tpu.memory_space<smem>>
    %27 = vector.broadcast %26 : f32 to vector<16x16xf32>
    %28 = arith.mulf %27, %17 : vector<16x16xf32>
    %29 = arith.addf %13, %28 : vector<16x16xf32>
    %c108 = arith.constant 108 : index
    %30 = memref.load %arg2[%c108] : memref<144xf32, #tpu.memory_space<smem>>
    %31 = vector.broadcast %30 : f32 to vector<16x16xf32>
    %32 = arith.mulf %31, %17 : vector<16x16xf32>
    %33 = arith.addf %14, %32 : vector<16x16xf32>
    %34 = vector.extract_strided_slice %16 {offsets = [0, 1], sizes = [16, 16], strides = [1, 1]} : vector<18x18xf32> to vector<16x16xf32>
    %c1_27 = arith.constant 1 : index
    %35 = memref.load %arg2[%c1_27] : memref<144xf32, #tpu.memory_space<smem>>
    %36 = vector.broadcast %35 : f32 to vector<16x16xf32>
    %37 = arith.mulf %36, %34 : vector<16x16xf32>
    %38 = arith.addf %21, %37 : vector<16x16xf32>
    %c37 = arith.constant 37 : index
    %39 = memref.load %arg2[%c37] : memref<144xf32, #tpu.memory_space<smem>>
    %40 = vector.broadcast %39 : f32 to vector<16x16xf32>
    %41 = arith.mulf %40, %34 : vector<16x16xf32>
    %42 = arith.addf %25, %41 : vector<16x16xf32>
    %c73 = arith.constant 73 : index
    %43 = memref.load %arg2[%c73] : memref<144xf32, #tpu.memory_space<smem>>
    %44 = vector.broadcast %43 : f32 to vector<16x16xf32>
    %45 = arith.mulf %44, %34 : vector<16x16xf32>
    %46 = arith.addf %29, %45 : vector<16x16xf32>
    %c109 = arith.constant 109 : index
    %47 = memref.load %arg2[%c109] : memref<144xf32, #tpu.memory_space<smem>>
    %48 = vector.broadcast %47 : f32 to vector<16x16xf32>
    %49 = arith.mulf %48, %34 : vector<16x16xf32>
    %50 = arith.addf %33, %49 : vector<16x16xf32>
    %51 = vector.extract_strided_slice %16 {offsets = [0, 2], sizes = [16, 16], strides = [1, 1]} : vector<18x18xf32> to vector<16x16xf32>
    %c2 = arith.constant 2 : index
    %52 = memref.load %arg2[%c2] : memref<144xf32, #tpu.memory_space<smem>>
    %53 = vector.broadcast %52 : f32 to vector<16x16xf32>
    %54 = arith.mulf %53, %51 : vector<16x16xf32>
    %55 = arith.addf %38, %54 : vector<16x16xf32>
    %c38 = arith.constant 38 : index
    %56 = memref.load %arg2[%c38] : memref<144xf32, #tpu.memory_space<smem>>
    %57 = vector.broadcast %56 : f32 to vector<16x16xf32>
    %58 = arith.mulf %57, %51 : vector<16x16xf32>
    %59 = arith.addf %42, %58 : vector<16x16xf32>
    %c74 = arith.constant 74 : index
    %60 = memref.load %arg2[%c74] : memref<144xf32, #tpu.memory_space<smem>>
    %61 = vector.broadcast %60 : f32 to vector<16x16xf32>
    %62 = arith.mulf %61, %51 : vector<16x16xf32>
    %63 = arith.addf %46, %62 : vector<16x16xf32>
    %c110 = arith.constant 110 : index
    %64 = memref.load %arg2[%c110] : memref<144xf32, #tpu.memory_space<smem>>
    %65 = vector.broadcast %64 : f32 to vector<16x16xf32>
    %66 = arith.mulf %65, %51 : vector<16x16xf32>
    %67 = arith.addf %50, %66 : vector<16x16xf32>
    %68 = vector.extract_strided_slice %16 {offsets = [1, 0], sizes = [16, 16], strides = [1, 1]} : vector<18x18xf32> to vector<16x16xf32>
    %c3 = arith.constant 3 : index
    %69 = memref.load %arg2[%c3] : memref<144xf32, #tpu.memory_space<smem>>
    %70 = vector.broadcast %69 : f32 to vector<16x16xf32>
    %71 = arith.mulf %70, %68 : vector<16x16xf32>
    %72 = arith.addf %55, %71 : vector<16x16xf32>
    %c39 = arith.constant 39 : index
    %73 = memref.load %arg2[%c39] : memref<144xf32, #tpu.memory_space<smem>>
    %74 = vector.broadcast %73 : f32 to vector<16x16xf32>
    %75 = arith.mulf %74, %68 : vector<16x16xf32>
    %76 = arith.addf %59, %75 : vector<16x16xf32>
    %c75 = arith.constant 75 : index
    %77 = memref.load %arg2[%c75] : memref<144xf32, #tpu.memory_space<smem>>
    %78 = vector.broadcast %77 : f32 to vector<16x16xf32>
    %79 = arith.mulf %78, %68 : vector<16x16xf32>
    %80 = arith.addf %63, %79 : vector<16x16xf32>
    %c111 = arith.constant 111 : index
    %81 = memref.load %arg2[%c111] : memref<144xf32, #tpu.memory_space<smem>>
    %82 = vector.broadcast %81 : f32 to vector<16x16xf32>
    %83 = arith.mulf %82, %68 : vector<16x16xf32>
    %84 = arith.addf %67, %83 : vector<16x16xf32>
    %85 = vector.extract_strided_slice %16 {offsets = [1, 1], sizes = [16, 16], strides = [1, 1]} : vector<18x18xf32> to vector<16x16xf32>
    %c4 = arith.constant 4 : index
    %86 = memref.load %arg2[%c4] : memref<144xf32, #tpu.memory_space<smem>>
    %87 = vector.broadcast %86 : f32 to vector<16x16xf32>
    %88 = arith.mulf %87, %85 : vector<16x16xf32>
    %89 = arith.addf %72, %88 : vector<16x16xf32>
    %c40 = arith.constant 40 : index
    %90 = memref.load %arg2[%c40] : memref<144xf32, #tpu.memory_space<smem>>
    %91 = vector.broadcast %90 : f32 to vector<16x16xf32>
    %92 = arith.mulf %91, %85 : vector<16x16xf32>
    %93 = arith.addf %76, %92 : vector<16x16xf32>
    %c76 = arith.constant 76 : index
    %94 = memref.load %arg2[%c76] : memref<144xf32, #tpu.memory_space<smem>>
    %95 = vector.broadcast %94 : f32 to vector<16x16xf32>
    %96 = arith.mulf %95, %85 : vector<16x16xf32>
    %97 = arith.addf %80, %96 : vector<16x16xf32>
    %c112 = arith.constant 112 : index
    %98 = memref.load %arg2[%c112] : memref<144xf32, #tpu.memory_space<smem>>
    %99 = vector.broadcast %98 : f32 to vector<16x16xf32>
    %100 = arith.mulf %99, %85 : vector<16x16xf32>
    %101 = arith.addf %84, %100 : vector<16x16xf32>
    %102 = vector.extract_strided_slice %16 {offsets = [1, 2], sizes = [16, 16], strides = [1, 1]} : vector<18x18xf32> to vector<16x16xf32>
    %c5 = arith.constant 5 : index
    %103 = memref.load %arg2[%c5] : memref<144xf32, #tpu.memory_space<smem>>
    %104 = vector.broadcast %103 : f32 to vector<16x16xf32>
    %105 = arith.mulf %104, %102 : vector<16x16xf32>
    %106 = arith.addf %89, %105 : vector<16x16xf32>
    %c41 = arith.constant 41 : index
    %107 = memref.load %arg2[%c41] : memref<144xf32, #tpu.memory_space<smem>>
    %108 = vector.broadcast %107 : f32 to vector<16x16xf32>
    %109 = arith.mulf %108, %102 : vector<16x16xf32>
    %110 = arith.addf %93, %109 : vector<16x16xf32>
    %c77 = arith.constant 77 : index
    %111 = memref.load %arg2[%c77] : memref<144xf32, #tpu.memory_space<smem>>
    %112 = vector.broadcast %111 : f32 to vector<16x16xf32>
    %113 = arith.mulf %112, %102 : vector<16x16xf32>
    %114 = arith.addf %97, %113 : vector<16x16xf32>
    %c113 = arith.constant 113 : index
    %115 = memref.load %arg2[%c113] : memref<144xf32, #tpu.memory_space<smem>>
    %116 = vector.broadcast %115 : f32 to vector<16x16xf32>
    %117 = arith.mulf %116, %102 : vector<16x16xf32>
    %118 = arith.addf %101, %117 : vector<16x16xf32>
    %119 = vector.extract_strided_slice %16 {offsets = [2, 0], sizes = [16, 16], strides = [1, 1]} : vector<18x18xf32> to vector<16x16xf32>
    %c6 = arith.constant 6 : index
    %120 = memref.load %arg2[%c6] : memref<144xf32, #tpu.memory_space<smem>>
    %121 = vector.broadcast %120 : f32 to vector<16x16xf32>
    %122 = arith.mulf %121, %119 : vector<16x16xf32>
    %123 = arith.addf %106, %122 : vector<16x16xf32>
    %c42 = arith.constant 42 : index
    %124 = memref.load %arg2[%c42] : memref<144xf32, #tpu.memory_space<smem>>
    %125 = vector.broadcast %124 : f32 to vector<16x16xf32>
    %126 = arith.mulf %125, %119 : vector<16x16xf32>
    %127 = arith.addf %110, %126 : vector<16x16xf32>
    %c78 = arith.constant 78 : index
    %128 = memref.load %arg2[%c78] : memref<144xf32, #tpu.memory_space<smem>>
    %129 = vector.broadcast %128 : f32 to vector<16x16xf32>
    %130 = arith.mulf %129, %119 : vector<16x16xf32>
    %131 = arith.addf %114, %130 : vector<16x16xf32>
    %c114 = arith.constant 114 : index
    %132 = memref.load %arg2[%c114] : memref<144xf32, #tpu.memory_space<smem>>
    %133 = vector.broadcast %132 : f32 to vector<16x16xf32>
    %134 = arith.mulf %133, %119 : vector<16x16xf32>
    %135 = arith.addf %118, %134 : vector<16x16xf32>
    %136 = vector.extract_strided_slice %16 {offsets = [2, 1], sizes = [16, 16], strides = [1, 1]} : vector<18x18xf32> to vector<16x16xf32>
    %c7 = arith.constant 7 : index
    %137 = memref.load %arg2[%c7] : memref<144xf32, #tpu.memory_space<smem>>
    %138 = vector.broadcast %137 : f32 to vector<16x16xf32>
    %139 = arith.mulf %138, %136 : vector<16x16xf32>
    %140 = arith.addf %123, %139 : vector<16x16xf32>
    %c43 = arith.constant 43 : index
    %141 = memref.load %arg2[%c43] : memref<144xf32, #tpu.memory_space<smem>>
    %142 = vector.broadcast %141 : f32 to vector<16x16xf32>
    %143 = arith.mulf %142, %136 : vector<16x16xf32>
    %144 = arith.addf %127, %143 : vector<16x16xf32>
    %c79 = arith.constant 79 : index
    %145 = memref.load %arg2[%c79] : memref<144xf32, #tpu.memory_space<smem>>
    %146 = vector.broadcast %145 : f32 to vector<16x16xf32>
    %147 = arith.mulf %146, %136 : vector<16x16xf32>
    %148 = arith.addf %131, %147 : vector<16x16xf32>
    %c115 = arith.constant 115 : index
    %149 = memref.load %arg2[%c115] : memref<144xf32, #tpu.memory_space<smem>>
    %150 = vector.broadcast %149 : f32 to vector<16x16xf32>
    %151 = arith.mulf %150, %136 : vector<16x16xf32>
    %152 = arith.addf %135, %151 : vector<16x16xf32>
    %153 = vector.extract_strided_slice %16 {offsets = [2, 2], sizes = [16, 16], strides = [1, 1]} : vector<18x18xf32> to vector<16x16xf32>
    %c8 = arith.constant 8 : index
    %154 = memref.load %arg2[%c8] : memref<144xf32, #tpu.memory_space<smem>>
    %155 = vector.broadcast %154 : f32 to vector<16x16xf32>
    %156 = arith.mulf %155, %153 : vector<16x16xf32>
    %157 = arith.addf %140, %156 : vector<16x16xf32>
    %c44 = arith.constant 44 : index
    %158 = memref.load %arg2[%c44] : memref<144xf32, #tpu.memory_space<smem>>
    %159 = vector.broadcast %158 : f32 to vector<16x16xf32>
    %160 = arith.mulf %159, %153 : vector<16x16xf32>
    %161 = arith.addf %144, %160 : vector<16x16xf32>
    %c80 = arith.constant 80 : index
    %162 = memref.load %arg2[%c80] : memref<144xf32, #tpu.memory_space<smem>>
    %163 = vector.broadcast %162 : f32 to vector<16x16xf32>
    %164 = arith.mulf %163, %153 : vector<16x16xf32>
    %165 = arith.addf %148, %164 : vector<16x16xf32>
    %c116 = arith.constant 116 : index
    %166 = memref.load %arg2[%c116] : memref<144xf32, #tpu.memory_space<smem>>
    %167 = vector.broadcast %166 : f32 to vector<16x16xf32>
    %168 = arith.mulf %167, %153 : vector<16x16xf32>
    %169 = arith.addf %152, %168 : vector<16x16xf32>
    %c1_28 = arith.constant 1 : index
    %c0_29 = arith.constant 0 : index
    %c0_30 = arith.constant 0 : index
    %170 = vector.load %arg9[%c1_28, %c0_29, %c0_30] : memref<4x18x18xf32, #tpu.memory_space<vmem>>, vector<1x18x18xf32>
    %171 = vector.shape_cast %170 : vector<1x18x18xf32> to vector<18x18xf32>
    %172 = vector.extract_strided_slice %171 {offsets = [0, 0], sizes = [16, 16], strides = [1, 1]} : vector<18x18xf32> to vector<16x16xf32>
    %c9 = arith.constant 9 : index
    %173 = memref.load %arg2[%c9] : memref<144xf32, #tpu.memory_space<smem>>
    %174 = vector.broadcast %173 : f32 to vector<16x16xf32>
    %175 = arith.mulf %174, %172 : vector<16x16xf32>
    %176 = arith.addf %157, %175 : vector<16x16xf32>
    %c45 = arith.constant 45 : index
    %177 = memref.load %arg2[%c45] : memref<144xf32, #tpu.memory_space<smem>>
    %178 = vector.broadcast %177 : f32 to vector<16x16xf32>
    %179 = arith.mulf %178, %172 : vector<16x16xf32>
    %180 = arith.addf %161, %179 : vector<16x16xf32>
    %c81 = arith.constant 81 : index
    %181 = memref.load %arg2[%c81] : memref<144xf32, #tpu.memory_space<smem>>
    %182 = vector.broadcast %181 : f32 to vector<16x16xf32>
    %183 = arith.mulf %182, %172 : vector<16x16xf32>
    %184 = arith.addf %165, %183 : vector<16x16xf32>
    %c117 = arith.constant 117 : index
    %185 = memref.load %arg2[%c117] : memref<144xf32, #tpu.memory_space<smem>>
    %186 = vector.broadcast %185 : f32 to vector<16x16xf32>
    %187 = arith.mulf %186, %172 : vector<16x16xf32>
    %188 = arith.addf %169, %187 : vector<16x16xf32>
    %189 = vector.extract_strided_slice %171 {offsets = [0, 1], sizes = [16, 16], strides = [1, 1]} : vector<18x18xf32> to vector<16x16xf32>
    %c10 = arith.constant 10 : index
    %190 = memref.load %arg2[%c10] : memref<144xf32, #tpu.memory_space<smem>>
    %191 = vector.broadcast %190 : f32 to vector<16x16xf32>
    %192 = arith.mulf %191, %189 : vector<16x16xf32>
    %193 = arith.addf %176, %192 : vector<16x16xf32>
    %c46 = arith.constant 46 : index
    %194 = memref.load %arg2[%c46] : memref<144xf32, #tpu.memory_space<smem>>
    %195 = vector.broadcast %194 : f32 to vector<16x16xf32>
    %196 = arith.mulf %195, %189 : vector<16x16xf32>
    %197 = arith.addf %180, %196 : vector<16x16xf32>
    %c82 = arith.constant 82 : index
    %198 = memref.load %arg2[%c82] : memref<144xf32, #tpu.memory_space<smem>>
    %199 = vector.broadcast %198 : f32 to vector<16x16xf32>
    %200 = arith.mulf %199, %189 : vector<16x16xf32>
    %201 = arith.addf %184, %200 : vector<16x16xf32>
    %c118 = arith.constant 118 : index
    %202 = memref.load %arg2[%c118] : memref<144xf32, #tpu.memory_space<smem>>
    %203 = vector.broadcast %202 : f32 to vector<16x16xf32>
    %204 = arith.mulf %203, %189 : vector<16x16xf32>
    %205 = arith.addf %188, %204 : vector<16x16xf32>
    %206 = vector.extract_strided_slice %171 {offsets = [0, 2], sizes = [16, 16], strides = [1, 1]} : vector<18x18xf32> to vector<16x16xf32>
    %c11 = arith.constant 11 : index
    %207 = memref.load %arg2[%c11] : memref<144xf32, #tpu.memory_space<smem>>
    %208 = vector.broadcast %207 : f32 to vector<16x16xf32>
    %209 = arith.mulf %208, %206 : vector<16x16xf32>
    %210 = arith.addf %193, %209 : vector<16x16xf32>
    %c47 = arith.constant 47 : index
    %211 = memref.load %arg2[%c47] : memref<144xf32, #tpu.memory_space<smem>>
    %212 = vector.broadcast %211 : f32 to vector<16x16xf32>
    %213 = arith.mulf %212, %206 : vector<16x16xf32>
    %214 = arith.addf %197, %213 : vector<16x16xf32>
    %c83 = arith.constant 83 : index
    %215 = memref.load %arg2[%c83] : memref<144xf32, #tpu.memory_space<smem>>
    %216 = vector.broadcast %215 : f32 to vector<16x16xf32>
    %217 = arith.mulf %216, %206 : vector<16x16xf32>
    %218 = arith.addf %201, %217 : vector<16x16xf32>
    %c119 = arith.constant 119 : index
    %219 = memref.load %arg2[%c119] : memref<144xf32, #tpu.memory_space<smem>>
    %220 = vector.broadcast %219 : f32 to vector<16x16xf32>
    %221 = arith.mulf %220, %206 : vector<16x16xf32>
    %222 = arith.addf %205, %221 : vector<16x16xf32>
    %223 = vector.extract_strided_slice %171 {offsets = [1, 0], sizes = [16, 16], strides = [1, 1]} : vector<18x18xf32> to vector<16x16xf32>
    %c12 = arith.constant 12 : index
    %224 = memref.load %arg2[%c12] : memref<144xf32, #tpu.memory_space<smem>>
    %225 = vector.broadcast %224 : f32 to vector<16x16xf32>
    %226 = arith.mulf %225, %223 : vector<16x16xf32>
    %227 = arith.addf %210, %226 : vector<16x16xf32>
    %c48 = arith.constant 48 : index
    %228 = memref.load %arg2[%c48] : memref<144xf32, #tpu.memory_space<smem>>
    %229 = vector.broadcast %228 : f32 to vector<16x16xf32>
    %230 = arith.mulf %229, %223 : vector<16x16xf32>
    %231 = arith.addf %214, %230 : vector<16x16xf32>
    %c84 = arith.constant 84 : index
    %232 = memref.load %arg2[%c84] : memref<144xf32, #tpu.memory_space<smem>>
    %233 = vector.broadcast %232 : f32 to vector<16x16xf32>
    %234 = arith.mulf %233, %223 : vector<16x16xf32>
    %235 = arith.addf %218, %234 : vector<16x16xf32>
    %c120 = arith.constant 120 : index
    %236 = memref.load %arg2[%c120] : memref<144xf32, #tpu.memory_space<smem>>
    %237 = vector.broadcast %236 : f32 to vector<16x16xf32>
    %238 = arith.mulf %237, %223 : vector<16x16xf32>
    %239 = arith.addf %222, %238 : vector<16x16xf32>
    %240 = vector.extract_strided_slice %171 {offsets = [1, 1], sizes = [16, 16], strides = [1, 1]} : vector<18x18xf32> to vector<16x16xf32>
    %c13 = arith.constant 13 : index
    %241 = memref.load %arg2[%c13] : memref<144xf32, #tpu.memory_space<smem>>
    %242 = vector.broadcast %241 : f32 to vector<16x16xf32>
    %243 = arith.mulf %242, %240 : vector<16x16xf32>
    %244 = arith.addf %227, %243 : vector<16x16xf32>
    %c49 = arith.constant 49 : index
    %245 = memref.load %arg2[%c49] : memref<144xf32, #tpu.memory_space<smem>>
    %246 = vector.broadcast %245 : f32 to vector<16x16xf32>
    %247 = arith.mulf %246, %240 : vector<16x16xf32>
    %248 = arith.addf %231, %247 : vector<16x16xf32>
    %c85 = arith.constant 85 : index
    %249 = memref.load %arg2[%c85] : memref<144xf32, #tpu.memory_space<smem>>
    %250 = vector.broadcast %249 : f32 to vector<16x16xf32>
    %251 = arith.mulf %250, %240 : vector<16x16xf32>
    %252 = arith.addf %235, %251 : vector<16x16xf32>
    %c121 = arith.constant 121 : index
    %253 = memref.load %arg2[%c121] : memref<144xf32, #tpu.memory_space<smem>>
    %254 = vector.broadcast %253 : f32 to vector<16x16xf32>
    %255 = arith.mulf %254, %240 : vector<16x16xf32>
    %256 = arith.addf %239, %255 : vector<16x16xf32>
    %257 = vector.extract_strided_slice %171 {offsets = [1, 2], sizes = [16, 16], strides = [1, 1]} : vector<18x18xf32> to vector<16x16xf32>
    %c14 = arith.constant 14 : index
    %258 = memref.load %arg2[%c14] : memref<144xf32, #tpu.memory_space<smem>>
    %259 = vector.broadcast %258 : f32 to vector<16x16xf32>
    %260 = arith.mulf %259, %257 : vector<16x16xf32>
    %261 = arith.addf %244, %260 : vector<16x16xf32>
    %c50 = arith.constant 50 : index
    %262 = memref.load %arg2[%c50] : memref<144xf32, #tpu.memory_space<smem>>
    %263 = vector.broadcast %262 : f32 to vector<16x16xf32>
    %264 = arith.mulf %263, %257 : vector<16x16xf32>
    %265 = arith.addf %248, %264 : vector<16x16xf32>
    %c86 = arith.constant 86 : index
    %266 = memref.load %arg2[%c86] : memref<144xf32, #tpu.memory_space<smem>>
    %267 = vector.broadcast %266 : f32 to vector<16x16xf32>
    %268 = arith.mulf %267, %257 : vector<16x16xf32>
    %269 = arith.addf %252, %268 : vector<16x16xf32>
    %c122 = arith.constant 122 : index
    %270 = memref.load %arg2[%c122] : memref<144xf32, #tpu.memory_space<smem>>
    %271 = vector.broadcast %270 : f32 to vector<16x16xf32>
    %272 = arith.mulf %271, %257 : vector<16x16xf32>
    %273 = arith.addf %256, %272 : vector<16x16xf32>
    %274 = vector.extract_strided_slice %171 {offsets = [2, 0], sizes = [16, 16], strides = [1, 1]} : vector<18x18xf32> to vector<16x16xf32>
    %c15 = arith.constant 15 : index
    %275 = memref.load %arg2[%c15] : memref<144xf32, #tpu.memory_space<smem>>
    %276 = vector.broadcast %275 : f32 to vector<16x16xf32>
    %277 = arith.mulf %276, %274 : vector<16x16xf32>
    %278 = arith.addf %261, %277 : vector<16x16xf32>
    %c51 = arith.constant 51 : index
    %279 = memref.load %arg2[%c51] : memref<144xf32, #tpu.memory_space<smem>>
    %280 = vector.broadcast %279 : f32 to vector<16x16xf32>
    %281 = arith.mulf %280, %274 : vector<16x16xf32>
    %282 = arith.addf %265, %281 : vector<16x16xf32>
    %c87 = arith.constant 87 : index
    %283 = memref.load %arg2[%c87] : memref<144xf32, #tpu.memory_space<smem>>
    %284 = vector.broadcast %283 : f32 to vector<16x16xf32>
    %285 = arith.mulf %284, %274 : vector<16x16xf32>
    %286 = arith.addf %269, %285 : vector<16x16xf32>
    %c123 = arith.constant 123 : index
    %287 = memref.load %arg2[%c123] : memref<144xf32, #tpu.memory_space<smem>>
    %288 = vector.broadcast %287 : f32 to vector<16x16xf32>
    %289 = arith.mulf %288, %274 : vector<16x16xf32>
    %290 = arith.addf %273, %289 : vector<16x16xf32>
    %291 = vector.extract_strided_slice %171 {offsets = [2, 1], sizes = [16, 16], strides = [1, 1]} : vector<18x18xf32> to vector<16x16xf32>
    %c16 = arith.constant 16 : index
    %292 = memref.load %arg2[%c16] : memref<144xf32, #tpu.memory_space<smem>>
    %293 = vector.broadcast %292 : f32 to vector<16x16xf32>
    %294 = arith.mulf %293, %291 : vector<16x16xf32>
    %295 = arith.addf %278, %294 : vector<16x16xf32>
    %c52 = arith.constant 52 : index
    %296 = memref.load %arg2[%c52] : memref<144xf32, #tpu.memory_space<smem>>
    %297 = vector.broadcast %296 : f32 to vector<16x16xf32>
    %298 = arith.mulf %297, %291 : vector<16x16xf32>
    %299 = arith.addf %282, %298 : vector<16x16xf32>
    %c88 = arith.constant 88 : index
    %300 = memref.load %arg2[%c88] : memref<144xf32, #tpu.memory_space<smem>>
    %301 = vector.broadcast %300 : f32 to vector<16x16xf32>
    %302 = arith.mulf %301, %291 : vector<16x16xf32>
    %303 = arith.addf %286, %302 : vector<16x16xf32>
    %c124 = arith.constant 124 : index
    %304 = memref.load %arg2[%c124] : memref<144xf32, #tpu.memory_space<smem>>
    %305 = vector.broadcast %304 : f32 to vector<16x16xf32>
    %306 = arith.mulf %305, %291 : vector<16x16xf32>
    %307 = arith.addf %290, %306 : vector<16x16xf32>
    %308 = vector.extract_strided_slice %171 {offsets = [2, 2], sizes = [16, 16], strides = [1, 1]} : vector<18x18xf32> to vector<16x16xf32>
    %c17_31 = arith.constant 17 : index
    %309 = memref.load %arg2[%c17_31] : memref<144xf32, #tpu.memory_space<smem>>
    %310 = vector.broadcast %309 : f32 to vector<16x16xf32>
    %311 = arith.mulf %310, %308 : vector<16x16xf32>
    %312 = arith.addf %295, %311 : vector<16x16xf32>
    %c53 = arith.constant 53 : index
    %313 = memref.load %arg2[%c53] : memref<144xf32, #tpu.memory_space<smem>>
    %314 = vector.broadcast %313 : f32 to vector<16x16xf32>
    %315 = arith.mulf %314, %308 : vector<16x16xf32>
    %316 = arith.addf %299, %315 : vector<16x16xf32>
    %c89 = arith.constant 89 : index
    %317 = memref.load %arg2[%c89] : memref<144xf32, #tpu.memory_space<smem>>
    %318 = vector.broadcast %317 : f32 to vector<16x16xf32>
    %319 = arith.mulf %318, %308 : vector<16x16xf32>
    %320 = arith.addf %303, %319 : vector<16x16xf32>
    %c125 = arith.constant 125 : index
    %321 = memref.load %arg2[%c125] : memref<144xf32, #tpu.memory_space<smem>>
    %322 = vector.broadcast %321 : f32 to vector<16x16xf32>
    %323 = arith.mulf %322, %308 : vector<16x16xf32>
    %324 = arith.addf %307, %323 : vector<16x16xf32>
    %c2_32 = arith.constant 2 : index
    %c0_33 = arith.constant 0 : index
    %c0_34 = arith.constant 0 : index
    %325 = vector.load %arg9[%c2_32, %c0_33, %c0_34] : memref<4x18x18xf32, #tpu.memory_space<vmem>>, vector<1x18x18xf32>
    %326 = vector.shape_cast %325 : vector<1x18x18xf32> to vector<18x18xf32>
    %327 = vector.extract_strided_slice %326 {offsets = [0, 0], sizes = [16, 16], strides = [1, 1]} : vector<18x18xf32> to vector<16x16xf32>
    %c18 = arith.constant 18 : index
    %328 = memref.load %arg2[%c18] : memref<144xf32, #tpu.memory_space<smem>>
    %329 = vector.broadcast %328 : f32 to vector<16x16xf32>
    %330 = arith.mulf %329, %327 : vector<16x16xf32>
    %331 = arith.addf %312, %330 : vector<16x16xf32>
    %c54 = arith.constant 54 : index
    %332 = memref.load %arg2[%c54] : memref<144xf32, #tpu.memory_space<smem>>
    %333 = vector.broadcast %332 : f32 to vector<16x16xf32>
    %334 = arith.mulf %333, %327 : vector<16x16xf32>
    %335 = arith.addf %316, %334 : vector<16x16xf32>
    %c90 = arith.constant 90 : index
    %336 = memref.load %arg2[%c90] : memref<144xf32, #tpu.memory_space<smem>>
    %337 = vector.broadcast %336 : f32 to vector<16x16xf32>
    %338 = arith.mulf %337, %327 : vector<16x16xf32>
    %339 = arith.addf %320, %338 : vector<16x16xf32>
    %c126 = arith.constant 126 : index
    %340 = memref.load %arg2[%c126] : memref<144xf32, #tpu.memory_space<smem>>
    %341 = vector.broadcast %340 : f32 to vector<16x16xf32>
    %342 = arith.mulf %341, %327 : vector<16x16xf32>
    %343 = arith.addf %324, %342 : vector<16x16xf32>
    %344 = vector.extract_strided_slice %326 {offsets = [0, 1], sizes = [16, 16], strides = [1, 1]} : vector<18x18xf32> to vector<16x16xf32>
    %c19 = arith.constant 19 : index
    %345 = memref.load %arg2[%c19] : memref<144xf32, #tpu.memory_space<smem>>
    %346 = vector.broadcast %345 : f32 to vector<16x16xf32>
    %347 = arith.mulf %346, %344 : vector<16x16xf32>
    %348 = arith.addf %331, %347 : vector<16x16xf32>
    %c55 = arith.constant 55 : index
    %349 = memref.load %arg2[%c55] : memref<144xf32, #tpu.memory_space<smem>>
    %350 = vector.broadcast %349 : f32 to vector<16x16xf32>
    %351 = arith.mulf %350, %344 : vector<16x16xf32>
    %352 = arith.addf %335, %351 : vector<16x16xf32>
    %c91 = arith.constant 91 : index
    %353 = memref.load %arg2[%c91] : memref<144xf32, #tpu.memory_space<smem>>
    %354 = vector.broadcast %353 : f32 to vector<16x16xf32>
    %355 = arith.mulf %354, %344 : vector<16x16xf32>
    %356 = arith.addf %339, %355 : vector<16x16xf32>
    %c127 = arith.constant 127 : index
    %357 = memref.load %arg2[%c127] : memref<144xf32, #tpu.memory_space<smem>>
    %358 = vector.broadcast %357 : f32 to vector<16x16xf32>
    %359 = arith.mulf %358, %344 : vector<16x16xf32>
    %360 = arith.addf %343, %359 : vector<16x16xf32>
    %361 = vector.extract_strided_slice %326 {offsets = [0, 2], sizes = [16, 16], strides = [1, 1]} : vector<18x18xf32> to vector<16x16xf32>
    %c20 = arith.constant 20 : index
    %362 = memref.load %arg2[%c20] : memref<144xf32, #tpu.memory_space<smem>>
    %363 = vector.broadcast %362 : f32 to vector<16x16xf32>
    %364 = arith.mulf %363, %361 : vector<16x16xf32>
    %365 = arith.addf %348, %364 : vector<16x16xf32>
    %c56 = arith.constant 56 : index
    %366 = memref.load %arg2[%c56] : memref<144xf32, #tpu.memory_space<smem>>
    %367 = vector.broadcast %366 : f32 to vector<16x16xf32>
    %368 = arith.mulf %367, %361 : vector<16x16xf32>
    %369 = arith.addf %352, %368 : vector<16x16xf32>
    %c92 = arith.constant 92 : index
    %370 = memref.load %arg2[%c92] : memref<144xf32, #tpu.memory_space<smem>>
    %371 = vector.broadcast %370 : f32 to vector<16x16xf32>
    %372 = arith.mulf %371, %361 : vector<16x16xf32>
    %373 = arith.addf %356, %372 : vector<16x16xf32>
    %c128 = arith.constant 128 : index
    %374 = memref.load %arg2[%c128] : memref<144xf32, #tpu.memory_space<smem>>
    %375 = vector.broadcast %374 : f32 to vector<16x16xf32>
    %376 = arith.mulf %375, %361 : vector<16x16xf32>
    %377 = arith.addf %360, %376 : vector<16x16xf32>
    %378 = vector.extract_strided_slice %326 {offsets = [1, 0], sizes = [16, 16], strides = [1, 1]} : vector<18x18xf32> to vector<16x16xf32>
    %c21 = arith.constant 21 : index
    %379 = memref.load %arg2[%c21] : memref<144xf32, #tpu.memory_space<smem>>
    %380 = vector.broadcast %379 : f32 to vector<16x16xf32>
    %381 = arith.mulf %380, %378 : vector<16x16xf32>
    %382 = arith.addf %365, %381 : vector<16x16xf32>
    %c57 = arith.constant 57 : index
    %383 = memref.load %arg2[%c57] : memref<144xf32, #tpu.memory_space<smem>>
    %384 = vector.broadcast %383 : f32 to vector<16x16xf32>
    %385 = arith.mulf %384, %378 : vector<16x16xf32>
    %386 = arith.addf %369, %385 : vector<16x16xf32>
    %c93 = arith.constant 93 : index
    %387 = memref.load %arg2[%c93] : memref<144xf32, #tpu.memory_space<smem>>
    %388 = vector.broadcast %387 : f32 to vector<16x16xf32>
    %389 = arith.mulf %388, %378 : vector<16x16xf32>
    %390 = arith.addf %373, %389 : vector<16x16xf32>
    %c129 = arith.constant 129 : index
    %391 = memref.load %arg2[%c129] : memref<144xf32, #tpu.memory_space<smem>>
    %392 = vector.broadcast %391 : f32 to vector<16x16xf32>
    %393 = arith.mulf %392, %378 : vector<16x16xf32>
    %394 = arith.addf %377, %393 : vector<16x16xf32>
    %395 = vector.extract_strided_slice %326 {offsets = [1, 1], sizes = [16, 16], strides = [1, 1]} : vector<18x18xf32> to vector<16x16xf32>
    %c22 = arith.constant 22 : index
    %396 = memref.load %arg2[%c22] : memref<144xf32, #tpu.memory_space<smem>>
    %397 = vector.broadcast %396 : f32 to vector<16x16xf32>
    %398 = arith.mulf %397, %395 : vector<16x16xf32>
    %399 = arith.addf %382, %398 : vector<16x16xf32>
    %c58 = arith.constant 58 : index
    %400 = memref.load %arg2[%c58] : memref<144xf32, #tpu.memory_space<smem>>
    %401 = vector.broadcast %400 : f32 to vector<16x16xf32>
    %402 = arith.mulf %401, %395 : vector<16x16xf32>
    %403 = arith.addf %386, %402 : vector<16x16xf32>
    %c94 = arith.constant 94 : index
    %404 = memref.load %arg2[%c94] : memref<144xf32, #tpu.memory_space<smem>>
    %405 = vector.broadcast %404 : f32 to vector<16x16xf32>
    %406 = arith.mulf %405, %395 : vector<16x16xf32>
    %407 = arith.addf %390, %406 : vector<16x16xf32>
    %c130 = arith.constant 130 : index
    %408 = memref.load %arg2[%c130] : memref<144xf32, #tpu.memory_space<smem>>
    %409 = vector.broadcast %408 : f32 to vector<16x16xf32>
    %410 = arith.mulf %409, %395 : vector<16x16xf32>
    %411 = arith.addf %394, %410 : vector<16x16xf32>
    %412 = vector.extract_strided_slice %326 {offsets = [1, 2], sizes = [16, 16], strides = [1, 1]} : vector<18x18xf32> to vector<16x16xf32>
    %c23 = arith.constant 23 : index
    %413 = memref.load %arg2[%c23] : memref<144xf32, #tpu.memory_space<smem>>
    %414 = vector.broadcast %413 : f32 to vector<16x16xf32>
    %415 = arith.mulf %414, %412 : vector<16x16xf32>
    %416 = arith.addf %399, %415 : vector<16x16xf32>
    %c59 = arith.constant 59 : index
    %417 = memref.load %arg2[%c59] : memref<144xf32, #tpu.memory_space<smem>>
    %418 = vector.broadcast %417 : f32 to vector<16x16xf32>
    %419 = arith.mulf %418, %412 : vector<16x16xf32>
    %420 = arith.addf %403, %419 : vector<16x16xf32>
    %c95 = arith.constant 95 : index
    %421 = memref.load %arg2[%c95] : memref<144xf32, #tpu.memory_space<smem>>
    %422 = vector.broadcast %421 : f32 to vector<16x16xf32>
    %423 = arith.mulf %422, %412 : vector<16x16xf32>
    %424 = arith.addf %407, %423 : vector<16x16xf32>
    %c131 = arith.constant 131 : index
    %425 = memref.load %arg2[%c131] : memref<144xf32, #tpu.memory_space<smem>>
    %426 = vector.broadcast %425 : f32 to vector<16x16xf32>
    %427 = arith.mulf %426, %412 : vector<16x16xf32>
    %428 = arith.addf %411, %427 : vector<16x16xf32>
    %429 = vector.extract_strided_slice %326 {offsets = [2, 0], sizes = [16, 16], strides = [1, 1]} : vector<18x18xf32> to vector<16x16xf32>
    %c24 = arith.constant 24 : index
    %430 = memref.load %arg2[%c24] : memref<144xf32, #tpu.memory_space<smem>>
    %431 = vector.broadcast %430 : f32 to vector<16x16xf32>
    %432 = arith.mulf %431, %429 : vector<16x16xf32>
    %433 = arith.addf %416, %432 : vector<16x16xf32>
    %c60 = arith.constant 60 : index
    %434 = memref.load %arg2[%c60] : memref<144xf32, #tpu.memory_space<smem>>
    %435 = vector.broadcast %434 : f32 to vector<16x16xf32>
    %436 = arith.mulf %435, %429 : vector<16x16xf32>
    %437 = arith.addf %420, %436 : vector<16x16xf32>
    %c96 = arith.constant 96 : index
    %438 = memref.load %arg2[%c96] : memref<144xf32, #tpu.memory_space<smem>>
    %439 = vector.broadcast %438 : f32 to vector<16x16xf32>
    %440 = arith.mulf %439, %429 : vector<16x16xf32>
    %441 = arith.addf %424, %440 : vector<16x16xf32>
    %c132 = arith.constant 132 : index
    %442 = memref.load %arg2[%c132] : memref<144xf32, #tpu.memory_space<smem>>
    %443 = vector.broadcast %442 : f32 to vector<16x16xf32>
    %444 = arith.mulf %443, %429 : vector<16x16xf32>
    %445 = arith.addf %428, %444 : vector<16x16xf32>
    %446 = vector.extract_strided_slice %326 {offsets = [2, 1], sizes = [16, 16], strides = [1, 1]} : vector<18x18xf32> to vector<16x16xf32>
    %c25 = arith.constant 25 : index
    %447 = memref.load %arg2[%c25] : memref<144xf32, #tpu.memory_space<smem>>
    %448 = vector.broadcast %447 : f32 to vector<16x16xf32>
    %449 = arith.mulf %448, %446 : vector<16x16xf32>
    %450 = arith.addf %433, %449 : vector<16x16xf32>
    %c61 = arith.constant 61 : index
    %451 = memref.load %arg2[%c61] : memref<144xf32, #tpu.memory_space<smem>>
    %452 = vector.broadcast %451 : f32 to vector<16x16xf32>
    %453 = arith.mulf %452, %446 : vector<16x16xf32>
    %454 = arith.addf %437, %453 : vector<16x16xf32>
    %c97 = arith.constant 97 : index
    %455 = memref.load %arg2[%c97] : memref<144xf32, #tpu.memory_space<smem>>
    %456 = vector.broadcast %455 : f32 to vector<16x16xf32>
    %457 = arith.mulf %456, %446 : vector<16x16xf32>
    %458 = arith.addf %441, %457 : vector<16x16xf32>
    %c133 = arith.constant 133 : index
    %459 = memref.load %arg2[%c133] : memref<144xf32, #tpu.memory_space<smem>>
    %460 = vector.broadcast %459 : f32 to vector<16x16xf32>
    %461 = arith.mulf %460, %446 : vector<16x16xf32>
    %462 = arith.addf %445, %461 : vector<16x16xf32>
    %463 = vector.extract_strided_slice %326 {offsets = [2, 2], sizes = [16, 16], strides = [1, 1]} : vector<18x18xf32> to vector<16x16xf32>
    %c26 = arith.constant 26 : index
    %464 = memref.load %arg2[%c26] : memref<144xf32, #tpu.memory_space<smem>>
    %465 = vector.broadcast %464 : f32 to vector<16x16xf32>
    %466 = arith.mulf %465, %463 : vector<16x16xf32>
    %467 = arith.addf %450, %466 : vector<16x16xf32>
    %c62 = arith.constant 62 : index
    %468 = memref.load %arg2[%c62] : memref<144xf32, #tpu.memory_space<smem>>
    %469 = vector.broadcast %468 : f32 to vector<16x16xf32>
    %470 = arith.mulf %469, %463 : vector<16x16xf32>
    %471 = arith.addf %454, %470 : vector<16x16xf32>
    %c98 = arith.constant 98 : index
    %472 = memref.load %arg2[%c98] : memref<144xf32, #tpu.memory_space<smem>>
    %473 = vector.broadcast %472 : f32 to vector<16x16xf32>
    %474 = arith.mulf %473, %463 : vector<16x16xf32>
    %475 = arith.addf %458, %474 : vector<16x16xf32>
    %c134 = arith.constant 134 : index
    %476 = memref.load %arg2[%c134] : memref<144xf32, #tpu.memory_space<smem>>
    %477 = vector.broadcast %476 : f32 to vector<16x16xf32>
    %478 = arith.mulf %477, %463 : vector<16x16xf32>
    %479 = arith.addf %462, %478 : vector<16x16xf32>
    %c3_35 = arith.constant 3 : index
    %c0_36 = arith.constant 0 : index
    %c0_37 = arith.constant 0 : index
    %480 = vector.load %arg9[%c3_35, %c0_36, %c0_37] : memref<4x18x18xf32, #tpu.memory_space<vmem>>, vector<1x18x18xf32>
    %481 = vector.shape_cast %480 : vector<1x18x18xf32> to vector<18x18xf32>
    %482 = vector.extract_strided_slice %481 {offsets = [0, 0], sizes = [16, 16], strides = [1, 1]} : vector<18x18xf32> to vector<16x16xf32>
    %c27 = arith.constant 27 : index
    %483 = memref.load %arg2[%c27] : memref<144xf32, #tpu.memory_space<smem>>
    %484 = vector.broadcast %483 : f32 to vector<16x16xf32>
    %485 = arith.mulf %484, %482 : vector<16x16xf32>
    %486 = arith.addf %467, %485 : vector<16x16xf32>
    %c63 = arith.constant 63 : index
    %487 = memref.load %arg2[%c63] : memref<144xf32, #tpu.memory_space<smem>>
    %488 = vector.broadcast %487 : f32 to vector<16x16xf32>
    %489 = arith.mulf %488, %482 : vector<16x16xf32>
    %490 = arith.addf %471, %489 : vector<16x16xf32>
    %c99 = arith.constant 99 : index
    %491 = memref.load %arg2[%c99] : memref<144xf32, #tpu.memory_space<smem>>
    %492 = vector.broadcast %491 : f32 to vector<16x16xf32>
    %493 = arith.mulf %492, %482 : vector<16x16xf32>
    %494 = arith.addf %475, %493 : vector<16x16xf32>
    %c135 = arith.constant 135 : index
    %495 = memref.load %arg2[%c135] : memref<144xf32, #tpu.memory_space<smem>>
    %496 = vector.broadcast %495 : f32 to vector<16x16xf32>
    %497 = arith.mulf %496, %482 : vector<16x16xf32>
    %498 = arith.addf %479, %497 : vector<16x16xf32>
    %499 = vector.extract_strided_slice %481 {offsets = [0, 1], sizes = [16, 16], strides = [1, 1]} : vector<18x18xf32> to vector<16x16xf32>
    %c28 = arith.constant 28 : index
    %500 = memref.load %arg2[%c28] : memref<144xf32, #tpu.memory_space<smem>>
    %501 = vector.broadcast %500 : f32 to vector<16x16xf32>
    %502 = arith.mulf %501, %499 : vector<16x16xf32>
    %503 = arith.addf %486, %502 : vector<16x16xf32>
    %c64 = arith.constant 64 : index
    %504 = memref.load %arg2[%c64] : memref<144xf32, #tpu.memory_space<smem>>
    %505 = vector.broadcast %504 : f32 to vector<16x16xf32>
    %506 = arith.mulf %505, %499 : vector<16x16xf32>
    %507 = arith.addf %490, %506 : vector<16x16xf32>
    %c100 = arith.constant 100 : index
    %508 = memref.load %arg2[%c100] : memref<144xf32, #tpu.memory_space<smem>>
    %509 = vector.broadcast %508 : f32 to vector<16x16xf32>
    %510 = arith.mulf %509, %499 : vector<16x16xf32>
    %511 = arith.addf %494, %510 : vector<16x16xf32>
    %c136 = arith.constant 136 : index
    %512 = memref.load %arg2[%c136] : memref<144xf32, #tpu.memory_space<smem>>
    %513 = vector.broadcast %512 : f32 to vector<16x16xf32>
    %514 = arith.mulf %513, %499 : vector<16x16xf32>
    %515 = arith.addf %498, %514 : vector<16x16xf32>
    %516 = vector.extract_strided_slice %481 {offsets = [0, 2], sizes = [16, 16], strides = [1, 1]} : vector<18x18xf32> to vector<16x16xf32>
    %c29 = arith.constant 29 : index
    %517 = memref.load %arg2[%c29] : memref<144xf32, #tpu.memory_space<smem>>
    %518 = vector.broadcast %517 : f32 to vector<16x16xf32>
    %519 = arith.mulf %518, %516 : vector<16x16xf32>
    %520 = arith.addf %503, %519 : vector<16x16xf32>
    %c65 = arith.constant 65 : index
    %521 = memref.load %arg2[%c65] : memref<144xf32, #tpu.memory_space<smem>>
    %522 = vector.broadcast %521 : f32 to vector<16x16xf32>
    %523 = arith.mulf %522, %516 : vector<16x16xf32>
    %524 = arith.addf %507, %523 : vector<16x16xf32>
    %c101 = arith.constant 101 : index
    %525 = memref.load %arg2[%c101] : memref<144xf32, #tpu.memory_space<smem>>
    %526 = vector.broadcast %525 : f32 to vector<16x16xf32>
    %527 = arith.mulf %526, %516 : vector<16x16xf32>
    %528 = arith.addf %511, %527 : vector<16x16xf32>
    %c137 = arith.constant 137 : index
    %529 = memref.load %arg2[%c137] : memref<144xf32, #tpu.memory_space<smem>>
    %530 = vector.broadcast %529 : f32 to vector<16x16xf32>
    %531 = arith.mulf %530, %516 : vector<16x16xf32>
    %532 = arith.addf %515, %531 : vector<16x16xf32>
    %533 = vector.extract_strided_slice %481 {offsets = [1, 0], sizes = [16, 16], strides = [1, 1]} : vector<18x18xf32> to vector<16x16xf32>
    %c30 = arith.constant 30 : index
    %534 = memref.load %arg2[%c30] : memref<144xf32, #tpu.memory_space<smem>>
    %535 = vector.broadcast %534 : f32 to vector<16x16xf32>
    %536 = arith.mulf %535, %533 : vector<16x16xf32>
    %537 = arith.addf %520, %536 : vector<16x16xf32>
    %c66 = arith.constant 66 : index
    %538 = memref.load %arg2[%c66] : memref<144xf32, #tpu.memory_space<smem>>
    %539 = vector.broadcast %538 : f32 to vector<16x16xf32>
    %540 = arith.mulf %539, %533 : vector<16x16xf32>
    %541 = arith.addf %524, %540 : vector<16x16xf32>
    %c102 = arith.constant 102 : index
    %542 = memref.load %arg2[%c102] : memref<144xf32, #tpu.memory_space<smem>>
    %543 = vector.broadcast %542 : f32 to vector<16x16xf32>
    %544 = arith.mulf %543, %533 : vector<16x16xf32>
    %545 = arith.addf %528, %544 : vector<16x16xf32>
    %c138 = arith.constant 138 : index
    %546 = memref.load %arg2[%c138] : memref<144xf32, #tpu.memory_space<smem>>
    %547 = vector.broadcast %546 : f32 to vector<16x16xf32>
    %548 = arith.mulf %547, %533 : vector<16x16xf32>
    %549 = arith.addf %532, %548 : vector<16x16xf32>
    %550 = vector.extract_strided_slice %481 {offsets = [1, 1], sizes = [16, 16], strides = [1, 1]} : vector<18x18xf32> to vector<16x16xf32>
    %c31 = arith.constant 31 : index
    %551 = memref.load %arg2[%c31] : memref<144xf32, #tpu.memory_space<smem>>
    %552 = vector.broadcast %551 : f32 to vector<16x16xf32>
    %553 = arith.mulf %552, %550 : vector<16x16xf32>
    %554 = arith.addf %537, %553 : vector<16x16xf32>
    %c67 = arith.constant 67 : index
    %555 = memref.load %arg2[%c67] : memref<144xf32, #tpu.memory_space<smem>>
    %556 = vector.broadcast %555 : f32 to vector<16x16xf32>
    %557 = arith.mulf %556, %550 : vector<16x16xf32>
    %558 = arith.addf %541, %557 : vector<16x16xf32>
    %c103 = arith.constant 103 : index
    %559 = memref.load %arg2[%c103] : memref<144xf32, #tpu.memory_space<smem>>
    %560 = vector.broadcast %559 : f32 to vector<16x16xf32>
    %561 = arith.mulf %560, %550 : vector<16x16xf32>
    %562 = arith.addf %545, %561 : vector<16x16xf32>
    %c139 = arith.constant 139 : index
    %563 = memref.load %arg2[%c139] : memref<144xf32, #tpu.memory_space<smem>>
    %564 = vector.broadcast %563 : f32 to vector<16x16xf32>
    %565 = arith.mulf %564, %550 : vector<16x16xf32>
    %566 = arith.addf %549, %565 : vector<16x16xf32>
    %567 = vector.extract_strided_slice %481 {offsets = [1, 2], sizes = [16, 16], strides = [1, 1]} : vector<18x18xf32> to vector<16x16xf32>
    %c32 = arith.constant 32 : index
    %568 = memref.load %arg2[%c32] : memref<144xf32, #tpu.memory_space<smem>>
    %569 = vector.broadcast %568 : f32 to vector<16x16xf32>
    %570 = arith.mulf %569, %567 : vector<16x16xf32>
    %571 = arith.addf %554, %570 : vector<16x16xf32>
    %c68 = arith.constant 68 : index
    %572 = memref.load %arg2[%c68] : memref<144xf32, #tpu.memory_space<smem>>
    %573 = vector.broadcast %572 : f32 to vector<16x16xf32>
    %574 = arith.mulf %573, %567 : vector<16x16xf32>
    %575 = arith.addf %558, %574 : vector<16x16xf32>
    %c104 = arith.constant 104 : index
    %576 = memref.load %arg2[%c104] : memref<144xf32, #tpu.memory_space<smem>>
    %577 = vector.broadcast %576 : f32 to vector<16x16xf32>
    %578 = arith.mulf %577, %567 : vector<16x16xf32>
    %579 = arith.addf %562, %578 : vector<16x16xf32>
    %c140 = arith.constant 140 : index
    %580 = memref.load %arg2[%c140] : memref<144xf32, #tpu.memory_space<smem>>
    %581 = vector.broadcast %580 : f32 to vector<16x16xf32>
    %582 = arith.mulf %581, %567 : vector<16x16xf32>
    %583 = arith.addf %566, %582 : vector<16x16xf32>
    %584 = vector.extract_strided_slice %481 {offsets = [2, 0], sizes = [16, 16], strides = [1, 1]} : vector<18x18xf32> to vector<16x16xf32>
    %c33 = arith.constant 33 : index
    %585 = memref.load %arg2[%c33] : memref<144xf32, #tpu.memory_space<smem>>
    %586 = vector.broadcast %585 : f32 to vector<16x16xf32>
    %587 = arith.mulf %586, %584 : vector<16x16xf32>
    %588 = arith.addf %571, %587 : vector<16x16xf32>
    %c69 = arith.constant 69 : index
    %589 = memref.load %arg2[%c69] : memref<144xf32, #tpu.memory_space<smem>>
    %590 = vector.broadcast %589 : f32 to vector<16x16xf32>
    %591 = arith.mulf %590, %584 : vector<16x16xf32>
    %592 = arith.addf %575, %591 : vector<16x16xf32>
    %c105 = arith.constant 105 : index
    %593 = memref.load %arg2[%c105] : memref<144xf32, #tpu.memory_space<smem>>
    %594 = vector.broadcast %593 : f32 to vector<16x16xf32>
    %595 = arith.mulf %594, %584 : vector<16x16xf32>
    %596 = arith.addf %579, %595 : vector<16x16xf32>
    %c141 = arith.constant 141 : index
    %597 = memref.load %arg2[%c141] : memref<144xf32, #tpu.memory_space<smem>>
    %598 = vector.broadcast %597 : f32 to vector<16x16xf32>
    %599 = arith.mulf %598, %584 : vector<16x16xf32>
    %600 = arith.addf %583, %599 : vector<16x16xf32>
    %601 = vector.extract_strided_slice %481 {offsets = [2, 1], sizes = [16, 16], strides = [1, 1]} : vector<18x18xf32> to vector<16x16xf32>
    %c34 = arith.constant 34 : index
    %602 = memref.load %arg2[%c34] : memref<144xf32, #tpu.memory_space<smem>>
    %603 = vector.broadcast %602 : f32 to vector<16x16xf32>
    %604 = arith.mulf %603, %601 : vector<16x16xf32>
    %605 = arith.addf %588, %604 : vector<16x16xf32>
    %c70 = arith.constant 70 : index
    %606 = memref.load %arg2[%c70] : memref<144xf32, #tpu.memory_space<smem>>
    %607 = vector.broadcast %606 : f32 to vector<16x16xf32>
    %608 = arith.mulf %607, %601 : vector<16x16xf32>
    %609 = arith.addf %592, %608 : vector<16x16xf32>
    %c106 = arith.constant 106 : index
    %610 = memref.load %arg2[%c106] : memref<144xf32, #tpu.memory_space<smem>>
    %611 = vector.broadcast %610 : f32 to vector<16x16xf32>
    %612 = arith.mulf %611, %601 : vector<16x16xf32>
    %613 = arith.addf %596, %612 : vector<16x16xf32>
    %c142 = arith.constant 142 : index
    %614 = memref.load %arg2[%c142] : memref<144xf32, #tpu.memory_space<smem>>
    %615 = vector.broadcast %614 : f32 to vector<16x16xf32>
    %616 = arith.mulf %615, %601 : vector<16x16xf32>
    %617 = arith.addf %600, %616 : vector<16x16xf32>
    %618 = vector.extract_strided_slice %481 {offsets = [2, 2], sizes = [16, 16], strides = [1, 1]} : vector<18x18xf32> to vector<16x16xf32>
    %c35 = arith.constant 35 : index
    %619 = memref.load %arg2[%c35] : memref<144xf32, #tpu.memory_space<smem>>
    %620 = vector.broadcast %619 : f32 to vector<16x16xf32>
    %621 = arith.mulf %620, %618 : vector<16x16xf32>
    %622 = arith.addf %605, %621 : vector<16x16xf32>
    %c71 = arith.constant 71 : index
    %623 = memref.load %arg2[%c71] : memref<144xf32, #tpu.memory_space<smem>>
    %624 = vector.broadcast %623 : f32 to vector<16x16xf32>
    %625 = arith.mulf %624, %618 : vector<16x16xf32>
    %626 = arith.addf %609, %625 : vector<16x16xf32>
    %c107 = arith.constant 107 : index
    %627 = memref.load %arg2[%c107] : memref<144xf32, #tpu.memory_space<smem>>
    %628 = vector.broadcast %627 : f32 to vector<16x16xf32>
    %629 = arith.mulf %628, %618 : vector<16x16xf32>
    %630 = arith.addf %613, %629 : vector<16x16xf32>
    %c143 = arith.constant 143 : index
    %631 = memref.load %arg2[%c143] : memref<144xf32, #tpu.memory_space<smem>>
    %632 = vector.broadcast %631 : f32 to vector<16x16xf32>
    %633 = arith.mulf %632, %618 : vector<16x16xf32>
    %634 = arith.addf %617, %633 : vector<16x16xf32>
    %c0_38 = arith.constant 0 : index
    %635 = memref.load %arg3[%c0_38] : memref<4xf32, #tpu.memory_space<smem>>
    %636 = vector.broadcast %635 : f32 to vector<16x16xf32>
    %637 = arith.addf %622, %636 : vector<16x16xf32>
    %cst_39 = arith.constant 0.000000e+00 : f32
    %638 = vector.broadcast %cst_39 : f32 to vector<16x16xf32>
    %639 = arith.maximumf %637, %638 : vector<16x16xf32>
    %c1_40 = arith.constant 1 : index
    %640 = memref.load %arg3[%c1_40] : memref<4xf32, #tpu.memory_space<smem>>
    %641 = vector.broadcast %640 : f32 to vector<16x16xf32>
    %642 = arith.addf %626, %641 : vector<16x16xf32>
    %cst_41 = arith.constant 0.000000e+00 : f32
    %643 = vector.broadcast %cst_41 : f32 to vector<16x16xf32>
    %644 = arith.maximumf %642, %643 : vector<16x16xf32>
    %c2_42 = arith.constant 2 : index
    %645 = memref.load %arg3[%c2_42] : memref<4xf32, #tpu.memory_space<smem>>
    %646 = vector.broadcast %645 : f32 to vector<16x16xf32>
    %647 = arith.addf %630, %646 : vector<16x16xf32>
    %cst_43 = arith.constant 0.000000e+00 : f32
    %648 = vector.broadcast %cst_43 : f32 to vector<16x16xf32>
    %649 = arith.maximumf %647, %648 : vector<16x16xf32>
    %c3_44 = arith.constant 3 : index
    %650 = memref.load %arg3[%c3_44] : memref<4xf32, #tpu.memory_space<smem>>
    %651 = vector.broadcast %650 : f32 to vector<16x16xf32>
    %652 = arith.addf %634, %651 : vector<16x16xf32>
    %cst_45 = arith.constant 0.000000e+00 : f32
    %653 = vector.broadcast %cst_45 : f32 to vector<16x16xf32>
    %654 = arith.maximumf %652, %653 : vector<16x16xf32>
    %655 = vector.shape_cast %639 : vector<16x16xf32> to vector<1x16x16xf32>
    %c0_46 = arith.constant 0 : index
    %c1_47 = arith.constant 1 : index
    %c1_48 = arith.constant 1 : index
    %656 = vector.load %arg9[%c0_46, %c1_47, %c1_48] : memref<4x18x18xf32, #tpu.memory_space<vmem>>, vector<1x16x16xf32>
    tpu.vector_store %arg9[%c0_46, %c1_47, %c1_48], %655 {strides = array<i32>} : memref<4x18x18xf32, #tpu.memory_space<vmem>>, vector<1x16x16xf32>,
    %657 = vector.shape_cast %644 : vector<16x16xf32> to vector<1x16x16xf32>
    %c1_49 = arith.constant 1 : index
    %c1_50 = arith.constant 1 : index
    %c1_51 = arith.constant 1 : index
    %658 = vector.load %arg9[%c1_49, %c1_50, %c1_51] : memref<4x18x18xf32, #tpu.memory_space<vmem>>, vector<1x16x16xf32>
    tpu.vector_store %arg9[%c1_49, %c1_50, %c1_51], %657 {strides = array<i32>} : memref<4x18x18xf32, #tpu.memory_space<vmem>>, vector<1x16x16xf32>,
    %659 = vector.shape_cast %649 : vector<16x16xf32> to vector<1x16x16xf32>
    %c2_52 = arith.constant 2 : index
    %c1_53 = arith.constant 1 : index
    %c1_54 = arith.constant 1 : index
    %660 = vector.load %arg9[%c2_52, %c1_53, %c1_54] : memref<4x18x18xf32, #tpu.memory_space<vmem>>, vector<1x16x16xf32>
    tpu.vector_store %arg9[%c2_52, %c1_53, %c1_54], %659 {strides = array<i32>} : memref<4x18x18xf32, #tpu.memory_space<vmem>>, vector<1x16x16xf32>,
    %661 = vector.shape_cast %654 : vector<16x16xf32> to vector<1x16x16xf32>
    %c3_55 = arith.constant 3 : index
    %c1_56 = arith.constant 1 : index
    %c1_57 = arith.constant 1 : index
    %662 = vector.load %arg9[%c3_55, %c1_56, %c1_57] : memref<4x18x18xf32, #tpu.memory_space<vmem>>, vector<1x16x16xf32>
    tpu.vector_store %arg9[%c3_55, %c1_56, %c1_57], %661 {strides = array<i32>} : memref<4x18x18xf32, #tpu.memory_space<vmem>>, vector<1x16x16xf32>,
    %cst_58 = arith.constant 0.000000e+00 : f32
    %663 = vector.broadcast %cst_58 : f32 to vector<16x16xf32>
    %cst_59 = arith.constant 0.000000e+00 : f32
    %664 = vector.broadcast %cst_59 : f32 to vector<16x16xf32>
    %cst_60 = arith.constant 0.000000e+00 : f32
    %665 = vector.broadcast %cst_60 : f32 to vector<16x16xf32>
    %cst_61 = arith.constant 0.000000e+00 : f32
    %666 = vector.broadcast %cst_61 : f32 to vector<16x16xf32>
    %c0_62 = arith.constant 0 : index
    %c0_63 = arith.constant 0 : index
    %c0_64 = arith.constant 0 : index
    %667 = vector.load %arg9[%c0_62, %c0_63, %c0_64] : memref<4x18x18xf32, #tpu.memory_space<vmem>>, vector<1x18x18xf32>
    %668 = vector.shape_cast %667 : vector<1x18x18xf32> to vector<18x18xf32>
    %669 = vector.extract_strided_slice %668 {offsets = [0, 0], sizes = [16, 16], strides = [1, 1]} : vector<18x18xf32> to vector<16x16xf32>
    %c0_65 = arith.constant 0 : index
    %670 = memref.load %arg4[%c0_65] : memref<144xf32, #tpu.memory_space<smem>>
    %671 = vector.broadcast %670 : f32 to vector<16x16xf32>
    %672 = arith.mulf %671, %669 : vector<16x16xf32>
    %673 = arith.addf %663, %672 : vector<16x16xf32>
    %c36_66 = arith.constant 36 : index
    %674 = memref.load %arg4[%c36_66] : memref<144xf32, #tpu.memory_space<smem>>
    %675 = vector.broadcast %674 : f32 to vector<16x16xf32>
    %676 = arith.mulf %675, %669 : vector<16x16xf32>
    %677 = arith.addf %664, %676 : vector<16x16xf32>
    %c72_67 = arith.constant 72 : index
    %678 = memref.load %arg4[%c72_67] : memref<144xf32, #tpu.memory_space<smem>>
    %679 = vector.broadcast %678 : f32 to vector<16x16xf32>
    %680 = arith.mulf %679, %669 : vector<16x16xf32>
    %681 = arith.addf %665, %680 : vector<16x16xf32>
    %c108_68 = arith.constant 108 : index
    %682 = memref.load %arg4[%c108_68] : memref<144xf32, #tpu.memory_space<smem>>
    %683 = vector.broadcast %682 : f32 to vector<16x16xf32>
    %684 = arith.mulf %683, %669 : vector<16x16xf32>
    %685 = arith.addf %666, %684 : vector<16x16xf32>
    %686 = vector.extract_strided_slice %668 {offsets = [0, 1], sizes = [16, 16], strides = [1, 1]} : vector<18x18xf32> to vector<16x16xf32>
    %c1_69 = arith.constant 1 : index
    %687 = memref.load %arg4[%c1_69] : memref<144xf32, #tpu.memory_space<smem>>
    %688 = vector.broadcast %687 : f32 to vector<16x16xf32>
    %689 = arith.mulf %688, %686 : vector<16x16xf32>
    %690 = arith.addf %673, %689 : vector<16x16xf32>
    %c37_70 = arith.constant 37 : index
    %691 = memref.load %arg4[%c37_70] : memref<144xf32, #tpu.memory_space<smem>>
    %692 = vector.broadcast %691 : f32 to vector<16x16xf32>
    %693 = arith.mulf %692, %686 : vector<16x16xf32>
    %694 = arith.addf %677, %693 : vector<16x16xf32>
    %c73_71 = arith.constant 73 : index
    %695 = memref.load %arg4[%c73_71] : memref<144xf32, #tpu.memory_space<smem>>
    %696 = vector.broadcast %695 : f32 to vector<16x16xf32>
    %697 = arith.mulf %696, %686 : vector<16x16xf32>
    %698 = arith.addf %681, %697 : vector<16x16xf32>
    %c109_72 = arith.constant 109 : index
    %699 = memref.load %arg4[%c109_72] : memref<144xf32, #tpu.memory_space<smem>>
    %700 = vector.broadcast %699 : f32 to vector<16x16xf32>
    %701 = arith.mulf %700, %686 : vector<16x16xf32>
    %702 = arith.addf %685, %701 : vector<16x16xf32>
    %703 = vector.extract_strided_slice %668 {offsets = [0, 2], sizes = [16, 16], strides = [1, 1]} : vector<18x18xf32> to vector<16x16xf32>
    %c2_73 = arith.constant 2 : index
    %704 = memref.load %arg4[%c2_73] : memref<144xf32, #tpu.memory_space<smem>>
    %705 = vector.broadcast %704 : f32 to vector<16x16xf32>
    %706 = arith.mulf %705, %703 : vector<16x16xf32>
    %707 = arith.addf %690, %706 : vector<16x16xf32>
    %c38_74 = arith.constant 38 : index
    %708 = memref.load %arg4[%c38_74] : memref<144xf32, #tpu.memory_space<smem>>
    %709 = vector.broadcast %708 : f32 to vector<16x16xf32>
    %710 = arith.mulf %709, %703 : vector<16x16xf32>
    %711 = arith.addf %694, %710 : vector<16x16xf32>
    %c74_75 = arith.constant 74 : index
    %712 = memref.load %arg4[%c74_75] : memref<144xf32, #tpu.memory_space<smem>>
    %713 = vector.broadcast %712 : f32 to vector<16x16xf32>
    %714 = arith.mulf %713, %703 : vector<16x16xf32>
    %715 = arith.addf %698, %714 : vector<16x16xf32>
    %c110_76 = arith.constant 110 : index
    %716 = memref.load %arg4[%c110_76] : memref<144xf32, #tpu.memory_space<smem>>
    %717 = vector.broadcast %716 : f32 to vector<16x16xf32>
    %718 = arith.mulf %717, %703 : vector<16x16xf32>
    %719 = arith.addf %702, %718 : vector<16x16xf32>
    %720 = vector.extract_strided_slice %668 {offsets = [1, 0], sizes = [16, 16], strides = [1, 1]} : vector<18x18xf32> to vector<16x16xf32>
    %c3_77 = arith.constant 3 : index
    %721 = memref.load %arg4[%c3_77] : memref<144xf32, #tpu.memory_space<smem>>
    %722 = vector.broadcast %721 : f32 to vector<16x16xf32>
    %723 = arith.mulf %722, %720 : vector<16x16xf32>
    %724 = arith.addf %707, %723 : vector<16x16xf32>
    %c39_78 = arith.constant 39 : index
    %725 = memref.load %arg4[%c39_78] : memref<144xf32, #tpu.memory_space<smem>>
    %726 = vector.broadcast %725 : f32 to vector<16x16xf32>
    %727 = arith.mulf %726, %720 : vector<16x16xf32>
    %728 = arith.addf %711, %727 : vector<16x16xf32>
    %c75_79 = arith.constant 75 : index
    %729 = memref.load %arg4[%c75_79] : memref<144xf32, #tpu.memory_space<smem>>
    %730 = vector.broadcast %729 : f32 to vector<16x16xf32>
    %731 = arith.mulf %730, %720 : vector<16x16xf32>
    %732 = arith.addf %715, %731 : vector<16x16xf32>
    %c111_80 = arith.constant 111 : index
    %733 = memref.load %arg4[%c111_80] : memref<144xf32, #tpu.memory_space<smem>>
    %734 = vector.broadcast %733 : f32 to vector<16x16xf32>
    %735 = arith.mulf %734, %720 : vector<16x16xf32>
    %736 = arith.addf %719, %735 : vector<16x16xf32>
    %737 = vector.extract_strided_slice %668 {offsets = [1, 1], sizes = [16, 16], strides = [1, 1]} : vector<18x18xf32> to vector<16x16xf32>
    %c4_81 = arith.constant 4 : index
    %738 = memref.load %arg4[%c4_81] : memref<144xf32, #tpu.memory_space<smem>>
    %739 = vector.broadcast %738 : f32 to vector<16x16xf32>
    %740 = arith.mulf %739, %737 : vector<16x16xf32>
    %741 = arith.addf %724, %740 : vector<16x16xf32>
    %c40_82 = arith.constant 40 : index
    %742 = memref.load %arg4[%c40_82] : memref<144xf32, #tpu.memory_space<smem>>
    %743 = vector.broadcast %742 : f32 to vector<16x16xf32>
    %744 = arith.mulf %743, %737 : vector<16x16xf32>
    %745 = arith.addf %728, %744 : vector<16x16xf32>
    %c76_83 = arith.constant 76 : index
    %746 = memref.load %arg4[%c76_83] : memref<144xf32, #tpu.memory_space<smem>>
    %747 = vector.broadcast %746 : f32 to vector<16x16xf32>
    %748 = arith.mulf %747, %737 : vector<16x16xf32>
    %749 = arith.addf %732, %748 : vector<16x16xf32>
    %c112_84 = arith.constant 112 : index
    %750 = memref.load %arg4[%c112_84] : memref<144xf32, #tpu.memory_space<smem>>
    %751 = vector.broadcast %750 : f32 to vector<16x16xf32>
    %752 = arith.mulf %751, %737 : vector<16x16xf32>
    %753 = arith.addf %736, %752 : vector<16x16xf32>
    %754 = vector.extract_strided_slice %668 {offsets = [1, 2], sizes = [16, 16], strides = [1, 1]} : vector<18x18xf32> to vector<16x16xf32>
    %c5_85 = arith.constant 5 : index
    %755 = memref.load %arg4[%c5_85] : memref<144xf32, #tpu.memory_space<smem>>
    %756 = vector.broadcast %755 : f32 to vector<16x16xf32>
    %757 = arith.mulf %756, %754 : vector<16x16xf32>
    %758 = arith.addf %741, %757 : vector<16x16xf32>
    %c41_86 = arith.constant 41 : index
    %759 = memref.load %arg4[%c41_86] : memref<144xf32, #tpu.memory_space<smem>>
    %760 = vector.broadcast %759 : f32 to vector<16x16xf32>
    %761 = arith.mulf %760, %754 : vector<16x16xf32>
    %762 = arith.addf %745, %761 : vector<16x16xf32>
    %c77_87 = arith.constant 77 : index
    %763 = memref.load %arg4[%c77_87] : memref<144xf32, #tpu.memory_space<smem>>
    %764 = vector.broadcast %763 : f32 to vector<16x16xf32>
    %765 = arith.mulf %764, %754 : vector<16x16xf32>
    %766 = arith.addf %749, %765 : vector<16x16xf32>
    %c113_88 = arith.constant 113 : index
    %767 = memref.load %arg4[%c113_88] : memref<144xf32, #tpu.memory_space<smem>>
    %768 = vector.broadcast %767 : f32 to vector<16x16xf32>
    %769 = arith.mulf %768, %754 : vector<16x16xf32>
    %770 = arith.addf %753, %769 : vector<16x16xf32>
    %771 = vector.extract_strided_slice %668 {offsets = [2, 0], sizes = [16, 16], strides = [1, 1]} : vector<18x18xf32> to vector<16x16xf32>
    %c6_89 = arith.constant 6 : index
    %772 = memref.load %arg4[%c6_89] : memref<144xf32, #tpu.memory_space<smem>>
    %773 = vector.broadcast %772 : f32 to vector<16x16xf32>
    %774 = arith.mulf %773, %771 : vector<16x16xf32>
    %775 = arith.addf %758, %774 : vector<16x16xf32>
    %c42_90 = arith.constant 42 : index
    %776 = memref.load %arg4[%c42_90] : memref<144xf32, #tpu.memory_space<smem>>
    %777 = vector.broadcast %776 : f32 to vector<16x16xf32>
    %778 = arith.mulf %777, %771 : vector<16x16xf32>
    %779 = arith.addf %762, %778 : vector<16x16xf32>
    %c78_91 = arith.constant 78 : index
    %780 = memref.load %arg4[%c78_91] : memref<144xf32, #tpu.memory_space<smem>>
    %781 = vector.broadcast %780 : f32 to vector<16x16xf32>
    %782 = arith.mulf %781, %771 : vector<16x16xf32>
    %783 = arith.addf %766, %782 : vector<16x16xf32>
    %c114_92 = arith.constant 114 : index
    %784 = memref.load %arg4[%c114_92] : memref<144xf32, #tpu.memory_space<smem>>
    %785 = vector.broadcast %784 : f32 to vector<16x16xf32>
    %786 = arith.mulf %785, %771 : vector<16x16xf32>
    %787 = arith.addf %770, %786 : vector<16x16xf32>
    %788 = vector.extract_strided_slice %668 {offsets = [2, 1], sizes = [16, 16], strides = [1, 1]} : vector<18x18xf32> to vector<16x16xf32>
    %c7_93 = arith.constant 7 : index
    %789 = memref.load %arg4[%c7_93] : memref<144xf32, #tpu.memory_space<smem>>
    %790 = vector.broadcast %789 : f32 to vector<16x16xf32>
    %791 = arith.mulf %790, %788 : vector<16x16xf32>
    %792 = arith.addf %775, %791 : vector<16x16xf32>
    %c43_94 = arith.constant 43 : index
    %793 = memref.load %arg4[%c43_94] : memref<144xf32, #tpu.memory_space<smem>>
    %794 = vector.broadcast %793 : f32 to vector<16x16xf32>
    %795 = arith.mulf %794, %788 : vector<16x16xf32>
    %796 = arith.addf %779, %795 : vector<16x16xf32>
    %c79_95 = arith.constant 79 : index
    %797 = memref.load %arg4[%c79_95] : memref<144xf32, #tpu.memory_space<smem>>
    %798 = vector.broadcast %797 : f32 to vector<16x16xf32>
    %799 = arith.mulf %798, %788 : vector<16x16xf32>
    %800 = arith.addf %783, %799 : vector<16x16xf32>
    %c115_96 = arith.constant 115 : index
    %801 = memref.load %arg4[%c115_96] : memref<144xf32, #tpu.memory_space<smem>>
    %802 = vector.broadcast %801 : f32 to vector<16x16xf32>
    %803 = arith.mulf %802, %788 : vector<16x16xf32>
    %804 = arith.addf %787, %803 : vector<16x16xf32>
    %805 = vector.extract_strided_slice %668 {offsets = [2, 2], sizes = [16, 16], strides = [1, 1]} : vector<18x18xf32> to vector<16x16xf32>
    %c8_97 = arith.constant 8 : index
    %806 = memref.load %arg4[%c8_97] : memref<144xf32, #tpu.memory_space<smem>>
    %807 = vector.broadcast %806 : f32 to vector<16x16xf32>
    %808 = arith.mulf %807, %805 : vector<16x16xf32>
    %809 = arith.addf %792, %808 : vector<16x16xf32>
    %c44_98 = arith.constant 44 : index
    %810 = memref.load %arg4[%c44_98] : memref<144xf32, #tpu.memory_space<smem>>
    %811 = vector.broadcast %810 : f32 to vector<16x16xf32>
    %812 = arith.mulf %811, %805 : vector<16x16xf32>
    %813 = arith.addf %796, %812 : vector<16x16xf32>
    %c80_99 = arith.constant 80 : index
    %814 = memref.load %arg4[%c80_99] : memref<144xf32, #tpu.memory_space<smem>>
    %815 = vector.broadcast %814 : f32 to vector<16x16xf32>
    %816 = arith.mulf %815, %805 : vector<16x16xf32>
    %817 = arith.addf %800, %816 : vector<16x16xf32>
    %c116_100 = arith.constant 116 : index
    %818 = memref.load %arg4[%c116_100] : memref<144xf32, #tpu.memory_space<smem>>
    %819 = vector.broadcast %818 : f32 to vector<16x16xf32>
    %820 = arith.mulf %819, %805 : vector<16x16xf32>
    %821 = arith.addf %804, %820 : vector<16x16xf32>
    %c1_101 = arith.constant 1 : index
    %c0_102 = arith.constant 0 : index
    %c0_103 = arith.constant 0 : index
    %822 = vector.load %arg9[%c1_101, %c0_102, %c0_103] : memref<4x18x18xf32, #tpu.memory_space<vmem>>, vector<1x18x18xf32>
    %823 = vector.shape_cast %822 : vector<1x18x18xf32> to vector<18x18xf32>
    %824 = vector.extract_strided_slice %823 {offsets = [0, 0], sizes = [16, 16], strides = [1, 1]} : vector<18x18xf32> to vector<16x16xf32>
    %c9_104 = arith.constant 9 : index
    %825 = memref.load %arg4[%c9_104] : memref<144xf32, #tpu.memory_space<smem>>
    %826 = vector.broadcast %825 : f32 to vector<16x16xf32>
    %827 = arith.mulf %826, %824 : vector<16x16xf32>
    %828 = arith.addf %809, %827 : vector<16x16xf32>
    %c45_105 = arith.constant 45 : index
    %829 = memref.load %arg4[%c45_105] : memref<144xf32, #tpu.memory_space<smem>>
    %830 = vector.broadcast %829 : f32 to vector<16x16xf32>
    %831 = arith.mulf %830, %824 : vector<16x16xf32>
    %832 = arith.addf %813, %831 : vector<16x16xf32>
    %c81_106 = arith.constant 81 : index
    %833 = memref.load %arg4[%c81_106] : memref<144xf32, #tpu.memory_space<smem>>
    %834 = vector.broadcast %833 : f32 to vector<16x16xf32>
    %835 = arith.mulf %834, %824 : vector<16x16xf32>
    %836 = arith.addf %817, %835 : vector<16x16xf32>
    %c117_107 = arith.constant 117 : index
    %837 = memref.load %arg4[%c117_107] : memref<144xf32, #tpu.memory_space<smem>>
    %838 = vector.broadcast %837 : f32 to vector<16x16xf32>
    %839 = arith.mulf %838, %824 : vector<16x16xf32>
    %840 = arith.addf %821, %839 : vector<16x16xf32>
    %841 = vector.extract_strided_slice %823 {offsets = [0, 1], sizes = [16, 16], strides = [1, 1]} : vector<18x18xf32> to vector<16x16xf32>
    %c10_108 = arith.constant 10 : index
    %842 = memref.load %arg4[%c10_108] : memref<144xf32, #tpu.memory_space<smem>>
    %843 = vector.broadcast %842 : f32 to vector<16x16xf32>
    %844 = arith.mulf %843, %841 : vector<16x16xf32>
    %845 = arith.addf %828, %844 : vector<16x16xf32>
    %c46_109 = arith.constant 46 : index
    %846 = memref.load %arg4[%c46_109] : memref<144xf32, #tpu.memory_space<smem>>
    %847 = vector.broadcast %846 : f32 to vector<16x16xf32>
    %848 = arith.mulf %847, %841 : vector<16x16xf32>
    %849 = arith.addf %832, %848 : vector<16x16xf32>
    %c82_110 = arith.constant 82 : index
    %850 = memref.load %arg4[%c82_110] : memref<144xf32, #tpu.memory_space<smem>>
    %851 = vector.broadcast %850 : f32 to vector<16x16xf32>
    %852 = arith.mulf %851, %841 : vector<16x16xf32>
    %853 = arith.addf %836, %852 : vector<16x16xf32>
    %c118_111 = arith.constant 118 : index
    %854 = memref.load %arg4[%c118_111] : memref<144xf32, #tpu.memory_space<smem>>
    %855 = vector.broadcast %854 : f32 to vector<16x16xf32>
    %856 = arith.mulf %855, %841 : vector<16x16xf32>
    %857 = arith.addf %840, %856 : vector<16x16xf32>
    %858 = vector.extract_strided_slice %823 {offsets = [0, 2], sizes = [16, 16], strides = [1, 1]} : vector<18x18xf32> to vector<16x16xf32>
    %c11_112 = arith.constant 11 : index
    %859 = memref.load %arg4[%c11_112] : memref<144xf32, #tpu.memory_space<smem>>
    %860 = vector.broadcast %859 : f32 to vector<16x16xf32>
    %861 = arith.mulf %860, %858 : vector<16x16xf32>
    %862 = arith.addf %845, %861 : vector<16x16xf32>
    %c47_113 = arith.constant 47 : index
    %863 = memref.load %arg4[%c47_113] : memref<144xf32, #tpu.memory_space<smem>>
    %864 = vector.broadcast %863 : f32 to vector<16x16xf32>
    %865 = arith.mulf %864, %858 : vector<16x16xf32>
    %866 = arith.addf %849, %865 : vector<16x16xf32>
    %c83_114 = arith.constant 83 : index
    %867 = memref.load %arg4[%c83_114] : memref<144xf32, #tpu.memory_space<smem>>
    %868 = vector.broadcast %867 : f32 to vector<16x16xf32>
    %869 = arith.mulf %868, %858 : vector<16x16xf32>
    %870 = arith.addf %853, %869 : vector<16x16xf32>
    %c119_115 = arith.constant 119 : index
    %871 = memref.load %arg4[%c119_115] : memref<144xf32, #tpu.memory_space<smem>>
    %872 = vector.broadcast %871 : f32 to vector<16x16xf32>
    %873 = arith.mulf %872, %858 : vector<16x16xf32>
    %874 = arith.addf %857, %873 : vector<16x16xf32>
    %875 = vector.extract_strided_slice %823 {offsets = [1, 0], sizes = [16, 16], strides = [1, 1]} : vector<18x18xf32> to vector<16x16xf32>
    %c12_116 = arith.constant 12 : index
    %876 = memref.load %arg4[%c12_116] : memref<144xf32, #tpu.memory_space<smem>>
    %877 = vector.broadcast %876 : f32 to vector<16x16xf32>
    %878 = arith.mulf %877, %875 : vector<16x16xf32>
    %879 = arith.addf %862, %878 : vector<16x16xf32>
    %c48_117 = arith.constant 48 : index
    %880 = memref.load %arg4[%c48_117] : memref<144xf32, #tpu.memory_space<smem>>
    %881 = vector.broadcast %880 : f32 to vector<16x16xf32>
    %882 = arith.mulf %881, %875 : vector<16x16xf32>
    %883 = arith.addf %866, %882 : vector<16x16xf32>
    %c84_118 = arith.constant 84 : index
    %884 = memref.load %arg4[%c84_118] : memref<144xf32, #tpu.memory_space<smem>>
    %885 = vector.broadcast %884 : f32 to vector<16x16xf32>
    %886 = arith.mulf %885, %875 : vector<16x16xf32>
    %887 = arith.addf %870, %886 : vector<16x16xf32>
    %c120_119 = arith.constant 120 : index
    %888 = memref.load %arg4[%c120_119] : memref<144xf32, #tpu.memory_space<smem>>
    %889 = vector.broadcast %888 : f32 to vector<16x16xf32>
    %890 = arith.mulf %889, %875 : vector<16x16xf32>
    %891 = arith.addf %874, %890 : vector<16x16xf32>
    %892 = vector.extract_strided_slice %823 {offsets = [1, 1], sizes = [16, 16], strides = [1, 1]} : vector<18x18xf32> to vector<16x16xf32>
    %c13_120 = arith.constant 13 : index
    %893 = memref.load %arg4[%c13_120] : memref<144xf32, #tpu.memory_space<smem>>
    %894 = vector.broadcast %893 : f32 to vector<16x16xf32>
    %895 = arith.mulf %894, %892 : vector<16x16xf32>
    %896 = arith.addf %879, %895 : vector<16x16xf32>
    %c49_121 = arith.constant 49 : index
    %897 = memref.load %arg4[%c49_121] : memref<144xf32, #tpu.memory_space<smem>>
    %898 = vector.broadcast %897 : f32 to vector<16x16xf32>
    %899 = arith.mulf %898, %892 : vector<16x16xf32>
    %900 = arith.addf %883, %899 : vector<16x16xf32>
    %c85_122 = arith.constant 85 : index
    %901 = memref.load %arg4[%c85_122] : memref<144xf32, #tpu.memory_space<smem>>
    %902 = vector.broadcast %901 : f32 to vector<16x16xf32>
    %903 = arith.mulf %902, %892 : vector<16x16xf32>
    %904 = arith.addf %887, %903 : vector<16x16xf32>
    %c121_123 = arith.constant 121 : index
    %905 = memref.load %arg4[%c121_123] : memref<144xf32, #tpu.memory_space<smem>>
    %906 = vector.broadcast %905 : f32 to vector<16x16xf32>
    %907 = arith.mulf %906, %892 : vector<16x16xf32>
    %908 = arith.addf %891, %907 : vector<16x16xf32>
    %909 = vector.extract_strided_slice %823 {offsets = [1, 2], sizes = [16, 16], strides = [1, 1]} : vector<18x18xf32> to vector<16x16xf32>
    %c14_124 = arith.constant 14 : index
    %910 = memref.load %arg4[%c14_124] : memref<144xf32, #tpu.memory_space<smem>>
    %911 = vector.broadcast %910 : f32 to vector<16x16xf32>
    %912 = arith.mulf %911, %909 : vector<16x16xf32>
    %913 = arith.addf %896, %912 : vector<16x16xf32>
    %c50_125 = arith.constant 50 : index
    %914 = memref.load %arg4[%c50_125] : memref<144xf32, #tpu.memory_space<smem>>
    %915 = vector.broadcast %914 : f32 to vector<16x16xf32>
    %916 = arith.mulf %915, %909 : vector<16x16xf32>
    %917 = arith.addf %900, %916 : vector<16x16xf32>
    %c86_126 = arith.constant 86 : index
    %918 = memref.load %arg4[%c86_126] : memref<144xf32, #tpu.memory_space<smem>>
    %919 = vector.broadcast %918 : f32 to vector<16x16xf32>
    %920 = arith.mulf %919, %909 : vector<16x16xf32>
    %921 = arith.addf %904, %920 : vector<16x16xf32>
    %c122_127 = arith.constant 122 : index
    %922 = memref.load %arg4[%c122_127] : memref<144xf32, #tpu.memory_space<smem>>
    %923 = vector.broadcast %922 : f32 to vector<16x16xf32>
    %924 = arith.mulf %923, %909 : vector<16x16xf32>
    %925 = arith.addf %908, %924 : vector<16x16xf32>
    %926 = vector.extract_strided_slice %823 {offsets = [2, 0], sizes = [16, 16], strides = [1, 1]} : vector<18x18xf32> to vector<16x16xf32>
    %c15_128 = arith.constant 15 : index
    %927 = memref.load %arg4[%c15_128] : memref<144xf32, #tpu.memory_space<smem>>
    %928 = vector.broadcast %927 : f32 to vector<16x16xf32>
    %929 = arith.mulf %928, %926 : vector<16x16xf32>
    %930 = arith.addf %913, %929 : vector<16x16xf32>
    %c51_129 = arith.constant 51 : index
    %931 = memref.load %arg4[%c51_129] : memref<144xf32, #tpu.memory_space<smem>>
    %932 = vector.broadcast %931 : f32 to vector<16x16xf32>
    %933 = arith.mulf %932, %926 : vector<16x16xf32>
    %934 = arith.addf %917, %933 : vector<16x16xf32>
    %c87_130 = arith.constant 87 : index
    %935 = memref.load %arg4[%c87_130] : memref<144xf32, #tpu.memory_space<smem>>
    %936 = vector.broadcast %935 : f32 to vector<16x16xf32>
    %937 = arith.mulf %936, %926 : vector<16x16xf32>
    %938 = arith.addf %921, %937 : vector<16x16xf32>
    %c123_131 = arith.constant 123 : index
    %939 = memref.load %arg4[%c123_131] : memref<144xf32, #tpu.memory_space<smem>>
    %940 = vector.broadcast %939 : f32 to vector<16x16xf32>
    %941 = arith.mulf %940, %926 : vector<16x16xf32>
    %942 = arith.addf %925, %941 : vector<16x16xf32>
    %943 = vector.extract_strided_slice %823 {offsets = [2, 1], sizes = [16, 16], strides = [1, 1]} : vector<18x18xf32> to vector<16x16xf32>
    %c16_132 = arith.constant 16 : index
    %944 = memref.load %arg4[%c16_132] : memref<144xf32, #tpu.memory_space<smem>>
    %945 = vector.broadcast %944 : f32 to vector<16x16xf32>
    %946 = arith.mulf %945, %943 : vector<16x16xf32>
    %947 = arith.addf %930, %946 : vector<16x16xf32>
    %c52_133 = arith.constant 52 : index
    %948 = memref.load %arg4[%c52_133] : memref<144xf32, #tpu.memory_space<smem>>
    %949 = vector.broadcast %948 : f32 to vector<16x16xf32>
    %950 = arith.mulf %949, %943 : vector<16x16xf32>
    %951 = arith.addf %934, %950 : vector<16x16xf32>
    %c88_134 = arith.constant 88 : index
    %952 = memref.load %arg4[%c88_134] : memref<144xf32, #tpu.memory_space<smem>>
    %953 = vector.broadcast %952 : f32 to vector<16x16xf32>
    %954 = arith.mulf %953, %943 : vector<16x16xf32>
    %955 = arith.addf %938, %954 : vector<16x16xf32>
    %c124_135 = arith.constant 124 : index
    %956 = memref.load %arg4[%c124_135] : memref<144xf32, #tpu.memory_space<smem>>
    %957 = vector.broadcast %956 : f32 to vector<16x16xf32>
    %958 = arith.mulf %957, %943 : vector<16x16xf32>
    %959 = arith.addf %942, %958 : vector<16x16xf32>
    %960 = vector.extract_strided_slice %823 {offsets = [2, 2], sizes = [16, 16], strides = [1, 1]} : vector<18x18xf32> to vector<16x16xf32>
    %c17_136 = arith.constant 17 : index
    %961 = memref.load %arg4[%c17_136] : memref<144xf32, #tpu.memory_space<smem>>
    %962 = vector.broadcast %961 : f32 to vector<16x16xf32>
    %963 = arith.mulf %962, %960 : vector<16x16xf32>
    %964 = arith.addf %947, %963 : vector<16x16xf32>
    %c53_137 = arith.constant 53 : index
    %965 = memref.load %arg4[%c53_137] : memref<144xf32, #tpu.memory_space<smem>>
    %966 = vector.broadcast %965 : f32 to vector<16x16xf32>
    %967 = arith.mulf %966, %960 : vector<16x16xf32>
    %968 = arith.addf %951, %967 : vector<16x16xf32>
    %c89_138 = arith.constant 89 : index
    %969 = memref.load %arg4[%c89_138] : memref<144xf32, #tpu.memory_space<smem>>
    %970 = vector.broadcast %969 : f32 to vector<16x16xf32>
    %971 = arith.mulf %970, %960 : vector<16x16xf32>
    %972 = arith.addf %955, %971 : vector<16x16xf32>
    %c125_139 = arith.constant 125 : index
    %973 = memref.load %arg4[%c125_139] : memref<144xf32, #tpu.memory_space<smem>>
    %974 = vector.broadcast %973 : f32 to vector<16x16xf32>
    %975 = arith.mulf %974, %960 : vector<16x16xf32>
    %976 = arith.addf %959, %975 : vector<16x16xf32>
    %c2_140 = arith.constant 2 : index
    %c0_141 = arith.constant 0 : index
    %c0_142 = arith.constant 0 : index
    %977 = vector.load %arg9[%c2_140, %c0_141, %c0_142] : memref<4x18x18xf32, #tpu.memory_space<vmem>>, vector<1x18x18xf32>
    %978 = vector.shape_cast %977 : vector<1x18x18xf32> to vector<18x18xf32>
    %979 = vector.extract_strided_slice %978 {offsets = [0, 0], sizes = [16, 16], strides = [1, 1]} : vector<18x18xf32> to vector<16x16xf32>
    %c18_143 = arith.constant 18 : index
    %980 = memref.load %arg4[%c18_143] : memref<144xf32, #tpu.memory_space<smem>>
    %981 = vector.broadcast %980 : f32 to vector<16x16xf32>
    %982 = arith.mulf %981, %979 : vector<16x16xf32>
    %983 = arith.addf %964, %982 : vector<16x16xf32>
    %c54_144 = arith.constant 54 : index
    %984 = memref.load %arg4[%c54_144] : memref<144xf32, #tpu.memory_space<smem>>
    %985 = vector.broadcast %984 : f32 to vector<16x16xf32>
    %986 = arith.mulf %985, %979 : vector<16x16xf32>
    %987 = arith.addf %968, %986 : vector<16x16xf32>
    %c90_145 = arith.constant 90 : index
    %988 = memref.load %arg4[%c90_145] : memref<144xf32, #tpu.memory_space<smem>>
    %989 = vector.broadcast %988 : f32 to vector<16x16xf32>
    %990 = arith.mulf %989, %979 : vector<16x16xf32>
    %991 = arith.addf %972, %990 : vector<16x16xf32>
    %c126_146 = arith.constant 126 : index
    %992 = memref.load %arg4[%c126_146] : memref<144xf32, #tpu.memory_space<smem>>
    %993 = vector.broadcast %992 : f32 to vector<16x16xf32>
    %994 = arith.mulf %993, %979 : vector<16x16xf32>
    %995 = arith.addf %976, %994 : vector<16x16xf32>
    %996 = vector.extract_strided_slice %978 {offsets = [0, 1], sizes = [16, 16], strides = [1, 1]} : vector<18x18xf32> to vector<16x16xf32>
    %c19_147 = arith.constant 19 : index
    %997 = memref.load %arg4[%c19_147] : memref<144xf32, #tpu.memory_space<smem>>
    %998 = vector.broadcast %997 : f32 to vector<16x16xf32>
    %999 = arith.mulf %998, %996 : vector<16x16xf32>
    %1000 = arith.addf %983, %999 : vector<16x16xf32>
    %c55_148 = arith.constant 55 : index
    %1001 = memref.load %arg4[%c55_148] : memref<144xf32, #tpu.memory_space<smem>>
    %1002 = vector.broadcast %1001 : f32 to vector<16x16xf32>
    %1003 = arith.mulf %1002, %996 : vector<16x16xf32>
    %1004 = arith.addf %987, %1003 : vector<16x16xf32>
    %c91_149 = arith.constant 91 : index
    %1005 = memref.load %arg4[%c91_149] : memref<144xf32, #tpu.memory_space<smem>>
    %1006 = vector.broadcast %1005 : f32 to vector<16x16xf32>
    %1007 = arith.mulf %1006, %996 : vector<16x16xf32>
    %1008 = arith.addf %991, %1007 : vector<16x16xf32>
    %c127_150 = arith.constant 127 : index
    %1009 = memref.load %arg4[%c127_150] : memref<144xf32, #tpu.memory_space<smem>>
    %1010 = vector.broadcast %1009 : f32 to vector<16x16xf32>
    %1011 = arith.mulf %1010, %996 : vector<16x16xf32>
    %1012 = arith.addf %995, %1011 : vector<16x16xf32>
    %1013 = vector.extract_strided_slice %978 {offsets = [0, 2], sizes = [16, 16], strides = [1, 1]} : vector<18x18xf32> to vector<16x16xf32>
    %c20_151 = arith.constant 20 : index
    %1014 = memref.load %arg4[%c20_151] : memref<144xf32, #tpu.memory_space<smem>>
    %1015 = vector.broadcast %1014 : f32 to vector<16x16xf32>
    %1016 = arith.mulf %1015, %1013 : vector<16x16xf32>
    %1017 = arith.addf %1000, %1016 : vector<16x16xf32>
    %c56_152 = arith.constant 56 : index
    %1018 = memref.load %arg4[%c56_152] : memref<144xf32, #tpu.memory_space<smem>>
    %1019 = vector.broadcast %1018 : f32 to vector<16x16xf32>
    %1020 = arith.mulf %1019, %1013 : vector<16x16xf32>
    %1021 = arith.addf %1004, %1020 : vector<16x16xf32>
    %c92_153 = arith.constant 92 : index
    %1022 = memref.load %arg4[%c92_153] : memref<144xf32, #tpu.memory_space<smem>>
    %1023 = vector.broadcast %1022 : f32 to vector<16x16xf32>
    %1024 = arith.mulf %1023, %1013 : vector<16x16xf32>
    %1025 = arith.addf %1008, %1024 : vector<16x16xf32>
    %c128_154 = arith.constant 128 : index
    %1026 = memref.load %arg4[%c128_154] : memref<144xf32, #tpu.memory_space<smem>>
    %1027 = vector.broadcast %1026 : f32 to vector<16x16xf32>
    %1028 = arith.mulf %1027, %1013 : vector<16x16xf32>
    %1029 = arith.addf %1012, %1028 : vector<16x16xf32>
    %1030 = vector.extract_strided_slice %978 {offsets = [1, 0], sizes = [16, 16], strides = [1, 1]} : vector<18x18xf32> to vector<16x16xf32>
    %c21_155 = arith.constant 21 : index
    %1031 = memref.load %arg4[%c21_155] : memref<144xf32, #tpu.memory_space<smem>>
    %1032 = vector.broadcast %1031 : f32 to vector<16x16xf32>
    %1033 = arith.mulf %1032, %1030 : vector<16x16xf32>
    %1034 = arith.addf %1017, %1033 : vector<16x16xf32>
    %c57_156 = arith.constant 57 : index
    %1035 = memref.load %arg4[%c57_156] : memref<144xf32, #tpu.memory_space<smem>>
    %1036 = vector.broadcast %1035 : f32 to vector<16x16xf32>
    %1037 = arith.mulf %1036, %1030 : vector<16x16xf32>
    %1038 = arith.addf %1021, %1037 : vector<16x16xf32>
    %c93_157 = arith.constant 93 : index
    %1039 = memref.load %arg4[%c93_157] : memref<144xf32, #tpu.memory_space<smem>>
    %1040 = vector.broadcast %1039 : f32 to vector<16x16xf32>
    %1041 = arith.mulf %1040, %1030 : vector<16x16xf32>
    %1042 = arith.addf %1025, %1041 : vector<16x16xf32>
    %c129_158 = arith.constant 129 : index
    %1043 = memref.load %arg4[%c129_158] : memref<144xf32, #tpu.memory_space<smem>>
    %1044 = vector.broadcast %1043 : f32 to vector<16x16xf32>
    %1045 = arith.mulf %1044, %1030 : vector<16x16xf32>
    %1046 = arith.addf %1029, %1045 : vector<16x16xf32>
    %1047 = vector.extract_strided_slice %978 {offsets = [1, 1], sizes = [16, 16], strides = [1, 1]} : vector<18x18xf32> to vector<16x16xf32>
    %c22_159 = arith.constant 22 : index
    %1048 = memref.load %arg4[%c22_159] : memref<144xf32, #tpu.memory_space<smem>>
    %1049 = vector.broadcast %1048 : f32 to vector<16x16xf32>
    %1050 = arith.mulf %1049, %1047 : vector<16x16xf32>
    %1051 = arith.addf %1034, %1050 : vector<16x16xf32>
    %c58_160 = arith.constant 58 : index
    %1052 = memref.load %arg4[%c58_160] : memref<144xf32, #tpu.memory_space<smem>>
    %1053 = vector.broadcast %1052 : f32 to vector<16x16xf32>
    %1054 = arith.mulf %1053, %1047 : vector<16x16xf32>
    %1055 = arith.addf %1038, %1054 : vector<16x16xf32>
    %c94_161 = arith.constant 94 : index
    %1056 = memref.load %arg4[%c94_161] : memref<144xf32, #tpu.memory_space<smem>>
    %1057 = vector.broadcast %1056 : f32 to vector<16x16xf32>
    %1058 = arith.mulf %1057, %1047 : vector<16x16xf32>
    %1059 = arith.addf %1042, %1058 : vector<16x16xf32>
    %c130_162 = arith.constant 130 : index
    %1060 = memref.load %arg4[%c130_162] : memref<144xf32, #tpu.memory_space<smem>>
    %1061 = vector.broadcast %1060 : f32 to vector<16x16xf32>
    %1062 = arith.mulf %1061, %1047 : vector<16x16xf32>
    %1063 = arith.addf %1046, %1062 : vector<16x16xf32>
    %1064 = vector.extract_strided_slice %978 {offsets = [1, 2], sizes = [16, 16], strides = [1, 1]} : vector<18x18xf32> to vector<16x16xf32>
    %c23_163 = arith.constant 23 : index
    %1065 = memref.load %arg4[%c23_163] : memref<144xf32, #tpu.memory_space<smem>>
    %1066 = vector.broadcast %1065 : f32 to vector<16x16xf32>
    %1067 = arith.mulf %1066, %1064 : vector<16x16xf32>
    %1068 = arith.addf %1051, %1067 : vector<16x16xf32>
    %c59_164 = arith.constant 59 : index
    %1069 = memref.load %arg4[%c59_164] : memref<144xf32, #tpu.memory_space<smem>>
    %1070 = vector.broadcast %1069 : f32 to vector<16x16xf32>
    %1071 = arith.mulf %1070, %1064 : vector<16x16xf32>
    %1072 = arith.addf %1055, %1071 : vector<16x16xf32>
    %c95_165 = arith.constant 95 : index
    %1073 = memref.load %arg4[%c95_165] : memref<144xf32, #tpu.memory_space<smem>>
    %1074 = vector.broadcast %1073 : f32 to vector<16x16xf32>
    %1075 = arith.mulf %1074, %1064 : vector<16x16xf32>
    %1076 = arith.addf %1059, %1075 : vector<16x16xf32>
    %c131_166 = arith.constant 131 : index
    %1077 = memref.load %arg4[%c131_166] : memref<144xf32, #tpu.memory_space<smem>>
    %1078 = vector.broadcast %1077 : f32 to vector<16x16xf32>
    %1079 = arith.mulf %1078, %1064 : vector<16x16xf32>
    %1080 = arith.addf %1063, %1079 : vector<16x16xf32>
    %1081 = vector.extract_strided_slice %978 {offsets = [2, 0], sizes = [16, 16], strides = [1, 1]} : vector<18x18xf32> to vector<16x16xf32>
    %c24_167 = arith.constant 24 : index
    %1082 = memref.load %arg4[%c24_167] : memref<144xf32, #tpu.memory_space<smem>>
    %1083 = vector.broadcast %1082 : f32 to vector<16x16xf32>
    %1084 = arith.mulf %1083, %1081 : vector<16x16xf32>
    %1085 = arith.addf %1068, %1084 : vector<16x16xf32>
    %c60_168 = arith.constant 60 : index
    %1086 = memref.load %arg4[%c60_168] : memref<144xf32, #tpu.memory_space<smem>>
    %1087 = vector.broadcast %1086 : f32 to vector<16x16xf32>
    %1088 = arith.mulf %1087, %1081 : vector<16x16xf32>
    %1089 = arith.addf %1072, %1088 : vector<16x16xf32>
    %c96_169 = arith.constant 96 : index
    %1090 = memref.load %arg4[%c96_169] : memref<144xf32, #tpu.memory_space<smem>>
    %1091 = vector.broadcast %1090 : f32 to vector<16x16xf32>
    %1092 = arith.mulf %1091, %1081 : vector<16x16xf32>
    %1093 = arith.addf %1076, %1092 : vector<16x16xf32>
    %c132_170 = arith.constant 132 : index
    %1094 = memref.load %arg4[%c132_170] : memref<144xf32, #tpu.memory_space<smem>>
    %1095 = vector.broadcast %1094 : f32 to vector<16x16xf32>
    %1096 = arith.mulf %1095, %1081 : vector<16x16xf32>
    %1097 = arith.addf %1080, %1096 : vector<16x16xf32>
    %1098 = vector.extract_strided_slice %978 {offsets = [2, 1], sizes = [16, 16], strides = [1, 1]} : vector<18x18xf32> to vector<16x16xf32>
    %c25_171 = arith.constant 25 : index
    %1099 = memref.load %arg4[%c25_171] : memref<144xf32, #tpu.memory_space<smem>>
    %1100 = vector.broadcast %1099 : f32 to vector<16x16xf32>
    %1101 = arith.mulf %1100, %1098 : vector<16x16xf32>
    %1102 = arith.addf %1085, %1101 : vector<16x16xf32>
    %c61_172 = arith.constant 61 : index
    %1103 = memref.load %arg4[%c61_172] : memref<144xf32, #tpu.memory_space<smem>>
    %1104 = vector.broadcast %1103 : f32 to vector<16x16xf32>
    %1105 = arith.mulf %1104, %1098 : vector<16x16xf32>
    %1106 = arith.addf %1089, %1105 : vector<16x16xf32>
    %c97_173 = arith.constant 97 : index
    %1107 = memref.load %arg4[%c97_173] : memref<144xf32, #tpu.memory_space<smem>>
    %1108 = vector.broadcast %1107 : f32 to vector<16x16xf32>
    %1109 = arith.mulf %1108, %1098 : vector<16x16xf32>
    %1110 = arith.addf %1093, %1109 : vector<16x16xf32>
    %c133_174 = arith.constant 133 : index
    %1111 = memref.load %arg4[%c133_174] : memref<144xf32, #tpu.memory_space<smem>>
    %1112 = vector.broadcast %1111 : f32 to vector<16x16xf32>
    %1113 = arith.mulf %1112, %1098 : vector<16x16xf32>
    %1114 = arith.addf %1097, %1113 : vector<16x16xf32>
    %1115 = vector.extract_strided_slice %978 {offsets = [2, 2], sizes = [16, 16], strides = [1, 1]} : vector<18x18xf32> to vector<16x16xf32>
    %c26_175 = arith.constant 26 : index
    %1116 = memref.load %arg4[%c26_175] : memref<144xf32, #tpu.memory_space<smem>>
    %1117 = vector.broadcast %1116 : f32 to vector<16x16xf32>
    %1118 = arith.mulf %1117, %1115 : vector<16x16xf32>
    %1119 = arith.addf %1102, %1118 : vector<16x16xf32>
    %c62_176 = arith.constant 62 : index
    %1120 = memref.load %arg4[%c62_176] : memref<144xf32, #tpu.memory_space<smem>>
    %1121 = vector.broadcast %1120 : f32 to vector<16x16xf32>
    %1122 = arith.mulf %1121, %1115 : vector<16x16xf32>
    %1123 = arith.addf %1106, %1122 : vector<16x16xf32>
    %c98_177 = arith.constant 98 : index
    %1124 = memref.load %arg4[%c98_177] : memref<144xf32, #tpu.memory_space<smem>>
    %1125 = vector.broadcast %1124 : f32 to vector<16x16xf32>
    %1126 = arith.mulf %1125, %1115 : vector<16x16xf32>
    %1127 = arith.addf %1110, %1126 : vector<16x16xf32>
    %c134_178 = arith.constant 134 : index
    %1128 = memref.load %arg4[%c134_178] : memref<144xf32, #tpu.memory_space<smem>>
    %1129 = vector.broadcast %1128 : f32 to vector<16x16xf32>
    %1130 = arith.mulf %1129, %1115 : vector<16x16xf32>
    %1131 = arith.addf %1114, %1130 : vector<16x16xf32>
    %c3_179 = arith.constant 3 : index
    %c0_180 = arith.constant 0 : index
    %c0_181 = arith.constant 0 : index
    %1132 = vector.load %arg9[%c3_179, %c0_180, %c0_181] : memref<4x18x18xf32, #tpu.memory_space<vmem>>, vector<1x18x18xf32>
    %1133 = vector.shape_cast %1132 : vector<1x18x18xf32> to vector<18x18xf32>
    %1134 = vector.extract_strided_slice %1133 {offsets = [0, 0], sizes = [16, 16], strides = [1, 1]} : vector<18x18xf32> to vector<16x16xf32>
    %c27_182 = arith.constant 27 : index
    %1135 = memref.load %arg4[%c27_182] : memref<144xf32, #tpu.memory_space<smem>>
    %1136 = vector.broadcast %1135 : f32 to vector<16x16xf32>
    %1137 = arith.mulf %1136, %1134 : vector<16x16xf32>
    %1138 = arith.addf %1119, %1137 : vector<16x16xf32>
    %c63_183 = arith.constant 63 : index
    %1139 = memref.load %arg4[%c63_183] : memref<144xf32, #tpu.memory_space<smem>>
    %1140 = vector.broadcast %1139 : f32 to vector<16x16xf32>
    %1141 = arith.mulf %1140, %1134 : vector<16x16xf32>
    %1142 = arith.addf %1123, %1141 : vector<16x16xf32>
    %c99_184 = arith.constant 99 : index
    %1143 = memref.load %arg4[%c99_184] : memref<144xf32, #tpu.memory_space<smem>>
    %1144 = vector.broadcast %1143 : f32 to vector<16x16xf32>
    %1145 = arith.mulf %1144, %1134 : vector<16x16xf32>
    %1146 = arith.addf %1127, %1145 : vector<16x16xf32>
    %c135_185 = arith.constant 135 : index
    %1147 = memref.load %arg4[%c135_185] : memref<144xf32, #tpu.memory_space<smem>>
    %1148 = vector.broadcast %1147 : f32 to vector<16x16xf32>
    %1149 = arith.mulf %1148, %1134 : vector<16x16xf32>
    %1150 = arith.addf %1131, %1149 : vector<16x16xf32>
    %1151 = vector.extract_strided_slice %1133 {offsets = [0, 1], sizes = [16, 16], strides = [1, 1]} : vector<18x18xf32> to vector<16x16xf32>
    %c28_186 = arith.constant 28 : index
    %1152 = memref.load %arg4[%c28_186] : memref<144xf32, #tpu.memory_space<smem>>
    %1153 = vector.broadcast %1152 : f32 to vector<16x16xf32>
    %1154 = arith.mulf %1153, %1151 : vector<16x16xf32>
    %1155 = arith.addf %1138, %1154 : vector<16x16xf32>
    %c64_187 = arith.constant 64 : index
    %1156 = memref.load %arg4[%c64_187] : memref<144xf32, #tpu.memory_space<smem>>
    %1157 = vector.broadcast %1156 : f32 to vector<16x16xf32>
    %1158 = arith.mulf %1157, %1151 : vector<16x16xf32>
    %1159 = arith.addf %1142, %1158 : vector<16x16xf32>
    %c100_188 = arith.constant 100 : index
    %1160 = memref.load %arg4[%c100_188] : memref<144xf32, #tpu.memory_space<smem>>
    %1161 = vector.broadcast %1160 : f32 to vector<16x16xf32>
    %1162 = arith.mulf %1161, %1151 : vector<16x16xf32>
    %1163 = arith.addf %1146, %1162 : vector<16x16xf32>
    %c136_189 = arith.constant 136 : index
    %1164 = memref.load %arg4[%c136_189] : memref<144xf32, #tpu.memory_space<smem>>
    %1165 = vector.broadcast %1164 : f32 to vector<16x16xf32>
    %1166 = arith.mulf %1165, %1151 : vector<16x16xf32>
    %1167 = arith.addf %1150, %1166 : vector<16x16xf32>
    %1168 = vector.extract_strided_slice %1133 {offsets = [0, 2], sizes = [16, 16], strides = [1, 1]} : vector<18x18xf32> to vector<16x16xf32>
    %c29_190 = arith.constant 29 : index
    %1169 = memref.load %arg4[%c29_190] : memref<144xf32, #tpu.memory_space<smem>>
    %1170 = vector.broadcast %1169 : f32 to vector<16x16xf32>
    %1171 = arith.mulf %1170, %1168 : vector<16x16xf32>
    %1172 = arith.addf %1155, %1171 : vector<16x16xf32>
    %c65_191 = arith.constant 65 : index
    %1173 = memref.load %arg4[%c65_191] : memref<144xf32, #tpu.memory_space<smem>>
    %1174 = vector.broadcast %1173 : f32 to vector<16x16xf32>
    %1175 = arith.mulf %1174, %1168 : vector<16x16xf32>
    %1176 = arith.addf %1159, %1175 : vector<16x16xf32>
    %c101_192 = arith.constant 101 : index
    %1177 = memref.load %arg4[%c101_192] : memref<144xf32, #tpu.memory_space<smem>>
    %1178 = vector.broadcast %1177 : f32 to vector<16x16xf32>
    %1179 = arith.mulf %1178, %1168 : vector<16x16xf32>
    %1180 = arith.addf %1163, %1179 : vector<16x16xf32>
    %c137_193 = arith.constant 137 : index
    %1181 = memref.load %arg4[%c137_193] : memref<144xf32, #tpu.memory_space<smem>>
    %1182 = vector.broadcast %1181 : f32 to vector<16x16xf32>
    %1183 = arith.mulf %1182, %1168 : vector<16x16xf32>
    %1184 = arith.addf %1167, %1183 : vector<16x16xf32>
    %1185 = vector.extract_strided_slice %1133 {offsets = [1, 0], sizes = [16, 16], strides = [1, 1]} : vector<18x18xf32> to vector<16x16xf32>
    %c30_194 = arith.constant 30 : index
    %1186 = memref.load %arg4[%c30_194] : memref<144xf32, #tpu.memory_space<smem>>
    %1187 = vector.broadcast %1186 : f32 to vector<16x16xf32>
    %1188 = arith.mulf %1187, %1185 : vector<16x16xf32>
    %1189 = arith.addf %1172, %1188 : vector<16x16xf32>
    %c66_195 = arith.constant 66 : index
    %1190 = memref.load %arg4[%c66_195] : memref<144xf32, #tpu.memory_space<smem>>
    %1191 = vector.broadcast %1190 : f32 to vector<16x16xf32>
    %1192 = arith.mulf %1191, %1185 : vector<16x16xf32>
    %1193 = arith.addf %1176, %1192 : vector<16x16xf32>
    %c102_196 = arith.constant 102 : index
    %1194 = memref.load %arg4[%c102_196] : memref<144xf32, #tpu.memory_space<smem>>
    %1195 = vector.broadcast %1194 : f32 to vector<16x16xf32>
    %1196 = arith.mulf %1195, %1185 : vector<16x16xf32>
    %1197 = arith.addf %1180, %1196 : vector<16x16xf32>
    %c138_197 = arith.constant 138 : index
    %1198 = memref.load %arg4[%c138_197] : memref<144xf32, #tpu.memory_space<smem>>
    %1199 = vector.broadcast %1198 : f32 to vector<16x16xf32>
    %1200 = arith.mulf %1199, %1185 : vector<16x16xf32>
    %1201 = arith.addf %1184, %1200 : vector<16x16xf32>
    %1202 = vector.extract_strided_slice %1133 {offsets = [1, 1], sizes = [16, 16], strides = [1, 1]} : vector<18x18xf32> to vector<16x16xf32>
    %c31_198 = arith.constant 31 : index
    %1203 = memref.load %arg4[%c31_198] : memref<144xf32, #tpu.memory_space<smem>>
    %1204 = vector.broadcast %1203 : f32 to vector<16x16xf32>
    %1205 = arith.mulf %1204, %1202 : vector<16x16xf32>
    %1206 = arith.addf %1189, %1205 : vector<16x16xf32>
    %c67_199 = arith.constant 67 : index
    %1207 = memref.load %arg4[%c67_199] : memref<144xf32, #tpu.memory_space<smem>>
    %1208 = vector.broadcast %1207 : f32 to vector<16x16xf32>
    %1209 = arith.mulf %1208, %1202 : vector<16x16xf32>
    %1210 = arith.addf %1193, %1209 : vector<16x16xf32>
    %c103_200 = arith.constant 103 : index
    %1211 = memref.load %arg4[%c103_200] : memref<144xf32, #tpu.memory_space<smem>>
    %1212 = vector.broadcast %1211 : f32 to vector<16x16xf32>
    %1213 = arith.mulf %1212, %1202 : vector<16x16xf32>
    %1214 = arith.addf %1197, %1213 : vector<16x16xf32>
    %c139_201 = arith.constant 139 : index
    %1215 = memref.load %arg4[%c139_201] : memref<144xf32, #tpu.memory_space<smem>>
    %1216 = vector.broadcast %1215 : f32 to vector<16x16xf32>
    %1217 = arith.mulf %1216, %1202 : vector<16x16xf32>
    %1218 = arith.addf %1201, %1217 : vector<16x16xf32>
    %1219 = vector.extract_strided_slice %1133 {offsets = [1, 2], sizes = [16, 16], strides = [1, 1]} : vector<18x18xf32> to vector<16x16xf32>
    %c32_202 = arith.constant 32 : index
    %1220 = memref.load %arg4[%c32_202] : memref<144xf32, #tpu.memory_space<smem>>
    %1221 = vector.broadcast %1220 : f32 to vector<16x16xf32>
    %1222 = arith.mulf %1221, %1219 : vector<16x16xf32>
    %1223 = arith.addf %1206, %1222 : vector<16x16xf32>
    %c68_203 = arith.constant 68 : index
    %1224 = memref.load %arg4[%c68_203] : memref<144xf32, #tpu.memory_space<smem>>
    %1225 = vector.broadcast %1224 : f32 to vector<16x16xf32>
    %1226 = arith.mulf %1225, %1219 : vector<16x16xf32>
    %1227 = arith.addf %1210, %1226 : vector<16x16xf32>
    %c104_204 = arith.constant 104 : index
    %1228 = memref.load %arg4[%c104_204] : memref<144xf32, #tpu.memory_space<smem>>
    %1229 = vector.broadcast %1228 : f32 to vector<16x16xf32>
    %1230 = arith.mulf %1229, %1219 : vector<16x16xf32>
    %1231 = arith.addf %1214, %1230 : vector<16x16xf32>
    %c140_205 = arith.constant 140 : index
    %1232 = memref.load %arg4[%c140_205] : memref<144xf32, #tpu.memory_space<smem>>
    %1233 = vector.broadcast %1232 : f32 to vector<16x16xf32>
    %1234 = arith.mulf %1233, %1219 : vector<16x16xf32>
    %1235 = arith.addf %1218, %1234 : vector<16x16xf32>
    %1236 = vector.extract_strided_slice %1133 {offsets = [2, 0], sizes = [16, 16], strides = [1, 1]} : vector<18x18xf32> to vector<16x16xf32>
    %c33_206 = arith.constant 33 : index
    %1237 = memref.load %arg4[%c33_206] : memref<144xf32, #tpu.memory_space<smem>>
    %1238 = vector.broadcast %1237 : f32 to vector<16x16xf32>
    %1239 = arith.mulf %1238, %1236 : vector<16x16xf32>
    %1240 = arith.addf %1223, %1239 : vector<16x16xf32>
    %c69_207 = arith.constant 69 : index
    %1241 = memref.load %arg4[%c69_207] : memref<144xf32, #tpu.memory_space<smem>>
    %1242 = vector.broadcast %1241 : f32 to vector<16x16xf32>
    %1243 = arith.mulf %1242, %1236 : vector<16x16xf32>
    %1244 = arith.addf %1227, %1243 : vector<16x16xf32>
    %c105_208 = arith.constant 105 : index
    %1245 = memref.load %arg4[%c105_208] : memref<144xf32, #tpu.memory_space<smem>>
    %1246 = vector.broadcast %1245 : f32 to vector<16x16xf32>
    %1247 = arith.mulf %1246, %1236 : vector<16x16xf32>
    %1248 = arith.addf %1231, %1247 : vector<16x16xf32>
    %c141_209 = arith.constant 141 : index
    %1249 = memref.load %arg4[%c141_209] : memref<144xf32, #tpu.memory_space<smem>>
    %1250 = vector.broadcast %1249 : f32 to vector<16x16xf32>
    %1251 = arith.mulf %1250, %1236 : vector<16x16xf32>
    %1252 = arith.addf %1235, %1251 : vector<16x16xf32>
    %1253 = vector.extract_strided_slice %1133 {offsets = [2, 1], sizes = [16, 16], strides = [1, 1]} : vector<18x18xf32> to vector<16x16xf32>
    %c34_210 = arith.constant 34 : index
    %1254 = memref.load %arg4[%c34_210] : memref<144xf32, #tpu.memory_space<smem>>
    %1255 = vector.broadcast %1254 : f32 to vector<16x16xf32>
    %1256 = arith.mulf %1255, %1253 : vector<16x16xf32>
    %1257 = arith.addf %1240, %1256 : vector<16x16xf32>
    %c70_211 = arith.constant 70 : index
    %1258 = memref.load %arg4[%c70_211] : memref<144xf32, #tpu.memory_space<smem>>
    %1259 = vector.broadcast %1258 : f32 to vector<16x16xf32>
    %1260 = arith.mulf %1259, %1253 : vector<16x16xf32>
    %1261 = arith.addf %1244, %1260 : vector<16x16xf32>
    %c106_212 = arith.constant 106 : index
    %1262 = memref.load %arg4[%c106_212] : memref<144xf32, #tpu.memory_space<smem>>
    %1263 = vector.broadcast %1262 : f32 to vector<16x16xf32>
    %1264 = arith.mulf %1263, %1253 : vector<16x16xf32>
    %1265 = arith.addf %1248, %1264 : vector<16x16xf32>
    %c142_213 = arith.constant 142 : index
    %1266 = memref.load %arg4[%c142_213] : memref<144xf32, #tpu.memory_space<smem>>
    %1267 = vector.broadcast %1266 : f32 to vector<16x16xf32>
    %1268 = arith.mulf %1267, %1253 : vector<16x16xf32>
    %1269 = arith.addf %1252, %1268 : vector<16x16xf32>
    %1270 = vector.extract_strided_slice %1133 {offsets = [2, 2], sizes = [16, 16], strides = [1, 1]} : vector<18x18xf32> to vector<16x16xf32>
    %c35_214 = arith.constant 35 : index
    %1271 = memref.load %arg4[%c35_214] : memref<144xf32, #tpu.memory_space<smem>>
    %1272 = vector.broadcast %1271 : f32 to vector<16x16xf32>
    %1273 = arith.mulf %1272, %1270 : vector<16x16xf32>
    %1274 = arith.addf %1257, %1273 : vector<16x16xf32>
    %c71_215 = arith.constant 71 : index
    %1275 = memref.load %arg4[%c71_215] : memref<144xf32, #tpu.memory_space<smem>>
    %1276 = vector.broadcast %1275 : f32 to vector<16x16xf32>
    %1277 = arith.mulf %1276, %1270 : vector<16x16xf32>
    %1278 = arith.addf %1261, %1277 : vector<16x16xf32>
    %c107_216 = arith.constant 107 : index
    %1279 = memref.load %arg4[%c107_216] : memref<144xf32, #tpu.memory_space<smem>>
    %1280 = vector.broadcast %1279 : f32 to vector<16x16xf32>
    %1281 = arith.mulf %1280, %1270 : vector<16x16xf32>
    %1282 = arith.addf %1265, %1281 : vector<16x16xf32>
    %c143_217 = arith.constant 143 : index
    %1283 = memref.load %arg4[%c143_217] : memref<144xf32, #tpu.memory_space<smem>>
    %1284 = vector.broadcast %1283 : f32 to vector<16x16xf32>
    %1285 = arith.mulf %1284, %1270 : vector<16x16xf32>
    %1286 = arith.addf %1269, %1285 : vector<16x16xf32>
    %c0_218 = arith.constant 0 : index
    %1287 = memref.load %arg5[%c0_218] : memref<4xf32, #tpu.memory_space<smem>>
    %1288 = vector.broadcast %1287 : f32 to vector<16x16xf32>
    %1289 = arith.addf %1274, %1288 : vector<16x16xf32>
    %cst_219 = arith.constant 0.000000e+00 : f32
    %1290 = vector.broadcast %cst_219 : f32 to vector<16x16xf32>
    %1291 = arith.maximumf %1289, %1290 : vector<16x16xf32>
    %c1_220 = arith.constant 1 : index
    %1292 = memref.load %arg5[%c1_220] : memref<4xf32, #tpu.memory_space<smem>>
    %1293 = vector.broadcast %1292 : f32 to vector<16x16xf32>
    %1294 = arith.addf %1278, %1293 : vector<16x16xf32>
    %cst_221 = arith.constant 0.000000e+00 : f32
    %1295 = vector.broadcast %cst_221 : f32 to vector<16x16xf32>
    %1296 = arith.maximumf %1294, %1295 : vector<16x16xf32>
    %c2_222 = arith.constant 2 : index
    %1297 = memref.load %arg5[%c2_222] : memref<4xf32, #tpu.memory_space<smem>>
    %1298 = vector.broadcast %1297 : f32 to vector<16x16xf32>
    %1299 = arith.addf %1282, %1298 : vector<16x16xf32>
    %cst_223 = arith.constant 0.000000e+00 : f32
    %1300 = vector.broadcast %cst_223 : f32 to vector<16x16xf32>
    %1301 = arith.maximumf %1299, %1300 : vector<16x16xf32>
    %c3_224 = arith.constant 3 : index
    %1302 = memref.load %arg5[%c3_224] : memref<4xf32, #tpu.memory_space<smem>>
    %1303 = vector.broadcast %1302 : f32 to vector<16x16xf32>
    %1304 = arith.addf %1286, %1303 : vector<16x16xf32>
    %cst_225 = arith.constant 0.000000e+00 : f32
    %1305 = vector.broadcast %cst_225 : f32 to vector<16x16xf32>
    %1306 = arith.maximumf %1304, %1305 : vector<16x16xf32>
    %cst_226 = arith.constant 0.000000e+00 : f32
    %1307 = vector.broadcast %cst_226 : f32 to vector<16x16xf32>
    %c0_227 = arith.constant 0 : index
    %1308 = memref.load %arg6[%c0_227] : memref<12xf32, #tpu.memory_space<smem>>
    %1309 = vector.broadcast %1308 : f32 to vector<16x16xf32>
    %1310 = arith.mulf %1309, %1291 : vector<16x16xf32>
    %1311 = arith.addf %1307, %1310 : vector<16x16xf32>
    %c1_228 = arith.constant 1 : index
    %1312 = memref.load %arg6[%c1_228] : memref<12xf32, #tpu.memory_space<smem>>
    %1313 = vector.broadcast %1312 : f32 to vector<16x16xf32>
    %1314 = arith.mulf %1313, %1296 : vector<16x16xf32>
    %1315 = arith.addf %1311, %1314 : vector<16x16xf32>
    %c2_229 = arith.constant 2 : index
    %1316 = memref.load %arg6[%c2_229] : memref<12xf32, #tpu.memory_space<smem>>
    %1317 = vector.broadcast %1316 : f32 to vector<16x16xf32>
    %1318 = arith.mulf %1317, %1301 : vector<16x16xf32>
    %1319 = arith.addf %1315, %1318 : vector<16x16xf32>
    %c3_230 = arith.constant 3 : index
    %1320 = memref.load %arg6[%c3_230] : memref<12xf32, #tpu.memory_space<smem>>
    %1321 = vector.broadcast %1320 : f32 to vector<16x16xf32>
    %1322 = arith.mulf %1321, %1306 : vector<16x16xf32>
    %1323 = arith.addf %1319, %1322 : vector<16x16xf32>
    %c0_231 = arith.constant 0 : index
    %1324 = memref.load %arg7[%c0_231] : memref<3xf32, #tpu.memory_space<smem>>
    %1325 = vector.broadcast %1324 : f32 to vector<16x16xf32>
    %1326 = arith.addf %1323, %1325 : vector<16x16xf32>
    %1327 = arith.negf %1326 : vector<16x16xf32>
    %1328 = math.exp %1327 : vector<16x16xf32>
    %cst_232 = arith.constant 1.000000e+00 : f32
    %1329 = vector.broadcast %cst_232 : f32 to vector<16x16xf32>
    %1330 = arith.addf %1329, %1328 : vector<16x16xf32>
    %1331 = arith.divf %1329, %1330 : vector<16x16xf32>
    %cst_233 = arith.constant 9.99999974E-5 : f32
    %cst_234 = arith.constant 0.999899983 : f32
    %1332 = vector.broadcast %cst_233 : f32 to vector<16x16xf32>
    %1333 = arith.maximumf %1332, %1331 : vector<16x16xf32>
    %1334 = vector.broadcast %cst_234 : f32 to vector<16x16xf32>
    %1335 = arith.minimumf %1334, %1333 : vector<16x16xf32>
    %1336 = vector.shape_cast %1335 : vector<16x16xf32> to vector<1x1x16x16xf32>
    %c0_235 = arith.constant 0 : index
    %c0_236 = arith.constant 0 : index
    %c0_237 = arith.constant 0 : index
    %c0_238 = arith.constant 0 : index
    %1337 = vector.load %arg8[%c0_235, %c0_236, %c0_237, %c0_238] : memref<1x3x16x16xf32, #tpu.memory_space<vmem>>, vector<1x1x16x16xf32>
    tpu.vector_store %arg8[%c0_235, %c0_236, %c0_237, %c0_238], %1336 {strides = array<i32>} : memref<1x3x16x16xf32, #tpu.memory_space<vmem>>, vector<1x1x16x16xf32>,
    %cst_239 = arith.constant 0.000000e+00 : f32
    %1338 = vector.broadcast %cst_239 : f32 to vector<16x16xf32>
    %c4_240 = arith.constant 4 : index
    %1339 = memref.load %arg6[%c4_240] : memref<12xf32, #tpu.memory_space<smem>>
    %1340 = vector.broadcast %1339 : f32 to vector<16x16xf32>
    %1341 = arith.mulf %1340, %1291 : vector<16x16xf32>
    %1342 = arith.addf %1338, %1341 : vector<16x16xf32>
    %c5_241 = arith.constant 5 : index
    %1343 = memref.load %arg6[%c5_241] : memref<12xf32, #tpu.memory_space<smem>>
    %1344 = vector.broadcast %1343 : f32 to vector<16x16xf32>
    %1345 = arith.mulf %1344, %1296 : vector<16x16xf32>
    %1346 = arith.addf %1342, %1345 : vector<16x16xf32>
    %c6_242 = arith.constant 6 : index
    %1347 = memref.load %arg6[%c6_242] : memref<12xf32, #tpu.memory_space<smem>>
    %1348 = vector.broadcast %1347 : f32 to vector<16x16xf32>
    %1349 = arith.mulf %1348, %1301 : vector<16x16xf32>
    %1350 = arith.addf %1346, %1349 : vector<16x16xf32>
    %c7_243 = arith.constant 7 : index
    %1351 = memref.load %arg6[%c7_243] : memref<12xf32, #tpu.memory_space<smem>>
    %1352 = vector.broadcast %1351 : f32 to vector<16x16xf32>
    %1353 = arith.mulf %1352, %1306 : vector<16x16xf32>
    %1354 = arith.addf %1350, %1353 : vector<16x16xf32>
    %c1_244 = arith.constant 1 : index
    %1355 = memref.load %arg7[%c1_244] : memref<3xf32, #tpu.memory_space<smem>>
    %1356 = vector.broadcast %1355 : f32 to vector<16x16xf32>
    %1357 = arith.addf %1354, %1356 : vector<16x16xf32>
    %1358 = arith.negf %1357 : vector<16x16xf32>
    %1359 = math.exp %1358 : vector<16x16xf32>
    %cst_245 = arith.constant 1.000000e+00 : f32
    %1360 = vector.broadcast %cst_245 : f32 to vector<16x16xf32>
    %1361 = arith.addf %1360, %1359 : vector<16x16xf32>
    %1362 = arith.divf %1360, %1361 : vector<16x16xf32>
    %cst_246 = arith.constant 9.99999974E-5 : f32
    %cst_247 = arith.constant 0.999899983 : f32
    %1363 = vector.broadcast %cst_246 : f32 to vector<16x16xf32>
    %1364 = arith.maximumf %1363, %1362 : vector<16x16xf32>
    %1365 = vector.broadcast %cst_247 : f32 to vector<16x16xf32>
    %1366 = arith.minimumf %1365, %1364 : vector<16x16xf32>
    %1367 = vector.shape_cast %1366 : vector<16x16xf32> to vector<1x1x16x16xf32>
    %c0_248 = arith.constant 0 : index
    %c1_249 = arith.constant 1 : index
    %c0_250 = arith.constant 0 : index
    %c0_251 = arith.constant 0 : index
    %1368 = vector.load %arg8[%c0_248, %c1_249, %c0_250, %c0_251] : memref<1x3x16x16xf32, #tpu.memory_space<vmem>>, vector<1x1x16x16xf32>
    tpu.vector_store %arg8[%c0_248, %c1_249, %c0_250, %c0_251], %1367 {strides = array<i32>} : memref<1x3x16x16xf32, #tpu.memory_space<vmem>>, vector<1x1x16x16xf32>,
    %cst_252 = arith.constant 0.000000e+00 : f32
    %1369 = vector.broadcast %cst_252 : f32 to vector<16x16xf32>
    %c8_253 = arith.constant 8 : index
    %1370 = memref.load %arg6[%c8_253] : memref<12xf32, #tpu.memory_space<smem>>
    %1371 = vector.broadcast %1370 : f32 to vector<16x16xf32>
    %1372 = arith.mulf %1371, %1291 : vector<16x16xf32>
    %1373 = arith.addf %1369, %1372 : vector<16x16xf32>
    %c9_254 = arith.constant 9 : index
    %1374 = memref.load %arg6[%c9_254] : memref<12xf32, #tpu.memory_space<smem>>
    %1375 = vector.broadcast %1374 : f32 to vector<16x16xf32>
    %1376 = arith.mulf %1375, %1296 : vector<16x16xf32>
    %1377 = arith.addf %1373, %1376 : vector<16x16xf32>
    %c10_255 = arith.constant 10 : index
    %1378 = memref.load %arg6[%c10_255] : memref<12xf32, #tpu.memory_space<smem>>
    %1379 = vector.broadcast %1378 : f32 to vector<16x16xf32>
    %1380 = arith.mulf %1379, %1301 : vector<16x16xf32>
    %1381 = arith.addf %1377, %1380 : vector<16x16xf32>
    %c11_256 = arith.constant 11 : index
    %1382 = memref.load %arg6[%c11_256] : memref<12xf32, #tpu.memory_space<smem>>
    %1383 = vector.broadcast %1382 : f32 to vector<16x16xf32>
    %1384 = arith.mulf %1383, %1306 : vector<16x16xf32>
    %1385 = arith.addf %1381, %1384 : vector<16x16xf32>
    %c2_257 = arith.constant 2 : index
    %1386 = memref.load %arg7[%c2_257] : memref<3xf32, #tpu.memory_space<smem>>
    %1387 = vector.broadcast %1386 : f32 to vector<16x16xf32>
    %1388 = arith.addf %1385, %1387 : vector<16x16xf32>
    %1389 = arith.negf %1388 : vector<16x16xf32>
    %1390 = math.exp %1389 : vector<16x16xf32>
    %cst_258 = arith.constant 1.000000e+00 : f32
    %1391 = vector.broadcast %cst_258 : f32 to vector<16x16xf32>
    %1392 = arith.addf %1391, %1390 : vector<16x16xf32>
    %1393 = arith.divf %1391, %1392 : vector<16x16xf32>
    %cst_259 = arith.constant 9.99999974E-5 : f32
    %cst_260 = arith.constant 0.999899983 : f32
    %1394 = vector.broadcast %cst_259 : f32 to vector<16x16xf32>
    %1395 = arith.maximumf %1394, %1393 : vector<16x16xf32>
    %1396 = vector.broadcast %cst_260 : f32 to vector<16x16xf32>
    %1397 = arith.minimumf %1396, %1395 : vector<16x16xf32>
    %1398 = vector.shape_cast %1397 : vector<16x16xf32> to vector<1x1x16x16xf32>
    %c0_261 = arith.constant 0 : index
    %c2_262 = arith.constant 2 : index
    %c0_263 = arith.constant 0 : index
    %c0_264 = arith.constant 0 : index
    %1399 = vector.load %arg8[%c0_261, %c2_262, %c0_263, %c0_264] : memref<1x3x16x16xf32, #tpu.memory_space<vmem>>, vector<1x1x16x16xf32>
    tpu.vector_store %arg8[%c0_261, %c2_262, %c0_263, %c0_264], %1398 {strides = array<i32>} : memref<1x3x16x16xf32, #tpu.memory_space<vmem>>, vector<1x1x16x16xf32>,
    return
  }
  func.func @transform_0(%arg0: i32) -> (i32, i32, i32, i32) {
    %c0_i32 = arith.constant 0 : i32
    %c0_i32_0 = arith.constant 0 : i32
    %c0_i32_1 = arith.constant 0 : i32
    %c0_i32_2 = arith.constant 0 : i32
    return %arg0, %c0_i32, %c0_i32_0, %c0_i32_1 : i32, i32, i32, i32
  }
  func.func @transform_1(%arg0: i32) -> i32 {
    %c0_i32 = arith.constant 0 : i32
    %c0_i32_0 = arith.constant 0 : i32
    return %c0_i32 : i32
  }
  func.func @transform_2(%arg0: i32) -> i32 {
    %c0_i32 = arith.constant 0 : i32
    %c0_i32_0 = arith.constant 0 : i32
    return %c0_i32 : i32
  }
  func.func @transform_3(%arg0: i32) -> i32 {
    %c0_i32 = arith.constant 0 : i32
    %c0_i32_0 = arith.constant 0 : i32
    return %c0_i32 : i32
  }
  func.func @transform_4(%arg0: i32) -> i32 {
    %c0_i32 = arith.constant 0 : i32
    %c0_i32_0 = arith.constant 0 : i32
    return %c0_i32 : i32
  }
  func.func @transform_5(%arg0: i32) -> i32 {
    %c0_i32 = arith.constant 0 : i32
    %c0_i32_0 = arith.constant 0 : i32
    return %c0_i32 : i32
  }
  func.func @transform_6(%arg0: i32) -> i32 {
    %c0_i32 = arith.constant 0 : i32
    %c0_i32_0 = arith.constant 0 : i32
    return %c0_i32 : i32
  }
  func.func @transform_7(%arg0: i32) -> (i32, i32, i32, i32) {
    %c0_i32 = arith.constant 0 : i32
    %c0_i32_0 = arith.constant 0 : i32
    %c0_i32_1 = arith.constant 0 : i32
    %c0_i32_2 = arith.constant 0 : i32
    return %arg0, %c0_i32, %c0_i32_0, %c0_i32_1 : i32, i32, i32, i32
  }
}

</mosaic_0001>

<llo_original>
// kernel: tpu_custom_call.1
$region0: #{tpu_custom_call.1}
  #allocation0 [shape = 'u32[]', space=smem, size = 0x4, offset = 0x4, fixed_abs, tag = 'smem constant byte address 0x4 - core index']
  #allocation1 [shape = 'u32[144,128]{1,0:T(1,128)}', space=vmem, size = 0x12000, scoped, tag = 'internal scratch']
  #allocation2 [shape = 'f32[4,18,18]{2,1,0:T(8,128)}', space=vmem, size = 0xc000, scoped, tag = 'scratch operand']
  %s0 = inlined_call_operand.hbm [shape: f32[2,4,16,16], index: 0, kind: input, shape index: {}]
  %s1 = inlined_call_operand.hbm [shape: f32[144], index: 1, kind: input, shape index: {}]
  %s2 = inlined_call_operand.vmem [shape: f32[4], index: 2, kind: input, shape index: {}]
  %s3 = inlined_call_operand.vmem [shape: f32[144], index: 3, kind: input, shape index: {}]
  %s4 = inlined_call_operand.vmem [shape: f32[4], index: 4, kind: input, shape index: {}]
  %s5 = inlined_call_operand.vmem [shape: f32[12], index: 5, kind: input, shape index: {}]
  %s6 = inlined_call_operand.vmem [shape: f32[3], index: 6, kind: input, shape index: {}]
  %s7 = inlined_call_operand.hbm [shape: f32[2,3,16,16], index: 7, kind: output, shape index: {}]
  %s8 = sld [smem:[#allocation0]]
  $region89: #{tpu_custom_call.1} parent=0
    _
  %s10 = ssub.s32 1, %s8
  %s11 = scalar_select 0, %s10, %s8
  $region1: #{tpu_custom_call.1} parent=0
    #allocation3 [shape = 'u8[65536]{0}', space=vmem, size = 0x10000, scoped, tag = 'input window, operand 0']
    #allocation4 [shape = 's32[2]{0}', space=sflag, size = 0x8, scoped, tag = 'scoped memory for tpu_custom_call.1']
    #allocation5 [shape = 's32[2]{0}', space=sflag, size = 0x8, scoped, tag = 'scoped memory for tpu_custom_call.1']
    #allocation6 [shape = 's32[2]{0}', space=sflag, size = 0x8, scoped, tag = 'scoped memory for tpu_custom_call.1']
    #allocation7 [shape = 's32[2]{0}', space=sflag, size = 0x8, scoped, tag = 'scoped memory for tpu_custom_call.1']
    #allocation8 [shape = 'u8[1024]{0}', space=smem, size = 0x400, scoped, tag = 'input window, operand 1, single buffered']
    #allocation9 [shape = 'u8[512]{0}', space=smem, size = 0x200, scoped, tag = 'input window, operand 2, single buffered']
    #allocation10 [shape = 'u8[1024]{0}', space=smem, size = 0x400, scoped, tag = 'input window, operand 3, single buffered']
    #allocation11 [shape = 's32[1]{0}', space=sflag, size = 0x4, scoped, tag = 'scoped memory for tpu_custom_call.1']
    #allocation12 [shape = 'u8[512]{0}', space=smem, size = 0x200, scoped, tag = 'input window, operand 4, single buffered']
    #allocation13 [shape = 'u8[512]{0}', space=smem, size = 0x200, scoped, tag = 'input window, operand 5, single buffered']
    #allocation14 [shape = 's32[1]{0}', space=sflag, size = 0x4, scoped, tag = 'scoped memory for tpu_custom_call.1']
    #allocation15 [shape = 'u8[512]{0}', space=smem, size = 0x200, scoped, tag = 'input window, operand 6, single buffered']
    #allocation16 [shape = 'u8[49152]{0}', space=vmem, size = 0xc000, scoped, tag = 'output window, operand 0']
    %12 = vsyncpa [#allocation4], 0
    %s13 = scalar_lea.sflag [#allocation4], 1
    %14 = vsyncpa %s13, 0
    %15 = vsyncpa [#allocation6], 0
    %16 = vsyncpa [#allocation7], 0
    %17 = vsyncpa [#allocation11], 0
    %18 = vsyncpa [#allocation14], 0
    %19 = vsyncpa [#allocation5], 0
    %s20 = scalar_lea.sflag [#allocation5], 1
    %21 = vsyncpa %s20, 0
    loop: start=0, step=1, limit=4
    $region2: #{tpu_custom_call.1} parent=1 // loop_pre_header
      _
    $region3: #{tpu_custom_call.1} parent=1 // loop_header
      %s23 = sphi 0, %s27
      %p24 = scmp.ge.s32.totalorder %s23, 4
      %s33 = sphi 0, %s35
      %s36 = sphi 0, %s33
      %s37 = sphi 0, %s36
      %s53 = sphi 0, %s37
      %s57 = sphi 0, %s57
      %s59 = sphi 0, %s57
      %s60 = sphi 0, %s59
      %s74 = sphi 0, %s60
      %s78 = sphi 0, %s78
      %s80 = sphi 0, %s78
      %s81 = sphi 0, %s80
      %s95 = sphi 0, %s81
      %s99 = sphi 0, %s99
      %s101 = sphi 0, %s99
      %s102 = sphi 0, %s101
      %s116 = sphi 0, %s102
      %s120 = sphi 0, %s120
      %s122 = sphi 0, %s120
      %s123 = sphi 0, %s122
      %s137 = sphi 0, %s123
      %s141 = sphi 0, %s141
      %s143 = sphi 0, %s141
      %s144 = sphi 0, %s143
      %s158 = sphi 0, %s144
      %s162 = sphi 0, %s162
      %s164 = sphi 0, %s162
      %s165 = sphi 0, %s164
      %s179 = sphi 0, %s165
      %s185 = sphi 0, %s187
      %s188 = sphi 0, %s185
      %s189 = sphi 0, %s188
      %s205 = sphi 0, %s189
    $region4: #{tpu_custom_call.1} parent=1 // loop_header_branch
      %26 = sbr.rel (%p24) target = $region8
    $region5: #{tpu_custom_call.1} parent=1 // loop_body
      %s28 = ssub.s32 %s23, 1
      %s29 = ssub.s32 %s23, 2
      %s30 = sadd.s32 %s23, 1
      %s31 = ssub.s32 %s23, %s30
      %p32 = scmp.eq.s32.totalorder %s31, 0
      %s34 = sadd.s32 %s33, 1
      %s35 = scalar_select %p32, %s33, %s34
      %p38 = pneg %p32
      %p39 = scmp.eq.s32.totalorder %s23, 1
      %p40 = por %p38, %p39
      %p41 = scmp.ne.s32.totalorder %s33, %s36
      %p42 = scmp.eq.s32.totalorder %s23, 0
      %p43 = por %p41, %p42
      %p44 = scmp.ne.s32.totalorder %s33, %s36
      %p45 = scmp.eq.s32.totalorder %s28, 1
      %p46 = por %p44, %p45
      %p47 = scmp.ne.s32.totalorder %s36, %s37
      %p48 = scmp.eq.s32.totalorder %s28, 0
      %p49 = por %p47, %p48
      %p50 = scmp.ne.s32.totalorder %s36, %s37
      %p51 = scmp.eq.s32.totalorder %s29, 1
      %p52 = por %p50, %p51
      %p54 = scmp.ne.s32.totalorder %s37, %s53
      %p55 = scmp.eq.s32.totalorder %s29, 0
      %p56 = por %p54, %p55
      %s58 = sadd.s32 %s57, 1
      %p61 = scmp.eq.s32.totalorder %s23, 1
      %p62 = scmp.ne.s32.totalorder %s57, %s59
      %p63 = scmp.eq.s32.totalorder %s23, 0
      %p64 = por %p62, %p63
      %p65 = scmp.ne.s32.totalorder %s57, %s59
      %p66 = scmp.eq.s32.totalorder %s28, 1
      %p67 = por %p65, %p66
      %p68 = scmp.ne.s32.totalorder %s59, %s60
      %p69 = scmp.eq.s32.totalorder %s28, 0
      %p70 = por %p68, %p69
      %p71 = scmp.ne.s32.totalorder %s59, %s60
      %p72 = scmp.eq.s32.totalorder %s29, 1
      %p73 = por %p71, %p72
      %p75 = scmp.ne.s32.totalorder %s60, %s74
      %p76 = scmp.eq.s32.totalorder %s29, 0
      %p77 = por %p75, %p76
      %s79 = sadd.s32 %s78, 1
      %p82 = scmp.eq.s32.totalorder %s23, 1
      %p83 = scmp.ne.s32.totalorder %s78, %s80
      %p84 = scmp.eq.s32.totalorder %s23, 0
      %p85 = por %p83, %p84
      %p86 = scmp.ne.s32.totalorder %s78, %s80
      %p87 = scmp.eq.s32.totalorder %s28, 1
      %p88 = por %p86, %p87
      %p89 = scmp.ne.s32.totalorder %s80, %s81
      %p90 = scmp.eq.s32.totalorder %s28, 0
      %p91 = por %p89, %p90
      %p92 = scmp.ne.s32.totalorder %s80, %s81
      %p93 = scmp.eq.s32.totalorder %s29, 1
      %p94 = por %p92, %p93
      %p96 = scmp.ne.s32.totalorder %s81, %s95
      %p97 = scmp.eq.s32.totalorder %s29, 0
      %p98 = por %p96, %p97
      %s100 = sadd.s32 %s99, 1
      %p103 = scmp.eq.s32.totalorder %s23, 1
      %p104 = scmp.ne.s32.totalorder %s99, %s101
      %p105 = scmp.eq.s32.totalorder %s23, 0
      %p106 = por %p104, %p105
      %p107 = scmp.ne.s32.totalorder %s99, %s101
      %p108 = scmp.eq.s32.totalorder %s28, 1
      %p109 = por %p107, %p108
      %p110 = scmp.ne.s32.totalorder %s101, %s102
      %p111 = scmp.eq.s32.totalorder %s28, 0
      %p112 = por %p110, %p111
      %p113 = scmp.ne.s32.totalorder %s101, %s102
      %p114 = scmp.eq.s32.totalorder %s29, 1
      %p115 = por %p113, %p114
      %p117 = scmp.ne.s32.totalorder %s102, %s116
      %p118 = scmp.eq.s32.totalorder %s29, 0
      %p119 = por %p117, %p118
      %s121 = sadd.s32 %s120, 1
      %p124 = scmp.eq.s32.totalorder %s23, 1
      %p125 = scmp.ne.s32.totalorder %s120, %s122
      %p126 = scmp.eq.s32.totalorder %s23, 0
      %p127 = por %p125, %p126
      %p128 = scmp.ne.s32.totalorder %s120, %s122
      %p129 = scmp.eq.s32.totalorder %s28, 1
      %p130 = por %p128, %p129
      %p131 = scmp.ne.s32.totalorder %s122, %s123
      %p132 = scmp.eq.s32.totalorder %s28, 0
      %p133 = por %p131, %p132
      %p134 = scmp.ne.s32.totalorder %s122, %s123
      %p135 = scmp.eq.s32.totalorder %s29, 1
      %p136 = por %p134, %p135
      %p138 = scmp.ne.s32.totalorder %s123, %s137
      %p139 = scmp.eq.s32.totalorder %s29, 0
      %p140 = por %p138, %p139
      %s142 = sadd.s32 %s141, 1
      %p145 = scmp.eq.s32.totalorder %s23, 1
      %p146 = scmp.ne.s32.totalorder %s141, %s143
      %p147 = scmp.eq.s32.totalorder %s23, 0
      %p148 = por %p146, %p147
      %p149 = scmp.ne.s32.totalorder %s141, %s143
      %p150 = scmp.eq.s32.totalorder %s28, 1
      %p151 = por %p149, %p150
      %p152 = scmp.ne.s32.totalorder %s143, %s144
      %p153 = scmp.eq.s32.totalorder %s28, 0
      %p154 = por %p152, %p153
      %p155 = scmp.ne.s32.totalorder %s143, %s144
      %p156 = scmp.eq.s32.totalorder %s29, 1
      %p157 = por %p155, %p156
      %p159 = scmp.ne.s32.totalorder %s144, %s158
      %p160 = scmp.eq.s32.totalorder %s29, 0
      %p161 = por %p159, %p160
      %s163 = sadd.s32 %s162, 1
      %p166 = scmp.eq.s32.totalorder %s23, 1
      %p167 = scmp.ne.s32.totalorder %s162, %s164
      %p168 = scmp.eq.s32.totalorder %s23, 0
      %p169 = por %p167, %p168
      %p170 = scmp.ne.s32.totalorder %s162, %s164
      %p171 = scmp.eq.s32.totalorder %s28, 1
      %p172 = por %p170, %p171
      %p173 = scmp.ne.s32.totalorder %s164, %s165
      %p174 = scmp.eq.s32.totalorder %s28, 0
      %p175 = por %p173, %p174
      %p176 = scmp.ne.s32.totalorder %s164, %s165
      %p177 = scmp.eq.s32.totalorder %s29, 1
      %p178 = por %p176, %p177
      %p180 = scmp.ne.s32.totalorder %s165, %s179
      %p181 = scmp.eq.s32.totalorder %s29, 0
      %p182 = por %p180, %p181
      %s183 = ssub.s32 %s23, %s30
      %p184 = scmp.eq.s32.totalorder %s183, 0
      %s186 = sadd.s32 %s185, 1
      %s187 = scalar_select %p184, %s185, %s186
      %p190 = pneg %p184
      %p191 = scmp.eq.s32.totalorder %s23, 1
      %p192 = por %p190, %p191
      %p193 = scmp.ne.s32.totalorder %s185, %s188
      %p194 = scmp.eq.s32.totalorder %s23, 0
      %p195 = por %p193, %p194
      %p196 = scmp.ne.s32.totalorder %s185, %s188
      %p197 = scmp.eq.s32.totalorder %s28, 1
      %p198 = por %p196, %p197
      %p199 = scmp.ne.s32.totalorder %s188, %s189
      %p200 = scmp.eq.s32.totalorder %s28, 0
      %p201 = por %p199, %p200
      %p202 = scmp.ne.s32.totalorder %s188, %s189
      %p203 = scmp.eq.s32.totalorder %s29, 1
      %p204 = por %p202, %p203
      %p206 = scmp.ne.s32.totalorder %s189, %s205
      %p207 = scmp.eq.s32.totalorder %s29, 0
      %p208 = por %p206, %p207
      %p209 = scmp.le.s32.totalorder 1, %s23
      %p210 = scmp.lt.s32.totalorder %s23, 3
      %p211 = pnand %p209, %p210
      %p212 = pneg %p211
      // Predicated region
      $region9: #{tpu_custom_call.1} parent=5 // pred_check
        _
      $region10: #{tpu_custom_call.1} parent=5 // pred_check_branch
        %214 = sbr.rel (%p211) target = $region12
      $region11: #{tpu_custom_call.1} parent=5 // pred_region
        %s215 = ssub.s32 %s23, 1
        // Predicated region
        $region13: #{tpu_custom_call.1} parent=11 // pred_check
          %p216 = pneg %p70
        $region14: #{tpu_custom_call.1} parent=11 // pred_check_branch
          %218 = sbr.rel (%p216) target = $region16
        $region15: #{tpu_custom_call.1} parent=11 // pred_region
          %s220 = ssub.s32 32, 32
          %221 = vsyncadd [#allocation6], %s220
          %224 = dma.hbm_to_smem %s1, 32, [#allocation8], [#allocation6]
        $region16: #{tpu_custom_call.1} parent=11 // pred_fallthru
          _
        // Predicated region
        $region17: #{tpu_custom_call.1} parent=11 // pred_check
          %p225 = pneg %p91
        $region18: #{tpu_custom_call.1} parent=11 // pred_check_branch
          %227 = sbr.rel (%p225) target = $region20
        $region19: #{tpu_custom_call.1} parent=11 // pred_region
          %s229 = ssub.s32 16, 16
          %230 = vsyncadd [#allocation7], %s229
          %s232 = sshll.u32 %s2, 4
          %s233 = int_to_ptr.vmem [resolvable:$true] %s232
          %235 = dma.vmem_to_smem %s233, 16, [#allocation9], [#allocation7]
        $region20: #{tpu_custom_call.1} parent=11 // pred_fallthru
          _
        // Predicated region
        $region21: #{tpu_custom_call.1} parent=11 // pred_check
          %p236 = pneg %p112
        $region22: #{tpu_custom_call.1} parent=11 // pred_check_branch
          %238 = sbr.rel (%p236) target = $region24
        $region23: #{tpu_custom_call.1} parent=11 // pred_region
          %s240 = ssub.s32 32, 32
          %241 = vsyncadd [#allocation11], %s240
          %s243 = sshll.u32 %s3, 4
          %s244 = int_to_ptr.vmem [resolvable:$true] %s243
          %246 = dma.vmem_to_smem %s244, 32, [#allocation10], [#allocation11]
        $region24: #{tpu_custom_call.1} parent=11 // pred_fallthru
          _
        // Predicated region
        $region25: #{tpu_custom_call.1} parent=11 // pred_check
          %p247 = pneg %p133
        $region26: #{tpu_custom_call.1} parent=11 // pred_check_branch
          %249 = sbr.rel (%p247) target = $region28
        $region27: #{tpu_custom_call.1} parent=11 // pred_region
          %s251 = ssub.s32 16, 16
          %252 = vsyncadd [#allocation11], %s251
          %s254 = sshll.u32 %s4, 4
          %s255 = int_to_ptr.vmem [resolvable:$true] %s254
          %257 = dma.vmem_to_smem %s255, 16, [#allocation12], [#allocation11]
        $region28: #{tpu_custom_call.1} parent=11 // pred_fallthru
          _
        // Predicated region
        $region29: #{tpu_custom_call.1} parent=11 // pred_check
          %p258 = pneg %p154
        $region30: #{tpu_custom_call.1} parent=11 // pred_check_branch
          %260 = sbr.rel (%p258) target = $region32
        $region31: #{tpu_custom_call.1} parent=11 // pred_region
          %s262 = ssub.s32 16, 16
          %263 = vsyncadd [#allocation14], %s262
          %s265 = sshll.u32 %s5, 4
          %s266 = int_to_ptr.vmem [resolvable:$true] %s265
          %268 = dma.vmem_to_smem %s266, 16, [#allocation13], [#allocation14]
        $region32: #{tpu_custom_call.1} parent=11 // pred_fallthru
          _
        // Predicated region
        $region33: #{tpu_custom_call.1} parent=11 // pred_check
          %p269 = pneg %p175
        $region34: #{tpu_custom_call.1} parent=11 // pred_check_branch
          %271 = sbr.rel (%p269) target = $region36
        $region35: #{tpu_custom_call.1} parent=11 // pred_region
          %s273 = ssub.s32 16, 16
          %274 = vsyncadd [#allocation14], %s273
          %s276 = sshll.u32 %s6, 4
          %s277 = int_to_ptr.vmem [resolvable:$true] %s276
          %279 = dma.vmem_to_smem %s277, 16, [#allocation15], [#allocation14]
        $region36: #{tpu_custom_call.1} parent=11 // pred_fallthru
          _
      $region12: #{tpu_custom_call.1} parent=5 // pred_fallthru
        _
      %p280 = scmp.lt.s32.totalorder %s23, 2
      // Predicated region
      $region37: #{tpu_custom_call.1} parent=5 // pred_check
        %p281 = pneg %p280
      $region38: #{tpu_custom_call.1} parent=5 // pred_check_branch
        %283 = sbr.rel (%p281) target = $region40
      $region39: #{tpu_custom_call.1} parent=5 // pred_region
        // Predicated region
        $region41: #{tpu_custom_call.1} parent=39 // pred_check
          %p284 = pneg %p43
        $region42: #{tpu_custom_call.1} parent=39 // pred_check_branch
          %286 = sbr.rel (%p284) target = $region44
        $region43: #{tpu_custom_call.1} parent=39 // pred_region
          %s287 = sand.u32 %s33, 1
          %s288 = scalar_lea.sflag [#allocation4], %s287
          %s289 = sand.u32 %s33, 1
          %s290 = smul.addr %s289, 64
          %s291 = scalar_lea.vmem [#allocation3], %s290
          %s293 = ssub.s32 1024, 1024
          %294 = vsyncadd %s288, %s293
          %s295 = smul.addr %s23, 8
          %s296 = smul.addr %s295, 128
          %s297 = scalar_lea.hbm %s0, %s296
          %s298 = sshll.u32 %s291, 4
          %s299 = int_to_ptr.vmem [resolvable:$true] %s298
          %304 = dma.hbm_to_vmem [thread:$0]  %s297, 1024, %s299, %s288, 128, 128, 8
        $region44: #{tpu_custom_call.1} parent=39 // pred_fallthru
          _
      $region40: #{tpu_custom_call.1} parent=5 // pred_fallthru
        _
      %p305 = scmp.le.s32.totalorder 1, %s23
      %p306 = scmp.lt.s32.totalorder %s23, 3
      %p307 = pnand %p305, %p306
      %p308 = pneg %p307
      // Predicated region
      $region45: #{tpu_custom_call.1} parent=5 // pred_check
        _
      $region46: #{tpu_custom_call.1} parent=5 // pred_check_branch
        %310 = sbr.rel (%p307) target = $region48
      $region47: #{tpu_custom_call.1} parent=5 // pred_region
        %s311 = ssub.s32 %s23, 1
        %s312 = sand.u32 %s36, 1
        %s313 = scalar_lea.sflag [#allocation4], %s312
        %s314 = sand.u32 %s36, 1
        %s315 = smul.addr %s314, 64
        %s316 = scalar_lea.vmem [#allocation3], %s315
        // Predicated region
        $region49: #{tpu_custom_call.1} parent=47 // pred_check
          %p317 = pneg %p49
        $region50: #{tpu_custom_call.1} parent=47 // pred_check_branch
          %319 = sbr.rel (%p317) target = $region52
        $region51: #{tpu_custom_call.1} parent=47 // pred_region
          %320 = dma.done %s313, 1024
        $region52: #{tpu_custom_call.1} parent=47 // pred_fallthru
          _
        // Predicated region
        $region53: #{tpu_custom_call.1} parent=47 // pred_check
          %p321 = pneg %p70
        $region54: #{tpu_custom_call.1} parent=47 // pred_check_branch
          %323 = sbr.rel (%p321) target = $region56
        $region55: #{tpu_custom_call.1} parent=47 // pred_region
          %324 = dma.done [#allocation6], 32
        $region56: #{tpu_custom_call.1} parent=47 // pred_fallthru
          _
        // Predicated region
        $region57: #{tpu_custom_call.1} parent=47 // pred_check
          %p325 = pneg %p91
        $region58: #{tpu_custom_call.1} parent=47 // pred_check_branch
          %327 = sbr.rel (%p325) target = $region60
        $region59: #{tpu_custom_call.1} parent=47 // pred_region
          %328 = dma.done [#allocation7], 16
        $region60: #{tpu_custom_call.1} parent=47 // pred_fallthru
          _
        // Predicated region
        $region61: #{tpu_custom_call.1} parent=47 // pred_check
          %p329 = pneg %p112
        $region62: #{tpu_custom_call.1} parent=47 // pred_check_branch
          %331 = sbr.rel (%p329) target = $region64
        $region63: #{tpu_custom_call.1} parent=47 // pred_region
          %332 = dma.done [#allocation11], 32
        $region64: #{tpu_custom_call.1} parent=47 // pred_fallthru
          _
        // Predicated region
        $region65: #{tpu_custom_call.1} parent=47 // pred_check
          %p333 = pneg %p133
        $region66: #{tpu_custom_call.1} parent=47 // pred_check_branch
          %335 = sbr.rel (%p333) target = $region68
        $region67: #{tpu_custom_call.1} parent=47 // pred_region
          %336 = dma.done [#allocation11], 16
        $region68: #{tpu_custom_call.1} parent=47 // pred_fallthru
          _
        // Predicated region
        $region69: #{tpu_custom_call.1} parent=47 // pred_check
          %p337 = pneg %p154
        $region70: #{tpu_custom_call.1} parent=47 // pred_check_branch
          %339 = sbr.rel (%p337) target = $region72
        $region71: #{tpu_custom_call.1} parent=47 // pred_region
          %340 = dma.done [#allocation14], 16
        $region72: #{tpu_custom_call.1} parent=47 // pred_fallthru
          _
        // Predicated region
        $region73: #{tpu_custom_call.1} parent=47 // pred_check
          %p341 = pneg %p175
        $region74: #{tpu_custom_call.1} parent=47 // pred_check_branch
          %343 = sbr.rel (%p341) target = $region76
        $region75: #{tpu_custom_call.1} parent=47 // pred_region
          %344 = dma.done [#allocation14], 16
        $region76: #{tpu_custom_call.1} parent=47 // pred_fallthru
          _
        %345 = sfence
        %s346 = sand.u32 %s36, 1
        %s347 = scalar_lea.sflag [#allocation4], %s346
        %s348 = sand.u32 %s36, 1
        %s349 = smul.addr %s348, 64
        %s350 = scalar_lea.vmem [#allocation3], %s349
        %p351 = pneg %p49
        %p352 = pneg %p46
        %p353 = pneg %p70
        %p354 = pneg %p67
        %p355 = pneg %p91
        %p356 = pneg %p88
        %p357 = pneg %p112
        %p358 = pneg %p109
        %p359 = pneg %p133
        %p360 = pneg %p130
        %p361 = pneg %p154
        %p362 = pneg %p151
        %p363 = pneg %p175
        %p364 = pneg %p172
        %p365 = pneg %p201
        %p366 = pneg %p198
        %s367 = sand.u32 %s188, 1
        %s368 = scalar_lea.sflag [#allocation5], %s367
        %s369 = sand.u32 %s188, 1
        %s370 = smul.addr %s369, 48
        %s371 = scalar_lea.vmem [#allocation16], %s370
        %vm372 = vcmask 139264
        %373 = vst.msk [vmem:[#allocation2] sm:$0x1] %vm372, 0.0
        %374 = vst.msk [vmem:[#allocation2 + $0x18] sm:$0x1] %vm372, 0.0
        %375 = vst.msk [vmem:[#allocation2 + $0x30] sm:$0x1] %vm372, 0.0
        %376 = vst.msk [vmem:[#allocation2 + $0x48] sm:$0x1] %vm372, 0.0
        %377 = vst.msk [vmem:[#allocation2 + $0x11] sm:$0x1] %vm372, 0.0
        %378 = vst.msk [vmem:[#allocation2 + $0x29] sm:$0x1] %vm372, 0.0
        %379 = vst.msk [vmem:[#allocation2 + $0x41] sm:$0x1] %vm372, 0.0
        %380 = vst.msk [vmem:[#allocation2 + $0x59] sm:$0x1] %vm372, 0.0
        %vm381 = vcmask 7168
        %382 = vst.msk [vmem:[#allocation2] sm:$0xff] %vm381, 0.0
        %383 = vst.msk [vmem:[#allocation2 + $0x8] sm:$0xff] %vm381, 0.0
        %vm384 = vcmask 1024
        %385 = vst.msk [vmem:[#allocation2 + $0x10] sm:$0x3] %vm384, 0.0
        %386 = vst.msk [vmem:[#allocation2 + $0x18] sm:$0xff] %vm381, 0.0
        %387 = vst.msk [vmem:[#allocation2 + $0x20] sm:$0xff] %vm381, 0.0
        %388 = vst.msk [vmem:[#allocation2 + $0x28] sm:$0x3] %vm384, 0.0
        %389 = vst.msk [vmem:[#allocation2 + $0x30] sm:$0xff] %vm381, 0.0
        %390 = vst.msk [vmem:[#allocation2 + $0x38] sm:$0xff] %vm381, 0.0
        %391 = vst.msk [vmem:[#allocation2 + $0x40] sm:$0x3] %vm384, 0.0
        %392 = vst.msk [vmem:[#allocation2 + $0x48] sm:$0xff] %vm381, 0.0
        %393 = vst.msk [vmem:[#allocation2 + $0x50] sm:$0xff] %vm381, 0.0
        %394 = vst.msk [vmem:[#allocation2 + $0x58] sm:$0x3] %vm384, 0.0
        %vm395 = vcmask 146568
        %396 = vst.msk [vmem:[#allocation2] sm:$0xff] %vm395, 0.0
        %397 = vst.msk [vmem:[#allocation2 + $0x8] sm:$0xff] %vm395, 0.0
        %vm398 = vcmask 140424
        %399 = vst.msk [vmem:[#allocation2 + $0x10] sm:$0x3] %vm398, 0.0
        %400 = vst.msk [vmem:[#allocation2 + $0x18] sm:$0xff] %vm395, 0.0
        %401 = vst.msk [vmem:[#allocation2 + $0x20] sm:$0xff] %vm395, 0.0
        %402 = vst.msk [vmem:[#allocation2 + $0x28] sm:$0x3] %vm398, 0.0
        %403 = vst.msk [vmem:[#allocation2 + $0x30] sm:$0xff] %vm395, 0.0
        %404 = vst.msk [vmem:[#allocation2 + $0x38] sm:$0xff] %vm395, 0.0
        %405 = vst.msk [vmem:[#allocation2 + $0x40] sm:$0x3] %vm398, 0.0
        %406 = vst.msk [vmem:[#allocation2 + $0x48] sm:$0xff] %vm395, 0.0
        %407 = vst.msk [vmem:[#allocation2 + $0x50] sm:$0xff] %vm395, 0.0
        %408 = vst.msk [vmem:[#allocation2 + $0x58] sm:$0x3] %vm398, 0.0
        %v409 = vld [vmem:[%s316] sm:$0xff]
        %v410 = vld [vmem:[%s316 + $0x8] sm:$0xff]
        %v411 = vld [vmem:[%s316 + $0x10] sm:$0xff]
        %v412 = vld [vmem:[%s316 + $0x18] sm:$0xff]
        %v413 = vld [vmem:[%s316 + $0x20] sm:$0xff]
        %v414 = vld [vmem:[%s316 + $0x28] sm:$0xff]
        %v415 = vld [vmem:[%s316 + $0x30] sm:$0xff]
        %v416 = vld [vmem:[%s316 + $0x38] sm:$0xff]
        %425 = vrot.lane.b32.xlu0 %v409, 1
        %v426 = vpop.permute.xlu0 %425
        %427 = vrot.lane.b32.xlu0 %v410, 1
        %v428 = vpop.permute.xlu0 %427
        %429 = vrot.lane.b32.xlu0 %v411, 1
        %v430 = vpop.permute.xlu0 %429
        %431 = vrot.lane.b32.xlu0 %v412, 1
        %v432 = vpop.permute.xlu0 %431
        %433 = vrot.lane.b32.xlu0 %v413, 1
        %v434 = vpop.permute.xlu0 %433
        %435 = vrot.lane.b32.xlu0 %v414, 1
        %v436 = vpop.permute.xlu0 %435
        %437 = vrot.lane.b32.xlu0 %v415, 1
        %v438 = vpop.permute.xlu0 %437
        %439 = vrot.lane.b32.xlu0 %v416, 1
        %v440 = vpop.permute.xlu0 %439
        %vm449 = vcmask 138248
        %450 = vst.msk [vmem:[#allocation2 + $0x1] sm:$0xff] %vm449, %v426
        %451 = vst.msk [vmem:[#allocation2 + $0x9] sm:$0xff] %vm449, %v428
        %452 = vst.msk [vmem:[#allocation2 + $0x19] sm:$0xff] %vm449, %v430
        %453 = vst.msk [vmem:[#allocation2 + $0x21] sm:$0xff] %vm449, %v432
        %454 = vst.msk [vmem:[#allocation2 + $0x31] sm:$0xff] %vm449, %v434
        %455 = vst.msk [vmem:[#allocation2 + $0x39] sm:$0xff] %vm449, %v436
        %456 = vst.msk [vmem:[#allocation2 + $0x49] sm:$0xff] %vm449, %v438
        %457 = vst.msk [vmem:[#allocation2 + $0x51] sm:$0xff] %vm449, %v440
        %v458 = vld [vmem:[#allocation2] sm:$0xff]
        %v459 = vld [vmem:[#allocation2 + $0x8] sm:$0xff]
        %v460 = vld [vmem:[#allocation2 + $0x10] sm:$0x3]
        %s461 = sld [smem:[#allocation8]]
        %v462 = vstv %s461
        %v463 = vmul.f32 %v462, %v458
        %v464 = vmul.f32 %v462, %v459
        %v465 = vadd.f32 %v463, 0.0
        %v466 = vadd.f32 %v464, 0.0
        %s467 = sld [smem:[#allocation8 + $0x24]]
        %v468 = vstv %s467
        %v469 = vmul.f32 %v468, %v458
        %v470 = vmul.f32 %v468, %v459
        %v471 = vadd.f32 %v469, 0.0
        %v472 = vadd.f32 %v470, 0.0
        %s473 = sld [smem:[#allocation8 + $0x48]]
        %v474 = vstv %s473
        %v475 = vmul.f32 %v474, %v458
        %v476 = vmul.f32 %v474, %v459
        %v477 = vadd.f32 %v475, 0.0
        %v478 = vadd.f32 %v476, 0.0
        %s479 = sld [smem:[#allocation8 + $0x6c]]
        %v480 = vstv %s479
        %v481 = vmul.f32 %v480, %v458
        %v482 = vmul.f32 %v480, %v459
        %v483 = vadd.f32 %v481, 0.0
        %v484 = vadd.f32 %v482, 0.0
        %s485 = sld [smem:[#allocation8 + $0x1]]
        %v486 = vstv %s485
        %v487 = vmul.f32 %v486, %v458
        %v488 = vmul.f32 %v486, %v459
        %491 = vrot.lane.b32.xlu0 %v487, 127
        %v492 = vpop.permute.xlu0 %491
        %493 = vrot.lane.b32.xlu0 %v488, 127
        %v494 = vpop.permute.xlu0 %493
        %v497 = vadd.f32 %v465, %v492
        %v498 = vadd.f32 %v466, %v494
        %s499 = sld [smem:[#allocation8 + $0x25]]
        %v500 = vstv %s499
        %v501 = vmul.f32 %v500, %v458
        %v502 = vmul.f32 %v500, %v459
        %505 = vrot.lane.b32.xlu0 %v501, 127
        %v506 = vpop.permute.xlu0 %505
        %507 = vrot.lane.b32.xlu0 %v502, 127
        %v508 = vpop.permute.xlu0 %507
        %v511 = vadd.f32 %v471, %v506
        %v512 = vadd.f32 %v472, %v508
        %s513 = sld [smem:[#allocation8 + $0x49]]
        %v514 = vstv %s513
        %v515 = vmul.f32 %v514, %v458
        %v516 = vmul.f32 %v514, %v459
        %519 = vrot.lane.b32.xlu0 %v515, 127
        %v520 = vpop.permute.xlu0 %519
        %521 = vrot.lane.b32.xlu0 %v516, 127
        %v522 = vpop.permute.xlu0 %521
        %v525 = vadd.f32 %v477, %v520
        %v526 = vadd.f32 %v478, %v522
        %s527 = sld [smem:[#allocation8 + $0x6d]]
        %v528 = vstv %s527
        %v529 = vmul.f32 %v528, %v458
        %v530 = vmul.f32 %v528, %v459
        %533 = vrot.lane.b32.xlu0 %v529, 127
        %v534 = vpop.permute.xlu0 %533
        %535 = vrot.lane.b32.xlu0 %v530, 127
        %v536 = vpop.permute.xlu0 %535
        %v539 = vadd.f32 %v483, %v534
        %v540 = vadd.f32 %v484, %v536
        %s541 = sld [smem:[#allocation8 + $0x2]]
        %v542 = vstv %s541
        %v543 = vmul.f32 %v542, %v458
        %v544 = vmul.f32 %v542, %v459
        %547 = vrot.lane.b32.xlu0 %v543, 126
        %v548 = vpop.permute.xlu0 %547
        %549 = vrot.lane.b32.xlu0 %v544, 126
        %v550 = vpop.permute.xlu0 %549
        %v553 = vadd.f32 %v497, %v548
        %v554 = vadd.f32 %v498, %v550
        %s555 = sld [smem:[#allocation8 + $0x26]]
        %v556 = vstv %s555
        %v557 = vmul.f32 %v556, %v458
        %v558 = vmul.f32 %v556, %v459
        %561 = vrot.lane.b32.xlu0 %v557, 126
        %v562 = vpop.permute.xlu0 %561
        %563 = vrot.lane.b32.xlu0 %v558, 126
        %v564 = vpop.permute.xlu0 %563
        %v567 = vadd.f32 %v511, %v562
        %v568 = vadd.f32 %v512, %v564
        %s569 = sld [smem:[#allocation8 + $0x4a]]
        %v570 = vstv %s569
        %v571 = vmul.f32 %v570, %v458
        %v572 = vmul.f32 %v570, %v459
        %575 = vrot.lane.b32.xlu0 %v571, 126
        %v576 = vpop.permute.xlu0 %575
        %577 = vrot.lane.b32.xlu0 %v572, 126
        %v578 = vpop.permute.xlu0 %577
        %v581 = vadd.f32 %v525, %v576
        %v582 = vadd.f32 %v526, %v578
        %s583 = sld [smem:[#allocation8 + $0x6e]]
        %v584 = vstv %s583
        %v585 = vmul.f32 %v584, %v458
        %v586 = vmul.f32 %v584, %v459
        %589 = vrot.lane.b32.xlu0 %v585, 126
        %v590 = vpop.permute.xlu0 %589
        %591 = vrot.lane.b32.xlu0 %v586, 126
        %v592 = vpop.permute.xlu0 %591
        %v595 = vadd.f32 %v539, %v590
        %v596 = vadd.f32 %v540, %v592
        %s597 = sld [smem:[#allocation8 + $0x3]]
        %v598 = vstv %s597
        %v599 = vmul.f32 %v598, %v458
        %v600 = vmul.f32 %v598, %v459
        %v601 = vmul.f32 %v598, %v460
        %vm605 = vcmask 1046528
        %v606 = vrot.slane %v599, 1
        %v607 = vrot.slane %v600, 1
        %v608 = vsel %vm605, %v606, %v607
        %v609 = vrot.slane %v601, 1
        %v610 = vsel %vm605, %v607, %v609
        %v613 = vadd.f32 %v553, %v608
        %v614 = vadd.f32 %v554, %v610
        %s615 = sld [smem:[#allocation8 + $0x27]]
        %v616 = vstv %s615
        %v617 = vmul.f32 %v616, %v458
        %v618 = vmul.f32 %v616, %v459
        %v619 = vmul.f32 %v616, %v460
        %v623 = vrot.slane %v617, 1
        %v624 = vrot.slane %v618, 1
        %v625 = vsel %vm605, %v623, %v624
        %v626 = vrot.slane %v619, 1
        %v627 = vsel %vm605, %v624, %v626
        %v630 = vadd.f32 %v567, %v625
        %v631 = vadd.f32 %v568, %v627
        %s632 = sld [smem:[#allocation8 + $0x4b]]
        %v633 = vstv %s632
        %v634 = vmul.f32 %v633, %v458
        %v635 = vmul.f32 %v633, %v459
        %v636 = vmul.f32 %v633, %v460
        %v640 = vrot.slane %v634, 1
        %v641 = vrot.slane %v635, 1
        %v642 = vsel %vm605, %v640, %v641
        %v643 = vrot.slane %v636, 1
        %v644 = vsel %vm605, %v641, %v643
        %v647 = vadd.f32 %v581, %v642
        %v648 = vadd.f32 %v582, %v644
        %s649 = sld [smem:[#allocation8 + $0x6f]]
        %v650 = vstv %s649
        %v651 = vmul.f32 %v650, %v458
        %v652 = vmul.f32 %v650, %v459
        %v653 = vmul.f32 %v650, %v460
        %v657 = vrot.slane %v651, 1
        %v658 = vrot.slane %v652, 1
        %v659 = vsel %vm605, %v657, %v658
        %v660 = vrot.slane %v653, 1
        %v661 = vsel %vm605, %v658, %v660
        %v664 = vadd.f32 %v595, %v659
        %v665 = vadd.f32 %v596, %v661
        %s666 = sld [smem:[#allocation8 + $0x4]]
        %v667 = vstv %s666
        %v668 = vmul.f32 %v667, %v458
        %v669 = vmul.f32 %v667, %v459
        %v670 = vmul.f32 %v667, %v460
        %v674 = vrot.slane %v668, 1
        %v675 = vrot.slane %v669, 1
        %v676 = vsel %vm605, %v674, %v675
        %v677 = vrot.slane %v670, 1
        %v678 = vsel %vm605, %v675, %v677
        %679 = vrot.lane.b32.xlu0 %v676, 127
        %v680 = vpop.permute.xlu0 %679
        %681 = vrot.lane.b32.xlu0 %v678, 127
        %v682 = vpop.permute.xlu0 %681
        %v685 = vadd.f32 %v613, %v680
        %v686 = vadd.f32 %v614, %v682
        %s687 = sld [smem:[#allocation8 + $0x28]]
        %v688 = vstv %s687
        %v689 = vmul.f32 %v688, %v458
        %v690 = vmul.f32 %v688, %v459
        %v691 = vmul.f32 %v688, %v460
        %v695 = vrot.slane %v689, 1
        %v696 = vrot.slane %v690, 1
        %v697 = vsel %vm605, %v695, %v696
        %v698 = vrot.slane %v691, 1
        %v699 = vsel %vm605, %v696, %v698
        %700 = vrot.lane.b32.xlu0 %v697, 127
        %v701 = vpop.permute.xlu0 %700
        %702 = vrot.lane.b32.xlu0 %v699, 127
        %v703 = vpop.permute.xlu0 %702
        %v706 = vadd.f32 %v630, %v701
        %v707 = vadd.f32 %v631, %v703
        %s708 = sld [smem:[#allocation8 + $0x4c]]
        %v709 = vstv %s708
        %v710 = vmul.f32 %v709, %v458
        %v711 = vmul.f32 %v709, %v459
        %v712 = vmul.f32 %v709, %v460
        %v716 = vrot.slane %v710, 1
        %v717 = vrot.slane %v711, 1
        %v718 = vsel %vm605, %v716, %v717
        %v719 = vrot.slane %v712, 1
        %v720 = vsel %vm605, %v717, %v719
        %721 = vrot.lane.b32.xlu0 %v718, 127
        %v722 = vpop.permute.xlu0 %721
        %723 = vrot.lane.b32.xlu0 %v720, 127
        %v724 = vpop.permute.xlu0 %723
        %v727 = vadd.f32 %v647, %v722
        %v728 = vadd.f32 %v648, %v724
        %s729 = sld [smem:[#allocation8 + $0x70]]
        %v730 = vstv %s729
        %v731 = vmul.f32 %v730, %v458
        %v732 = vmul.f32 %v730, %v459
        %v733 = vmul.f32 %v730, %v460
        %v737 = vrot.slane %v731, 1
        %v738 = vrot.slane %v732, 1
        %v739 = vsel %vm605, %v737, %v738
        %v740 = vrot.slane %v733, 1
        %v741 = vsel %vm605, %v738, %v740
        %742 = vrot.lane.b32.xlu0 %v739, 127
        %v743 = vpop.permute.xlu0 %742
        %744 = vrot.lane.b32.xlu0 %v741, 127
        %v745 = vpop.permute.xlu0 %744
        %v748 = vadd.f32 %v664, %v743
        %v749 = vadd.f32 %v665, %v745
        %s750 = sld [smem:[#allocation8 + $0x5]]
        %v751 = vstv %s750
        %v752 = vmul.f32 %v751, %v458
        %v753 = vmul.f32 %v751, %v459
        %v754 = vmul.f32 %v751, %v460
        %v758 = vrot.slane %v752, 1
        %v759 = vrot.slane %v753, 1
        %v760 = vsel %vm605, %v758, %v759
        %v761 = vrot.slane %v754, 1
        %v762 = vsel %vm605, %v759, %v761
        %763 = vrot.lane.b32.xlu0 %v760, 126
        %v764 = vpop.permute.xlu0 %763
        %765 = vrot.lane.b32.xlu0 %v762, 126
        %v766 = vpop.permute.xlu0 %765
        %v769 = vadd.f32 %v685, %v764
        %v770 = vadd.f32 %v686, %v766
        %s771 = sld [smem:[#allocation8 + $0x29]]
        %v772 = vstv %s771
        %v773 = vmul.f32 %v772, %v458
        %v774 = vmul.f32 %v772, %v459
        %v775 = vmul.f32 %v772, %v460
        %v779 = vrot.slane %v773, 1
        %v780 = vrot.slane %v774, 1
        %v781 = vsel %vm605, %v779, %v780
        %v782 = vrot.slane %v775, 1
        %v783 = vsel %vm605, %v780, %v782
        %784 = vrot.lane.b32.xlu0 %v781, 126
        %v785 = vpop.permute.xlu0 %784
        %786 = vrot.lane.b32.xlu0 %v783, 126
        %v787 = vpop.permute.xlu0 %786
        %v790 = vadd.f32 %v706, %v785
        %v791 = vadd.f32 %v707, %v787
        %s792 = sld [smem:[#allocation8 + $0x4d]]
        %v793 = vstv %s792
        %v794 = vmul.f32 %v793, %v458
        %v795 = vmul.f32 %v793, %v459
        %v796 = vmul.f32 %v793, %v460
        %v800 = vrot.slane %v794, 1
        %v801 = vrot.slane %v795, 1
        %v802 = vsel %vm605, %v800, %v801
        %v803 = vrot.slane %v796, 1
        %v804 = vsel %vm605, %v801, %v803
        %805 = vrot.lane.b32.xlu0 %v802, 126
        %v806 = vpop.permute.xlu0 %805
        %807 = vrot.lane.b32.xlu0 %v804, 126
        %v808 = vpop.permute.xlu0 %807
        %v811 = vadd.f32 %v727, %v806
        %v812 = vadd.f32 %v728, %v808
        %s813 = sld [smem:[#allocation8 + $0x71]]
        %v814 = vstv %s813
        %v815 = vmul.f32 %v814, %v458
        %v816 = vmul.f32 %v814, %v459
        %v817 = vmul.f32 %v814, %v460
        %v821 = vrot.slane %v815, 1
        %v822 = vrot.slane %v816, 1
        %v823 = vsel %vm605, %v821, %v822
        %v824 = vrot.slane %v817, 1
        %v825 = vsel %vm605, %v822, %v824
        %826 = vrot.lane.b32.xlu0 %v823, 126
        %v827 = vpop.permute.xlu0 %826
        %828 = vrot.lane.b32.xlu0 %v825, 126
        %v829 = vpop.permute.xlu0 %828
        %v832 = vadd.f32 %v748, %v827
        %v833 = vadd.f32 %v749, %v829
        %s834 = sld [smem:[#allocation8 + $0x6]]
        %v835 = vstv %s834
        %v836 = vmul.f32 %v835, %v458
        %v837 = vmul.f32 %v835, %v459
        %v838 = vmul.f32 %v835, %v460
        %vm842 = vcmask 1045504
        %v843 = vrot.slane %v836, 2
        %v844 = vrot.slane %v837, 2
        %v845 = vsel %vm842, %v843, %v844
        %v846 = vrot.slane %v838, 2
        %v847 = vsel %vm842, %v844, %v846
        %v850 = vadd.f32 %v769, %v845
        %v851 = vadd.f32 %v770, %v847
        %s852 = sld [smem:[#allocation8 + $0x2a]]
        %v853 = vstv %s852
        %v854 = vmul.f32 %v853, %v458
        %v855 = vmul.f32 %v853, %v459
        %v856 = vmul.f32 %v853, %v460
        %v860 = vrot.slane %v854, 2
        %v861 = vrot.slane %v855, 2
        %v862 = vsel %vm842, %v860, %v861
        %v863 = vrot.slane %v856, 2
        %v864 = vsel %vm842, %v861, %v863
        %v867 = vadd.f32 %v790, %v862
        %v868 = vadd.f32 %v791, %v864
        %s869 = sld [smem:[#allocation8 + $0x4e]]
        %v870 = vstv %s869
        %v871 = vmul.f32 %v870, %v458
        %v872 = vmul.f32 %v870, %v459
        %v873 = vmul.f32 %v870, %v460
        %v877 = vrot.slane %v871, 2
        %v878 = vrot.slane %v872, 2
        %v879 = vsel %vm842, %v877, %v878
        %v880 = vrot.slane %v873, 2
        %v881 = vsel %vm842, %v878, %v880
        %v884 = vadd.f32 %v811, %v879
        %v885 = vadd.f32 %v812, %v881
        %s886 = sld [smem:[#allocation8 + $0x72]]
        %v887 = vstv %s886
        %v888 = vmul.f32 %v887, %v458
        %v889 = vmul.f32 %v887, %v459
        %v890 = vmul.f32 %v887, %v460
        %v894 = vrot.slane %v888, 2
        %v895 = vrot.slane %v889, 2
        %v896 = vsel %vm842, %v894, %v895
        %v897 = vrot.slane %v890, 2
        %v898 = vsel %vm842, %v895, %v897
        %v901 = vadd.f32 %v832, %v896
        %v902 = vadd.f32 %v833, %v898
        %s903 = sld [smem:[#allocation8 + $0x7]]
        %v904 = vstv %s903
        %v905 = vmul.f32 %v904, %v458
        %v906 = vmul.f32 %v904, %v459
        %v907 = vmul.f32 %v904, %v460
        %v911 = vrot.slane %v905, 2
        %v912 = vrot.slane %v906, 2
        %v913 = vsel %vm842, %v911, %v912
        %v914 = vrot.slane %v907, 2
        %v915 = vsel %vm842, %v912, %v914
        %916 = vrot.lane.b32.xlu0 %v913, 127
        %v917 = vpop.permute.xlu0 %916
        %918 = vrot.lane.b32.xlu0 %v915, 127
        %v919 = vpop.permute.xlu0 %918
        %v922 = vadd.f32 %v850, %v917
        %v923 = vadd.f32 %v851, %v919
        %s924 = sld [smem:[#allocation8 + $0x2b]]
        %v925 = vstv %s924
        %v926 = vmul.f32 %v925, %v458
        %v927 = vmul.f32 %v925, %v459
        %v928 = vmul.f32 %v925, %v460
        %v932 = vrot.slane %v926, 2
        %v933 = vrot.slane %v927, 2
        %v934 = vsel %vm842, %v932, %v933
        %v935 = vrot.slane %v928, 2
        %v936 = vsel %vm842, %v933, %v935
        %937 = vrot.lane.b32.xlu0 %v934, 127
        %v938 = vpop.permute.xlu0 %937
        %939 = vrot.lane.b32.xlu0 %v936, 127
        %v940 = vpop.permute.xlu0 %939
        %v943 = vadd.f32 %v867, %v938
        %v944 = vadd.f32 %v868, %v940
        %s945 = sld [smem:[#allocation8 + $0x4f]]
        %v946 = vstv %s945
        %v947 = vmul.f32 %v946, %v458
        %v948 = vmul.f32 %v946, %v459
        %v949 = vmul.f32 %v946, %v460
        %v953 = vrot.slane %v947, 2
        %v954 = vrot.slane %v948, 2
        %v955 = vsel %vm842, %v953, %v954
        %v956 = vrot.slane %v949, 2
        %v957 = vsel %vm842, %v954, %v956
        %958 = vrot.lane.b32.xlu0 %v955, 127
        %v959 = vpop.permute.xlu0 %958
        %960 = vrot.lane.b32.xlu0 %v957, 127
        %v961 = vpop.permute.xlu0 %960
        %v964 = vadd.f32 %v884, %v959
        %v965 = vadd.f32 %v885, %v961
        %s966 = sld [smem:[#allocation8 + $0x73]]
        %v967 = vstv %s966
        %v968 = vmul.f32 %v967, %v458
        %v969 = vmul.f32 %v967, %v459
        %v970 = vmul.f32 %v967, %v460
        %v974 = vrot.slane %v968, 2
        %v975 = vrot.slane %v969, 2
        %v976 = vsel %vm842, %v974, %v975
        %v977 = vrot.slane %v970, 2
        %v978 = vsel %vm842, %v975, %v977
        %979 = vrot.lane.b32.xlu0 %v976, 127
        %v980 = vpop.permute.xlu0 %979
        %981 = vrot.lane.b32.xlu0 %v978, 127
        %v982 = vpop.permute.xlu0 %981
        %v985 = vadd.f32 %v901, %v980
        %v986 = vadd.f32 %v902, %v982
        %s987 = sld [smem:[#allocation8 + $0x8]]
        %v988 = vstv %s987
        %v989 = vmul.f32 %v988, %v458
        %v990 = vmul.f32 %v988, %v459
        %v991 = vmul.f32 %v988, %v460
        %v995 = vrot.slane %v989, 2
        %v996 = vrot.slane %v990, 2
        %v997 = vsel %vm842, %v995, %v996
        %v998 = vrot.slane %v991, 2
        %v999 = vsel %vm842, %v996, %v998
        %1000 = vrot.lane.b32.xlu0 %v997, 126
        %v1001 = vpop.permute.xlu0 %1000
        %1002 = vrot.lane.b32.xlu0 %v999, 126
        %v1003 = vpop.permute.xlu0 %1002
        %v1006 = vadd.f32 %v922, %v1001
        %v1007 = vadd.f32 %v923, %v1003
        %s1008 = sld [smem:[#allocation8 + $0x2c]]
        %v1009 = vstv %s1008
        %v1010 = vmul.f32 %v1009, %v458
        %v1011 = vmul.f32 %v1009, %v459
        %v1012 = vmul.f32 %v1009, %v460
        %v1016 = vrot.slane %v1010, 2
        %v1017 = vrot.slane %v1011, 2
        %v1018 = vsel %vm842, %v1016, %v1017
        %v1019 = vrot.slane %v1012, 2
        %v1020 = vsel %vm842, %v1017, %v1019
        %1021 = vrot.lane.b32.xlu0 %v1018, 126
        %v1022 = vpop.permute.xlu0 %1021
        %1023 = vrot.lane.b32.xlu0 %v1020, 126
        %v1024 = vpop.permute.xlu0 %1023
        %v1027 = vadd.f32 %v943, %v1022
        %v1028 = vadd.f32 %v944, %v1024
        %s1029 = sld [smem:[#allocation8 + $0x50]]
        %v1030 = vstv %s1029
        %v1031 = vmul.f32 %v1030, %v458
        %v1032 = vmul.f32 %v1030, %v459
        %v1033 = vmul.f32 %v1030, %v460
        %v1037 = vrot.slane %v1031, 2
        %v1038 = vrot.slane %v1032, 2
        %v1039 = vsel %vm842, %v1037, %v1038
        %v1040 = vrot.slane %v1033, 2
        %v1041 = vsel %vm842, %v1038, %v1040
        %1042 = vrot.lane.b32.xlu0 %v1039, 126
        %v1043 = vpop.permute.xlu0 %1042
        %1044 = vrot.lane.b32.xlu0 %v1041, 126
        %v1045 = vpop.permute.xlu0 %1044
        %v1048 = vadd.f32 %v964, %v1043
        %v1049 = vadd.f32 %v965, %v1045
        %s1050 = sld [smem:[#allocation8 + $0x74]]
        %v1051 = vstv %s1050
        %v1052 = vmul.f32 %v1051, %v458
        %v1053 = vmul.f32 %v1051, %v459
        %v1054 = vmul.f32 %v1051, %v460
        %v1058 = vrot.slane %v1052, 2
        %v1059 = vrot.slane %v1053, 2
        %v1060 = vsel %vm842, %v1058, %v1059
        %v1061 = vrot.slane %v1054, 2
        %v1062 = vsel %vm842, %v1059, %v1061
        %1063 = vrot.lane.b32.xlu0 %v1060, 126
        %v1064 = vpop.permute.xlu0 %1063
        %1065 = vrot.lane.b32.xlu0 %v1062, 126
        %v1066 = vpop.permute.xlu0 %1065
        %v1069 = vadd.f32 %v985, %v1064
        %v1070 = vadd.f32 %v986, %v1066
        %s1071 = scalar_lea.vmem [#allocation2], 24
        %v1072 = vld [vmem:[%s1071] sm:$0xff]
        %v1073 = vld [vmem:[%s1071 + $0x8] sm:$0xff]
        %v1074 = vld [vmem:[%s1071 + $0x10] sm:$0x3]
        %s1075 = sld [smem:[#allocation8 + $0x9]]
        %v1076 = vstv %s1075
        %v1077 = vmul.f32 %v1076, %v1072
        %v1078 = vmul.f32 %v1076, %v1073
        %v1079 = vadd.f32 %v1006, %v1077
        %v1080 = vadd.f32 %v1007, %v1078
        %s1081 = sld [smem:[#allocation8 + $0x2d]]
        %v1082 = vstv %s1081
        %v1083 = vmul.f32 %v1082, %v1072
        %v1084 = vmul.f32 %v1082, %v1073
        %v1085 = vadd.f32 %v1027, %v1083
        %v1086 = vadd.f32 %v1028, %v1084
        %s1087 = sld [smem:[#allocation8 + $0x51]]
        %v1088 = vstv %s1087
        %v1089 = vmul.f32 %v1088, %v1072
        %v1090 = vmul.f32 %v1088, %v1073
        %v1091 = vadd.f32 %v1048, %v1089
        %v1092 = vadd.f32 %v1049, %v1090
        %s1093 = sld [smem:[#allocation8 + $0x75]]
        %v1094 = vstv %s1093
        %v1095 = vmul.f32 %v1094, %v1072
        %v1096 = vmul.f32 %v1094, %v1073
        %v1097 = vadd.f32 %v1069, %v1095
        %v1098 = vadd.f32 %v1070, %v1096
        %s1099 = sld [smem:[#allocation8 + $0xa]]
        %v1100 = vstv %s1099
        %v1101 = vmul.f32 %v1100, %v1072
        %v1102 = vmul.f32 %v1100, %v1073
        %1105 = vrot.lane.b32.xlu0 %v1101, 127
        %v1106 = vpop.permute.xlu0 %1105
        %1107 = vrot.lane.b32.xlu0 %v1102, 127
        %v1108 = vpop.permute.xlu0 %1107
        %v1111 = vadd.f32 %v1079, %v1106
        %v1112 = vadd.f32 %v1080, %v1108
        %s1113 = sld [smem:[#allocation8 + $0x2e]]
        %v1114 = vstv %s1113
        %v1115 = vmul.f32 %v1114, %v1072
        %v1116 = vmul.f32 %v1114, %v1073
        %1119 = vrot.lane.b32.xlu0 %v1115, 127
        %v1120 = vpop.permute.xlu0 %1119
        %1121 = vrot.lane.b32.xlu0 %v1116, 127
        %v1122 = vpop.permute.xlu0 %1121
        %v1125 = vadd.f32 %v1085, %v1120
        %v1126 = vadd.f32 %v1086, %v1122
        %s1127 = sld [smem:[#allocation8 + $0x52]]
        %v1128 = vstv %s1127
        %v1129 = vmul.f32 %v1128, %v1072
        %v1130 = vmul.f32 %v1128, %v1073
        %1133 = vrot.lane.b32.xlu0 %v1129, 127
        %v1134 = vpop.permute.xlu0 %1133
        %1135 = vrot.lane.b32.xlu0 %v1130, 127
        %v1136 = vpop.permute.xlu0 %1135
        %v1139 = vadd.f32 %v1091, %v1134
        %v1140 = vadd.f32 %v1092, %v1136
        %s1141 = sld [smem:[#allocation8 + $0x76]]
        %v1142 = vstv %s1141
        %v1143 = vmul.f32 %v1142, %v1072
        %v1144 = vmul.f32 %v1142, %v1073
        %1147 = vrot.lane.b32.xlu0 %v1143, 127
        %v1148 = vpop.permute.xlu0 %1147
        %1149 = vrot.lane.b32.xlu0 %v1144, 127
        %v1150 = vpop.permute.xlu0 %1149
        %v1153 = vadd.f32 %v1097, %v1148
        %v1154 = vadd.f32 %v1098, %v1150
        %s1155 = sld [smem:[#allocation8 + $0xb]]
        %v1156 = vstv %s1155
        %v1157 = vmul.f32 %v1156, %v1072
        %v1158 = vmul.f32 %v1156, %v1073
        %1161 = vrot.lane.b32.xlu0 %v1157, 126
        %v1162 = vpop.permute.xlu0 %1161
        %1163 = vrot.lane.b32.xlu0 %v1158, 126
        %v1164 = vpop.permute.xlu0 %1163
        %v1167 = vadd.f32 %v1111, %v1162
        %v1168 = vadd.f32 %v1112, %v1164
        %s1169 = sld [smem:[#allocation8 + $0x2f]]
        %v1170 = vstv %s1169
        %v1171 = vmul.f32 %v1170, %v1072
        %v1172 = vmul.f32 %v1170, %v1073
        %1175 = vrot.lane.b32.xlu0 %v1171, 126
        %v1176 = vpop.permute.xlu0 %1175
        %1177 = vrot.lane.b32.xlu0 %v1172, 126
        %v1178 = vpop.permute.xlu0 %1177
        %v1181 = vadd.f32 %v1125, %v1176
        %v1182 = vadd.f32 %v1126, %v1178
        %s1183 = sld [smem:[#allocation8 + $0x53]]
        %v1184 = vstv %s1183
        %v1185 = vmul.f32 %v1184, %v1072
        %v1186 = vmul.f32 %v1184, %v1073
        %1189 = vrot.lane.b32.xlu0 %v1185, 126
        %v1190 = vpop.permute.xlu0 %1189
        %1191 = vrot.lane.b32.xlu0 %v1186, 126
        %v1192 = vpop.permute.xlu0 %1191
        %v1195 = vadd.f32 %v1139, %v1190
        %v1196 = vadd.f32 %v1140, %v1192
        %s1197 = sld [smem:[#allocation8 + $0x77]]
        %v1198 = vstv %s1197
        %v1199 = vmul.f32 %v1198, %v1072
        %v1200 = vmul.f32 %v1198, %v1073
        %1203 = vrot.lane.b32.xlu0 %v1199, 126
        %v1204 = vpop.permute.xlu0 %1203
        %1205 = vrot.lane.b32.xlu0 %v1200, 126
        %v1206 = vpop.permute.xlu0 %1205
        %v1209 = vadd.f32 %v1153, %v1204
        %v1210 = vadd.f32 %v1154, %v1206
        %s1211 = sld [smem:[#allocation8 + $0xc]]
        %v1212 = vstv %s1211
        %v1213 = vmul.f32 %v1212, %v1072
        %v1214 = vmul.f32 %v1212, %v1073
        %v1215 = vmul.f32 %v1212, %v1074
        %v1219 = vrot.slane %v1213, 1
        %v1220 = vrot.slane %v1214, 1
        %v1221 = vsel %vm605, %v1219, %v1220
        %v1222 = vrot.slane %v1215, 1
        %v1223 = vsel %vm605, %v1220, %v1222
        %v1226 = vadd.f32 %v1167, %v1221
        %v1227 = vadd.f32 %v1168, %v1223
        %s1228 = sld [smem:[#allocation8 + $0x30]]
        %v1229 = vstv %s1228
        %v1230 = vmul.f32 %v1229, %v1072
        %v1231 = vmul.f32 %v1229, %v1073
        %v1232 = vmul.f32 %v1229, %v1074
        %v1236 = vrot.slane %v1230, 1
        %v1237 = vrot.slane %v1231, 1
        %v1238 = vsel %vm605, %v1236, %v1237
        %v1239 = vrot.slane %v1232, 1
        %v1240 = vsel %vm605, %v1237, %v1239
        %v1243 = vadd.f32 %v1181, %v1238
        %v1244 = vadd.f32 %v1182, %v1240
        %s1245 = sld [smem:[#allocation8 + $0x54]]
        %v1246 = vstv %s1245
        %v1247 = vmul.f32 %v1246, %v1072
        %v1248 = vmul.f32 %v1246, %v1073
        %v1249 = vmul.f32 %v1246, %v1074
        %v1253 = vrot.slane %v1247, 1
        %v1254 = vrot.slane %v1248, 1
        %v1255 = vsel %vm605, %v1253, %v1254
        %v1256 = vrot.slane %v1249, 1
        %v1257 = vsel %vm605, %v1254, %v1256
        %v1260 = vadd.f32 %v1195, %v1255
        %v1261 = vadd.f32 %v1196, %v1257
        %s1262 = sld [smem:[#allocation8 + $0x78]]
        %v1263 = vstv %s1262
        %v1264 = vmul.f32 %v1263, %v1072
        %v1265 = vmul.f32 %v1263, %v1073
        %v1266 = vmul.f32 %v1263, %v1074
        %v1270 = vrot.slane %v1264, 1
        %v1271 = vrot.slane %v1265, 1
        %v1272 = vsel %vm605, %v1270, %v1271
        %v1273 = vrot.slane %v1266, 1
        %v1274 = vsel %vm605, %v1271, %v1273
        %v1277 = vadd.f32 %v1209, %v1272
        %v1278 = vadd.f32 %v1210, %v1274
        %s1279 = sld [smem:[#allocation8 + $0xd]]
        %v1280 = vstv %s1279
        %v1281 = vmul.f32 %v1280, %v1072
        %v1282 = vmul.f32 %v1280, %v1073
        %v1283 = vmul.f32 %v1280, %v1074
        %v1287 = vrot.slane %v1281, 1
        %v1288 = vrot.slane %v1282, 1
        %v1289 = vsel %vm605, %v1287, %v1288
        %v1290 = vrot.slane %v1283, 1
        %v1291 = vsel %vm605, %v1288, %v1290
        %1292 = vrot.lane.b32.xlu0 %v1289, 127
        %v1293 = vpop.permute.xlu0 %1292
        %1294 = vrot.lane.b32.xlu0 %v1291, 127
        %v1295 = vpop.permute.xlu0 %1294
        %v1298 = vadd.f32 %v1226, %v1293
        %v1299 = vadd.f32 %v1227, %v1295
        %s1300 = sld [smem:[#allocation8 + $0x31]]
        %v1301 = vstv %s1300
        %v1302 = vmul.f32 %v1301, %v1072
        %v1303 = vmul.f32 %v1301, %v1073
        %v1304 = vmul.f32 %v1301, %v1074
        %v1308 = vrot.slane %v1302, 1
        %v1309 = vrot.slane %v1303, 1
        %v1310 = vsel %vm605, %v1308, %v1309
        %v1311 = vrot.slane %v1304, 1
        %v1312 = vsel %vm605, %v1309, %v1311
        %1313 = vrot.lane.b32.xlu0 %v1310, 127
        %v1314 = vpop.permute.xlu0 %1313
        %1315 = vrot.lane.b32.xlu0 %v1312, 127
        %v1316 = vpop.permute.xlu0 %1315
        %v1319 = vadd.f32 %v1243, %v1314
        %v1320 = vadd.f32 %v1244, %v1316
        %s1321 = sld [smem:[#allocation8 + $0x55]]
        %v1322 = vstv %s1321
        %v1323 = vmul.f32 %v1322, %v1072
        %v1324 = vmul.f32 %v1322, %v1073
        %v1325 = vmul.f32 %v1322, %v1074
        %v1329 = vrot.slane %v1323, 1
        %v1330 = vrot.slane %v1324, 1
        %v1331 = vsel %vm605, %v1329, %v1330
        %v1332 = vrot.slane %v1325, 1
        %v1333 = vsel %vm605, %v1330, %v1332
        %1334 = vrot.lane.b32.xlu0 %v1331, 127
        %v1335 = vpop.permute.xlu0 %1334
        %1336 = vrot.lane.b32.xlu0 %v1333, 127
        %v1337 = vpop.permute.xlu0 %1336
        %v1340 = vadd.f32 %v1260, %v1335
        %v1341 = vadd.f32 %v1261, %v1337
        %s1342 = sld [smem:[#allocation8 + $0x79]]
        %v1343 = vstv %s1342
        %v1344 = vmul.f32 %v1343, %v1072
        %v1345 = vmul.f32 %v1343, %v1073
        %v1346 = vmul.f32 %v1343, %v1074
        %v1350 = vrot.slane %v1344, 1
        %v1351 = vrot.slane %v1345, 1
        %v1352 = vsel %vm605, %v1350, %v1351
        %v1353 = vrot.slane %v1346, 1
        %v1354 = vsel %vm605, %v1351, %v1353
        %1355 = vrot.lane.b32.xlu0 %v1352, 127
        %v1356 = vpop.permute.xlu0 %1355
        %1357 = vrot.lane.b32.xlu0 %v1354, 127
        %v1358 = vpop.permute.xlu0 %1357
        %v1361 = vadd.f32 %v1277, %v1356
        %v1362 = vadd.f32 %v1278, %v1358
        %s1363 = sld [smem:[#allocation8 + $0xe]]
        %v1364 = vstv %s1363
        %v1365 = vmul.f32 %v1364, %v1072
        %v1366 = vmul.f32 %v1364, %v1073
        %v1367 = vmul.f32 %v1364, %v1074
        %v1371 = vrot.slane %v1365, 1
        %v1372 = vrot.slane %v1366, 1
        %v1373 = vsel %vm605, %v1371, %v1372
        %v1374 = vrot.slane %v1367, 1
        %v1375 = vsel %vm605, %v1372, %v1374
        %1376 = vrot.lane.b32.xlu0 %v1373, 126
        %v1377 = vpop.permute.xlu0 %1376
        %1378 = vrot.lane.b32.xlu0 %v1375, 126
        %v1379 = vpop.permute.xlu0 %1378
        %v1382 = vadd.f32 %v1298, %v1377
        %v1383 = vadd.f32 %v1299, %v1379
        %s1384 = sld [smem:[#allocation8 + $0x32]]
        %v1385 = vstv %s1384
        %v1386 = vmul.f32 %v1385, %v1072
        %v1387 = vmul.f32 %v1385, %v1073
        %v1388 = vmul.f32 %v1385, %v1074
        %v1392 = vrot.slane %v1386, 1
        %v1393 = vrot.slane %v1387, 1
        %v1394 = vsel %vm605, %v1392, %v1393
        %v1395 = vrot.slane %v1388, 1
        %v1396 = vsel %vm605, %v1393, %v1395
        %1397 = vrot.lane.b32.xlu0 %v1394, 126
        %v1398 = vpop.permute.xlu0 %1397
        %1399 = vrot.lane.b32.xlu0 %v1396, 126
        %v1400 = vpop.permute.xlu0 %1399
        %v1403 = vadd.f32 %v1319, %v1398
        %v1404 = vadd.f32 %v1320, %v1400
        %s1405 = sld [smem:[#allocation8 + $0x56]]
        %v1406 = vstv %s1405
        %v1407 = vmul.f32 %v1406, %v1072
        %v1408 = vmul.f32 %v1406, %v1073
        %v1409 = vmul.f32 %v1406, %v1074
        %v1413 = vrot.slane %v1407, 1
        %v1414 = vrot.slane %v1408, 1
        %v1415 = vsel %vm605, %v1413, %v1414
        %v1416 = vrot.slane %v1409, 1
        %v1417 = vsel %vm605, %v1414, %v1416
        %1418 = vrot.lane.b32.xlu0 %v1415, 126
        %v1419 = vpop.permute.xlu0 %1418
        %1420 = vrot.lane.b32.xlu0 %v1417, 126
        %v1421 = vpop.permute.xlu0 %1420
        %v1424 = vadd.f32 %v1340, %v1419
        %v1425 = vadd.f32 %v1341, %v1421
        %s1426 = sld [smem:[#allocation8 + $0x7a]]
        %v1427 = vstv %s1426
        %v1428 = vmul.f32 %v1427, %v1072
        %v1429 = vmul.f32 %v1427, %v1073
        %v1430 = vmul.f32 %v1427, %v1074
        %v1434 = vrot.slane %v1428, 1
        %v1435 = vrot.slane %v1429, 1
        %v1436 = vsel %vm605, %v1434, %v1435
        %v1437 = vrot.slane %v1430, 1
        %v1438 = vsel %vm605, %v1435, %v1437
        %1439 = vrot.lane.b32.xlu0 %v1436, 126
        %v1440 = vpop.permute.xlu0 %1439
        %1441 = vrot.lane.b32.xlu0 %v1438, 126
        %v1442 = vpop.permute.xlu0 %1441
        %v1445 = vadd.f32 %v1361, %v1440
        %v1446 = vadd.f32 %v1362, %v1442
        %s1447 = sld [smem:[#allocation8 + $0xf]]
        %v1448 = vstv %s1447
        %v1449 = vmul.f32 %v1448, %v1072
        %v1450 = vmul.f32 %v1448, %v1073
        %v1451 = vmul.f32 %v1448, %v1074
        %v1455 = vrot.slane %v1449, 2
        %v1456 = vrot.slane %v1450, 2
        %v1457 = vsel %vm842, %v1455, %v1456
        %v1458 = vrot.slane %v1451, 2
        %v1459 = vsel %vm842, %v1456, %v1458
        %v1462 = vadd.f32 %v1382, %v1457
        %v1463 = vadd.f32 %v1383, %v1459
        %s1464 = sld [smem:[#allocation8 + $0x33]]
        %v1465 = vstv %s1464
        %v1466 = vmul.f32 %v1465, %v1072
        %v1467 = vmul.f32 %v1465, %v1073
        %v1468 = vmul.f32 %v1465, %v1074
        %v1472 = vrot.slane %v1466, 2
        %v1473 = vrot.slane %v1467, 2
        %v1474 = vsel %vm842, %v1472, %v1473
        %v1475 = vrot.slane %v1468, 2
        %v1476 = vsel %vm842, %v1473, %v1475
        %v1479 = vadd.f32 %v1403, %v1474
        %v1480 = vadd.f32 %v1404, %v1476
        %s1481 = sld [smem:[#allocation8 + $0x57]]
        %v1482 = vstv %s1481
        %v1483 = vmul.f32 %v1482, %v1072
        %v1484 = vmul.f32 %v1482, %v1073
        %v1485 = vmul.f32 %v1482, %v1074
        %v1489 = vrot.slane %v1483, 2
        %v1490 = vrot.slane %v1484, 2
        %v1491 = vsel %vm842, %v1489, %v1490
        %v1492 = vrot.slane %v1485, 2
        %v1493 = vsel %vm842, %v1490, %v1492
        %v1496 = vadd.f32 %v1424, %v1491
        %v1497 = vadd.f32 %v1425, %v1493
        %s1498 = sld [smem:[#allocation8 + $0x7b]]
        %v1499 = vstv %s1498
        %v1500 = vmul.f32 %v1499, %v1072
        %v1501 = vmul.f32 %v1499, %v1073
        %v1502 = vmul.f32 %v1499, %v1074
        %v1506 = vrot.slane %v1500, 2
        %v1507 = vrot.slane %v1501, 2
        %v1508 = vsel %vm842, %v1506, %v1507
        %v1509 = vrot.slane %v1502, 2
        %v1510 = vsel %vm842, %v1507, %v1509
        %v1513 = vadd.f32 %v1445, %v1508
        %v1514 = vadd.f32 %v1446, %v1510
        %s1515 = sld [smem:[#allocation8 + $0x10]]
        %v1516 = vstv %s1515
        %v1517 = vmul.f32 %v1516, %v1072
        %v1518 = vmul.f32 %v1516, %v1073
        %v1519 = vmul.f32 %v1516, %v1074
        %v1523 = vrot.slane %v1517, 2
        %v1524 = vrot.slane %v1518, 2
        %v1525 = vsel %vm842, %v1523, %v1524
        %v1526 = vrot.slane %v1519, 2
        %v1527 = vsel %vm842, %v1524, %v1526
        %1528 = vrot.lane.b32.xlu0 %v1525, 127
        %v1529 = vpop.permute.xlu0 %1528
        %1530 = vrot.lane.b32.xlu0 %v1527, 127
        %v1531 = vpop.permute.xlu0 %1530
        %v1534 = vadd.f32 %v1462, %v1529
        %v1535 = vadd.f32 %v1463, %v1531
        %s1536 = sld [smem:[#allocation8 + $0x34]]
        %v1537 = vstv %s1536
        %v1538 = vmul.f32 %v1537, %v1072
        %v1539 = vmul.f32 %v1537, %v1073
        %v1540 = vmul.f32 %v1537, %v1074
        %v1544 = vrot.slane %v1538, 2
        %v1545 = vrot.slane %v1539, 2
        %v1546 = vsel %vm842, %v1544, %v1545
        %v1547 = vrot.slane %v1540, 2
        %v1548 = vsel %vm842, %v1545, %v1547
        %1549 = vrot.lane.b32.xlu0 %v1546, 127
        %v1550 = vpop.permute.xlu0 %1549
        %1551 = vrot.lane.b32.xlu0 %v1548, 127
        %v1552 = vpop.permute.xlu0 %1551
        %v1555 = vadd.f32 %v1479, %v1550
        %v1556 = vadd.f32 %v1480, %v1552
        %s1557 = sld [smem:[#allocation8 + $0x58]]
        %v1558 = vstv %s1557
        %v1559 = vmul.f32 %v1558, %v1072
        %v1560 = vmul.f32 %v1558, %v1073
        %v1561 = vmul.f32 %v1558, %v1074
        %v1565 = vrot.slane %v1559, 2
        %v1566 = vrot.slane %v1560, 2
        %v1567 = vsel %vm842, %v1565, %v1566
        %v1568 = vrot.slane %v1561, 2
        %v1569 = vsel %vm842, %v1566, %v1568
        %1570 = vrot.lane.b32.xlu0 %v1567, 127
        %v1571 = vpop.permute.xlu0 %1570
        %1572 = vrot.lane.b32.xlu0 %v1569, 127
        %v1573 = vpop.permute.xlu0 %1572
        %v1576 = vadd.f32 %v1496, %v1571
        %v1577 = vadd.f32 %v1497, %v1573
        %s1578 = sld [smem:[#allocation8 + $0x7c]]
        %v1579 = vstv %s1578
        %v1580 = vmul.f32 %v1579, %v1072
        %v1581 = vmul.f32 %v1579, %v1073
        %v1582 = vmul.f32 %v1579, %v1074
        %v1586 = vrot.slane %v1580, 2
        %v1587 = vrot.slane %v1581, 2
        %v1588 = vsel %vm842, %v1586, %v1587
        %v1589 = vrot.slane %v1582, 2
        %v1590 = vsel %vm842, %v1587, %v1589
        %1591 = vrot.lane.b32.xlu0 %v1588, 127
        %v1592 = vpop.permute.xlu0 %1591
        %1593 = vrot.lane.b32.xlu0 %v1590, 127
        %v1594 = vpop.permute.xlu0 %1593
        %v1597 = vadd.f32 %v1513, %v1592
        %v1598 = vadd.f32 %v1514, %v1594
        %s1599 = sld [smem:[#allocation8 + $0x11]]
        %v1600 = vstv %s1599
        %v1601 = vmul.f32 %v1600, %v1072
        %v1602 = vmul.f32 %v1600, %v1073
        %v1603 = vmul.f32 %v1600, %v1074
        %v1607 = vrot.slane %v1601, 2
        %v1608 = vrot.slane %v1602, 2
        %v1609 = vsel %vm842, %v1607, %v1608
        %v1610 = vrot.slane %v1603, 2
        %v1611 = vsel %vm842, %v1608, %v1610
        %1612 = vrot.lane.b32.xlu0 %v1609, 126
        %v1613 = vpop.permute.xlu0 %1612
        %1614 = vrot.lane.b32.xlu0 %v1611, 126
        %v1615 = vpop.permute.xlu0 %1614
        %v1618 = vadd.f32 %v1534, %v1613
        %v1619 = vadd.f32 %v1535, %v1615
        %s1620 = sld [smem:[#allocation8 + $0x35]]
        %v1621 = vstv %s1620
        %v1622 = vmul.f32 %v1621, %v1072
        %v1623 = vmul.f32 %v1621, %v1073
        %v1624 = vmul.f32 %v1621, %v1074
        %v1628 = vrot.slane %v1622, 2
        %v1629 = vrot.slane %v1623, 2
        %v1630 = vsel %vm842, %v1628, %v1629
        %v1631 = vrot.slane %v1624, 2
        %v1632 = vsel %vm842, %v1629, %v1631
        %1633 = vrot.lane.b32.xlu0 %v1630, 126
        %v1634 = vpop.permute.xlu0 %1633
        %1635 = vrot.lane.b32.xlu0 %v1632, 126
        %v1636 = vpop.permute.xlu0 %1635
        %v1639 = vadd.f32 %v1555, %v1634
        %v1640 = vadd.f32 %v1556, %v1636
        %s1641 = sld [smem:[#allocation8 + $0x59]]
        %v1642 = vstv %s1641
        %v1643 = vmul.f32 %v1642, %v1072
        %v1644 = vmul.f32 %v1642, %v1073
        %v1645 = vmul.f32 %v1642, %v1074
        %v1649 = vrot.slane %v1643, 2
        %v1650 = vrot.slane %v1644, 2
        %v1651 = vsel %vm842, %v1649, %v1650
        %v1652 = vrot.slane %v1645, 2
        %v1653 = vsel %vm842, %v1650, %v1652
        %1654 = vrot.lane.b32.xlu0 %v1651, 126
        %v1655 = vpop.permute.xlu0 %1654
        %1656 = vrot.lane.b32.xlu0 %v1653, 126
        %v1657 = vpop.permute.xlu0 %1656
        %v1660 = vadd.f32 %v1576, %v1655
        %v1661 = vadd.f32 %v1577, %v1657
        %s1662 = sld [smem:[#allocation8 + $0x7d]]
        %v1663 = vstv %s1662
        %v1664 = vmul.f32 %v1663, %v1072
        %v1665 = vmul.f32 %v1663, %v1073
        %v1666 = vmul.f32 %v1663, %v1074
        %v1670 = vrot.slane %v1664, 2
        %v1671 = vrot.slane %v1665, 2
        %v1672 = vsel %vm842, %v1670, %v1671
        %v1673 = vrot.slane %v1666, 2
        %v1674 = vsel %vm842, %v1671, %v1673
        %1675 = vrot.lane.b32.xlu0 %v1672, 126
        %v1676 = vpop.permute.xlu0 %1675
        %1677 = vrot.lane.b32.xlu0 %v1674, 126
        %v1678 = vpop.permute.xlu0 %1677
        %v1681 = vadd.f32 %v1597, %v1676
        %v1682 = vadd.f32 %v1598, %v1678
        %s1683 = scalar_lea.vmem [#allocation2], 48
        %v1684 = vld [vmem:[%s1683] sm:$0xff]
        %v1685 = vld [vmem:[%s1683 + $0x8] sm:$0xff]
        %v1686 = vld [vmem:[%s1683 + $0x10] sm:$0x3]
        %s1687 = sld [smem:[#allocation8 + $0x12]]
        %v1688 = vstv %s1687
        %v1689 = vmul.f32 %v1688, %v1684
        %v1690 = vmul.f32 %v1688, %v1685
        %v1691 = vadd.f32 %v1618, %v1689
        %v1692 = vadd.f32 %v1619, %v1690
        %s1693 = sld [smem:[#allocation8 + $0x36]]
        %v1694 = vstv %s1693
        %v1695 = vmul.f32 %v1694, %v1684
        %v1696 = vmul.f32 %v1694, %v1685
        %v1697 = vadd.f32 %v1639, %v1695
        %v1698 = vadd.f32 %v1640, %v1696
        %s1699 = sld [smem:[#allocation8 + $0x5a]]
        %v1700 = vstv %s1699
        %v1701 = vmul.f32 %v1700, %v1684
        %v1702 = vmul.f32 %v1700, %v1685
        %v1703 = vadd.f32 %v1660, %v1701
        %v1704 = vadd.f32 %v1661, %v1702
        %s1705 = sld [smem:[#allocation8 + $0x7e]]
        %v1706 = vstv %s1705
        %v1707 = vmul.f32 %v1706, %v1684
        %v1708 = vmul.f32 %v1706, %v1685
        %v1709 = vadd.f32 %v1681, %v1707
        %v1710 = vadd.f32 %v1682, %v1708
        %s1711 = sld [smem:[#allocation8 + $0x13]]
        %v1712 = vstv %s1711
        %v1713 = vmul.f32 %v1712, %v1684
        %v1714 = vmul.f32 %v1712, %v1685
        %1717 = vrot.lane.b32.xlu0 %v1713, 127
        %v1718 = vpop.permute.xlu0 %1717
        %1719 = vrot.lane.b32.xlu0 %v1714, 127
        %v1720 = vpop.permute.xlu0 %1719
        %v1723 = vadd.f32 %v1691, %v1718
        %v1724 = vadd.f32 %v1692, %v1720
        %s1725 = sld [smem:[#allocation8 + $0x37]]
        %v1726 = vstv %s1725
        %v1727 = vmul.f32 %v1726, %v1684
        %v1728 = vmul.f32 %v1726, %v1685
        %1731 = vrot.lane.b32.xlu0 %v1727, 127
        %v1732 = vpop.permute.xlu0 %1731
        %1733 = vrot.lane.b32.xlu0 %v1728, 127
        %v1734 = vpop.permute.xlu0 %1733
        %v1737 = vadd.f32 %v1697, %v1732
        %v1738 = vadd.f32 %v1698, %v1734
        %s1739 = sld [smem:[#allocation8 + $0x5b]]
        %v1740 = vstv %s1739
        %v1741 = vmul.f32 %v1740, %v1684
        %v1742 = vmul.f32 %v1740, %v1685
        %1745 = vrot.lane.b32.xlu0 %v1741, 127
        %v1746 = vpop.permute.xlu0 %1745
        %1747 = vrot.lane.b32.xlu0 %v1742, 127
        %v1748 = vpop.permute.xlu0 %1747
        %v1751 = vadd.f32 %v1703, %v1746
        %v1752 = vadd.f32 %v1704, %v1748
        %s1753 = sld [smem:[#allocation8 + $0x7f]]
        %v1754 = vstv %s1753
        %v1755 = vmul.f32 %v1754, %v1684
        %v1756 = vmul.f32 %v1754, %v1685
        %1759 = vrot.lane.b32.xlu0 %v1755, 127
        %v1760 = vpop.permute.xlu0 %1759
        %1761 = vrot.lane.b32.xlu0 %v1756, 127
        %v1762 = vpop.permute.xlu0 %1761
        %v1765 = vadd.f32 %v1709, %v1760
        %v1766 = vadd.f32 %v1710, %v1762
        %s1767 = sld [smem:[#allocation8 + $0x14]]
        %v1768 = vstv %s1767
        %v1769 = vmul.f32 %v1768, %v1684
        %v1770 = vmul.f32 %v1768, %v1685
        %1773 = vrot.lane.b32.xlu0 %v1769, 126
        %v1774 = vpop.permute.xlu0 %1773
        %1775 = vrot.lane.b32.xlu0 %v1770, 126
        %v1776 = vpop.permute.xlu0 %1775
        %v1779 = vadd.f32 %v1723, %v1774
        %v1780 = vadd.f32 %v1724, %v1776
        %s1781 = sld [smem:[#allocation8 + $0x38]]
        %v1782 = vstv %s1781
        %v1783 = vmul.f32 %v1782, %v1684
        %v1784 = vmul.f32 %v1782, %v1685
        %1787 = vrot.lane.b32.xlu0 %v1783, 126
        %v1788 = vpop.permute.xlu0 %1787
        %1789 = vrot.lane.b32.xlu0 %v1784, 126
        %v1790 = vpop.permute.xlu0 %1789
        %v1793 = vadd.f32 %v1737, %v1788
        %v1794 = vadd.f32 %v1738, %v1790
        %s1795 = sld [smem:[#allocation8 + $0x5c]]
        %v1796 = vstv %s1795
        %v1797 = vmul.f32 %v1796, %v1684
        %v1798 = vmul.f32 %v1796, %v1685
        %1801 = vrot.lane.b32.xlu0 %v1797, 126
        %v1802 = vpop.permute.xlu0 %1801
        %1803 = vrot.lane.b32.xlu0 %v1798, 126
        %v1804 = vpop.permute.xlu0 %1803
        %v1807 = vadd.f32 %v1751, %v1802
        %v1808 = vadd.f32 %v1752, %v1804
        %s1809 = sld [smem:[#allocation8 + $0x80]]
        %v1810 = vstv %s1809
        %v1811 = vmul.f32 %v1810, %v1684
        %v1812 = vmul.f32 %v1810, %v1685
        %1815 = vrot.lane.b32.xlu0 %v1811, 126
        %v1816 = vpop.permute.xlu0 %1815
        %1817 = vrot.lane.b32.xlu0 %v1812, 126
        %v1818 = vpop.permute.xlu0 %1817
        %v1821 = vadd.f32 %v1765, %v1816
        %v1822 = vadd.f32 %v1766, %v1818
        %s1823 = sld [smem:[#allocation8 + $0x15]]
        %v1824 = vstv %s1823
        %v1825 = vmul.f32 %v1824, %v1684
        %v1826 = vmul.f32 %v1824, %v1685
        %v1827 = vmul.f32 %v1824, %v1686
        %v1831 = vrot.slane %v1825, 1
        %v1832 = vrot.slane %v1826, 1
        %v1833 = vsel %vm605, %v1831, %v1832
        %v1834 = vrot.slane %v1827, 1
        %v1835 = vsel %vm605, %v1832, %v1834
        %v1838 = vadd.f32 %v1779, %v1833
        %v1839 = vadd.f32 %v1780, %v1835
        %s1840 = sld [smem:[#allocation8 + $0x39]]
        %v1841 = vstv %s1840
        %v1842 = vmul.f32 %v1841, %v1684
        %v1843 = vmul.f32 %v1841, %v1685
        %v1844 = vmul.f32 %v1841, %v1686
        %v1848 = vrot.slane %v1842, 1
        %v1849 = vrot.slane %v1843, 1
        %v1850 = vsel %vm605, %v1848, %v1849
        %v1851 = vrot.slane %v1844, 1
        %v1852 = vsel %vm605, %v1849, %v1851
        %v1855 = vadd.f32 %v1793, %v1850
        %v1856 = vadd.f32 %v1794, %v1852
        %s1857 = sld [smem:[#allocation8 + $0x5d]]
        %v1858 = vstv %s1857
        %v1859 = vmul.f32 %v1858, %v1684
        %v1860 = vmul.f32 %v1858, %v1685
        %v1861 = vmul.f32 %v1858, %v1686
        %v1865 = vrot.slane %v1859, 1
        %v1866 = vrot.slane %v1860, 1
        %v1867 = vsel %vm605, %v1865, %v1866
        %v1868 = vrot.slane %v1861, 1
        %v1869 = vsel %vm605, %v1866, %v1868
        %v1872 = vadd.f32 %v1807, %v1867
        %v1873 = vadd.f32 %v1808, %v1869
        %s1874 = sld [smem:[#allocation8 + $0x81]]
        %v1875 = vstv %s1874
        %v1876 = vmul.f32 %v1875, %v1684
        %v1877 = vmul.f32 %v1875, %v1685
        %v1878 = vmul.f32 %v1875, %v1686
        %v1882 = vrot.slane %v1876, 1
        %v1883 = vrot.slane %v1877, 1
        %v1884 = vsel %vm605, %v1882, %v1883
        %v1885 = vrot.slane %v1878, 1
        %v1886 = vsel %vm605, %v1883, %v1885
        %v1889 = vadd.f32 %v1821, %v1884
        %v1890 = vadd.f32 %v1822, %v1886
        %s1891 = sld [smem:[#allocation8 + $0x16]]
        %v1892 = vstv %s1891
        %v1893 = vmul.f32 %v1892, %v1684
        %v1894 = vmul.f32 %v1892, %v1685
        %v1895 = vmul.f32 %v1892, %v1686
        %v1899 = vrot.slane %v1893, 1
        %v1900 = vrot.slane %v1894, 1
        %v1901 = vsel %vm605, %v1899, %v1900
        %v1902 = vrot.slane %v1895, 1
        %v1903 = vsel %vm605, %v1900, %v1902
        %1904 = vrot.lane.b32.xlu0 %v1901, 127
        %v1905 = vpop.permute.xlu0 %1904
        %1906 = vrot.lane.b32.xlu0 %v1903, 127
        %v1907 = vpop.permute.xlu0 %1906
        %v1910 = vadd.f32 %v1838, %v1905
        %v1911 = vadd.f32 %v1839, %v1907
        %s1912 = sld [smem:[#allocation8 + $0x3a]]
        %v1913 = vstv %s1912
        %v1914 = vmul.f32 %v1913, %v1684
        %v1915 = vmul.f32 %v1913, %v1685
        %v1916 = vmul.f32 %v1913, %v1686
        %v1920 = vrot.slane %v1914, 1
        %v1921 = vrot.slane %v1915, 1
        %v1922 = vsel %vm605, %v1920, %v1921
        %v1923 = vrot.slane %v1916, 1
        %v1924 = vsel %vm605, %v1921, %v1923
        %1925 = vrot.lane.b32.xlu0 %v1922, 127
        %v1926 = vpop.permute.xlu0 %1925
        %1927 = vrot.lane.b32.xlu0 %v1924, 127
        %v1928 = vpop.permute.xlu0 %1927
        %v1931 = vadd.f32 %v1855, %v1926
        %v1932 = vadd.f32 %v1856, %v1928
        %s1933 = sld [smem:[#allocation8 + $0x5e]]
        %v1934 = vstv %s1933
        %v1935 = vmul.f32 %v1934, %v1684
        %v1936 = vmul.f32 %v1934, %v1685
        %v1937 = vmul.f32 %v1934, %v1686
        %v1941 = vrot.slane %v1935, 1
        %v1942 = vrot.slane %v1936, 1
        %v1943 = vsel %vm605, %v1941, %v1942
        %v1944 = vrot.slane %v1937, 1
        %v1945 = vsel %vm605, %v1942, %v1944
        %1946 = vrot.lane.b32.xlu0 %v1943, 127
        %v1947 = vpop.permute.xlu0 %1946
        %1948 = vrot.lane.b32.xlu0 %v1945, 127
        %v1949 = vpop.permute.xlu0 %1948
        %v1952 = vadd.f32 %v1872, %v1947
        %v1953 = vadd.f32 %v1873, %v1949
        %s1954 = sld [smem:[#allocation8 + $0x82]]
        %v1955 = vstv %s1954
        %v1956 = vmul.f32 %v1955, %v1684
        %v1957 = vmul.f32 %v1955, %v1685
        %v1958 = vmul.f32 %v1955, %v1686
        %v1962 = vrot.slane %v1956, 1
        %v1963 = vrot.slane %v1957, 1
        %v1964 = vsel %vm605, %v1962, %v1963
        %v1965 = vrot.slane %v1958, 1
        %v1966 = vsel %vm605, %v1963, %v1965
        %1967 = vrot.lane.b32.xlu0 %v1964, 127
        %v1968 = vpop.permute.xlu0 %1967
        %1969 = vrot.lane.b32.xlu0 %v1966, 127
        %v1970 = vpop.permute.xlu0 %1969
        %v1973 = vadd.f32 %v1889, %v1968
        %v1974 = vadd.f32 %v1890, %v1970
        %s1975 = sld [smem:[#allocation8 + $0x17]]
        %v1976 = vstv %s1975
        %v1977 = vmul.f32 %v1976, %v1684
        %v1978 = vmul.f32 %v1976, %v1685
        %v1979 = vmul.f32 %v1976, %v1686
        %v1983 = vrot.slane %v1977, 1
        %v1984 = vrot.slane %v1978, 1
        %v1985 = vsel %vm605, %v1983, %v1984
        %v1986 = vrot.slane %v1979, 1
        %v1987 = vsel %vm605, %v1984, %v1986
        %1988 = vrot.lane.b32.xlu0 %v1985, 126
        %v1989 = vpop.permute.xlu0 %1988
        %1990 = vrot.lane.b32.xlu0 %v1987, 126
        %v1991 = vpop.permute.xlu0 %1990
        %v1994 = vadd.f32 %v1910, %v1989
        %v1995 = vadd.f32 %v1911, %v1991
        %s1996 = sld [smem:[#allocation8 + $0x3b]]
        %v1997 = vstv %s1996
        %v1998 = vmul.f32 %v1997, %v1684
        %v1999 = vmul.f32 %v1997, %v1685
        %v2000 = vmul.f32 %v1997, %v1686
        %v2004 = vrot.slane %v1998, 1
        %v2005 = vrot.slane %v1999, 1
        %v2006 = vsel %vm605, %v2004, %v2005
        %v2007 = vrot.slane %v2000, 1
        %v2008 = vsel %vm605, %v2005, %v2007
        %2009 = vrot.lane.b32.xlu0 %v2006, 126
        %v2010 = vpop.permute.xlu0 %2009
        %2011 = vrot.lane.b32.xlu0 %v2008, 126
        %v2012 = vpop.permute.xlu0 %2011
        %v2015 = vadd.f32 %v1931, %v2010
        %v2016 = vadd.f32 %v1932, %v2012
        %s2017 = sld [smem:[#allocation8 + $0x5f]]
        %v2018 = vstv %s2017
        %v2019 = vmul.f32 %v2018, %v1684
        %v2020 = vmul.f32 %v2018, %v1685
        %v2021 = vmul.f32 %v2018, %v1686
        %v2025 = vrot.slane %v2019, 1
        %v2026 = vrot.slane %v2020, 1
        %v2027 = vsel %vm605, %v2025, %v2026
        %v2028 = vrot.slane %v2021, 1
        %v2029 = vsel %vm605, %v2026, %v2028
        %2030 = vrot.lane.b32.xlu0 %v2027, 126
        %v2031 = vpop.permute.xlu0 %2030
        %2032 = vrot.lane.b32.xlu0 %v2029, 126
        %v2033 = vpop.permute.xlu0 %2032
        %v2036 = vadd.f32 %v1952, %v2031
        %v2037 = vadd.f32 %v1953, %v2033
        %s2038 = sld [smem:[#allocation8 + $0x83]]
        %v2039 = vstv %s2038
        %v2040 = vmul.f32 %v2039, %v1684
        %v2041 = vmul.f32 %v2039, %v1685
        %v2042 = vmul.f32 %v2039, %v1686
        %v2046 = vrot.slane %v2040, 1
        %v2047 = vrot.slane %v2041, 1
        %v2048 = vsel %vm605, %v2046, %v2047
        %v2049 = vrot.slane %v2042, 1
        %v2050 = vsel %vm605, %v2047, %v2049
        %2051 = vrot.lane.b32.xlu0 %v2048, 126
        %v2052 = vpop.permute.xlu0 %2051
        %2053 = vrot.lane.b32.xlu0 %v2050, 126
        %v2054 = vpop.permute.xlu0 %2053
        %v2057 = vadd.f32 %v1973, %v2052
        %v2058 = vadd.f32 %v1974, %v2054
        %s2059 = sld [smem:[#allocation8 + $0x18]]
        %v2060 = vstv %s2059
        %v2061 = vmul.f32 %v2060, %v1684
        %v2062 = vmul.f32 %v2060, %v1685
        %v2063 = vmul.f32 %v2060, %v1686
        %v2067 = vrot.slane %v2061, 2
        %v2068 = vrot.slane %v2062, 2
        %v2069 = vsel %vm842, %v2067, %v2068
        %v2070 = vrot.slane %v2063, 2
        %v2071 = vsel %vm842, %v2068, %v2070
        %v2074 = vadd.f32 %v1994, %v2069
        %v2075 = vadd.f32 %v1995, %v2071
        %s2076 = sld [smem:[#allocation8 + $0x3c]]
        %v2077 = vstv %s2076
        %v2078 = vmul.f32 %v2077, %v1684
        %v2079 = vmul.f32 %v2077, %v1685
        %v2080 = vmul.f32 %v2077, %v1686
        %v2084 = vrot.slane %v2078, 2
        %v2085 = vrot.slane %v2079, 2
        %v2086 = vsel %vm842, %v2084, %v2085
        %v2087 = vrot.slane %v2080, 2
        %v2088 = vsel %vm842, %v2085, %v2087
        %v2091 = vadd.f32 %v2015, %v2086
        %v2092 = vadd.f32 %v2016, %v2088
        %s2093 = sld [smem:[#allocation8 + $0x60]]
        %v2094 = vstv %s2093
        %v2095 = vmul.f32 %v2094, %v1684
        %v2096 = vmul.f32 %v2094, %v1685
        %v2097 = vmul.f32 %v2094, %v1686
        %v2101 = vrot.slane %v2095, 2
        %v2102 = vrot.slane %v2096, 2
        %v2103 = vsel %vm842, %v2101, %v2102
        %v2104 = vrot.slane %v2097, 2
        %v2105 = vsel %vm842, %v2102, %v2104
        %v2108 = vadd.f32 %v2036, %v2103
        %v2109 = vadd.f32 %v2037, %v2105
        %s2110 = sld [smem:[#allocation8 + $0x84]]
        %v2111 = vstv %s2110
        %v2112 = vmul.f32 %v2111, %v1684
        %v2113 = vmul.f32 %v2111, %v1685
        %v2114 = vmul.f32 %v2111, %v1686
        %v2118 = vrot.slane %v2112, 2
        %v2119 = vrot.slane %v2113, 2
        %v2120 = vsel %vm842, %v2118, %v2119
        %v2121 = vrot.slane %v2114, 2
        %v2122 = vsel %vm842, %v2119, %v2121
        %v2125 = vadd.f32 %v2057, %v2120
        %v2126 = vadd.f32 %v2058, %v2122
        %s2127 = sld [smem:[#allocation8 + $0x19]]
        %v2128 = vstv %s2127
        %v2129 = vmul.f32 %v2128, %v1684
        %v2130 = vmul.f32 %v2128, %v1685
        %v2131 = vmul.f32 %v2128, %v1686
        %v2135 = vrot.slane %v2129, 2
        %v2136 = vrot.slane %v2130, 2
        %v2137 = vsel %vm842, %v2135, %v2136
        %v2138 = vrot.slane %v2131, 2
        %v2139 = vsel %vm842, %v2136, %v2138
        %2140 = vrot.lane.b32.xlu0 %v2137, 127
        %v2141 = vpop.permute.xlu0 %2140
        %2142 = vrot.lane.b32.xlu0 %v2139, 127
        %v2143 = vpop.permute.xlu0 %2142
        %v2146 = vadd.f32 %v2074, %v2141
        %v2147 = vadd.f32 %v2075, %v2143
        %s2148 = sld [smem:[#allocation8 + $0x3d]]
        %v2149 = vstv %s2148
        %v2150 = vmul.f32 %v2149, %v1684
        %v2151 = vmul.f32 %v2149, %v1685
        %v2152 = vmul.f32 %v2149, %v1686
        %v2156 = vrot.slane %v2150, 2
        %v2157 = vrot.slane %v2151, 2
        %v2158 = vsel %vm842, %v2156, %v2157
        %v2159 = vrot.slane %v2152, 2
        %v2160 = vsel %vm842, %v2157, %v2159
        %2161 = vrot.lane.b32.xlu0 %v2158, 127
        %v2162 = vpop.permute.xlu0 %2161
        %2163 = vrot.lane.b32.xlu0 %v2160, 127
        %v2164 = vpop.permute.xlu0 %2163
        %v2167 = vadd.f32 %v2091, %v2162
        %v2168 = vadd.f32 %v2092, %v2164
        %s2169 = sld [smem:[#allocation8 + $0x61]]
        %v2170 = vstv %s2169
        %v2171 = vmul.f32 %v2170, %v1684
        %v2172 = vmul.f32 %v2170, %v1685
        %v2173 = vmul.f32 %v2170, %v1686
        %v2177 = vrot.slane %v2171, 2
        %v2178 = vrot.slane %v2172, 2
        %v2179 = vsel %vm842, %v2177, %v2178
        %v2180 = vrot.slane %v2173, 2
        %v2181 = vsel %vm842, %v2178, %v2180
        %2182 = vrot.lane.b32.xlu0 %v2179, 127
        %v2183 = vpop.permute.xlu0 %2182
        %2184 = vrot.lane.b32.xlu0 %v2181, 127
        %v2185 = vpop.permute.xlu0 %2184
        %v2188 = vadd.f32 %v2108, %v2183
        %v2189 = vadd.f32 %v2109, %v2185
        %s2190 = sld [smem:[#allocation8 + $0x85]]
        %v2191 = vstv %s2190
        %v2192 = vmul.f32 %v2191, %v1684
        %v2193 = vmul.f32 %v2191, %v1685
        %v2194 = vmul.f32 %v2191, %v1686
        %v2198 = vrot.slane %v2192, 2
        %v2199 = vrot.slane %v2193, 2
        %v2200 = vsel %vm842, %v2198, %v2199
        %v2201 = vrot.slane %v2194, 2
        %v2202 = vsel %vm842, %v2199, %v2201
        %2203 = vrot.lane.b32.xlu0 %v2200, 127
        %v2204 = vpop.permute.xlu0 %2203
        %2205 = vrot.lane.b32.xlu0 %v2202, 127
        %v2206 = vpop.permute.xlu0 %2205
        %v2209 = vadd.f32 %v2125, %v2204
        %v2210 = vadd.f32 %v2126, %v2206
        %s2211 = sld [smem:[#allocation8 + $0x1a]]
        %v2212 = vstv %s2211
        %v2213 = vmul.f32 %v2212, %v1684
        %v2214 = vmul.f32 %v2212, %v1685
        %v2215 = vmul.f32 %v2212, %v1686
        %v2219 = vrot.slane %v2213, 2
        %v2220 = vrot.slane %v2214, 2
        %v2221 = vsel %vm842, %v2219, %v2220
        %v2222 = vrot.slane %v2215, 2
        %v2223 = vsel %vm842, %v2220, %v2222
        %2224 = vrot.lane.b32.xlu0 %v2221, 126
        %v2225 = vpop.permute.xlu0 %2224
        %2226 = vrot.lane.b32.xlu0 %v2223, 126
        %v2227 = vpop.permute.xlu0 %2226
        %v2230 = vadd.f32 %v2146, %v2225
        %v2231 = vadd.f32 %v2147, %v2227
        %s2232 = sld [smem:[#allocation8 + $0x3e]]
        %v2233 = vstv %s2232
        %v2234 = vmul.f32 %v2233, %v1684
        %v2235 = vmul.f32 %v2233, %v1685
        %v2236 = vmul.f32 %v2233, %v1686
        %v2240 = vrot.slane %v2234, 2
        %v2241 = vrot.slane %v2235, 2
        %v2242 = vsel %vm842, %v2240, %v2241
        %v2243 = vrot.slane %v2236, 2
        %v2244 = vsel %vm842, %v2241, %v2243
        %2245 = vrot.lane.b32.xlu0 %v2242, 126
        %v2246 = vpop.permute.xlu0 %2245
        %2247 = vrot.lane.b32.xlu0 %v2244, 126
        %v2248 = vpop.permute.xlu0 %2247
        %v2251 = vadd.f32 %v2167, %v2246
        %v2252 = vadd.f32 %v2168, %v2248
        %s2253 = sld [smem:[#allocation8 + $0x62]]
        %v2254 = vstv %s2253
        %v2255 = vmul.f32 %v2254, %v1684
        %v2256 = vmul.f32 %v2254, %v1685
        %v2257 = vmul.f32 %v2254, %v1686
        %v2261 = vrot.slane %v2255, 2
        %v2262 = vrot.slane %v2256, 2
        %v2263 = vsel %vm842, %v2261, %v2262
        %v2264 = vrot.slane %v2257, 2
        %v2265 = vsel %vm842, %v2262, %v2264
        %2266 = vrot.lane.b32.xlu0 %v2263, 126
        %v2267 = vpop.permute.xlu0 %2266
        %2268 = vrot.lane.b32.xlu0 %v2265, 126
        %v2269 = vpop.permute.xlu0 %2268
        %v2272 = vadd.f32 %v2188, %v2267
        %v2273 = vadd.f32 %v2189, %v2269
        %s2274 = sld [smem:[#allocation8 + $0x86]]
        %v2275 = vstv %s2274
        %v2276 = vmul.f32 %v2275, %v1684
        %v2277 = vmul.f32 %v2275, %v1685
        %v2278 = vmul.f32 %v2275, %v1686
        %v2282 = vrot.slane %v2276, 2
        %v2283 = vrot.slane %v2277, 2
        %v2284 = vsel %vm842, %v2282, %v2283
        %v2285 = vrot.slane %v2278, 2
        %v2286 = vsel %vm842, %v2283, %v2285
        %2287 = vrot.lane.b32.xlu0 %v2284, 126
        %v2288 = vpop.permute.xlu0 %2287
        %2289 = vrot.lane.b32.xlu0 %v2286, 126
        %v2290 = vpop.permute.xlu0 %2289
        %v2293 = vadd.f32 %v2209, %v2288
        %v2294 = vadd.f32 %v2210, %v2290
        %s2295 = scalar_lea.vmem [#allocation2], 72
        %v2296 = vld [vmem:[%s2295] sm:$0xff]
        %v2297 = vld [vmem:[%s2295 + $0x8] sm:$0xff]
        %v2298 = vld [vmem:[%s2295 + $0x10] sm:$0x3]
        %s2299 = sld [smem:[#allocation8 + $0x1b]]
        %v2300 = vstv %s2299
        %v2301 = vmul.f32 %v2300, %v2296
        %v2302 = vmul.f32 %v2300, %v2297
        %v2303 = vadd.f32 %v2230, %v2301
        %v2304 = vadd.f32 %v2231, %v2302
        %s2305 = sld [smem:[#allocation8 + $0x3f]]
        %v2306 = vstv %s2305
        %v2307 = vmul.f32 %v2306, %v2296
        %v2308 = vmul.f32 %v2306, %v2297
        %v2309 = vadd.f32 %v2251, %v2307
        %v2310 = vadd.f32 %v2252, %v2308
        %s2311 = sld [smem:[#allocation8 + $0x63]]
        %v2312 = vstv %s2311
        %v2313 = vmul.f32 %v2312, %v2296
        %v2314 = vmul.f32 %v2312, %v2297
        %v2315 = vadd.f32 %v2272, %v2313
        %v2316 = vadd.f32 %v2273, %v2314
        %s2317 = sld [smem:[#allocation8 + $0x87]]
        %v2318 = vstv %s2317
        %v2319 = vmul.f32 %v2318, %v2296
        %v2320 = vmul.f32 %v2318, %v2297
        %v2321 = vadd.f32 %v2293, %v2319
        %v2322 = vadd.f32 %v2294, %v2320
        %s2323 = sld [smem:[#allocation8 + $0x1c]]
        %v2324 = vstv %s2323
        %v2325 = vmul.f32 %v2324, %v2296
        %v2326 = vmul.f32 %v2324, %v2297
        %2329 = vrot.lane.b32.xlu0 %v2325, 127
        %v2330 = vpop.permute.xlu0 %2329
        %2331 = vrot.lane.b32.xlu0 %v2326, 127
        %v2332 = vpop.permute.xlu0 %2331
        %v2335 = vadd.f32 %v2303, %v2330
        %v2336 = vadd.f32 %v2304, %v2332
        %s2337 = sld [smem:[#allocation8 + $0x40]]
        %v2338 = vstv %s2337
        %v2339 = vmul.f32 %v2338, %v2296
        %v2340 = vmul.f32 %v2338, %v2297
        %2343 = vrot.lane.b32.xlu0 %v2339, 127
        %v2344 = vpop.permute.xlu0 %2343
        %2345 = vrot.lane.b32.xlu0 %v2340, 127
        %v2346 = vpop.permute.xlu0 %2345
        %v2349 = vadd.f32 %v2309, %v2344
        %v2350 = vadd.f32 %v2310, %v2346
        %s2351 = sld [smem:[#allocation8 + $0x64]]
        %v2352 = vstv %s2351
        %v2353 = vmul.f32 %v2352, %v2296
        %v2354 = vmul.f32 %v2352, %v2297
        %2357 = vrot.lane.b32.xlu0 %v2353, 127
        %v2358 = vpop.permute.xlu0 %2357
        %2359 = vrot.lane.b32.xlu0 %v2354, 127
        %v2360 = vpop.permute.xlu0 %2359
        %v2363 = vadd.f32 %v2315, %v2358
        %v2364 = vadd.f32 %v2316, %v2360
        %s2365 = sld [smem:[#allocation8 + $0x88]]
        %v2366 = vstv %s2365
        %v2367 = vmul.f32 %v2366, %v2296
        %v2368 = vmul.f32 %v2366, %v2297
        %2371 = vrot.lane.b32.xlu0 %v2367, 127
        %v2372 = vpop.permute.xlu0 %2371
        %2373 = vrot.lane.b32.xlu0 %v2368, 127
        %v2374 = vpop.permute.xlu0 %2373
        %v2377 = vadd.f32 %v2321, %v2372
        %v2378 = vadd.f32 %v2322, %v2374
        %s2379 = sld [smem:[#allocation8 + $0x1d]]
        %v2380 = vstv %s2379
        %v2381 = vmul.f32 %v2380, %v2296
        %v2382 = vmul.f32 %v2380, %v2297
        %2385 = vrot.lane.b32.xlu0 %v2381, 126
        %v2386 = vpop.permute.xlu0 %2385
        %2387 = vrot.lane.b32.xlu0 %v2382, 126
        %v2388 = vpop.permute.xlu0 %2387
        %v2391 = vadd.f32 %v2335, %v2386
        %v2392 = vadd.f32 %v2336, %v2388
        %s2393 = sld [smem:[#allocation8 + $0x41]]
        %v2394 = vstv %s2393
        %v2395 = vmul.f32 %v2394, %v2296
        %v2396 = vmul.f32 %v2394, %v2297
        %2399 = vrot.lane.b32.xlu0 %v2395, 126
        %v2400 = vpop.permute.xlu0 %2399
        %2401 = vrot.lane.b32.xlu0 %v2396, 126
        %v2402 = vpop.permute.xlu0 %2401
        %v2405 = vadd.f32 %v2349, %v2400
        %v2406 = vadd.f32 %v2350, %v2402
        %s2407 = sld [smem:[#allocation8 + $0x65]]
        %v2408 = vstv %s2407
        %v2409 = vmul.f32 %v2408, %v2296
        %v2410 = vmul.f32 %v2408, %v2297
        %2413 = vrot.lane.b32.xlu0 %v2409, 126
        %v2414 = vpop.permute.xlu0 %2413
        %2415 = vrot.lane.b32.xlu0 %v2410, 126
        %v2416 = vpop.permute.xlu0 %2415
        %v2419 = vadd.f32 %v2363, %v2414
        %v2420 = vadd.f32 %v2364, %v2416
        %s2421 = sld [smem:[#allocation8 + $0x89]]
        %v2422 = vstv %s2421
        %v2423 = vmul.f32 %v2422, %v2296
        %v2424 = vmul.f32 %v2422, %v2297
        %2427 = vrot.lane.b32.xlu0 %v2423, 126
        %v2428 = vpop.permute.xlu0 %2427
        %2429 = vrot.lane.b32.xlu0 %v2424, 126
        %v2430 = vpop.permute.xlu0 %2429
        %v2433 = vadd.f32 %v2377, %v2428
        %v2434 = vadd.f32 %v2378, %v2430
        %s2435 = sld [smem:[#allocation8 + $0x1e]]
        %v2436 = vstv %s2435
        %v2437 = vmul.f32 %v2436, %v2296
        %v2438 = vmul.f32 %v2436, %v2297
        %v2439 = vmul.f32 %v2436, %v2298
        %v2443 = vrot.slane %v2437, 1
        %v2444 = vrot.slane %v2438, 1
        %v2445 = vsel %vm605, %v2443, %v2444
        %v2446 = vrot.slane %v2439, 1
        %v2447 = vsel %vm605, %v2444, %v2446
        %v2450 = vadd.f32 %v2391, %v2445
        %v2451 = vadd.f32 %v2392, %v2447
        %s2452 = sld [smem:[#allocation8 + $0x42]]
        %v2453 = vstv %s2452
        %v2454 = vmul.f32 %v2453, %v2296
        %v2455 = vmul.f32 %v2453, %v2297
        %v2456 = vmul.f32 %v2453, %v2298
        %v2460 = vrot.slane %v2454, 1
        %v2461 = vrot.slane %v2455, 1
        %v2462 = vsel %vm605, %v2460, %v2461
        %v2463 = vrot.slane %v2456, 1
        %v2464 = vsel %vm605, %v2461, %v2463
        %v2467 = vadd.f32 %v2405, %v2462
        %v2468 = vadd.f32 %v2406, %v2464
        %s2469 = sld [smem:[#allocation8 + $0x66]]
        %v2470 = vstv %s2469
        %v2471 = vmul.f32 %v2470, %v2296
        %v2472 = vmul.f32 %v2470, %v2297
        %v2473 = vmul.f32 %v2470, %v2298
        %v2477 = vrot.slane %v2471, 1
        %v2478 = vrot.slane %v2472, 1
        %v2479 = vsel %vm605, %v2477, %v2478
        %v2480 = vrot.slane %v2473, 1
        %v2481 = vsel %vm605, %v2478, %v2480
        %v2484 = vadd.f32 %v2419, %v2479
        %v2485 = vadd.f32 %v2420, %v2481
        %s2486 = sld [smem:[#allocation8 + $0x8a]]
        %v2487 = vstv %s2486
        %v2488 = vmul.f32 %v2487, %v2296
        %v2489 = vmul.f32 %v2487, %v2297
        %v2490 = vmul.f32 %v2487, %v2298
        %v2494 = vrot.slane %v2488, 1
        %v2495 = vrot.slane %v2489, 1
        %v2496 = vsel %vm605, %v2494, %v2495
        %v2497 = vrot.slane %v2490, 1
        %v2498 = vsel %vm605, %v2495, %v2497
        %v2501 = vadd.f32 %v2433, %v2496
        %v2502 = vadd.f32 %v2434, %v2498
        %s2503 = sld [smem:[#allocation8 + $0x1f]]
        %v2504 = vstv %s2503
        %v2505 = vmul.f32 %v2504, %v2296
        %v2506 = vmul.f32 %v2504, %v2297
        %v2507 = vmul.f32 %v2504, %v2298
        %v2511 = vrot.slane %v2505, 1
        %v2512 = vrot.slane %v2506, 1
        %v2513 = vsel %vm605, %v2511, %v2512
        %v2514 = vrot.slane %v2507, 1
        %v2515 = vsel %vm605, %v2512, %v2514
        %2516 = vrot.lane.b32.xlu0 %v2513, 127
        %v2517 = vpop.permute.xlu0 %2516
        %2518 = vrot.lane.b32.xlu0 %v2515, 127
        %v2519 = vpop.permute.xlu0 %2518
        %v2522 = vadd.f32 %v2450, %v2517
        %v2523 = vadd.f32 %v2451, %v2519
        %s2524 = sld [smem:[#allocation8 + $0x43]]
        %v2525 = vstv %s2524
        %v2526 = vmul.f32 %v2525, %v2296
        %v2527 = vmul.f32 %v2525, %v2297
        %v2528 = vmul.f32 %v2525, %v2298
        %v2532 = vrot.slane %v2526, 1
        %v2533 = vrot.slane %v2527, 1
        %v2534 = vsel %vm605, %v2532, %v2533
        %v2535 = vrot.slane %v2528, 1
        %v2536 = vsel %vm605, %v2533, %v2535
        %2537 = vrot.lane.b32.xlu0 %v2534, 127
        %v2538 = vpop.permute.xlu0 %2537
        %2539 = vrot.lane.b32.xlu0 %v2536, 127
        %v2540 = vpop.permute.xlu0 %2539
        %v2543 = vadd.f32 %v2467, %v2538
        %v2544 = vadd.f32 %v2468, %v2540
        %s2545 = sld [smem:[#allocation8 + $0x67]]
        %v2546 = vstv %s2545
        %v2547 = vmul.f32 %v2546, %v2296
        %v2548 = vmul.f32 %v2546, %v2297
        %v2549 = vmul.f32 %v2546, %v2298
        %v2553 = vrot.slane %v2547, 1
        %v2554 = vrot.slane %v2548, 1
        %v2555 = vsel %vm605, %v2553, %v2554
        %v2556 = vrot.slane %v2549, 1
        %v2557 = vsel %vm605, %v2554, %v2556
        %2558 = vrot.lane.b32.xlu0 %v2555, 127
        %v2559 = vpop.permute.xlu0 %2558
        %2560 = vrot.lane.b32.xlu0 %v2557, 127
        %v2561 = vpop.permute.xlu0 %2560
        %v2564 = vadd.f32 %v2484, %v2559
        %v2565 = vadd.f32 %v2485, %v2561
        %s2566 = sld [smem:[#allocation8 + $0x8b]]
        %v2567 = vstv %s2566
        %v2568 = vmul.f32 %v2567, %v2296
        %v2569 = vmul.f32 %v2567, %v2297
        %v2570 = vmul.f32 %v2567, %v2298
        %v2574 = vrot.slane %v2568, 1
        %v2575 = vrot.slane %v2569, 1
        %v2576 = vsel %vm605, %v2574, %v2575
        %v2577 = vrot.slane %v2570, 1
        %v2578 = vsel %vm605, %v2575, %v2577
        %2579 = vrot.lane.b32.xlu0 %v2576, 127
        %v2580 = vpop.permute.xlu0 %2579
        %2581 = vrot.lane.b32.xlu0 %v2578, 127
        %v2582 = vpop.permute.xlu0 %2581
        %v2585 = vadd.f32 %v2501, %v2580
        %v2586 = vadd.f32 %v2502, %v2582
        %s2587 = sld [smem:[#allocation8 + $0x20]]
        %v2588 = vstv %s2587
        %v2589 = vmul.f32 %v2588, %v2296
        %v2590 = vmul.f32 %v2588, %v2297
        %v2591 = vmul.f32 %v2588, %v2298
        %v2595 = vrot.slane %v2589, 1
        %v2596 = vrot.slane %v2590, 1
        %v2597 = vsel %vm605, %v2595, %v2596
        %v2598 = vrot.slane %v2591, 1
        %v2599 = vsel %vm605, %v2596, %v2598
        %2600 = vrot.lane.b32.xlu0 %v2597, 126
        %v2601 = vpop.permute.xlu0 %2600
        %2602 = vrot.lane.b32.xlu0 %v2599, 126
        %v2603 = vpop.permute.xlu0 %2602
        %v2606 = vadd.f32 %v2522, %v2601
        %v2607 = vadd.f32 %v2523, %v2603
        %s2608 = sld [smem:[#allocation8 + $0x44]]
        %v2609 = vstv %s2608
        %v2610 = vmul.f32 %v2609, %v2296
        %v2611 = vmul.f32 %v2609, %v2297
        %v2612 = vmul.f32 %v2609, %v2298
        %v2616 = vrot.slane %v2610, 1
        %v2617 = vrot.slane %v2611, 1
        %v2618 = vsel %vm605, %v2616, %v2617
        %v2619 = vrot.slane %v2612, 1
        %v2620 = vsel %vm605, %v2617, %v2619
        %2621 = vrot.lane.b32.xlu0 %v2618, 126
        %v2622 = vpop.permute.xlu0 %2621
        %2623 = vrot.lane.b32.xlu0 %v2620, 126
        %v2624 = vpop.permute.xlu0 %2623
        %v2627 = vadd.f32 %v2543, %v2622
        %v2628 = vadd.f32 %v2544, %v2624
        %s2629 = sld [smem:[#allocation8 + $0x68]]
        %v2630 = vstv %s2629
        %v2631 = vmul.f32 %v2630, %v2296
        %v2632 = vmul.f32 %v2630, %v2297
        %v2633 = vmul.f32 %v2630, %v2298
        %v2637 = vrot.slane %v2631, 1
        %v2638 = vrot.slane %v2632, 1
        %v2639 = vsel %vm605, %v2637, %v2638
        %v2640 = vrot.slane %v2633, 1
        %v2641 = vsel %vm605, %v2638, %v2640
        %2642 = vrot.lane.b32.xlu0 %v2639, 126
        %v2643 = vpop.permute.xlu0 %2642
        %2644 = vrot.lane.b32.xlu0 %v2641, 126
        %v2645 = vpop.permute.xlu0 %2644
        %v2648 = vadd.f32 %v2564, %v2643
        %v2649 = vadd.f32 %v2565, %v2645
        %s2650 = sld [smem:[#allocation8 + $0x8c]]
        %v2651 = vstv %s2650
        %v2652 = vmul.f32 %v2651, %v2296
        %v2653 = vmul.f32 %v2651, %v2297
        %v2654 = vmul.f32 %v2651, %v2298
        %v2658 = vrot.slane %v2652, 1
        %v2659 = vrot.slane %v2653, 1
        %v2660 = vsel %vm605, %v2658, %v2659
        %v2661 = vrot.slane %v2654, 1
        %v2662 = vsel %vm605, %v2659, %v2661
        %2663 = vrot.lane.b32.xlu0 %v2660, 126
        %v2664 = vpop.permute.xlu0 %2663
        %2665 = vrot.lane.b32.xlu0 %v2662, 126
        %v2666 = vpop.permute.xlu0 %2665
        %v2669 = vadd.f32 %v2585, %v2664
        %v2670 = vadd.f32 %v2586, %v2666
        %s2671 = sld [smem:[#allocation8 + $0x21]]
        %v2672 = vstv %s2671
        %v2673 = vmul.f32 %v2672, %v2296
        %v2674 = vmul.f32 %v2672, %v2297
        %v2675 = vmul.f32 %v2672, %v2298
        %v2679 = vrot.slane %v2673, 2
        %v2680 = vrot.slane %v2674, 2
        %v2681 = vsel %vm842, %v2679, %v2680
        %v2682 = vrot.slane %v2675, 2
        %v2683 = vsel %vm842, %v2680, %v2682
        %v2686 = vadd.f32 %v2606, %v2681
        %v2687 = vadd.f32 %v2607, %v2683
        %s2688 = sld [smem:[#allocation8 + $0x45]]
        %v2689 = vstv %s2688
        %v2690 = vmul.f32 %v2689, %v2296
        %v2691 = vmul.f32 %v2689, %v2297
        %v2692 = vmul.f32 %v2689, %v2298
        %v2696 = vrot.slane %v2690, 2
        %v2697 = vrot.slane %v2691, 2
        %v2698 = vsel %vm842, %v2696, %v2697
        %v2699 = vrot.slane %v2692, 2
        %v2700 = vsel %vm842, %v2697, %v2699
        %v2703 = vadd.f32 %v2627, %v2698
        %v2704 = vadd.f32 %v2628, %v2700
        %s2705 = sld [smem:[#allocation8 + $0x69]]
        %v2706 = vstv %s2705
        %v2707 = vmul.f32 %v2706, %v2296
        %v2708 = vmul.f32 %v2706, %v2297
        %v2709 = vmul.f32 %v2706, %v2298
        %v2713 = vrot.slane %v2707, 2
        %v2714 = vrot.slane %v2708, 2
        %v2715 = vsel %vm842, %v2713, %v2714
        %v2716 = vrot.slane %v2709, 2
        %v2717 = vsel %vm842, %v2714, %v2716
        %v2720 = vadd.f32 %v2648, %v2715
        %v2721 = vadd.f32 %v2649, %v2717
        %s2722 = sld [smem:[#allocation8 + $0x8d]]
        %v2723 = vstv %s2722
        %v2724 = vmul.f32 %v2723, %v2296
        %v2725 = vmul.f32 %v2723, %v2297
        %v2726 = vmul.f32 %v2723, %v2298
        %v2730 = vrot.slane %v2724, 2
        %v2731 = vrot.slane %v2725, 2
        %v2732 = vsel %vm842, %v2730, %v2731
        %v2733 = vrot.slane %v2726, 2
        %v2734 = vsel %vm842, %v2731, %v2733
        %v2737 = vadd.f32 %v2669, %v2732
        %v2738 = vadd.f32 %v2670, %v2734
        %s2739 = sld [smem:[#allocation8 + $0x22]]
        %v2740 = vstv %s2739
        %v2741 = vmul.f32 %v2740, %v2296
        %v2742 = vmul.f32 %v2740, %v2297
        %v2743 = vmul.f32 %v2740, %v2298
        %v2747 = vrot.slane %v2741, 2
        %v2748 = vrot.slane %v2742, 2
        %v2749 = vsel %vm842, %v2747, %v2748
        %v2750 = vrot.slane %v2743, 2
        %v2751 = vsel %vm842, %v2748, %v2750
        %2752 = vrot.lane.b32.xlu0 %v2749, 127
        %v2753 = vpop.permute.xlu0 %2752
        %2754 = vrot.lane.b32.xlu0 %v2751, 127
        %v2755 = vpop.permute.xlu0 %2754
        %v2758 = vadd.f32 %v2686, %v2753
        %v2759 = vadd.f32 %v2687, %v2755
        %s2760 = sld [smem:[#allocation8 + $0x46]]
        %v2761 = vstv %s2760
        %v2762 = vmul.f32 %v2761, %v2296
        %v2763 = vmul.f32 %v2761, %v2297
        %v2764 = vmul.f32 %v2761, %v2298
        %v2768 = vrot.slane %v2762, 2
        %v2769 = vrot.slane %v2763, 2
        %v2770 = vsel %vm842, %v2768, %v2769
        %v2771 = vrot.slane %v2764, 2
        %v2772 = vsel %vm842, %v2769, %v2771
        %2773 = vrot.lane.b32.xlu0 %v2770, 127
        %v2774 = vpop.permute.xlu0 %2773
        %2775 = vrot.lane.b32.xlu0 %v2772, 127
        %v2776 = vpop.permute.xlu0 %2775
        %v2779 = vadd.f32 %v2703, %v2774
        %v2780 = vadd.f32 %v2704, %v2776
        %s2781 = sld [smem:[#allocation8 + $0x6a]]
        %v2782 = vstv %s2781
        %v2783 = vmul.f32 %v2782, %v2296
        %v2784 = vmul.f32 %v2782, %v2297
        %v2785 = vmul.f32 %v2782, %v2298
        %v2789 = vrot.slane %v2783, 2
        %v2790 = vrot.slane %v2784, 2
        %v2791 = vsel %vm842, %v2789, %v2790
        %v2792 = vrot.slane %v2785, 2
        %v2793 = vsel %vm842, %v2790, %v2792
        %2794 = vrot.lane.b32.xlu0 %v2791, 127
        %v2795 = vpop.permute.xlu0 %2794
        %2796 = vrot.lane.b32.xlu0 %v2793, 127
        %v2797 = vpop.permute.xlu0 %2796
        %v2800 = vadd.f32 %v2720, %v2795
        %v2801 = vadd.f32 %v2721, %v2797
        %s2802 = sld [smem:[#allocation8 + $0x8e]]
        %v2803 = vstv %s2802
        %v2804 = vmul.f32 %v2803, %v2296
        %v2805 = vmul.f32 %v2803, %v2297
        %v2806 = vmul.f32 %v2803, %v2298
        %v2810 = vrot.slane %v2804, 2
        %v2811 = vrot.slane %v2805, 2
        %v2812 = vsel %vm842, %v2810, %v2811
        %v2813 = vrot.slane %v2806, 2
        %v2814 = vsel %vm842, %v2811, %v2813
        %2815 = vrot.lane.b32.xlu0 %v2812, 127
        %v2816 = vpop.permute.xlu0 %2815
        %2817 = vrot.lane.b32.xlu0 %v2814, 127
        %v2818 = vpop.permute.xlu0 %2817
        %v2821 = vadd.f32 %v2737, %v2816
        %v2822 = vadd.f32 %v2738, %v2818
        %s2823 = sld [smem:[#allocation8 + $0x23]]
        %v2824 = vstv %s2823
        %v2825 = vmul.f32 %v2824, %v2296
        %v2826 = vmul.f32 %v2824, %v2297
        %v2827 = vmul.f32 %v2824, %v2298
        %v2831 = vrot.slane %v2825, 2
        %v2832 = vrot.slane %v2826, 2
        %v2833 = vsel %vm842, %v2831, %v2832
        %v2834 = vrot.slane %v2827, 2
        %v2835 = vsel %vm842, %v2832, %v2834
        %2836 = vrot.lane.b32.xlu0 %v2833, 126
        %v2837 = vpop.permute.xlu0 %2836
        %2838 = vrot.lane.b32.xlu0 %v2835, 126
        %v2839 = vpop.permute.xlu0 %2838
        %v2842 = vadd.f32 %v2758, %v2837
        %v2843 = vadd.f32 %v2759, %v2839
        %s2844 = sld [smem:[#allocation8 + $0x47]]
        %v2845 = vstv %s2844
        %v2846 = vmul.f32 %v2845, %v2296
        %v2847 = vmul.f32 %v2845, %v2297
        %v2848 = vmul.f32 %v2845, %v2298
        %v2852 = vrot.slane %v2846, 2
        %v2853 = vrot.slane %v2847, 2
        %v2854 = vsel %vm842, %v2852, %v2853
        %v2855 = vrot.slane %v2848, 2
        %v2856 = vsel %vm842, %v2853, %v2855
        %2857 = vrot.lane.b32.xlu0 %v2854, 126
        %v2858 = vpop.permute.xlu0 %2857
        %2859 = vrot.lane.b32.xlu0 %v2856, 126
        %v2860 = vpop.permute.xlu0 %2859
        %v2863 = vadd.f32 %v2779, %v2858
        %v2864 = vadd.f32 %v2780, %v2860
        %s2865 = sld [smem:[#allocation8 + $0x6b]]
        %v2866 = vstv %s2865
        %v2867 = vmul.f32 %v2866, %v2296
        %v2868 = vmul.f32 %v2866, %v2297
        %v2869 = vmul.f32 %v2866, %v2298
        %v2873 = vrot.slane %v2867, 2
        %v2874 = vrot.slane %v2868, 2
        %v2875 = vsel %vm842, %v2873, %v2874
        %v2876 = vrot.slane %v2869, 2
        %v2877 = vsel %vm842, %v2874, %v2876
        %2878 = vrot.lane.b32.xlu0 %v2875, 126
        %v2879 = vpop.permute.xlu0 %2878
        %2880 = vrot.lane.b32.xlu0 %v2877, 126
        %v2881 = vpop.permute.xlu0 %2880
        %v2884 = vadd.f32 %v2800, %v2879
        %v2885 = vadd.f32 %v2801, %v2881
        %s2886 = sld [smem:[#allocation8 + $0x8f]]
        %v2887 = vstv %s2886
        %v2888 = vmul.f32 %v2887, %v2296
        %v2889 = vmul.f32 %v2887, %v2297
        %v2890 = vmul.f32 %v2887, %v2298
        %v2894 = vrot.slane %v2888, 2
        %v2895 = vrot.slane %v2889, 2
        %v2896 = vsel %vm842, %v2894, %v2895
        %v2897 = vrot.slane %v2890, 2
        %v2898 = vsel %vm842, %v2895, %v2897
        %2899 = vrot.lane.b32.xlu0 %v2896, 126
        %v2900 = vpop.permute.xlu0 %2899
        %2901 = vrot.lane.b32.xlu0 %v2898, 126
        %v2902 = vpop.permute.xlu0 %2901
        %v2905 = vadd.f32 %v2821, %v2900
        %v2906 = vadd.f32 %v2822, %v2902
        %s2907 = sld [smem:[#allocation9]]
        %v2908 = vstv %s2907
        %v2909 = vadd.f32 %v2842, %v2908
        %v2910 = vadd.f32 %v2843, %v2908
        %v2911 = vmax.f32 %v2909, 0.0
        %v2912 = vmax.f32 %v2910, 0.0
        %s2913 = sld [smem:[#allocation9 + $0x1]]
        %v2914 = vstv %s2913
        %v2915 = vadd.f32 %v2863, %v2914
        %v2916 = vadd.f32 %v2864, %v2914
        %v2917 = vmax.f32 %v2915, 0.0
        %v2918 = vmax.f32 %v2916, 0.0
        %s2919 = sld [smem:[#allocation9 + $0x2]]
        %v2920 = vstv %s2919
        %v2921 = vadd.f32 %v2884, %v2920
        %v2922 = vadd.f32 %v2885, %v2920
        %v2923 = vmax.f32 %v2921, 0.0
        %v2924 = vmax.f32 %v2922, 0.0
        %s2925 = sld [smem:[#allocation9 + $0x3]]
        %v2926 = vstv %s2925
        %v2927 = vadd.f32 %v2905, %v2926
        %v2928 = vadd.f32 %v2906, %v2926
        %v2929 = vmax.f32 %v2927, 0.0
        %v2930 = vmax.f32 %v2928, 0.0
        %2933 = vrot.lane.b32.xlu0 %v2911, 1
        %v2934 = vpop.permute.xlu0 %2933
        %2935 = vrot.lane.b32.xlu0 %v2912, 1
        %v2936 = vpop.permute.xlu0 %2935
        %2939 = vst.msk [vmem:[#allocation2 + $0x1] sm:$0xff] %vm449, %v2934
        %2940 = vst.msk [vmem:[#allocation2 + $0x9] sm:$0xff] %vm449, %v2936
        %2943 = vrot.lane.b32.xlu0 %v2917, 1
        %v2944 = vpop.permute.xlu0 %2943
        %2945 = vrot.lane.b32.xlu0 %v2918, 1
        %v2946 = vpop.permute.xlu0 %2945
        %2949 = vst.msk [vmem:[%s1071 + $0x1] sm:$0xff] %vm449, %v2944
        %2950 = vst.msk [vmem:[%s1071 + $0x9] sm:$0xff] %vm449, %v2946
        %2953 = vrot.lane.b32.xlu0 %v2923, 1
        %v2954 = vpop.permute.xlu0 %2953
        %2955 = vrot.lane.b32.xlu0 %v2924, 1
        %v2956 = vpop.permute.xlu0 %2955
        %2959 = vst.msk [vmem:[%s1683 + $0x1] sm:$0xff] %vm449, %v2954
        %2960 = vst.msk [vmem:[%s1683 + $0x9] sm:$0xff] %vm449, %v2956
        %2963 = vrot.lane.b32.xlu0 %v2929, 1
        %v2964 = vpop.permute.xlu0 %2963
        %2965 = vrot.lane.b32.xlu0 %v2930, 1
        %v2966 = vpop.permute.xlu0 %2965
        %2969 = vst.msk [vmem:[%s2295 + $0x1] sm:$0xff] %vm449, %v2964
        %2970 = vst.msk [vmem:[%s2295 + $0x9] sm:$0xff] %vm449, %v2966
        %v2971 = vld [vmem:[#allocation2] sm:$0xff]
        %v2972 = vld [vmem:[#allocation2 + $0x8] sm:$0xff]
        %v2973 = vld [vmem:[#allocation2 + $0x10] sm:$0x3]
        %s2974 = sld [smem:[#allocation10]]
        %v2975 = vstv %s2974
        %v2976 = vmul.f32 %v2975, %v2971
        %v2977 = vmul.f32 %v2975, %v2972
        %v2978 = vadd.f32 %v2976, 0.0
        %v2979 = vadd.f32 %v2977, 0.0
        %s2980 = sld [smem:[#allocation10 + $0x24]]
        %v2981 = vstv %s2980
        %v2982 = vmul.f32 %v2981, %v2971
        %v2983 = vmul.f32 %v2981, %v2972
        %v2984 = vadd.f32 %v2982, 0.0
        %v2985 = vadd.f32 %v2983, 0.0
        %s2986 = sld [smem:[#allocation10 + $0x48]]
        %v2987 = vstv %s2986
        %v2988 = vmul.f32 %v2987, %v2971
        %v2989 = vmul.f32 %v2987, %v2972
        %v2990 = vadd.f32 %v2988, 0.0
        %v2991 = vadd.f32 %v2989, 0.0
        %s2992 = sld [smem:[#allocation10 + $0x6c]]
        %v2993 = vstv %s2992
        %v2994 = vmul.f32 %v2993, %v2971
        %v2995 = vmul.f32 %v2993, %v2972
        %v2996 = vadd.f32 %v2994, 0.0
        %v2997 = vadd.f32 %v2995, 0.0
        %s2998 = sld [smem:[#allocation10 + $0x1]]
        %v2999 = vstv %s2998
        %v3000 = vmul.f32 %v2999, %v2971
        %v3001 = vmul.f32 %v2999, %v2972
        %3004 = vrot.lane.b32.xlu0 %v3000, 127
        %v3005 = vpop.permute.xlu0 %3004
        %3006 = vrot.lane.b32.xlu0 %v3001, 127
        %v3007 = vpop.permute.xlu0 %3006
        %v3010 = vadd.f32 %v2978, %v3005
        %v3011 = vadd.f32 %v2979, %v3007
        %s3012 = sld [smem:[#allocation10 + $0x25]]
        %v3013 = vstv %s3012
        %v3014 = vmul.f32 %v3013, %v2971
        %v3015 = vmul.f32 %v3013, %v2972
        %3018 = vrot.lane.b32.xlu0 %v3014, 127
        %v3019 = vpop.permute.xlu0 %3018
        %3020 = vrot.lane.b32.xlu0 %v3015, 127
        %v3021 = vpop.permute.xlu0 %3020
        %v3024 = vadd.f32 %v2984, %v3019
        %v3025 = vadd.f32 %v2985, %v3021
        %s3026 = sld [smem:[#allocation10 + $0x49]]
        %v3027 = vstv %s3026
        %v3028 = vmul.f32 %v3027, %v2971
        %v3029 = vmul.f32 %v3027, %v2972
        %3032 = vrot.lane.b32.xlu0 %v3028, 127
        %v3033 = vpop.permute.xlu0 %3032
        %3034 = vrot.lane.b32.xlu0 %v3029, 127
        %v3035 = vpop.permute.xlu0 %3034
        %v3038 = vadd.f32 %v2990, %v3033
        %v3039 = vadd.f32 %v2991, %v3035
        %s3040 = sld [smem:[#allocation10 + $0x6d]]
        %v3041 = vstv %s3040
        %v3042 = vmul.f32 %v3041, %v2971
        %v3043 = vmul.f32 %v3041, %v2972
        %3046 = vrot.lane.b32.xlu0 %v3042, 127
        %v3047 = vpop.permute.xlu0 %3046
        %3048 = vrot.lane.b32.xlu0 %v3043, 127
        %v3049 = vpop.permute.xlu0 %3048
        %v3052 = vadd.f32 %v2996, %v3047
        %v3053 = vadd.f32 %v2997, %v3049
        %s3054 = sld [smem:[#allocation10 + $0x2]]
        %v3055 = vstv %s3054
        %v3056 = vmul.f32 %v3055, %v2971
        %v3057 = vmul.f32 %v3055, %v2972
        %3060 = vrot.lane.b32.xlu0 %v3056, 126
        %v3061 = vpop.permute.xlu0 %3060
        %3062 = vrot.lane.b32.xlu0 %v3057, 126
        %v3063 = vpop.permute.xlu0 %3062
        %v3066 = vadd.f32 %v3010, %v3061
        %v3067 = vadd.f32 %v3011, %v3063
        %s3068 = sld [smem:[#allocation10 + $0x26]]
        %v3069 = vstv %s3068
        %v3070 = vmul.f32 %v3069, %v2971
        %v3071 = vmul.f32 %v3069, %v2972
        %3074 = vrot.lane.b32.xlu0 %v3070, 126
        %v3075 = vpop.permute.xlu0 %3074
        %3076 = vrot.lane.b32.xlu0 %v3071, 126
        %v3077 = vpop.permute.xlu0 %3076
        %v3080 = vadd.f32 %v3024, %v3075
        %v3081 = vadd.f32 %v3025, %v3077
        %s3082 = sld [smem:[#allocation10 + $0x4a]]
        %v3083 = vstv %s3082
        %v3084 = vmul.f32 %v3083, %v2971
        %v3085 = vmul.f32 %v3083, %v2972
        %3088 = vrot.lane.b32.xlu0 %v3084, 126
        %v3089 = vpop.permute.xlu0 %3088
        %3090 = vrot.lane.b32.xlu0 %v3085, 126
        %v3091 = vpop.permute.xlu0 %3090
        %v3094 = vadd.f32 %v3038, %v3089
        %v3095 = vadd.f32 %v3039, %v3091
        %s3096 = sld [smem:[#allocation10 + $0x6e]]
        %v3097 = vstv %s3096
        %v3098 = vmul.f32 %v3097, %v2971
        %v3099 = vmul.f32 %v3097, %v2972
        %3102 = vrot.lane.b32.xlu0 %v3098, 126
        %v3103 = vpop.permute.xlu0 %3102
        %3104 = vrot.lane.b32.xlu0 %v3099, 126
        %v3105 = vpop.permute.xlu0 %3104
        %v3108 = vadd.f32 %v3052, %v3103
        %v3109 = vadd.f32 %v3053, %v3105
        %s3110 = sld [smem:[#allocation10 + $0x3]]
        %v3111 = vstv %s3110
        %v3112 = vmul.f32 %v3111, %v2971
        %v3113 = vmul.f32 %v3111, %v2972
        %v3114 = vmul.f32 %v3111, %v2973
        %v3118 = vrot.slane %v3112, 1
        %v3119 = vrot.slane %v3113, 1
        %v3120 = vsel %vm605, %v3118, %v3119
        %v3121 = vrot.slane %v3114, 1
        %v3122 = vsel %vm605, %v3119, %v3121
        %v3125 = vadd.f32 %v3066, %v3120
        %v3126 = vadd.f32 %v3067, %v3122
        %s3127 = sld [smem:[#allocation10 + $0x27]]
        %v3128 = vstv %s3127
        %v3129 = vmul.f32 %v3128, %v2971
        %v3130 = vmul.f32 %v3128, %v2972
        %v3131 = vmul.f32 %v3128, %v2973
        %v3135 = vrot.slane %v3129, 1
        %v3136 = vrot.slane %v3130, 1
        %v3137 = vsel %vm605, %v3135, %v3136
        %v3138 = vrot.slane %v3131, 1
        %v3139 = vsel %vm605, %v3136, %v3138
        %v3142 = vadd.f32 %v3080, %v3137
        %v3143 = vadd.f32 %v3081, %v3139
        %s3144 = sld [smem:[#allocation10 + $0x4b]]
        %v3145 = vstv %s3144
        %v3146 = vmul.f32 %v3145, %v2971
        %v3147 = vmul.f32 %v3145, %v2972
        %v3148 = vmul.f32 %v3145, %v2973
        %v3152 = vrot.slane %v3146, 1
        %v3153 = vrot.slane %v3147, 1
        %v3154 = vsel %vm605, %v3152, %v3153
        %v3155 = vrot.slane %v3148, 1
        %v3156 = vsel %vm605, %v3153, %v3155
        %v3159 = vadd.f32 %v3094, %v3154
        %v3160 = vadd.f32 %v3095, %v3156
        %s3161 = sld [smem:[#allocation10 + $0x6f]]
        %v3162 = vstv %s3161
        %v3163 = vmul.f32 %v3162, %v2971
        %v3164 = vmul.f32 %v3162, %v2972
        %v3165 = vmul.f32 %v3162, %v2973
        %v3169 = vrot.slane %v3163, 1
        %v3170 = vrot.slane %v3164, 1
        %v3171 = vsel %vm605, %v3169, %v3170
        %v3172 = vrot.slane %v3165, 1
        %v3173 = vsel %vm605, %v3170, %v3172
        %v3176 = vadd.f32 %v3108, %v3171
        %v3177 = vadd.f32 %v3109, %v3173
        %s3178 = sld [smem:[#allocation10 + $0x4]]
        %v3179 = vstv %s3178
        %v3180 = vmul.f32 %v3179, %v2971
        %v3181 = vmul.f32 %v3179, %v2972
        %v3182 = vmul.f32 %v3179, %v2973
        %v3186 = vrot.slane %v3180, 1
        %v3187 = vrot.slane %v3181, 1
        %v3188 = vsel %vm605, %v3186, %v3187
        %v3189 = vrot.slane %v3182, 1
        %v3190 = vsel %vm605, %v3187, %v3189
        %3191 = vrot.lane.b32.xlu0 %v3188, 127
        %v3192 = vpop.permute.xlu0 %3191
        %3193 = vrot.lane.b32.xlu0 %v3190, 127
        %v3194 = vpop.permute.xlu0 %3193
        %v3197 = vadd.f32 %v3125, %v3192
        %v3198 = vadd.f32 %v3126, %v3194
        %s3199 = sld [smem:[#allocation10 + $0x28]]
        %v3200 = vstv %s3199
        %v3201 = vmul.f32 %v3200, %v2971
        %v3202 = vmul.f32 %v3200, %v2972
        %v3203 = vmul.f32 %v3200, %v2973
        %v3207 = vrot.slane %v3201, 1
        %v3208 = vrot.slane %v3202, 1
        %v3209 = vsel %vm605, %v3207, %v3208
        %v3210 = vrot.slane %v3203, 1
        %v3211 = vsel %vm605, %v3208, %v3210
        %3212 = vrot.lane.b32.xlu0 %v3209, 127
        %v3213 = vpop.permute.xlu0 %3212
        %3214 = vrot.lane.b32.xlu0 %v3211, 127
        %v3215 = vpop.permute.xlu0 %3214
        %v3218 = vadd.f32 %v3142, %v3213
        %v3219 = vadd.f32 %v3143, %v3215
        %s3220 = sld [smem:[#allocation10 + $0x4c]]
        %v3221 = vstv %s3220
        %v3222 = vmul.f32 %v3221, %v2971
        %v3223 = vmul.f32 %v3221, %v2972
        %v3224 = vmul.f32 %v3221, %v2973
        %v3228 = vrot.slane %v3222, 1
        %v3229 = vrot.slane %v3223, 1
        %v3230 = vsel %vm605, %v3228, %v3229
        %v3231 = vrot.slane %v3224, 1
        %v3232 = vsel %vm605, %v3229, %v3231
        %3233 = vrot.lane.b32.xlu0 %v3230, 127
        %v3234 = vpop.permute.xlu0 %3233
        %3235 = vrot.lane.b32.xlu0 %v3232, 127
        %v3236 = vpop.permute.xlu0 %3235
        %v3239 = vadd.f32 %v3159, %v3234
        %v3240 = vadd.f32 %v3160, %v3236
        %s3241 = sld [smem:[#allocation10 + $0x70]]
        %v3242 = vstv %s3241
        %v3243 = vmul.f32 %v3242, %v2971
        %v3244 = vmul.f32 %v3242, %v2972
        %v3245 = vmul.f32 %v3242, %v2973
        %v3249 = vrot.slane %v3243, 1
        %v3250 = vrot.slane %v3244, 1
        %v3251 = vsel %vm605, %v3249, %v3250
        %v3252 = vrot.slane %v3245, 1
        %v3253 = vsel %vm605, %v3250, %v3252
        %3254 = vrot.lane.b32.xlu0 %v3251, 127
        %v3255 = vpop.permute.xlu0 %3254
        %3256 = vrot.lane.b32.xlu0 %v3253, 127
        %v3257 = vpop.permute.xlu0 %3256
        %v3260 = vadd.f32 %v3176, %v3255
        %v3261 = vadd.f32 %v3177, %v3257
        %s3262 = sld [smem:[#allocation10 + $0x5]]
        %v3263 = vstv %s3262
        %v3264 = vmul.f32 %v3263, %v2971
        %v3265 = vmul.f32 %v3263, %v2972
        %v3266 = vmul.f32 %v3263, %v2973
        %v3270 = vrot.slane %v3264, 1
        %v3271 = vrot.slane %v3265, 1
        %v3272 = vsel %vm605, %v3270, %v3271
        %v3273 = vrot.slane %v3266, 1
        %v3274 = vsel %vm605, %v3271, %v3273
        %3275 = vrot.lane.b32.xlu0 %v3272, 126
        %v3276 = vpop.permute.xlu0 %3275
        %3277 = vrot.lane.b32.xlu0 %v3274, 126
        %v3278 = vpop.permute.xlu0 %3277
        %v3281 = vadd.f32 %v3197, %v3276
        %v3282 = vadd.f32 %v3198, %v3278
        %s3283 = sld [smem:[#allocation10 + $0x29]]
        %v3284 = vstv %s3283
        %v3285 = vmul.f32 %v3284, %v2971
        %v3286 = vmul.f32 %v3284, %v2972
        %v3287 = vmul.f32 %v3284, %v2973
        %v3291 = vrot.slane %v3285, 1
        %v3292 = vrot.slane %v3286, 1
        %v3293 = vsel %vm605, %v3291, %v3292
        %v3294 = vrot.slane %v3287, 1
        %v3295 = vsel %vm605, %v3292, %v3294
        %3296 = vrot.lane.b32.xlu0 %v3293, 126
        %v3297 = vpop.permute.xlu0 %3296
        %3298 = vrot.lane.b32.xlu0 %v3295, 126
        %v3299 = vpop.permute.xlu0 %3298
        %v3302 = vadd.f32 %v3218, %v3297
        %v3303 = vadd.f32 %v3219, %v3299
        %s3304 = sld [smem:[#allocation10 + $0x4d]]
        %v3305 = vstv %s3304
        %v3306 = vmul.f32 %v3305, %v2971
        %v3307 = vmul.f32 %v3305, %v2972
        %v3308 = vmul.f32 %v3305, %v2973
        %v3312 = vrot.slane %v3306, 1
        %v3313 = vrot.slane %v3307, 1
        %v3314 = vsel %vm605, %v3312, %v3313
        %v3315 = vrot.slane %v3308, 1
        %v3316 = vsel %vm605, %v3313, %v3315
        %3317 = vrot.lane.b32.xlu0 %v3314, 126
        %v3318 = vpop.permute.xlu0 %3317
        %3319 = vrot.lane.b32.xlu0 %v3316, 126
        %v3320 = vpop.permute.xlu0 %3319
        %v3323 = vadd.f32 %v3239, %v3318
        %v3324 = vadd.f32 %v3240, %v3320
        %s3325 = sld [smem:[#allocation10 + $0x71]]
        %v3326 = vstv %s3325
        %v3327 = vmul.f32 %v3326, %v2971
        %v3328 = vmul.f32 %v3326, %v2972
        %v3329 = vmul.f32 %v3326, %v2973
        %v3333 = vrot.slane %v3327, 1
        %v3334 = vrot.slane %v3328, 1
        %v3335 = vsel %vm605, %v3333, %v3334
        %v3336 = vrot.slane %v3329, 1
        %v3337 = vsel %vm605, %v3334, %v3336
        %3338 = vrot.lane.b32.xlu0 %v3335, 126
        %v3339 = vpop.permute.xlu0 %3338
        %3340 = vrot.lane.b32.xlu0 %v3337, 126
        %v3341 = vpop.permute.xlu0 %3340
        %v3344 = vadd.f32 %v3260, %v3339
        %v3345 = vadd.f32 %v3261, %v3341
        %s3346 = sld [smem:[#allocation10 + $0x6]]
        %v3347 = vstv %s3346
        %v3348 = vmul.f32 %v3347, %v2971
        %v3349 = vmul.f32 %v3347, %v2972
        %v3350 = vmul.f32 %v3347, %v2973
        %v3354 = vrot.slane %v3348, 2
        %v3355 = vrot.slane %v3349, 2
        %v3356 = vsel %vm842, %v3354, %v3355
        %v3357 = vrot.slane %v3350, 2
        %v3358 = vsel %vm842, %v3355, %v3357
        %v3361 = vadd.f32 %v3281, %v3356
        %v3362 = vadd.f32 %v3282, %v3358
        %s3363 = sld [smem:[#allocation10 + $0x2a]]
        %v3364 = vstv %s3363
        %v3365 = vmul.f32 %v3364, %v2971
        %v3366 = vmul.f32 %v3364, %v2972
        %v3367 = vmul.f32 %v3364, %v2973
        %v3371 = vrot.slane %v3365, 2
        %v3372 = vrot.slane %v3366, 2
        %v3373 = vsel %vm842, %v3371, %v3372
        %v3374 = vrot.slane %v3367, 2
        %v3375 = vsel %vm842, %v3372, %v3374
        %v3378 = vadd.f32 %v3302, %v3373
        %v3379 = vadd.f32 %v3303, %v3375
        %s3380 = sld [smem:[#allocation10 + $0x4e]]
        %v3381 = vstv %s3380
        %v3382 = vmul.f32 %v3381, %v2971
        %v3383 = vmul.f32 %v3381, %v2972
        %v3384 = vmul.f32 %v3381, %v2973
        %v3388 = vrot.slane %v3382, 2
        %v3389 = vrot.slane %v3383, 2
        %v3390 = vsel %vm842, %v3388, %v3389
        %v3391 = vrot.slane %v3384, 2
        %v3392 = vsel %vm842, %v3389, %v3391
        %v3395 = vadd.f32 %v3323, %v3390
        %v3396 = vadd.f32 %v3324, %v3392
        %s3397 = sld [smem:[#allocation10 + $0x72]]
        %v3398 = vstv %s3397
        %v3399 = vmul.f32 %v3398, %v2971
        %v3400 = vmul.f32 %v3398, %v2972
        %v3401 = vmul.f32 %v3398, %v2973
        %v3405 = vrot.slane %v3399, 2
        %v3406 = vrot.slane %v3400, 2
        %v3407 = vsel %vm842, %v3405, %v3406
        %v3408 = vrot.slane %v3401, 2
        %v3409 = vsel %vm842, %v3406, %v3408
        %v3412 = vadd.f32 %v3344, %v3407
        %v3413 = vadd.f32 %v3345, %v3409
        %s3414 = sld [smem:[#allocation10 + $0x7]]
        %v3415 = vstv %s3414
        %v3416 = vmul.f32 %v3415, %v2971
        %v3417 = vmul.f32 %v3415, %v2972
        %v3418 = vmul.f32 %v3415, %v2973
        %v3422 = vrot.slane %v3416, 2
        %v3423 = vrot.slane %v3417, 2
        %v3424 = vsel %vm842, %v3422, %v3423
        %v3425 = vrot.slane %v3418, 2
        %v3426 = vsel %vm842, %v3423, %v3425
        %3427 = vrot.lane.b32.xlu0 %v3424, 127
        %v3428 = vpop.permute.xlu0 %3427
        %3429 = vrot.lane.b32.xlu0 %v3426, 127
        %v3430 = vpop.permute.xlu0 %3429
        %v3433 = vadd.f32 %v3361, %v3428
        %v3434 = vadd.f32 %v3362, %v3430
        %s3435 = sld [smem:[#allocation10 + $0x2b]]
        %v3436 = vstv %s3435
        %v3437 = vmul.f32 %v3436, %v2971
        %v3438 = vmul.f32 %v3436, %v2972
        %v3439 = vmul.f32 %v3436, %v2973
        %v3443 = vrot.slane %v3437, 2
        %v3444 = vrot.slane %v3438, 2
        %v3445 = vsel %vm842, %v3443, %v3444
        %v3446 = vrot.slane %v3439, 2
        %v3447 = vsel %vm842, %v3444, %v3446
        %3448 = vrot.lane.b32.xlu0 %v3445, 127
        %v3449 = vpop.permute.xlu0 %3448
        %3450 = vrot.lane.b32.xlu0 %v3447, 127
        %v3451 = vpop.permute.xlu0 %3450
        %v3454 = vadd.f32 %v3378, %v3449
        %v3455 = vadd.f32 %v3379, %v3451
        %s3456 = sld [smem:[#allocation10 + $0x4f]]
        %v3457 = vstv %s3456
        %v3458 = vmul.f32 %v3457, %v2971
        %v3459 = vmul.f32 %v3457, %v2972
        %v3460 = vmul.f32 %v3457, %v2973
        %v3464 = vrot.slane %v3458, 2
        %v3465 = vrot.slane %v3459, 2
        %v3466 = vsel %vm842, %v3464, %v3465
        %v3467 = vrot.slane %v3460, 2
        %v3468 = vsel %vm842, %v3465, %v3467
        %3469 = vrot.lane.b32.xlu0 %v3466, 127
        %v3470 = vpop.permute.xlu0 %3469
        %3471 = vrot.lane.b32.xlu0 %v3468, 127
        %v3472 = vpop.permute.xlu0 %3471
        %v3475 = vadd.f32 %v3395, %v3470
        %v3476 = vadd.f32 %v3396, %v3472
        %s3477 = sld [smem:[#allocation10 + $0x73]]
        %v3478 = vstv %s3477
        %v3479 = vmul.f32 %v3478, %v2971
        %v3480 = vmul.f32 %v3478, %v2972
        %v3481 = vmul.f32 %v3478, %v2973
        %v3485 = vrot.slane %v3479, 2
        %v3486 = vrot.slane %v3480, 2
        %v3487 = vsel %vm842, %v3485, %v3486
        %v3488 = vrot.slane %v3481, 2
        %v3489 = vsel %vm842, %v3486, %v3488
        %3490 = vrot.lane.b32.xlu0 %v3487, 127
        %v3491 = vpop.permute.xlu0 %3490
        %3492 = vrot.lane.b32.xlu0 %v3489, 127
        %v3493 = vpop.permute.xlu0 %3492
        %v3496 = vadd.f32 %v3412, %v3491
        %v3497 = vadd.f32 %v3413, %v3493
        %s3498 = sld [smem:[#allocation10 + $0x8]]
        %v3499 = vstv %s3498
        %v3500 = vmul.f32 %v3499, %v2971
        %v3501 = vmul.f32 %v3499, %v2972
        %v3502 = vmul.f32 %v3499, %v2973
        %v3506 = vrot.slane %v3500, 2
        %v3507 = vrot.slane %v3501, 2
        %v3508 = vsel %vm842, %v3506, %v3507
        %v3509 = vrot.slane %v3502, 2
        %v3510 = vsel %vm842, %v3507, %v3509
        %3511 = vrot.lane.b32.xlu0 %v3508, 126
        %v3512 = vpop.permute.xlu0 %3511
        %3513 = vrot.lane.b32.xlu0 %v3510, 126
        %v3514 = vpop.permute.xlu0 %3513
        %v3517 = vadd.f32 %v3433, %v3512
        %v3518 = vadd.f32 %v3434, %v3514
        %s3519 = sld [smem:[#allocation10 + $0x2c]]
        %v3520 = vstv %s3519
        %v3521 = vmul.f32 %v3520, %v2971
        %v3522 = vmul.f32 %v3520, %v2972
        %v3523 = vmul.f32 %v3520, %v2973
        %v3527 = vrot.slane %v3521, 2
        %v3528 = vrot.slane %v3522, 2
        %v3529 = vsel %vm842, %v3527, %v3528
        %v3530 = vrot.slane %v3523, 2
        %v3531 = vsel %vm842, %v3528, %v3530
        %3532 = vrot.lane.b32.xlu0 %v3529, 126
        %v3533 = vpop.permute.xlu0 %3532
        %3534 = vrot.lane.b32.xlu0 %v3531, 126
        %v3535 = vpop.permute.xlu0 %3534
        %v3538 = vadd.f32 %v3454, %v3533
        %v3539 = vadd.f32 %v3455, %v3535
        %s3540 = sld [smem:[#allocation10 + $0x50]]
        %v3541 = vstv %s3540
        %v3542 = vmul.f32 %v3541, %v2971
        %v3543 = vmul.f32 %v3541, %v2972
        %v3544 = vmul.f32 %v3541, %v2973
        %v3548 = vrot.slane %v3542, 2
        %v3549 = vrot.slane %v3543, 2
        %v3550 = vsel %vm842, %v3548, %v3549
        %v3551 = vrot.slane %v3544, 2
        %v3552 = vsel %vm842, %v3549, %v3551
        %3553 = vrot.lane.b32.xlu0 %v3550, 126
        %v3554 = vpop.permute.xlu0 %3553
        %3555 = vrot.lane.b32.xlu0 %v3552, 126
        %v3556 = vpop.permute.xlu0 %3555
        %v3559 = vadd.f32 %v3475, %v3554
        %v3560 = vadd.f32 %v3476, %v3556
        %s3561 = sld [smem:[#allocation10 + $0x74]]
        %v3562 = vstv %s3561
        %v3563 = vmul.f32 %v3562, %v2971
        %v3564 = vmul.f32 %v3562, %v2972
        %v3565 = vmul.f32 %v3562, %v2973
        %v3569 = vrot.slane %v3563, 2
        %v3570 = vrot.slane %v3564, 2
        %v3571 = vsel %vm842, %v3569, %v3570
        %v3572 = vrot.slane %v3565, 2
        %v3573 = vsel %vm842, %v3570, %v3572
        %3574 = vrot.lane.b32.xlu0 %v3571, 126
        %v3575 = vpop.permute.xlu0 %3574
        %3576 = vrot.lane.b32.xlu0 %v3573, 126
        %v3577 = vpop.permute.xlu0 %3576
        %v3580 = vadd.f32 %v3496, %v3575
        %v3581 = vadd.f32 %v3497, %v3577
        %v3582 = vld [vmem:[%s1071] sm:$0xff]
        %v3583 = vld [vmem:[%s1071 + $0x8] sm:$0xff]
        %v3584 = vld [vmem:[%s1071 + $0x10] sm:$0x3]
        %s3585 = sld [smem:[#allocation10 + $0x9]]
        %v3586 = vstv %s3585
        %v3587 = vmul.f32 %v3586, %v3582
        %v3588 = vmul.f32 %v3586, %v3583
        %v3589 = vadd.f32 %v3517, %v3587
        %v3590 = vadd.f32 %v3518, %v3588
        %s3591 = sld [smem:[#allocation10 + $0x2d]]
        %v3592 = vstv %s3591
        %v3593 = vmul.f32 %v3592, %v3582
        %v3594 = vmul.f32 %v3592, %v3583
        %v3595 = vadd.f32 %v3538, %v3593
        %v3596 = vadd.f32 %v3539, %v3594
        %s3597 = sld [smem:[#allocation10 + $0x51]]
        %v3598 = vstv %s3597
        %v3599 = vmul.f32 %v3598, %v3582
        %v3600 = vmul.f32 %v3598, %v3583
        %v3601 = vadd.f32 %v3559, %v3599
        %v3602 = vadd.f32 %v3560, %v3600
        %s3603 = sld [smem:[#allocation10 + $0x75]]
        %v3604 = vstv %s3603
        %v3605 = vmul.f32 %v3604, %v3582
        %v3606 = vmul.f32 %v3604, %v3583
        %v3607 = vadd.f32 %v3580, %v3605
        %v3608 = vadd.f32 %v3581, %v3606
        %s3609 = sld [smem:[#allocation10 + $0xa]]
        %v3610 = vstv %s3609
        %v3611 = vmul.f32 %v3610, %v3582
        %v3612 = vmul.f32 %v3610, %v3583
        %3615 = vrot.lane.b32.xlu0 %v3611, 127
        %v3616 = vpop.permute.xlu0 %3615
        %3617 = vrot.lane.b32.xlu0 %v3612, 127
        %v3618 = vpop.permute.xlu0 %3617
        %v3621 = vadd.f32 %v3589, %v3616
        %v3622 = vadd.f32 %v3590, %v3618
        %s3623 = sld [smem:[#allocation10 + $0x2e]]
        %v3624 = vstv %s3623
        %v3625 = vmul.f32 %v3624, %v3582
        %v3626 = vmul.f32 %v3624, %v3583
        %3629 = vrot.lane.b32.xlu0 %v3625, 127
        %v3630 = vpop.permute.xlu0 %3629
        %3631 = vrot.lane.b32.xlu0 %v3626, 127
        %v3632 = vpop.permute.xlu0 %3631
        %v3635 = vadd.f32 %v3595, %v3630
        %v3636 = vadd.f32 %v3596, %v3632
        %s3637 = sld [smem:[#allocation10 + $0x52]]
        %v3638 = vstv %s3637
        %v3639 = vmul.f32 %v3638, %v3582
        %v3640 = vmul.f32 %v3638, %v3583
        %3643 = vrot.lane.b32.xlu0 %v3639, 127
        %v3644 = vpop.permute.xlu0 %3643
        %3645 = vrot.lane.b32.xlu0 %v3640, 127
        %v3646 = vpop.permute.xlu0 %3645
        %v3649 = vadd.f32 %v3601, %v3644
        %v3650 = vadd.f32 %v3602, %v3646
        %s3651 = sld [smem:[#allocation10 + $0x76]]
        %v3652 = vstv %s3651
        %v3653 = vmul.f32 %v3652, %v3582
        %v3654 = vmul.f32 %v3652, %v3583
        %3657 = vrot.lane.b32.xlu0 %v3653, 127
        %v3658 = vpop.permute.xlu0 %3657
        %3659 = vrot.lane.b32.xlu0 %v3654, 127
        %v3660 = vpop.permute.xlu0 %3659
        %v3663 = vadd.f32 %v3607, %v3658
        %v3664 = vadd.f32 %v3608, %v3660
        %s3665 = sld [smem:[#allocation10 + $0xb]]
        %v3666 = vstv %s3665
        %v3667 = vmul.f32 %v3666, %v3582
        %v3668 = vmul.f32 %v3666, %v3583
        %3671 = vrot.lane.b32.xlu0 %v3667, 126
        %v3672 = vpop.permute.xlu0 %3671
        %3673 = vrot.lane.b32.xlu0 %v3668, 126
        %v3674 = vpop.permute.xlu0 %3673
        %v3677 = vadd.f32 %v3621, %v3672
        %v3678 = vadd.f32 %v3622, %v3674
        %s3679 = sld [smem:[#allocation10 + $0x2f]]
        %v3680 = vstv %s3679
        %v3681 = vmul.f32 %v3680, %v3582
        %v3682 = vmul.f32 %v3680, %v3583
        %3685 = vrot.lane.b32.xlu0 %v3681, 126
        %v3686 = vpop.permute.xlu0 %3685
        %3687 = vrot.lane.b32.xlu0 %v3682, 126
        %v3688 = vpop.permute.xlu0 %3687
        %v3691 = vadd.f32 %v3635, %v3686
        %v3692 = vadd.f32 %v3636, %v3688
        %s3693 = sld [smem:[#allocation10 + $0x53]]
        %v3694 = vstv %s3693
        %v3695 = vmul.f32 %v3694, %v3582
        %v3696 = vmul.f32 %v3694, %v3583
        %3699 = vrot.lane.b32.xlu0 %v3695, 126
        %v3700 = vpop.permute.xlu0 %3699
        %3701 = vrot.lane.b32.xlu0 %v3696, 126
        %v3702 = vpop.permute.xlu0 %3701
        %v3705 = vadd.f32 %v3649, %v3700
        %v3706 = vadd.f32 %v3650, %v3702
        %s3707 = sld [smem:[#allocation10 + $0x77]]
        %v3708 = vstv %s3707
        %v3709 = vmul.f32 %v3708, %v3582
        %v3710 = vmul.f32 %v3708, %v3583
        %3713 = vrot.lane.b32.xlu0 %v3709, 126
        %v3714 = vpop.permute.xlu0 %3713
        %3715 = vrot.lane.b32.xlu0 %v3710, 126
        %v3716 = vpop.permute.xlu0 %3715
        %v3719 = vadd.f32 %v3663, %v3714
        %v3720 = vadd.f32 %v3664, %v3716
        %s3721 = sld [smem:[#allocation10 + $0xc]]
        %v3722 = vstv %s3721
        %v3723 = vmul.f32 %v3722, %v3582
        %v3724 = vmul.f32 %v3722, %v3583
        %v3725 = vmul.f32 %v3722, %v3584
        %v3729 = vrot.slane %v3723, 1
        %v3730 = vrot.slane %v3724, 1
        %v3731 = vsel %vm605, %v3729, %v3730
        %v3732 = vrot.slane %v3725, 1
        %v3733 = vsel %vm605, %v3730, %v3732
        %v3736 = vadd.f32 %v3677, %v3731
        %v3737 = vadd.f32 %v3678, %v3733
        %s3738 = sld [smem:[#allocation10 + $0x30]]
        %v3739 = vstv %s3738
        %v3740 = vmul.f32 %v3739, %v3582
        %v3741 = vmul.f32 %v3739, %v3583
        %v3742 = vmul.f32 %v3739, %v3584
        %v3746 = vrot.slane %v3740, 1
        %v3747 = vrot.slane %v3741, 1
        %v3748 = vsel %vm605, %v3746, %v3747
        %v3749 = vrot.slane %v3742, 1
        %v3750 = vsel %vm605, %v3747, %v3749
        %v3753 = vadd.f32 %v3691, %v3748
        %v3754 = vadd.f32 %v3692, %v3750
        %s3755 = sld [smem:[#allocation10 + $0x54]]
        %v3756 = vstv %s3755
        %v3757 = vmul.f32 %v3756, %v3582
        %v3758 = vmul.f32 %v3756, %v3583
        %v3759 = vmul.f32 %v3756, %v3584
        %v3763 = vrot.slane %v3757, 1
        %v3764 = vrot.slane %v3758, 1
        %v3765 = vsel %vm605, %v3763, %v3764
        %v3766 = vrot.slane %v3759, 1
        %v3767 = vsel %vm605, %v3764, %v3766
        %v3770 = vadd.f32 %v3705, %v3765
        %v3771 = vadd.f32 %v3706, %v3767
        %s3772 = sld [smem:[#allocation10 + $0x78]]
        %v3773 = vstv %s3772
        %v3774 = vmul.f32 %v3773, %v3582
        %v3775 = vmul.f32 %v3773, %v3583
        %v3776 = vmul.f32 %v3773, %v3584
        %v3780 = vrot.slane %v3774, 1
        %v3781 = vrot.slane %v3775, 1
        %v3782 = vsel %vm605, %v3780, %v3781
        %v3783 = vrot.slane %v3776, 1
        %v3784 = vsel %vm605, %v3781, %v3783
        %v3787 = vadd.f32 %v3719, %v3782
        %v3788 = vadd.f32 %v3720, %v3784
        %s3789 = sld [smem:[#allocation10 + $0xd]]
        %v3790 = vstv %s3789
        %v3791 = vmul.f32 %v3790, %v3582
        %v3792 = vmul.f32 %v3790, %v3583
        %v3793 = vmul.f32 %v3790, %v3584
        %v3797 = vrot.slane %v3791, 1
        %v3798 = vrot.slane %v3792, 1
        %v3799 = vsel %vm605, %v3797, %v3798
        %v3800 = vrot.slane %v3793, 1
        %v3801 = vsel %vm605, %v3798, %v3800
        %3802 = vrot.lane.b32.xlu0 %v3799, 127
        %v3803 = vpop.permute.xlu0 %3802
        %3804 = vrot.lane.b32.xlu0 %v3801, 127
        %v3805 = vpop.permute.xlu0 %3804
        %v3808 = vadd.f32 %v3736, %v3803
        %v3809 = vadd.f32 %v3737, %v3805
        %s3810 = sld [smem:[#allocation10 + $0x31]]
        %v3811 = vstv %s3810
        %v3812 = vmul.f32 %v3811, %v3582
        %v3813 = vmul.f32 %v3811, %v3583
        %v3814 = vmul.f32 %v3811, %v3584
        %v3818 = vrot.slane %v3812, 1
        %v3819 = vrot.slane %v3813, 1
        %v3820 = vsel %vm605, %v3818, %v3819
        %v3821 = vrot.slane %v3814, 1
        %v3822 = vsel %vm605, %v3819, %v3821
        %3823 = vrot.lane.b32.xlu0 %v3820, 127
        %v3824 = vpop.permute.xlu0 %3823
        %3825 = vrot.lane.b32.xlu0 %v3822, 127
        %v3826 = vpop.permute.xlu0 %3825
        %v3829 = vadd.f32 %v3753, %v3824
        %v3830 = vadd.f32 %v3754, %v3826
        %s3831 = sld [smem:[#allocation10 + $0x55]]
        %v3832 = vstv %s3831
        %v3833 = vmul.f32 %v3832, %v3582
        %v3834 = vmul.f32 %v3832, %v3583
        %v3835 = vmul.f32 %v3832, %v3584
        %v3839 = vrot.slane %v3833, 1
        %v3840 = vrot.slane %v3834, 1
        %v3841 = vsel %vm605, %v3839, %v3840
        %v3842 = vrot.slane %v3835, 1
        %v3843 = vsel %vm605, %v3840, %v3842
        %3844 = vrot.lane.b32.xlu0 %v3841, 127
        %v3845 = vpop.permute.xlu0 %3844
        %3846 = vrot.lane.b32.xlu0 %v3843, 127
        %v3847 = vpop.permute.xlu0 %3846
        %v3850 = vadd.f32 %v3770, %v3845
        %v3851 = vadd.f32 %v3771, %v3847
        %s3852 = sld [smem:[#allocation10 + $0x79]]
        %v3853 = vstv %s3852
        %v3854 = vmul.f32 %v3853, %v3582
        %v3855 = vmul.f32 %v3853, %v3583
        %v3856 = vmul.f32 %v3853, %v3584
        %v3860 = vrot.slane %v3854, 1
        %v3861 = vrot.slane %v3855, 1
        %v3862 = vsel %vm605, %v3860, %v3861
        %v3863 = vrot.slane %v3856, 1
        %v3864 = vsel %vm605, %v3861, %v3863
        %3865 = vrot.lane.b32.xlu0 %v3862, 127
        %v3866 = vpop.permute.xlu0 %3865
        %3867 = vrot.lane.b32.xlu0 %v3864, 127
        %v3868 = vpop.permute.xlu0 %3867
        %v3871 = vadd.f32 %v3787, %v3866
        %v3872 = vadd.f32 %v3788, %v3868
        %s3873 = sld [smem:[#allocation10 + $0xe]]
        %v3874 = vstv %s3873
        %v3875 = vmul.f32 %v3874, %v3582
        %v3876 = vmul.f32 %v3874, %v3583
        %v3877 = vmul.f32 %v3874, %v3584
        %v3881 = vrot.slane %v3875, 1
        %v3882 = vrot.slane %v3876, 1
        %v3883 = vsel %vm605, %v3881, %v3882
        %v3884 = vrot.slane %v3877, 1
        %v3885 = vsel %vm605, %v3882, %v3884
        %3886 = vrot.lane.b32.xlu0 %v3883, 126
        %v3887 = vpop.permute.xlu0 %3886
        %3888 = vrot.lane.b32.xlu0 %v3885, 126
        %v3889 = vpop.permute.xlu0 %3888
        %v3892 = vadd.f32 %v3808, %v3887
        %v3893 = vadd.f32 %v3809, %v3889
        %s3894 = sld [smem:[#allocation10 + $0x32]]
        %v3895 = vstv %s3894
        %v3896 = vmul.f32 %v3895, %v3582
        %v3897 = vmul.f32 %v3895, %v3583
        %v3898 = vmul.f32 %v3895, %v3584
        %v3902 = vrot.slane %v3896, 1
        %v3903 = vrot.slane %v3897, 1
        %v3904 = vsel %vm605, %v3902, %v3903
        %v3905 = vrot.slane %v3898, 1
        %v3906 = vsel %vm605, %v3903, %v3905
        %3907 = vrot.lane.b32.xlu0 %v3904, 126
        %v3908 = vpop.permute.xlu0 %3907
        %3909 = vrot.lane.b32.xlu0 %v3906, 126
        %v3910 = vpop.permute.xlu0 %3909
        %v3913 = vadd.f32 %v3829, %v3908
        %v3914 = vadd.f32 %v3830, %v3910
        %s3915 = sld [smem:[#allocation10 + $0x56]]
        %v3916 = vstv %s3915
        %v3917 = vmul.f32 %v3916, %v3582
        %v3918 = vmul.f32 %v3916, %v3583
        %v3919 = vmul.f32 %v3916, %v3584
        %v3923 = vrot.slane %v3917, 1
        %v3924 = vrot.slane %v3918, 1
        %v3925 = vsel %vm605, %v3923, %v3924
        %v3926 = vrot.slane %v3919, 1
        %v3927 = vsel %vm605, %v3924, %v3926
        %3928 = vrot.lane.b32.xlu0 %v3925, 126
        %v3929 = vpop.permute.xlu0 %3928
        %3930 = vrot.lane.b32.xlu0 %v3927, 126
        %v3931 = vpop.permute.xlu0 %3930
        %v3934 = vadd.f32 %v3850, %v3929
        %v3935 = vadd.f32 %v3851, %v3931
        %s3936 = sld [smem:[#allocation10 + $0x7a]]
        %v3937 = vstv %s3936
        %v3938 = vmul.f32 %v3937, %v3582
        %v3939 = vmul.f32 %v3937, %v3583
        %v3940 = vmul.f32 %v3937, %v3584
        %v3944 = vrot.slane %v3938, 1
        %v3945 = vrot.slane %v3939, 1
        %v3946 = vsel %vm605, %v3944, %v3945
        %v3947 = vrot.slane %v3940, 1
        %v3948 = vsel %vm605, %v3945, %v3947
        %3949 = vrot.lane.b32.xlu0 %v3946, 126
        %v3950 = vpop.permute.xlu0 %3949
        %3951 = vrot.lane.b32.xlu0 %v3948, 126
        %v3952 = vpop.permute.xlu0 %3951
        %v3955 = vadd.f32 %v3871, %v3950
        %v3956 = vadd.f32 %v3872, %v3952
        %s3957 = sld [smem:[#allocation10 + $0xf]]
        %v3958 = vstv %s3957
        %v3959 = vmul.f32 %v3958, %v3582
        %v3960 = vmul.f32 %v3958, %v3583
        %v3961 = vmul.f32 %v3958, %v3584
        %v3965 = vrot.slane %v3959, 2
        %v3966 = vrot.slane %v3960, 2
        %v3967 = vsel %vm842, %v3965, %v3966
        %v3968 = vrot.slane %v3961, 2
        %v3969 = vsel %vm842, %v3966, %v3968
        %v3972 = vadd.f32 %v3892, %v3967
        %v3973 = vadd.f32 %v3893, %v3969
        %s3974 = sld [smem:[#allocation10 + $0x33]]
        %v3975 = vstv %s3974
        %v3976 = vmul.f32 %v3975, %v3582
        %v3977 = vmul.f32 %v3975, %v3583
        %v3978 = vmul.f32 %v3975, %v3584
        %v3982 = vrot.slane %v3976, 2
        %v3983 = vrot.slane %v3977, 2
        %v3984 = vsel %vm842, %v3982, %v3983
        %v3985 = vrot.slane %v3978, 2
        %v3986 = vsel %vm842, %v3983, %v3985
        %v3989 = vadd.f32 %v3913, %v3984
        %v3990 = vadd.f32 %v3914, %v3986
        %s3991 = sld [smem:[#allocation10 + $0x57]]
        %v3992 = vstv %s3991
        %v3993 = vmul.f32 %v3992, %v3582
        %v3994 = vmul.f32 %v3992, %v3583
        %v3995 = vmul.f32 %v3992, %v3584
        %v3999 = vrot.slane %v3993, 2
        %v4000 = vrot.slane %v3994, 2
        %v4001 = vsel %vm842, %v3999, %v4000
        %v4002 = vrot.slane %v3995, 2
        %v4003 = vsel %vm842, %v4000, %v4002
        %v4006 = vadd.f32 %v3934, %v4001
        %v4007 = vadd.f32 %v3935, %v4003
        %s4008 = sld [smem:[#allocation10 + $0x7b]]
        %v4009 = vstv %s4008
        %v4010 = vmul.f32 %v4009, %v3582
        %v4011 = vmul.f32 %v4009, %v3583
        %v4012 = vmul.f32 %v4009, %v3584
        %v4016 = vrot.slane %v4010, 2
        %v4017 = vrot.slane %v4011, 2
        %v4018 = vsel %vm842, %v4016, %v4017
        %v4019 = vrot.slane %v4012, 2
        %v4020 = vsel %vm842, %v4017, %v4019
        %v4023 = vadd.f32 %v3955, %v4018
        %v4024 = vadd.f32 %v3956, %v4020
        %s4025 = sld [smem:[#allocation10 + $0x10]]
        %v4026 = vstv %s4025
        %v4027 = vmul.f32 %v4026, %v3582
        %v4028 = vmul.f32 %v4026, %v3583
        %v4029 = vmul.f32 %v4026, %v3584
        %v4033 = vrot.slane %v4027, 2
        %v4034 = vrot.slane %v4028, 2
        %v4035 = vsel %vm842, %v4033, %v4034
        %v4036 = vrot.slane %v4029, 2
        %v4037 = vsel %vm842, %v4034, %v4036
        %4038 = vrot.lane.b32.xlu0 %v4035, 127
        %v4039 = vpop.permute.xlu0 %4038
        %4040 = vrot.lane.b32.xlu0 %v4037, 127
        %v4041 = vpop.permute.xlu0 %4040
        %v4044 = vadd.f32 %v3972, %v4039
        %v4045 = vadd.f32 %v3973, %v4041
        %s4046 = sld [smem:[#allocation10 + $0x34]]
        %v4047 = vstv %s4046
        %v4048 = vmul.f32 %v4047, %v3582
        %v4049 = vmul.f32 %v4047, %v3583
        %v4050 = vmul.f32 %v4047, %v3584
        %v4054 = vrot.slane %v4048, 2
        %v4055 = vrot.slane %v4049, 2
        %v4056 = vsel %vm842, %v4054, %v4055
        %v4057 = vrot.slane %v4050, 2
        %v4058 = vsel %vm842, %v4055, %v4057
        %4059 = vrot.lane.b32.xlu0 %v4056, 127
        %v4060 = vpop.permute.xlu0 %4059
        %4061 = vrot.lane.b32.xlu0 %v4058, 127
        %v4062 = vpop.permute.xlu0 %4061
        %v4065 = vadd.f32 %v3989, %v4060
        %v4066 = vadd.f32 %v3990, %v4062
        %s4067 = sld [smem:[#allocation10 + $0x58]]
        %v4068 = vstv %s4067
        %v4069 = vmul.f32 %v4068, %v3582
        %v4070 = vmul.f32 %v4068, %v3583
        %v4071 = vmul.f32 %v4068, %v3584
        %v4075 = vrot.slane %v4069, 2
        %v4076 = vrot.slane %v4070, 2
        %v4077 = vsel %vm842, %v4075, %v4076
        %v4078 = vrot.slane %v4071, 2
        %v4079 = vsel %vm842, %v4076, %v4078
        %4080 = vrot.lane.b32.xlu0 %v4077, 127
        %v4081 = vpop.permute.xlu0 %4080
        %4082 = vrot.lane.b32.xlu0 %v4079, 127
        %v4083 = vpop.permute.xlu0 %4082
        %v4086 = vadd.f32 %v4006, %v4081
        %v4087 = vadd.f32 %v4007, %v4083
        %s4088 = sld [smem:[#allocation10 + $0x7c]]
        %v4089 = vstv %s4088
        %v4090 = vmul.f32 %v4089, %v3582
        %v4091 = vmul.f32 %v4089, %v3583
        %v4092 = vmul.f32 %v4089, %v3584
        %v4096 = vrot.slane %v4090, 2
        %v4097 = vrot.slane %v4091, 2
        %v4098 = vsel %vm842, %v4096, %v4097
        %v4099 = vrot.slane %v4092, 2
        %v4100 = vsel %vm842, %v4097, %v4099
        %4101 = vrot.lane.b32.xlu0 %v4098, 127
        %v4102 = vpop.permute.xlu0 %4101
        %4103 = vrot.lane.b32.xlu0 %v4100, 127
        %v4104 = vpop.permute.xlu0 %4103
        %v4107 = vadd.f32 %v4023, %v4102
        %v4108 = vadd.f32 %v4024, %v4104
        %s4109 = sld [smem:[#allocation10 + $0x11]]
        %v4110 = vstv %s4109
        %v4111 = vmul.f32 %v4110, %v3582
        %v4112 = vmul.f32 %v4110, %v3583
        %v4113 = vmul.f32 %v4110, %v3584
        %v4117 = vrot.slane %v4111, 2
        %v4118 = vrot.slane %v4112, 2
        %v4119 = vsel %vm842, %v4117, %v4118
        %v4120 = vrot.slane %v4113, 2
        %v4121 = vsel %vm842, %v4118, %v4120
        %4122 = vrot.lane.b32.xlu0 %v4119, 126
        %v4123 = vpop.permute.xlu0 %4122
        %4124 = vrot.lane.b32.xlu0 %v4121, 126
        %v4125 = vpop.permute.xlu0 %4124
        %v4128 = vadd.f32 %v4044, %v4123
        %v4129 = vadd.f32 %v4045, %v4125
        %s4130 = sld [smem:[#allocation10 + $0x35]]
        %v4131 = vstv %s4130
        %v4132 = vmul.f32 %v4131, %v3582
        %v4133 = vmul.f32 %v4131, %v3583
        %v4134 = vmul.f32 %v4131, %v3584
        %v4138 = vrot.slane %v4132, 2
        %v4139 = vrot.slane %v4133, 2
        %v4140 = vsel %vm842, %v4138, %v4139
        %v4141 = vrot.slane %v4134, 2
        %v4142 = vsel %vm842, %v4139, %v4141
        %4143 = vrot.lane.b32.xlu0 %v4140, 126
        %v4144 = vpop.permute.xlu0 %4143
        %4145 = vrot.lane.b32.xlu0 %v4142, 126
        %v4146 = vpop.permute.xlu0 %4145
        %v4149 = vadd.f32 %v4065, %v4144
        %v4150 = vadd.f32 %v4066, %v4146
        %s4151 = sld [smem:[#allocation10 + $0x59]]
        %v4152 = vstv %s4151
        %v4153 = vmul.f32 %v4152, %v3582
        %v4154 = vmul.f32 %v4152, %v3583
        %v4155 = vmul.f32 %v4152, %v3584
        %v4159 = vrot.slane %v4153, 2
        %v4160 = vrot.slane %v4154, 2
        %v4161 = vsel %vm842, %v4159, %v4160
        %v4162 = vrot.slane %v4155, 2
        %v4163 = vsel %vm842, %v4160, %v4162
        %4164 = vrot.lane.b32.xlu0 %v4161, 126
        %v4165 = vpop.permute.xlu0 %4164
        %4166 = vrot.lane.b32.xlu0 %v4163, 126
        %v4167 = vpop.permute.xlu0 %4166
        %v4170 = vadd.f32 %v4086, %v4165
        %v4171 = vadd.f32 %v4087, %v4167
        %s4172 = sld [smem:[#allocation10 + $0x7d]]
        %v4173 = vstv %s4172
        %v4174 = vmul.f32 %v4173, %v3582
        %v4175 = vmul.f32 %v4173, %v3583
        %v4176 = vmul.f32 %v4173, %v3584
        %v4180 = vrot.slane %v4174, 2
        %v4181 = vrot.slane %v4175, 2
        %v4182 = vsel %vm842, %v4180, %v4181
        %v4183 = vrot.slane %v4176, 2
        %v4184 = vsel %vm842, %v4181, %v4183
        %4185 = vrot.lane.b32.xlu0 %v4182, 126
        %v4186 = vpop.permute.xlu0 %4185
        %4187 = vrot.lane.b32.xlu0 %v4184, 126
        %v4188 = vpop.permute.xlu0 %4187
        %v4191 = vadd.f32 %v4107, %v4186
        %v4192 = vadd.f32 %v4108, %v4188
        %v4193 = vld [vmem:[%s1683] sm:$0xff]
        %v4194 = vld [vmem:[%s1683 + $0x8] sm:$0xff]
        %v4195 = vld [vmem:[%s1683 + $0x10] sm:$0x3]
        %s4196 = sld [smem:[#allocation10 + $0x12]]
        %v4197 = vstv %s4196
        %v4198 = vmul.f32 %v4197, %v4193
        %v4199 = vmul.f32 %v4197, %v4194
        %v4200 = vadd.f32 %v4128, %v4198
        %v4201 = vadd.f32 %v4129, %v4199
        %s4202 = sld [smem:[#allocation10 + $0x36]]
        %v4203 = vstv %s4202
        %v4204 = vmul.f32 %v4203, %v4193
        %v4205 = vmul.f32 %v4203, %v4194
        %v4206 = vadd.f32 %v4149, %v4204
        %v4207 = vadd.f32 %v4150, %v4205
        %s4208 = sld [smem:[#allocation10 + $0x5a]]
        %v4209 = vstv %s4208
        %v4210 = vmul.f32 %v4209, %v4193
        %v4211 = vmul.f32 %v4209, %v4194
        %v4212 = vadd.f32 %v4170, %v4210
        %v4213 = vadd.f32 %v4171, %v4211
        %s4214 = sld [smem:[#allocation10 + $0x7e]]
        %v4215 = vstv %s4214
        %v4216 = vmul.f32 %v4215, %v4193
        %v4217 = vmul.f32 %v4215, %v4194
        %v4218 = vadd.f32 %v4191, %v4216
        %v4219 = vadd.f32 %v4192, %v4217
        %s4220 = sld [smem:[#allocation10 + $0x13]]
        %v4221 = vstv %s4220
        %v4222 = vmul.f32 %v4221, %v4193
        %v4223 = vmul.f32 %v4221, %v4194
        %4226 = vrot.lane.b32.xlu0 %v4222, 127
        %v4227 = vpop.permute.xlu0 %4226
        %4228 = vrot.lane.b32.xlu0 %v4223, 127
        %v4229 = vpop.permute.xlu0 %4228
        %v4232 = vadd.f32 %v4200, %v4227
        %v4233 = vadd.f32 %v4201, %v4229
        %s4234 = sld [smem:[#allocation10 + $0x37]]
        %v4235 = vstv %s4234
        %v4236 = vmul.f32 %v4235, %v4193
        %v4237 = vmul.f32 %v4235, %v4194
        %4240 = vrot.lane.b32.xlu0 %v4236, 127
        %v4241 = vpop.permute.xlu0 %4240
        %4242 = vrot.lane.b32.xlu0 %v4237, 127
        %v4243 = vpop.permute.xlu0 %4242
        %v4246 = vadd.f32 %v4206, %v4241
        %v4247 = vadd.f32 %v4207, %v4243
        %s4248 = sld [smem:[#allocation10 + $0x5b]]
        %v4249 = vstv %s4248
        %v4250 = vmul.f32 %v4249, %v4193
        %v4251 = vmul.f32 %v4249, %v4194
        %4254 = vrot.lane.b32.xlu0 %v4250, 127
        %v4255 = vpop.permute.xlu0 %4254
        %4256 = vrot.lane.b32.xlu0 %v4251, 127
        %v4257 = vpop.permute.xlu0 %4256
        %v4260 = vadd.f32 %v4212, %v4255
        %v4261 = vadd.f32 %v4213, %v4257
        %s4262 = sld [smem:[#allocation10 + $0x7f]]
        %v4263 = vstv %s4262
        %v4264 = vmul.f32 %v4263, %v4193
        %v4265 = vmul.f32 %v4263, %v4194
        %4268 = vrot.lane.b32.xlu0 %v4264, 127
        %v4269 = vpop.permute.xlu0 %4268
        %4270 = vrot.lane.b32.xlu0 %v4265, 127
        %v4271 = vpop.permute.xlu0 %4270
        %v4274 = vadd.f32 %v4218, %v4269
        %v4275 = vadd.f32 %v4219, %v4271
        %s4276 = sld [smem:[#allocation10 + $0x14]]
        %v4277 = vstv %s4276
        %v4278 = vmul.f32 %v4277, %v4193
        %v4279 = vmul.f32 %v4277, %v4194
        %4282 = vrot.lane.b32.xlu0 %v4278, 126
        %v4283 = vpop.permute.xlu0 %4282
        %4284 = vrot.lane.b32.xlu0 %v4279, 126
        %v4285 = vpop.permute.xlu0 %4284
        %v4288 = vadd.f32 %v4232, %v4283
        %v4289 = vadd.f32 %v4233, %v4285
        %s4290 = sld [smem:[#allocation10 + $0x38]]
        %v4291 = vstv %s4290
        %v4292 = vmul.f32 %v4291, %v4193
        %v4293 = vmul.f32 %v4291, %v4194
        %4296 = vrot.lane.b32.xlu0 %v4292, 126
        %v4297 = vpop.permute.xlu0 %4296
        %4298 = vrot.lane.b32.xlu0 %v4293, 126
        %v4299 = vpop.permute.xlu0 %4298
        %v4302 = vadd.f32 %v4246, %v4297
        %v4303 = vadd.f32 %v4247, %v4299
        %s4304 = sld [smem:[#allocation10 + $0x5c]]
        %v4305 = vstv %s4304
        %v4306 = vmul.f32 %v4305, %v4193
        %v4307 = vmul.f32 %v4305, %v4194
        %4310 = vrot.lane.b32.xlu0 %v4306, 126
        %v4311 = vpop.permute.xlu0 %4310
        %4312 = vrot.lane.b32.xlu0 %v4307, 126
        %v4313 = vpop.permute.xlu0 %4312
        %v4316 = vadd.f32 %v4260, %v4311
        %v4317 = vadd.f32 %v4261, %v4313
        %s4318 = sld [smem:[#allocation10 + $0x80]]
        %v4319 = vstv %s4318
        %v4320 = vmul.f32 %v4319, %v4193
        %v4321 = vmul.f32 %v4319, %v4194
        %4324 = vrot.lane.b32.xlu0 %v4320, 126
        %v4325 = vpop.permute.xlu0 %4324
        %4326 = vrot.lane.b32.xlu0 %v4321, 126
        %v4327 = vpop.permute.xlu0 %4326
        %v4330 = vadd.f32 %v4274, %v4325
        %v4331 = vadd.f32 %v4275, %v4327
        %s4332 = sld [smem:[#allocation10 + $0x15]]
        %v4333 = vstv %s4332
        %v4334 = vmul.f32 %v4333, %v4193
        %v4335 = vmul.f32 %v4333, %v4194
        %v4336 = vmul.f32 %v4333, %v4195
        %v4340 = vrot.slane %v4334, 1
        %v4341 = vrot.slane %v4335, 1
        %v4342 = vsel %vm605, %v4340, %v4341
        %v4343 = vrot.slane %v4336, 1
        %v4344 = vsel %vm605, %v4341, %v4343
        %v4347 = vadd.f32 %v4288, %v4342
        %v4348 = vadd.f32 %v4289, %v4344
        %s4349 = sld [smem:[#allocation10 + $0x39]]
        %v4350 = vstv %s4349
        %v4351 = vmul.f32 %v4350, %v4193
        %v4352 = vmul.f32 %v4350, %v4194
        %v4353 = vmul.f32 %v4350, %v4195
        %v4357 = vrot.slane %v4351, 1
        %v4358 = vrot.slane %v4352, 1
        %v4359 = vsel %vm605, %v4357, %v4358
        %v4360 = vrot.slane %v4353, 1
        %v4361 = vsel %vm605, %v4358, %v4360
        %v4364 = vadd.f32 %v4302, %v4359
        %v4365 = vadd.f32 %v4303, %v4361
        %s4366 = sld [smem:[#allocation10 + $0x5d]]
        %v4367 = vstv %s4366
        %v4368 = vmul.f32 %v4367, %v4193
        %v4369 = vmul.f32 %v4367, %v4194
        %v4370 = vmul.f32 %v4367, %v4195
        %v4374 = vrot.slane %v4368, 1
        %v4375 = vrot.slane %v4369, 1
        %v4376 = vsel %vm605, %v4374, %v4375
        %v4377 = vrot.slane %v4370, 1
        %v4378 = vsel %vm605, %v4375, %v4377
        %v4381 = vadd.f32 %v4316, %v4376
        %v4382 = vadd.f32 %v4317, %v4378
        %s4383 = sld [smem:[#allocation10 + $0x81]]
        %v4384 = vstv %s4383
        %v4385 = vmul.f32 %v4384, %v4193
        %v4386 = vmul.f32 %v4384, %v4194
        %v4387 = vmul.f32 %v4384, %v4195
        %v4391 = vrot.slane %v4385, 1
        %v4392 = vrot.slane %v4386, 1
        %v4393 = vsel %vm605, %v4391, %v4392
        %v4394 = vrot.slane %v4387, 1
        %v4395 = vsel %vm605, %v4392, %v4394
        %v4398 = vadd.f32 %v4330, %v4393
        %v4399 = vadd.f32 %v4331, %v4395
        %s4400 = sld [smem:[#allocation10 + $0x16]]
        %v4401 = vstv %s4400
        %v4402 = vmul.f32 %v4401, %v4193
        %v4403 = vmul.f32 %v4401, %v4194
        %v4404 = vmul.f32 %v4401, %v4195
        %v4408 = vrot.slane %v4402, 1
        %v4409 = vrot.slane %v4403, 1
        %v4410 = vsel %vm605, %v4408, %v4409
        %v4411 = vrot.slane %v4404, 1
        %v4412 = vsel %vm605, %v4409, %v4411
        %4413 = vrot.lane.b32.xlu0 %v4410, 127
        %v4414 = vpop.permute.xlu0 %4413
        %4415 = vrot.lane.b32.xlu0 %v4412, 127
        %v4416 = vpop.permute.xlu0 %4415
        %v4419 = vadd.f32 %v4347, %v4414
        %v4420 = vadd.f32 %v4348, %v4416
        %s4421 = sld [smem:[#allocation10 + $0x3a]]
        %v4422 = vstv %s4421
        %v4423 = vmul.f32 %v4422, %v4193
        %v4424 = vmul.f32 %v4422, %v4194
        %v4425 = vmul.f32 %v4422, %v4195
        %v4429 = vrot.slane %v4423, 1
        %v4430 = vrot.slane %v4424, 1
        %v4431 = vsel %vm605, %v4429, %v4430
        %v4432 = vrot.slane %v4425, 1
        %v4433 = vsel %vm605, %v4430, %v4432
        %4434 = vrot.lane.b32.xlu0 %v4431, 127
        %v4435 = vpop.permute.xlu0 %4434
        %4436 = vrot.lane.b32.xlu0 %v4433, 127
        %v4437 = vpop.permute.xlu0 %4436
        %v4440 = vadd.f32 %v4364, %v4435
        %v4441 = vadd.f32 %v4365, %v4437
        %s4442 = sld [smem:[#allocation10 + $0x5e]]
        %v4443 = vstv %s4442
        %v4444 = vmul.f32 %v4443, %v4193
        %v4445 = vmul.f32 %v4443, %v4194
        %v4446 = vmul.f32 %v4443, %v4195
        %v4450 = vrot.slane %v4444, 1
        %v4451 = vrot.slane %v4445, 1
        %v4452 = vsel %vm605, %v4450, %v4451
        %v4453 = vrot.slane %v4446, 1
        %v4454 = vsel %vm605, %v4451, %v4453
        %4455 = vrot.lane.b32.xlu0 %v4452, 127
        %v4456 = vpop.permute.xlu0 %4455
        %4457 = vrot.lane.b32.xlu0 %v4454, 127
        %v4458 = vpop.permute.xlu0 %4457
        %v4461 = vadd.f32 %v4381, %v4456
        %v4462 = vadd.f32 %v4382, %v4458
        %s4463 = sld [smem:[#allocation10 + $0x82]]
        %v4464 = vstv %s4463
        %v4465 = vmul.f32 %v4464, %v4193
        %v4466 = vmul.f32 %v4464, %v4194
        %v4467 = vmul.f32 %v4464, %v4195
        %v4471 = vrot.slane %v4465, 1
        %v4472 = vrot.slane %v4466, 1
        %v4473 = vsel %vm605, %v4471, %v4472
        %v4474 = vrot.slane %v4467, 1
        %v4475 = vsel %vm605, %v4472, %v4474
        %4476 = vrot.lane.b32.xlu0 %v4473, 127
        %v4477 = vpop.permute.xlu0 %4476
        %4478 = vrot.lane.b32.xlu0 %v4475, 127
        %v4479 = vpop.permute.xlu0 %4478
        %v4482 = vadd.f32 %v4398, %v4477
        %v4483 = vadd.f32 %v4399, %v4479
        %s4484 = sld [smem:[#allocation10 + $0x17]]
        %v4485 = vstv %s4484
        %v4486 = vmul.f32 %v4485, %v4193
        %v4487 = vmul.f32 %v4485, %v4194
        %v4488 = vmul.f32 %v4485, %v4195
        %v4492 = vrot.slane %v4486, 1
        %v4493 = vrot.slane %v4487, 1
        %v4494 = vsel %vm605, %v4492, %v4493
        %v4495 = vrot.slane %v4488, 1
        %v4496 = vsel %vm605, %v4493, %v4495
        %4497 = vrot.lane.b32.xlu0 %v4494, 126
        %v4498 = vpop.permute.xlu0 %4497
        %4499 = vrot.lane.b32.xlu0 %v4496, 126
        %v4500 = vpop.permute.xlu0 %4499
        %v4503 = vadd.f32 %v4419, %v4498
        %v4504 = vadd.f32 %v4420, %v4500
        %s4505 = sld [smem:[#allocation10 + $0x3b]]
        %v4506 = vstv %s4505
        %v4507 = vmul.f32 %v4506, %v4193
        %v4508 = vmul.f32 %v4506, %v4194
        %v4509 = vmul.f32 %v4506, %v4195
        %v4513 = vrot.slane %v4507, 1
        %v4514 = vrot.slane %v4508, 1
        %v4515 = vsel %vm605, %v4513, %v4514
        %v4516 = vrot.slane %v4509, 1
        %v4517 = vsel %vm605, %v4514, %v4516
        %4518 = vrot.lane.b32.xlu0 %v4515, 126
        %v4519 = vpop.permute.xlu0 %4518
        %4520 = vrot.lane.b32.xlu0 %v4517, 126
        %v4521 = vpop.permute.xlu0 %4520
        %v4524 = vadd.f32 %v4440, %v4519
        %v4525 = vadd.f32 %v4441, %v4521
        %s4526 = sld [smem:[#allocation10 + $0x5f]]
        %v4527 = vstv %s4526
        %v4528 = vmul.f32 %v4527, %v4193
        %v4529 = vmul.f32 %v4527, %v4194
        %v4530 = vmul.f32 %v4527, %v4195
        %v4534 = vrot.slane %v4528, 1
        %v4535 = vrot.slane %v4529, 1
        %v4536 = vsel %vm605, %v4534, %v4535
        %v4537 = vrot.slane %v4530, 1
        %v4538 = vsel %vm605, %v4535, %v4537
        %4539 = vrot.lane.b32.xlu0 %v4536, 126
        %v4540 = vpop.permute.xlu0 %4539
        %4541 = vrot.lane.b32.xlu0 %v4538, 126
        %v4542 = vpop.permute.xlu0 %4541
        %v4545 = vadd.f32 %v4461, %v4540
        %v4546 = vadd.f32 %v4462, %v4542
        %s4547 = sld [smem:[#allocation10 + $0x83]]
        %v4548 = vstv %s4547
        %v4549 = vmul.f32 %v4548, %v4193
        %v4550 = vmul.f32 %v4548, %v4194
        %v4551 = vmul.f32 %v4548, %v4195
        %v4555 = vrot.slane %v4549, 1
        %v4556 = vrot.slane %v4550, 1
        %v4557 = vsel %vm605, %v4555, %v4556
        %v4558 = vrot.slane %v4551, 1
        %v4559 = vsel %vm605, %v4556, %v4558
        %4560 = vrot.lane.b32.xlu0 %v4557, 126
        %v4561 = vpop.permute.xlu0 %4560
        %4562 = vrot.lane.b32.xlu0 %v4559, 126
        %v4563 = vpop.permute.xlu0 %4562
        %v4566 = vadd.f32 %v4482, %v4561
        %v4567 = vadd.f32 %v4483, %v4563
        %s4568 = sld [smem:[#allocation10 + $0x18]]
        %v4569 = vstv %s4568
        %v4570 = vmul.f32 %v4569, %v4193
        %v4571 = vmul.f32 %v4569, %v4194
        %v4572 = vmul.f32 %v4569, %v4195
        %v4576 = vrot.slane %v4570, 2
        %v4577 = vrot.slane %v4571, 2
        %v4578 = vsel %vm842, %v4576, %v4577
        %v4579 = vrot.slane %v4572, 2
        %v4580 = vsel %vm842, %v4577, %v4579
        %v4583 = vadd.f32 %v4503, %v4578
        %v4584 = vadd.f32 %v4504, %v4580
        %s4585 = sld [smem:[#allocation10 + $0x3c]]
        %v4586 = vstv %s4585
        %v4587 = vmul.f32 %v4586, %v4193
        %v4588 = vmul.f32 %v4586, %v4194
        %v4589 = vmul.f32 %v4586, %v4195
        %v4593 = vrot.slane %v4587, 2
        %v4594 = vrot.slane %v4588, 2
        %v4595 = vsel %vm842, %v4593, %v4594
        %v4596 = vrot.slane %v4589, 2
        %v4597 = vsel %vm842, %v4594, %v4596
        %v4600 = vadd.f32 %v4524, %v4595
        %v4601 = vadd.f32 %v4525, %v4597
        %s4602 = sld [smem:[#allocation10 + $0x60]]
        %v4603 = vstv %s4602
        %v4604 = vmul.f32 %v4603, %v4193
        %v4605 = vmul.f32 %v4603, %v4194
        %v4606 = vmul.f32 %v4603, %v4195
        %v4610 = vrot.slane %v4604, 2
        %v4611 = vrot.slane %v4605, 2
        %v4612 = vsel %vm842, %v4610, %v4611
        %v4613 = vrot.slane %v4606, 2
        %v4614 = vsel %vm842, %v4611, %v4613
        %v4617 = vadd.f32 %v4545, %v4612
        %v4618 = vadd.f32 %v4546, %v4614
        %s4619 = sld [smem:[#allocation10 + $0x84]]
        %v4620 = vstv %s4619
        %v4621 = vmul.f32 %v4620, %v4193
        %v4622 = vmul.f32 %v4620, %v4194
        %v4623 = vmul.f32 %v4620, %v4195
        %v4627 = vrot.slane %v4621, 2
        %v4628 = vrot.slane %v4622, 2
        %v4629 = vsel %vm842, %v4627, %v4628
        %v4630 = vrot.slane %v4623, 2
        %v4631 = vsel %vm842, %v4628, %v4630
        %v4634 = vadd.f32 %v4566, %v4629
        %v4635 = vadd.f32 %v4567, %v4631
        %s4636 = sld [smem:[#allocation10 + $0x19]]
        %v4637 = vstv %s4636
        %v4638 = vmul.f32 %v4637, %v4193
        %v4639 = vmul.f32 %v4637, %v4194
        %v4640 = vmul.f32 %v4637, %v4195
        %v4644 = vrot.slane %v4638, 2
        %v4645 = vrot.slane %v4639, 2
        %v4646 = vsel %vm842, %v4644, %v4645
        %v4647 = vrot.slane %v4640, 2
        %v4648 = vsel %vm842, %v4645, %v4647
        %4649 = vrot.lane.b32.xlu0 %v4646, 127
        %v4650 = vpop.permute.xlu0 %4649
        %4651 = vrot.lane.b32.xlu0 %v4648, 127
        %v4652 = vpop.permute.xlu0 %4651
        %v4655 = vadd.f32 %v4583, %v4650
        %v4656 = vadd.f32 %v4584, %v4652
        %s4657 = sld [smem:[#allocation10 + $0x3d]]
        %v4658 = vstv %s4657
        %v4659 = vmul.f32 %v4658, %v4193
        %v4660 = vmul.f32 %v4658, %v4194
        %v4661 = vmul.f32 %v4658, %v4195
        %v4665 = vrot.slane %v4659, 2
        %v4666 = vrot.slane %v4660, 2
        %v4667 = vsel %vm842, %v4665, %v4666
        %v4668 = vrot.slane %v4661, 2
        %v4669 = vsel %vm842, %v4666, %v4668
        %4670 = vrot.lane.b32.xlu0 %v4667, 127
        %v4671 = vpop.permute.xlu0 %4670
        %4672 = vrot.lane.b32.xlu0 %v4669, 127
        %v4673 = vpop.permute.xlu0 %4672
        %v4676 = vadd.f32 %v4600, %v4671
        %v4677 = vadd.f32 %v4601, %v4673
        %s4678 = sld [smem:[#allocation10 + $0x61]]
        %v4679 = vstv %s4678
        %v4680 = vmul.f32 %v4679, %v4193
        %v4681 = vmul.f32 %v4679, %v4194
        %v4682 = vmul.f32 %v4679, %v4195
        %v4686 = vrot.slane %v4680, 2
        %v4687 = vrot.slane %v4681, 2
        %v4688 = vsel %vm842, %v4686, %v4687
        %v4689 = vrot.slane %v4682, 2
        %v4690 = vsel %vm842, %v4687, %v4689
        %4691 = vrot.lane.b32.xlu0 %v4688, 127
        %v4692 = vpop.permute.xlu0 %4691
        %4693 = vrot.lane.b32.xlu0 %v4690, 127
        %v4694 = vpop.permute.xlu0 %4693
        %v4697 = vadd.f32 %v4617, %v4692
        %v4698 = vadd.f32 %v4618, %v4694
        %s4699 = sld [smem:[#allocation10 + $0x85]]
        %v4700 = vstv %s4699
        %v4701 = vmul.f32 %v4700, %v4193
        %v4702 = vmul.f32 %v4700, %v4194
        %v4703 = vmul.f32 %v4700, %v4195
        %v4707 = vrot.slane %v4701, 2
        %v4708 = vrot.slane %v4702, 2
        %v4709 = vsel %vm842, %v4707, %v4708
        %v4710 = vrot.slane %v4703, 2
        %v4711 = vsel %vm842, %v4708, %v4710
        %4712 = vrot.lane.b32.xlu0 %v4709, 127
        %v4713 = vpop.permute.xlu0 %4712
        %4714 = vrot.lane.b32.xlu0 %v4711, 127
        %v4715 = vpop.permute.xlu0 %4714
        %v4718 = vadd.f32 %v4634, %v4713
        %v4719 = vadd.f32 %v4635, %v4715
        %s4720 = sld [smem:[#allocation10 + $0x1a]]
        %v4721 = vstv %s4720
        %v4722 = vmul.f32 %v4721, %v4193
        %v4723 = vmul.f32 %v4721, %v4194
        %v4724 = vmul.f32 %v4721, %v4195
        %v4728 = vrot.slane %v4722, 2
        %v4729 = vrot.slane %v4723, 2
        %v4730 = vsel %vm842, %v4728, %v4729
        %v4731 = vrot.slane %v4724, 2
        %v4732 = vsel %vm842, %v4729, %v4731
        %4733 = vrot.lane.b32.xlu0 %v4730, 126
        %v4734 = vpop.permute.xlu0 %4733
        %4735 = vrot.lane.b32.xlu0 %v4732, 126
        %v4736 = vpop.permute.xlu0 %4735
        %v4739 = vadd.f32 %v4655, %v4734
        %v4740 = vadd.f32 %v4656, %v4736
        %s4741 = sld [smem:[#allocation10 + $0x3e]]
        %v4742 = vstv %s4741
        %v4743 = vmul.f32 %v4742, %v4193
        %v4744 = vmul.f32 %v4742, %v4194
        %v4745 = vmul.f32 %v4742, %v4195
        %v4749 = vrot.slane %v4743, 2
        %v4750 = vrot.slane %v4744, 2
        %v4751 = vsel %vm842, %v4749, %v4750
        %v4752 = vrot.slane %v4745, 2
        %v4753 = vsel %vm842, %v4750, %v4752
        %4754 = vrot.lane.b32.xlu0 %v4751, 126
        %v4755 = vpop.permute.xlu0 %4754
        %4756 = vrot.lane.b32.xlu0 %v4753, 126
        %v4757 = vpop.permute.xlu0 %4756
        %v4760 = vadd.f32 %v4676, %v4755
        %v4761 = vadd.f32 %v4677, %v4757
        %s4762 = sld [smem:[#allocation10 + $0x62]]
        %v4763 = vstv %s4762
        %v4764 = vmul.f32 %v4763, %v4193
        %v4765 = vmul.f32 %v4763, %v4194
        %v4766 = vmul.f32 %v4763, %v4195
        %v4770 = vrot.slane %v4764, 2
        %v4771 = vrot.slane %v4765, 2
        %v4772 = vsel %vm842, %v4770, %v4771
        %v4773 = vrot.slane %v4766, 2
        %v4774 = vsel %vm842, %v4771, %v4773
        %4775 = vrot.lane.b32.xlu0 %v4772, 126
        %v4776 = vpop.permute.xlu0 %4775
        %4777 = vrot.lane.b32.xlu0 %v4774, 126
        %v4778 = vpop.permute.xlu0 %4777
        %v4781 = vadd.f32 %v4697, %v4776
        %v4782 = vadd.f32 %v4698, %v4778
        %s4783 = sld [smem:[#allocation10 + $0x86]]
        %v4784 = vstv %s4783
        %v4785 = vmul.f32 %v4784, %v4193
        %v4786 = vmul.f32 %v4784, %v4194
        %v4787 = vmul.f32 %v4784, %v4195
        %v4791 = vrot.slane %v4785, 2
        %v4792 = vrot.slane %v4786, 2
        %v4793 = vsel %vm842, %v4791, %v4792
        %v4794 = vrot.slane %v4787, 2
        %v4795 = vsel %vm842, %v4792, %v4794
        %4796 = vrot.lane.b32.xlu0 %v4793, 126
        %v4797 = vpop.permute.xlu0 %4796
        %4798 = vrot.lane.b32.xlu0 %v4795, 126
        %v4799 = vpop.permute.xlu0 %4798
        %v4802 = vadd.f32 %v4718, %v4797
        %v4803 = vadd.f32 %v4719, %v4799
        %v4804 = vld [vmem:[%s2295] sm:$0xff]
        %v4805 = vld [vmem:[%s2295 + $0x8] sm:$0xff]
        %v4806 = vld [vmem:[%s2295 + $0x10] sm:$0x3]
        %s4807 = sld [smem:[#allocation10 + $0x1b]]
        %v4808 = vstv %s4807
        %v4809 = vmul.f32 %v4808, %v4804
        %v4810 = vmul.f32 %v4808, %v4805
        %v4811 = vadd.f32 %v4739, %v4809
        %v4812 = vadd.f32 %v4740, %v4810
        %s4813 = sld [smem:[#allocation10 + $0x3f]]
        %v4814 = vstv %s4813
        %v4815 = vmul.f32 %v4814, %v4804
        %v4816 = vmul.f32 %v4814, %v4805
        %v4817 = vadd.f32 %v4760, %v4815
        %v4818 = vadd.f32 %v4761, %v4816
        %s4819 = sld [smem:[#allocation10 + $0x63]]
        %v4820 = vstv %s4819
        %v4821 = vmul.f32 %v4820, %v4804
        %v4822 = vmul.f32 %v4820, %v4805
        %v4823 = vadd.f32 %v4781, %v4821
        %v4824 = vadd.f32 %v4782, %v4822
        %s4825 = sld [smem:[#allocation10 + $0x87]]
        %v4826 = vstv %s4825
        %v4827 = vmul.f32 %v4826, %v4804
        %v4828 = vmul.f32 %v4826, %v4805
        %v4829 = vadd.f32 %v4802, %v4827
        %v4830 = vadd.f32 %v4803, %v4828
        %s4831 = sld [smem:[#allocation10 + $0x1c]]
        %v4832 = vstv %s4831
        %v4833 = vmul.f32 %v4832, %v4804
        %v4834 = vmul.f32 %v4832, %v4805
        %4837 = vrot.lane.b32.xlu0 %v4833, 127
        %v4838 = vpop.permute.xlu0 %4837
        %4839 = vrot.lane.b32.xlu0 %v4834, 127
        %v4840 = vpop.permute.xlu0 %4839
        %v4843 = vadd.f32 %v4811, %v4838
        %v4844 = vadd.f32 %v4812, %v4840
        %s4845 = sld [smem:[#allocation10 + $0x40]]
        %v4846 = vstv %s4845
        %v4847 = vmul.f32 %v4846, %v4804
        %v4848 = vmul.f32 %v4846, %v4805
        %4851 = vrot.lane.b32.xlu0 %v4847, 127
        %v4852 = vpop.permute.xlu0 %4851
        %4853 = vrot.lane.b32.xlu0 %v4848, 127
        %v4854 = vpop.permute.xlu0 %4853
        %v4857 = vadd.f32 %v4817, %v4852
        %v4858 = vadd.f32 %v4818, %v4854
        %s4859 = sld [smem:[#allocation10 + $0x64]]
        %v4860 = vstv %s4859
        %v4861 = vmul.f32 %v4860, %v4804
        %v4862 = vmul.f32 %v4860, %v4805
        %4865 = vrot.lane.b32.xlu0 %v4861, 127
        %v4866 = vpop.permute.xlu0 %4865
        %4867 = vrot.lane.b32.xlu0 %v4862, 127
        %v4868 = vpop.permute.xlu0 %4867
        %v4871 = vadd.f32 %v4823, %v4866
        %v4872 = vadd.f32 %v4824, %v4868
        %s4873 = sld [smem:[#allocation10 + $0x88]]
        %v4874 = vstv %s4873
        %v4875 = vmul.f32 %v4874, %v4804
        %v4876 = vmul.f32 %v4874, %v4805
        %4879 = vrot.lane.b32.xlu0 %v4875, 127
        %v4880 = vpop.permute.xlu0 %4879
        %4881 = vrot.lane.b32.xlu0 %v4876, 127
        %v4882 = vpop.permute.xlu0 %4881
        %v4885 = vadd.f32 %v4829, %v4880
        %v4886 = vadd.f32 %v4830, %v4882
        %s4887 = sld [smem:[#allocation10 + $0x1d]]
        %v4888 = vstv %s4887
        %v4889 = vmul.f32 %v4888, %v4804
        %v4890 = vmul.f32 %v4888, %v4805
        %4893 = vrot.lane.b32.xlu0 %v4889, 126
        %v4894 = vpop.permute.xlu0 %4893
        %4895 = vrot.lane.b32.xlu0 %v4890, 126
        %v4896 = vpop.permute.xlu0 %4895
        %v4899 = vadd.f32 %v4843, %v4894
        %v4900 = vadd.f32 %v4844, %v4896
        %s4901 = sld [smem:[#allocation10 + $0x41]]
        %v4902 = vstv %s4901
        %v4903 = vmul.f32 %v4902, %v4804
        %v4904 = vmul.f32 %v4902, %v4805
        %4907 = vrot.lane.b32.xlu0 %v4903, 126
        %v4908 = vpop.permute.xlu0 %4907
        %4909 = vrot.lane.b32.xlu0 %v4904, 126
        %v4910 = vpop.permute.xlu0 %4909
        %v4913 = vadd.f32 %v4857, %v4908
        %v4914 = vadd.f32 %v4858, %v4910
        %s4915 = sld [smem:[#allocation10 + $0x65]]
        %v4916 = vstv %s4915
        %v4917 = vmul.f32 %v4916, %v4804
        %v4918 = vmul.f32 %v4916, %v4805
        %4921 = vrot.lane.b32.xlu0 %v4917, 126
        %v4922 = vpop.permute.xlu0 %4921
        %4923 = vrot.lane.b32.xlu0 %v4918, 126
        %v4924 = vpop.permute.xlu0 %4923
        %v4927 = vadd.f32 %v4871, %v4922
        %v4928 = vadd.f32 %v4872, %v4924
        %s4929 = sld [smem:[#allocation10 + $0x89]]
        %v4930 = vstv %s4929
        %v4931 = vmul.f32 %v4930, %v4804
        %v4932 = vmul.f32 %v4930, %v4805
        %4935 = vrot.lane.b32.xlu0 %v4931, 126
        %v4936 = vpop.permute.xlu0 %4935
        %4937 = vrot.lane.b32.xlu0 %v4932, 126
        %v4938 = vpop.permute.xlu0 %4937
        %v4941 = vadd.f32 %v4885, %v4936
        %v4942 = vadd.f32 %v4886, %v4938
        %s4943 = sld [smem:[#allocation10 + $0x1e]]
        %v4944 = vstv %s4943
        %v4945 = vmul.f32 %v4944, %v4804
        %v4946 = vmul.f32 %v4944, %v4805
        %v4947 = vmul.f32 %v4944, %v4806
        %v4951 = vrot.slane %v4945, 1
        %v4952 = vrot.slane %v4946, 1
        %v4953 = vsel %vm605, %v4951, %v4952
        %v4954 = vrot.slane %v4947, 1
        %v4955 = vsel %vm605, %v4952, %v4954
        %v4958 = vadd.f32 %v4899, %v4953
        %v4959 = vadd.f32 %v4900, %v4955
        %s4960 = sld [smem:[#allocation10 + $0x42]]
        %v4961 = vstv %s4960
        %v4962 = vmul.f32 %v4961, %v4804
        %v4963 = vmul.f32 %v4961, %v4805
        %v4964 = vmul.f32 %v4961, %v4806
        %v4968 = vrot.slane %v4962, 1
        %v4969 = vrot.slane %v4963, 1
        %v4970 = vsel %vm605, %v4968, %v4969
        %v4971 = vrot.slane %v4964, 1
        %v4972 = vsel %vm605, %v4969, %v4971
        %v4975 = vadd.f32 %v4913, %v4970
        %v4976 = vadd.f32 %v4914, %v4972
        %s4977 = sld [smem:[#allocation10 + $0x66]]
        %v4978 = vstv %s4977
        %v4979 = vmul.f32 %v4978, %v4804
        %v4980 = vmul.f32 %v4978, %v4805
        %v4981 = vmul.f32 %v4978, %v4806
        %v4985 = vrot.slane %v4979, 1
        %v4986 = vrot.slane %v4980, 1
        %v4987 = vsel %vm605, %v4985, %v4986
        %v4988 = vrot.slane %v4981, 1
        %v4989 = vsel %vm605, %v4986, %v4988
        %v4992 = vadd.f32 %v4927, %v4987
        %v4993 = vadd.f32 %v4928, %v4989
        %s4994 = sld [smem:[#allocation10 + $0x8a]]
        %v4995 = vstv %s4994
        %v4996 = vmul.f32 %v4995, %v4804
        %v4997 = vmul.f32 %v4995, %v4805
        %v4998 = vmul.f32 %v4995, %v4806
        %v5002 = vrot.slane %v4996, 1
        %v5003 = vrot.slane %v4997, 1
        %v5004 = vsel %vm605, %v5002, %v5003
        %v5005 = vrot.slane %v4998, 1
        %v5006 = vsel %vm605, %v5003, %v5005
        %v5009 = vadd.f32 %v4941, %v5004
        %v5010 = vadd.f32 %v4942, %v5006
        %s5011 = sld [smem:[#allocation10 + $0x1f]]
        %v5012 = vstv %s5011
        %v5013 = vmul.f32 %v5012, %v4804
        %v5014 = vmul.f32 %v5012, %v4805
        %v5015 = vmul.f32 %v5012, %v4806
        %v5019 = vrot.slane %v5013, 1
        %v5020 = vrot.slane %v5014, 1
        %v5021 = vsel %vm605, %v5019, %v5020
        %v5022 = vrot.slane %v5015, 1
        %v5023 = vsel %vm605, %v5020, %v5022
        %5024 = vrot.lane.b32.xlu0 %v5021, 127
        %v5025 = vpop.permute.xlu0 %5024
        %5026 = vrot.lane.b32.xlu0 %v5023, 127
        %v5027 = vpop.permute.xlu0 %5026
        %v5030 = vadd.f32 %v4958, %v5025
        %v5031 = vadd.f32 %v4959, %v5027
        %s5032 = sld [smem:[#allocation10 + $0x43]]
        %v5033 = vstv %s5032
        %v5034 = vmul.f32 %v5033, %v4804
        %v5035 = vmul.f32 %v5033, %v4805
        %v5036 = vmul.f32 %v5033, %v4806
        %v5040 = vrot.slane %v5034, 1
        %v5041 = vrot.slane %v5035, 1
        %v5042 = vsel %vm605, %v5040, %v5041
        %v5043 = vrot.slane %v5036, 1
        %v5044 = vsel %vm605, %v5041, %v5043
        %5045 = vrot.lane.b32.xlu0 %v5042, 127
        %v5046 = vpop.permute.xlu0 %5045
        %5047 = vrot.lane.b32.xlu0 %v5044, 127
        %v5048 = vpop.permute.xlu0 %5047
        %v5051 = vadd.f32 %v4975, %v5046
        %v5052 = vadd.f32 %v4976, %v5048
        %s5053 = sld [smem:[#allocation10 + $0x67]]
        %v5054 = vstv %s5053
        %v5055 = vmul.f32 %v5054, %v4804
        %v5056 = vmul.f32 %v5054, %v4805
        %v5057 = vmul.f32 %v5054, %v4806
        %v5061 = vrot.slane %v5055, 1
        %v5062 = vrot.slane %v5056, 1
        %v5063 = vsel %vm605, %v5061, %v5062
        %v5064 = vrot.slane %v5057, 1
        %v5065 = vsel %vm605, %v5062, %v5064
        %5066 = vrot.lane.b32.xlu0 %v5063, 127
        %v5067 = vpop.permute.xlu0 %5066
        %5068 = vrot.lane.b32.xlu0 %v5065, 127
        %v5069 = vpop.permute.xlu0 %5068
        %v5072 = vadd.f32 %v4992, %v5067
        %v5073 = vadd.f32 %v4993, %v5069
        %s5074 = sld [smem:[#allocation10 + $0x8b]]
        %v5075 = vstv %s5074
        %v5076 = vmul.f32 %v5075, %v4804
        %v5077 = vmul.f32 %v5075, %v4805
        %v5078 = vmul.f32 %v5075, %v4806
        %v5082 = vrot.slane %v5076, 1
        %v5083 = vrot.slane %v5077, 1
        %v5084 = vsel %vm605, %v5082, %v5083
        %v5085 = vrot.slane %v5078, 1
        %v5086 = vsel %vm605, %v5083, %v5085
        %5087 = vrot.lane.b32.xlu0 %v5084, 127
        %v5088 = vpop.permute.xlu0 %5087
        %5089 = vrot.lane.b32.xlu0 %v5086, 127
        %v5090 = vpop.permute.xlu0 %5089
        %v5093 = vadd.f32 %v5009, %v5088
        %v5094 = vadd.f32 %v5010, %v5090
        %s5095 = sld [smem:[#allocation10 + $0x20]]
        %v5096 = vstv %s5095
        %v5097 = vmul.f32 %v5096, %v4804
        %v5098 = vmul.f32 %v5096, %v4805
        %v5099 = vmul.f32 %v5096, %v4806
        %v5103 = vrot.slane %v5097, 1
        %v5104 = vrot.slane %v5098, 1
        %v5105 = vsel %vm605, %v5103, %v5104
        %v5106 = vrot.slane %v5099, 1
        %v5107 = vsel %vm605, %v5104, %v5106
        %5108 = vrot.lane.b32.xlu0 %v5105, 126
        %v5109 = vpop.permute.xlu0 %5108
        %5110 = vrot.lane.b32.xlu0 %v5107, 126
        %v5111 = vpop.permute.xlu0 %5110
        %v5114 = vadd.f32 %v5030, %v5109
        %v5115 = vadd.f32 %v5031, %v5111
        %s5116 = sld [smem:[#allocation10 + $0x44]]
        %v5117 = vstv %s5116
        %v5118 = vmul.f32 %v5117, %v4804
        %v5119 = vmul.f32 %v5117, %v4805
        %v5120 = vmul.f32 %v5117, %v4806
        %v5124 = vrot.slane %v5118, 1
        %v5125 = vrot.slane %v5119, 1
        %v5126 = vsel %vm605, %v5124, %v5125
        %v5127 = vrot.slane %v5120, 1
        %v5128 = vsel %vm605, %v5125, %v5127
        %5129 = vrot.lane.b32.xlu0 %v5126, 126
        %v5130 = vpop.permute.xlu0 %5129
        %5131 = vrot.lane.b32.xlu0 %v5128, 126
        %v5132 = vpop.permute.xlu0 %5131
        %v5135 = vadd.f32 %v5051, %v5130
        %v5136 = vadd.f32 %v5052, %v5132
        %s5137 = sld [smem:[#allocation10 + $0x68]]
        %v5138 = vstv %s5137
        %v5139 = vmul.f32 %v5138, %v4804
        %v5140 = vmul.f32 %v5138, %v4805
        %v5141 = vmul.f32 %v5138, %v4806
        %v5145 = vrot.slane %v5139, 1
        %v5146 = vrot.slane %v5140, 1
        %v5147 = vsel %vm605, %v5145, %v5146
        %v5148 = vrot.slane %v5141, 1
        %v5149 = vsel %vm605, %v5146, %v5148
        %5150 = vrot.lane.b32.xlu0 %v5147, 126
        %v5151 = vpop.permute.xlu0 %5150
        %5152 = vrot.lane.b32.xlu0 %v5149, 126
        %v5153 = vpop.permute.xlu0 %5152
        %v5156 = vadd.f32 %v5072, %v5151
        %v5157 = vadd.f32 %v5073, %v5153
        %s5158 = sld [smem:[#allocation10 + $0x8c]]
        %v5159 = vstv %s5158
        %v5160 = vmul.f32 %v5159, %v4804
        %v5161 = vmul.f32 %v5159, %v4805
        %v5162 = vmul.f32 %v5159, %v4806
        %v5166 = vrot.slane %v5160, 1
        %v5167 = vrot.slane %v5161, 1
        %v5168 = vsel %vm605, %v5166, %v5167
        %v5169 = vrot.slane %v5162, 1
        %v5170 = vsel %vm605, %v5167, %v5169
        %5171 = vrot.lane.b32.xlu0 %v5168, 126
        %v5172 = vpop.permute.xlu0 %5171
        %5173 = vrot.lane.b32.xlu0 %v5170, 126
        %v5174 = vpop.permute.xlu0 %5173
        %v5177 = vadd.f32 %v5093, %v5172
        %v5178 = vadd.f32 %v5094, %v5174
        %s5179 = sld [smem:[#allocation10 + $0x21]]
        %v5180 = vstv %s5179
        %v5181 = vmul.f32 %v5180, %v4804
        %v5182 = vmul.f32 %v5180, %v4805
        %v5183 = vmul.f32 %v5180, %v4806
        %v5187 = vrot.slane %v5181, 2
        %v5188 = vrot.slane %v5182, 2
        %v5189 = vsel %vm842, %v5187, %v5188
        %v5190 = vrot.slane %v5183, 2
        %v5191 = vsel %vm842, %v5188, %v5190
        %v5194 = vadd.f32 %v5114, %v5189
        %v5195 = vadd.f32 %v5115, %v5191
        %s5196 = sld [smem:[#allocation10 + $0x45]]
        %v5197 = vstv %s5196
        %v5198 = vmul.f32 %v5197, %v4804
        %v5199 = vmul.f32 %v5197, %v4805
        %v5200 = vmul.f32 %v5197, %v4806
        %v5204 = vrot.slane %v5198, 2
        %v5205 = vrot.slane %v5199, 2
        %v5206 = vsel %vm842, %v5204, %v5205
        %v5207 = vrot.slane %v5200, 2
        %v5208 = vsel %vm842, %v5205, %v5207
        %v5211 = vadd.f32 %v5135, %v5206
        %v5212 = vadd.f32 %v5136, %v5208
        %s5213 = sld [smem:[#allocation10 + $0x69]]
        %v5214 = vstv %s5213
        %v5215 = vmul.f32 %v5214, %v4804
        %v5216 = vmul.f32 %v5214, %v4805
        %v5217 = vmul.f32 %v5214, %v4806
        %v5221 = vrot.slane %v5215, 2
        %v5222 = vrot.slane %v5216, 2
        %v5223 = vsel %vm842, %v5221, %v5222
        %v5224 = vrot.slane %v5217, 2
        %v5225 = vsel %vm842, %v5222, %v5224
        %v5228 = vadd.f32 %v5156, %v5223
        %v5229 = vadd.f32 %v5157, %v5225
        %s5230 = sld [smem:[#allocation10 + $0x8d]]
        %v5231 = vstv %s5230
        %v5232 = vmul.f32 %v5231, %v4804
        %v5233 = vmul.f32 %v5231, %v4805
        %v5234 = vmul.f32 %v5231, %v4806
        %v5238 = vrot.slane %v5232, 2
        %v5239 = vrot.slane %v5233, 2
        %v5240 = vsel %vm842, %v5238, %v5239
        %v5241 = vrot.slane %v5234, 2
        %v5242 = vsel %vm842, %v5239, %v5241
        %v5245 = vadd.f32 %v5177, %v5240
        %v5246 = vadd.f32 %v5178, %v5242
        %s5247 = sld [smem:[#allocation10 + $0x22]]
        %v5248 = vstv %s5247
        %v5249 = vmul.f32 %v5248, %v4804
        %v5250 = vmul.f32 %v5248, %v4805
        %v5251 = vmul.f32 %v5248, %v4806
        %v5255 = vrot.slane %v5249, 2
        %v5256 = vrot.slane %v5250, 2
        %v5257 = vsel %vm842, %v5255, %v5256
        %v5258 = vrot.slane %v5251, 2
        %v5259 = vsel %vm842, %v5256, %v5258
        %5260 = vrot.lane.b32.xlu0 %v5257, 127
        %v5261 = vpop.permute.xlu0 %5260
        %5262 = vrot.lane.b32.xlu0 %v5259, 127
        %v5263 = vpop.permute.xlu0 %5262
        %v5266 = vadd.f32 %v5194, %v5261
        %v5267 = vadd.f32 %v5195, %v5263
        %s5268 = sld [smem:[#allocation10 + $0x46]]
        %v5269 = vstv %s5268
        %v5270 = vmul.f32 %v5269, %v4804
        %v5271 = vmul.f32 %v5269, %v4805
        %v5272 = vmul.f32 %v5269, %v4806
        %v5276 = vrot.slane %v5270, 2
        %v5277 = vrot.slane %v5271, 2
        %v5278 = vsel %vm842, %v5276, %v5277
        %v5279 = vrot.slane %v5272, 2
        %v5280 = vsel %vm842, %v5277, %v5279
        %5281 = vrot.lane.b32.xlu0 %v5278, 127
        %v5282 = vpop.permute.xlu0 %5281
        %5283 = vrot.lane.b32.xlu0 %v5280, 127
        %v5284 = vpop.permute.xlu0 %5283
        %v5287 = vadd.f32 %v5211, %v5282
        %v5288 = vadd.f32 %v5212, %v5284
        %s5289 = sld [smem:[#allocation10 + $0x6a]]
        %v5290 = vstv %s5289
        %v5291 = vmul.f32 %v5290, %v4804
        %v5292 = vmul.f32 %v5290, %v4805
        %v5293 = vmul.f32 %v5290, %v4806
        %v5297 = vrot.slane %v5291, 2
        %v5298 = vrot.slane %v5292, 2
        %v5299 = vsel %vm842, %v5297, %v5298
        %v5300 = vrot.slane %v5293, 2
        %v5301 = vsel %vm842, %v5298, %v5300
        %5302 = vrot.lane.b32.xlu0 %v5299, 127
        %v5303 = vpop.permute.xlu0 %5302
        %5304 = vrot.lane.b32.xlu0 %v5301, 127
        %v5305 = vpop.permute.xlu0 %5304
        %v5308 = vadd.f32 %v5228, %v5303
        %v5309 = vadd.f32 %v5229, %v5305
        %s5310 = sld [smem:[#allocation10 + $0x8e]]
        %v5311 = vstv %s5310
        %v5312 = vmul.f32 %v5311, %v4804
        %v5313 = vmul.f32 %v5311, %v4805
        %v5314 = vmul.f32 %v5311, %v4806
        %v5318 = vrot.slane %v5312, 2
        %v5319 = vrot.slane %v5313, 2
        %v5320 = vsel %vm842, %v5318, %v5319
        %v5321 = vrot.slane %v5314, 2
        %v5322 = vsel %vm842, %v5319, %v5321
        %5323 = vrot.lane.b32.xlu0 %v5320, 127
        %v5324 = vpop.permute.xlu0 %5323
        %5325 = vrot.lane.b32.xlu0 %v5322, 127
        %v5326 = vpop.permute.xlu0 %5325
        %v5329 = vadd.f32 %v5245, %v5324
        %v5330 = vadd.f32 %v5246, %v5326
        %s5331 = sld [smem:[#allocation10 + $0x23]]
        %v5332 = vstv %s5331
        %v5333 = vmul.f32 %v5332, %v4804
        %v5334 = vmul.f32 %v5332, %v4805
        %v5335 = vmul.f32 %v5332, %v4806
        %v5339 = vrot.slane %v5333, 2
        %v5340 = vrot.slane %v5334, 2
        %v5341 = vsel %vm842, %v5339, %v5340
        %v5342 = vrot.slane %v5335, 2
        %v5343 = vsel %vm842, %v5340, %v5342
        %5344 = vrot.lane.b32.xlu0 %v5341, 126
        %v5345 = vpop.permute.xlu0 %5344
        %5346 = vrot.lane.b32.xlu0 %v5343, 126
        %v5347 = vpop.permute.xlu0 %5346
        %v5350 = vadd.f32 %v5266, %v5345
        %v5351 = vadd.f32 %v5267, %v5347
        %s5352 = sld [smem:[#allocation10 + $0x47]]
        %v5353 = vstv %s5352
        %v5354 = vmul.f32 %v5353, %v4804
        %v5355 = vmul.f32 %v5353, %v4805
        %v5356 = vmul.f32 %v5353, %v4806
        %v5360 = vrot.slane %v5354, 2
        %v5361 = vrot.slane %v5355, 2
        %v5362 = vsel %vm842, %v5360, %v5361
        %v5363 = vrot.slane %v5356, 2
        %v5364 = vsel %vm842, %v5361, %v5363
        %5365 = vrot.lane.b32.xlu0 %v5362, 126
        %v5366 = vpop.permute.xlu0 %5365
        %5367 = vrot.lane.b32.xlu0 %v5364, 126
        %v5368 = vpop.permute.xlu0 %5367
        %v5371 = vadd.f32 %v5287, %v5366
        %v5372 = vadd.f32 %v5288, %v5368
        %s5373 = sld [smem:[#allocation10 + $0x6b]]
        %v5374 = vstv %s5373
        %v5375 = vmul.f32 %v5374, %v4804
        %v5376 = vmul.f32 %v5374, %v4805
        %v5377 = vmul.f32 %v5374, %v4806
        %v5381 = vrot.slane %v5375, 2
        %v5382 = vrot.slane %v5376, 2
        %v5383 = vsel %vm842, %v5381, %v5382
        %v5384 = vrot.slane %v5377, 2
        %v5385 = vsel %vm842, %v5382, %v5384
        %5386 = vrot.lane.b32.xlu0 %v5383, 126
        %v5387 = vpop.permute.xlu0 %5386
        %5388 = vrot.lane.b32.xlu0 %v5385, 126
        %v5389 = vpop.permute.xlu0 %5388
        %v5392 = vadd.f32 %v5308, %v5387
        %v5393 = vadd.f32 %v5309, %v5389
        %s5394 = sld [smem:[#allocation10 + $0x8f]]
        %v5395 = vstv %s5394
        %v5396 = vmul.f32 %v5395, %v4804
        %v5397 = vmul.f32 %v5395, %v4805
        %v5398 = vmul.f32 %v5395, %v4806
        %v5402 = vrot.slane %v5396, 2
        %v5403 = vrot.slane %v5397, 2
        %v5404 = vsel %vm842, %v5402, %v5403
        %v5405 = vrot.slane %v5398, 2
        %v5406 = vsel %vm842, %v5403, %v5405
        %5407 = vrot.lane.b32.xlu0 %v5404, 126
        %v5408 = vpop.permute.xlu0 %5407
        %5409 = vrot.lane.b32.xlu0 %v5406, 126
        %v5410 = vpop.permute.xlu0 %5409
        %v5413 = vadd.f32 %v5329, %v5408
        %v5414 = vadd.f32 %v5330, %v5410
        %s5415 = sld [smem:[#allocation12]]
        %v5416 = vstv %s5415
        %v5417 = vadd.f32 %v5350, %v5416
        %v5418 = vadd.f32 %v5351, %v5416
        %v5419 = vmax.f32 %v5417, 0.0
        %v5420 = vmax.f32 %v5418, 0.0
        %s5421 = sld [smem:[#allocation12 + $0x1]]
        %v5422 = vstv %s5421
        %v5423 = vadd.f32 %v5371, %v5422
        %v5424 = vadd.f32 %v5372, %v5422
        %v5425 = vmax.f32 %v5423, 0.0
        %v5426 = vmax.f32 %v5424, 0.0
        %s5427 = sld [smem:[#allocation12 + $0x2]]
        %v5428 = vstv %s5427
        %v5429 = vadd.f32 %v5392, %v5428
        %v5430 = vadd.f32 %v5393, %v5428
        %v5431 = vmax.f32 %v5429, 0.0
        %v5432 = vmax.f32 %v5430, 0.0
        %s5433 = sld [smem:[#allocation12 + $0x3]]
        %v5434 = vstv %s5433
        %v5435 = vadd.f32 %v5413, %v5434
        %v5436 = vadd.f32 %v5414, %v5434
        %v5437 = vmax.f32 %v5435, 0.0
        %v5438 = vmax.f32 %v5436, 0.0
        %s5439 = sld [smem:[#allocation13]]
        %v5440 = vstv %s5439
        %v5441 = vmul.f32 %v5440, %v5419
        %v5442 = vmul.f32 %v5440, %v5420
        %v5443 = vadd.f32 %v5441, 0.0
        %v5444 = vadd.f32 %v5442, 0.0
        %s5445 = sld [smem:[#allocation13 + $0x1]]
        %v5446 = vstv %s5445
        %v5447 = vmul.f32 %v5446, %v5425
        %v5448 = vmul.f32 %v5446, %v5426
        %v5449 = vadd.f32 %v5443, %v5447
        %v5450 = vadd.f32 %v5444, %v5448
        %s5451 = sld [smem:[#allocation13 + $0x2]]
        %v5452 = vstv %s5451
        %v5453 = vmul.f32 %v5452, %v5431
        %v5454 = vmul.f32 %v5452, %v5432
        %v5455 = vadd.f32 %v5449, %v5453
        %v5456 = vadd.f32 %v5450, %v5454
        %s5457 = sld [smem:[#allocation13 + $0x3]]
        %v5458 = vstv %s5457
        %v5459 = vmul.f32 %v5458, %v5437
        %v5460 = vmul.f32 %v5458, %v5438
        %v5461 = vadd.f32 %v5455, %v5459
        %v5462 = vadd.f32 %v5456, %v5460
        %s5463 = sld [smem:[#allocation15]]
        %v5464 = vstv %s5463
        %v5465 = vadd.f32 %v5461, %v5464
        %v5466 = vadd.f32 %v5462, %v5464
        %v5467 = vxor.u32 %v5465, 2147483648
        %v5468 = vxor.u32 %v5466, 2147483648
        %v5469 = vmul.f32 %v5467, 1.442695
        %v5470 = vpow.pop %v5469
        %v5471 = vmul.f32 %v5468, 1.442695
        %v5472 = vpow.pop %v5471
        %v5473 = vadd.f32 %v5470, 1.0
        %v5474 = vadd.f32 %v5472, 1.0
        %v5475 = vrcp.pop %v5473
        %v5476 = vmul.f32 1.0, %v5475
        %v5477 = vrcp.pop %v5474
        %v5478 = vmul.f32 1.0, %v5477
        %v5479 = vmax.f32 %v5476, 0.0001
        %v5480 = vmax.f32 %v5478, 0.0001
        %v5481 = vmin.f32 %v5479, 0.9999
        %v5482 = vmin.f32 %v5480, 0.9999
        %vm5483 = vcmask 130048
        %5484 = vst.msk [vmem:[%s371] sm:$0xff] %vm5483, %v5481
        %5485 = vst.msk [vmem:[%s371 + $0x8] sm:$0xff] %vm5483, %v5482
        %s5486 = sld [smem:[#allocation13 + $0x4]]
        %v5487 = vstv %s5486
        %v5488 = vmul.f32 %v5487, %v5419
        %v5489 = vmul.f32 %v5487, %v5420
        %v5490 = vadd.f32 %v5488, 0.0
        %v5491 = vadd.f32 %v5489, 0.0
        %s5492 = sld [smem:[#allocation13 + $0x5]]
        %v5493 = vstv %s5492
        %v5494 = vmul.f32 %v5493, %v5425
        %v5495 = vmul.f32 %v5493, %v5426
        %v5496 = vadd.f32 %v5490, %v5494
        %v5497 = vadd.f32 %v5491, %v5495
        %s5498 = sld [smem:[#allocation13 + $0x6]]
        %v5499 = vstv %s5498
        %v5500 = vmul.f32 %v5499, %v5431
        %v5501 = vmul.f32 %v5499, %v5432
        %v5502 = vadd.f32 %v5496, %v5500
        %v5503 = vadd.f32 %v5497, %v5501
        %s5504 = sld [smem:[#allocation13 + $0x7]]
        %v5505 = vstv %s5504
        %v5506 = vmul.f32 %v5505, %v5437
        %v5507 = vmul.f32 %v5505, %v5438
        %v5508 = vadd.f32 %v5502, %v5506
        %v5509 = vadd.f32 %v5503, %v5507
        %s5510 = sld [smem:[#allocation15 + $0x1]]
        %v5511 = vstv %s5510
        %v5512 = vadd.f32 %v5508, %v5511
        %v5513 = vadd.f32 %v5509, %v5511
        %v5514 = vxor.u32 %v5512, 2147483648
        %v5515 = vxor.u32 %v5513, 2147483648
        %v5516 = vmul.f32 %v5514, 1.442695
        %v5517 = vpow.pop %v5516
        %v5518 = vmul.f32 %v5515, 1.442695
        %v5519 = vpow.pop %v5518
        %v5520 = vadd.f32 %v5517, 1.0
        %v5521 = vadd.f32 %v5519, 1.0
        %v5522 = vrcp.pop %v5520
        %v5523 = vmul.f32 1.0, %v5522
        %v5524 = vrcp.pop %v5521
        %v5525 = vmul.f32 1.0, %v5524
        %v5526 = vmax.f32 %v5523, 0.0001
        %v5527 = vmax.f32 %v5525, 0.0001
        %v5528 = vmin.f32 %v5526, 0.9999
        %v5529 = vmin.f32 %v5527, 0.9999
        %s5530 = scalar_lea.vmem %s371, 16 [#allocation16]
        %5531 = vst.msk [vmem:[%s5530] sm:$0xff] %vm5483, %v5528
        %5532 = vst.msk [vmem:[%s5530 + $0x8] sm:$0xff] %vm5483, %v5529
        %s5533 = sld [smem:[#allocation13 + $0x8]]
        %v5534 = vstv %s5533
        %v5535 = vmul.f32 %v5534, %v5419
        %v5536 = vmul.f32 %v5534, %v5420
        %v5537 = vadd.f32 %v5535, 0.0
        %v5538 = vadd.f32 %v5536, 0.0
        %s5539 = sld [smem:[#allocation13 + $0x9]]
        %v5540 = vstv %s5539
        %v5541 = vmul.f32 %v5540, %v5425
        %v5542 = vmul.f32 %v5540, %v5426
        %v5543 = vadd.f32 %v5537, %v5541
        %v5544 = vadd.f32 %v5538, %v5542
        %s5545 = sld [smem:[#allocation13 + $0xa]]
        %v5546 = vstv %s5545
        %v5547 = vmul.f32 %v5546, %v5431
        %v5548 = vmul.f32 %v5546, %v5432
        %v5549 = vadd.f32 %v5543, %v5547
        %v5550 = vadd.f32 %v5544, %v5548
        %s5551 = sld [smem:[#allocation13 + $0xb]]
        %v5552 = vstv %s5551
        %v5553 = vmul.f32 %v5552, %v5437
        %v5554 = vmul.f32 %v5552, %v5438
        %v5555 = vadd.f32 %v5549, %v5553
        %v5556 = vadd.f32 %v5550, %v5554
        %s5557 = sld [smem:[#allocation15 + $0x2]]
        %v5558 = vstv %s5557
        %v5559 = vadd.f32 %v5555, %v5558
        %v5560 = vadd.f32 %v5556, %v5558
        %v5561 = vxor.u32 %v5559, 2147483648
        %v5562 = vxor.u32 %v5560, 2147483648
        %v5563 = vmul.f32 %v5561, 1.442695
        %v5564 = vpow.pop %v5563
        %v5565 = vmul.f32 %v5562, 1.442695
        %v5566 = vpow.pop %v5565
        %v5567 = vadd.f32 %v5564, 1.0
        %v5568 = vadd.f32 %v5566, 1.0
        %v5569 = vrcp.pop %v5567
        %v5570 = vmul.f32 1.0, %v5569
        %v5571 = vrcp.pop %v5568
        %v5572 = vmul.f32 1.0, %v5571
        %v5573 = vmax.f32 %v5570, 0.0001
        %v5574 = vmax.f32 %v5572, 0.0001
        %v5575 = vmin.f32 %v5573, 0.9999
        %v5576 = vmin.f32 %v5574, 0.9999
        %s5577 = scalar_lea.vmem %s371, 32 [#allocation16]
        %5578 = vst.msk [vmem:[%s5577] sm:$0xff] %vm5483, %v5575
        %5579 = vst.msk [vmem:[%s5577 + $0x8] sm:$0xff] %vm5483, %v5576
        %s5580 = sand.u32 %s188, 1
        %s5581 = scalar_lea.sflag [#allocation5], %s5580
        %s5582 = sand.u32 %s188, 1
        %s5583 = smul.addr %s5582, 48
        %s5584 = scalar_lea.vmem [#allocation16], %s5583
        // Predicated region
        $region77: #{tpu_custom_call.1} parent=47 // pred_check
          %p5585 = pneg %p198
        $region78: #{tpu_custom_call.1} parent=47 // pred_check_branch
          %5587 = sbr.rel (%p5585) target = $region80
        $region79: #{tpu_custom_call.1} parent=47 // pred_region
          %s5589 = ssub.s32 768, 768
          %5590 = vsyncadd %s5581, %s5589
          %s5591 = smul.addr %s28, 6
          %s5592 = smul.addr %s5591, 128
          %s5593 = scalar_lea.hbm %s7, %s5592
          %s5594 = sshll.u32 %s5584, 4
          %s5595 = int_to_ptr.vmem [resolvable:$true] %s5594
          %5600 = dma.vmem_to_hbm [thread:$0]  %s5595, 768, %s5593, %s5581, 128, 128, 8
        $region80: #{tpu_custom_call.1} parent=47 // pred_fallthru
          _
      $region48: #{tpu_custom_call.1} parent=5 // pred_fallthru
        _
      %p5601 = scmp.le.s32.totalorder 2, %s23
      // Predicated region
      $region81: #{tpu_custom_call.1} parent=5 // pred_check
        %p5602 = pneg %p5601
      $region82: #{tpu_custom_call.1} parent=5 // pred_check_branch
        %5604 = sbr.rel (%p5602) target = $region84
      $region83: #{tpu_custom_call.1} parent=5 // pred_region
        %s5605 = ssub.s32 %s23, 2
        // Predicated region
        $region85: #{tpu_custom_call.1} parent=83 // pred_check
          %p5606 = pneg %p204
        $region86: #{tpu_custom_call.1} parent=83 // pred_check_branch
          %5608 = sbr.rel (%p5606) target = $region88
        $region87: #{tpu_custom_call.1} parent=83 // pred_region
          %s5609 = sand.u32 %s189, 1
          %s5610 = scalar_lea.sflag [#allocation5], %s5609
          %s5611 = sand.u32 %s189, 1
          %s5612 = smul.addr %s5611, 48
          %s5613 = scalar_lea.vmem [#allocation16], %s5612
          %5614 = dma.done %s5610, 768
        $region88: #{tpu_custom_call.1} parent=83 // pred_fallthru
          _
      $region84: #{tpu_custom_call.1} parent=5 // pred_fallthru
        _
    $region6: #{tpu_custom_call.1} parent=1 // loop_footer
      %s27 = sadd.s32 1, %s23
    $region7: #{tpu_custom_call.1} parent=1 // loop_footer_branch
      %22 = sbr.rel target = $region3
    $region8: #{tpu_custom_call.1} parent=1 // loop_exit
      _
    %5615 = vsyncpa [#allocation4], 1
    %s5616 = scalar_lea.sflag [#allocation4], 1
    %5617 = vsyncpa %s5616, 1
    %5618 = vsyncpa [#allocation5], 1
    %s5619 = scalar_lea.sflag [#allocation5], 1
    %5620 = vsyncpa %s5619, 1
    %5621 = vsyncpa [#allocation6], 1
    %s5622 = scalar_lea.sflag [#allocation6], 1
    %5623 = vsyncpa %s5622, 1
    %5624 = vsyncpa [#allocation7], 1
    %s5625 = scalar_lea.sflag [#allocation7], 1
    %5626 = vsyncpa %s5625, 1
    %5627 = vsyncpa [#allocation11], 1
    %5628 = vsyncpa [#allocation14], 1

</llo_original>
